<compile_context>
chip_gen: v7x
topology: tpu7x:2x2x1
jax: 0.10.0
libtpu: 0.0.40
codegen_flags: <defaults>
</compile_context>

<pallas_src>
import math
import functools

import jax
import jax.numpy as jnp
import numpy as np
from jax import lax
from jax.experimental import pallas as pl
from jax.experimental.pallas import tpu as pltpu


def _round_up(x, m):
    return (x + m - 1) // m * m


def _pick_row_tile(H, W, max_pixels=2048):
    """Largest divisor TH of H with TH*W <= max_pixels (whole image if small)."""
    if H * W <= max_pixels:
        return H
    for d in range(H, 0, -1):
        if H % d == 0 and d * W <= max_pixels and d >= 3 and (d * W) % 8 == 0:
            return d
    return H


def _convnext_kernel(ximg_ref, resid_ref, wk_ref, cb_ref, lnw_ref, lnb_ref,
                     w1_ref, b1_ref, w2_ref, b2_ref, g_ref,
                     out_ref, xbuf_ref,
                     *, H, W, TH, Wp, nT, E, eps, cdt):
    """One (batch, row-tile) step.

    ximg_ref : (BT, H, W, E) f32 in HBM (pl.ANY)        -- manual halo DMA
    resid_ref: (1, TH*W, E)  f32                        -- residual tile
    wk_ref   : (7, 7*E, E)   cdt   conv weight, (kw,E_in)-major contraction
    cb/lnw/lnb/b2/g : (1, E) f32 ;  b1 : (1, 4E) f32
    w1 : (E, 4E) cdt ; w2 : (4E, E) cdt
    out_ref  : (1, TH*W, E)
    xbuf_ref : (TH+7, Wp, E) f32 VMEM scratch (halo'd, W-padded slab)
    """
    f32 = jnp.float32
    b = pl.program_id(0)
    rt = pl.program_id(1)

    # ---- stage the halo'd, W-padded row slab into VMEM -------------------
    # Zero only regions the DMA never writes (no write/DMA overlap => no race).
    xbuf_ref[:, 0:3, :] = jnp.zeros((TH + 7, 3, E), f32)                # left pad
    xbuf_ref[:, 3 + W:Wp, :] = jnp.zeros((TH + 7, Wp - W - 3, E), f32)  # right pad
    xbuf_ref[TH + 6, :, :] = jnp.zeros((Wp, E), f32)                    # align row

    def copy_rows(src_row, dst_row, nrows):
        pltpu.sync_copy(
            ximg_ref.at[b, pl.ds(src_row, nrows), :, :],
            xbuf_ref.at[pl.ds(dst_row, nrows), pl.ds(3, W), :])

    if nT == 1:
        # Whole image in one tile: zero top/bottom halo rows, copy all H rows.
        xbuf_ref[0:3, :, :] = jnp.zeros((3, Wp, E), f32)
        xbuf_ref[TH + 3:TH + 6, :, :] = jnp.zeros((3, Wp, E), f32)
        copy_rows(0, 3, H)
    else:
        @pl.when(rt == 0)
        def _():
            xbuf_ref[0:3, :, :] = jnp.zeros((3, Wp, E), f32)
            copy_rows(0, 3, TH + 3)

        @pl.when(jnp.logical_and(rt > 0, rt < nT - 1))
        def _():
            copy_rows(rt * TH - 3, 0, TH + 6)

        @pl.when(rt == nT - 1)
        def _():
            xbuf_ref[TH + 3:TH + 6, :, :] = jnp.zeros((3, Wp, E), f32)
            copy_rows(rt * TH - 3, 0, TH + 3)

    # ---- dense 7x7 conv: 7 matmuls with K = 7E ---------------------------
    L = TH * Wp                       # conv computed in the padded-W domain
    acc = jnp.zeros((L, E), f32)
    for kh in range(7):
        # Contiguous rows -> layout-free flatten (Wp is a multiple of 8).
        slab = xbuf_ref[kh:kh + TH + 1, :, :].reshape((TH + 1) * Wp, E)
        # kw shifts are sublane-offset slices of the flat slab (no windowed
        # (H,W,E) relayouts); lane-concat builds the (L, 7E) im2col operand.
        im2col = jnp.concatenate(
            [slab[kw:kw + L, :].astype(cdt) for kw in range(7)], axis=-1)
        acc = acc + jnp.dot(im2col, wk_ref[kh], preferred_element_type=f32)
    acc = acc + cb_ref[...]           # bias broadcast, hoisted out of the loop

    # Extract valid W columns once (single windowed relayout per tile).
    x2d = acc.reshape(TH, Wp, E)[:, :W, :].reshape(TH * W, E)

    # ---- LayerNorm over channels (single-pass stats, f32) ----------------
    mu = jnp.mean(x2d, axis=-1, keepdims=True)
    ms = jnp.mean(x2d * x2d, axis=-1, keepdims=True)
    var = jnp.maximum(ms - mu * mu, 0.0)
    xn = (x2d - mu) * lax.rsqrt(var + eps)
    xn = xn * lnw_ref[...] + lnb_ref[...]

    # ---- MLP: E -> 4E -> E, exact (erf) GELU, bf16 MXU / f32 accumulate --
    h = jnp.dot(xn.astype(cdt), w1_ref[...],
                preferred_element_type=f32) + b1_ref[...]
    h = 0.5 * h * (1.0 + lax.erf(h * jnp.float32(1.0 / math.sqrt(2.0))))
    y = jnp.dot(h.astype(cdt), w2_ref[...],
                preferred_element_type=f32) + b2_ref[...]

    # ---- layer scale + residual (f32) ------------------------------------
    y = y * g_ref[...]
    out_ref[0] = (resid_ref[0] + y).astype(out_ref.dtype)


def convnext_block(x, params, *, eps=1e-5, use_bf16=True, row_tile=None):
    """x: (B, T, N, E) float32, N a perfect square.  Returns (B, T, N, E)."""
    B, T, N, E = x.shape
    H = W = int(math.sqrt(N))
    assert H * W == N, f"N={N} is not a perfect square."
    BT = B * T

    TH = row_tile if row_tile is not None else _pick_row_tile(H, W)
    assert H % TH == 0, f"row tile {TH} must divide H={H}"
    nT = H // TH
    if nT > 1:
        assert TH >= 3 and (TH * W) % 8 == 0, "invalid row tile for halo/layout"
    Wp = _round_up(W + 6, 8)                 # padded width, multiple of 8
    cdt = jnp.bfloat16 if use_bf16 else jnp.float32

    # --- glue (plain JAX, no padded-activation materialization) ----------
    ximg = x.reshape(BT, H, W, E)            # DMA source (HBM, pl.ANY)
    resid = x.reshape(BT, N, E)              # residual, auto-pipelined

    # torch OIHW (Eo, Ei, 7, 7) -> (kh, kw, Ei, Eo) -> (7, 7E, E), (kw,Ei)-major
    wk = jnp.transpose(params["conv_w"], (2, 3, 1, 0)).reshape(7, 7 * E, E)
    wk = wk.astype(cdt)
    cb = params["conv_b"].reshape(1, E).astype(jnp.float32)
    lnw = params["ln_w"].reshape(1, E).astype(jnp.float32)
    lnb = params["ln_b"].reshape(1, E).astype(jnp.float32)
    w1 = params["w1"].astype(cdt)                       # (E, 4E)
    b1 = params["b1"].reshape(1, 4 * E).astype(jnp.float32)
    w2 = params["w2"].astype(cdt)                       # (4E, E)
    b2 = params["b2"].reshape(1, E).astype(jnp.float32)
    g = params["gamma"].reshape(1, E).astype(jnp.float32)

    kernel = functools.partial(_convnext_kernel, H=H, W=W, TH=TH, Wp=Wp,
                               nT=nT, E=E, eps=eps, cdt=cdt)

    def const_spec(shape):
        n = len(shape)
        return pl.BlockSpec(shape, lambda b, r: (0,) * n)

    tile_spec = pl.BlockSpec((1, TH * W, E), lambda b, r: (b, r, 0))

    grid_spec = pltpu.PrefetchScalarGridSpec(
        num_scalar_prefetch=0,
        grid=(BT, nT),
        in_specs=[
            pl.BlockSpec(memory_space=pl.ANY),   # activation in HBM (halo DMA)
            tile_spec,                           # residual tile
            const_spec((7, 7 * E, E)),           # conv weight
            const_spec((1, E)),                  # conv bias
            const_spec((1, E)),                  # LN weight
            const_spec((1, E)),                  # LN bias
            const_spec((E, 4 * E)),              # pwconv1 weight
            const_spec((1, 4 * E)),              # pwconv1 bias
            const_spec((4 * E, E)),              # pwconv2 weight
            const_spec((1, E)),                  # pwconv2 bias
            const_spec((1, E)),                  # layer scale
        ],
        out_specs=tile_spec,
        scratch_shapes=[pltpu.VMEM((TH + 7, Wp, E), jnp.float32)],
    )

    out = pl.pallas_call(
        kernel,
        out_shape=jax.ShapeDtypeStruct((BT, N, E), x.dtype),
        grid_spec=grid_spec,
        compiler_params=pltpu.CompilerParams(
            dimension_semantics=("parallel", "parallel"),
            vmem_limit_bytes=48 * 1024 * 1024),
    )(ximg, resid, wk, cb, lnw, lnb, w1, b1, w2, b2, g)

    return out.reshape(B, T, N, E)


def ref_forward(x, params, eps=1e-5):
    """Pure-JAX reference mirroring the PyTorch forward (all f32)."""
    B, T, N, E = x.shape
    H = W = int(math.sqrt(N))
    residual = x
    xi = x.reshape(B * T, H, W, E)
    w_hwio = jnp.transpose(params["conv_w"], (2, 3, 1, 0))
    y = lax.conv_general_dilated(
        xi, w_hwio, window_strides=(1, 1), padding="SAME",
        dimension_numbers=("NHWC", "HWIO", "NHWC"))
    y = y + params["conv_b"]
    y = y.reshape(B * T, N, E)
    mean = y.mean(-1, keepdims=True)
    var = ((y - mean) ** 2).mean(-1, keepdims=True)
    y = (y - mean) / jnp.sqrt(var + eps)
    y = y * params["ln_w"] + params["ln_b"]
    h = y @ params["w1"] + params["b1"]
    h = jax.nn.gelu(h, approximate=False)
    y = h @ params["w2"] + params["b2"]
    y = params["gamma"] * y
    return residual + y.reshape(B, T, N, E)


def _make_params(E, key):
    keys = jax.random.split(key, 9)
    return {
        # nn.Conv2d(E, E, 7, padding=3).weight: (E_out, E_in, 7, 7)
        "conv_w": jax.random.normal(keys[0], (E, E, 7, 7), jnp.float32)
                  / math.sqrt(49 * E),
        "conv_b": 0.01 * jax.random.normal(keys[1], (E,), jnp.float32),
        # nn.LayerNorm(E) (perturbed so the affine path is exercised)
        "ln_w": 1.0 + 0.1 * jax.random.normal(keys[2], (E,), jnp.float32),
        "ln_b": 0.1 * jax.random.normal(keys[3], (E,), jnp.float32),
        # nn.Linear stored as (in, out); y = x @ W + b
        "w1": jax.random.normal(keys[4], (E, 4 * E), jnp.float32) / math.sqrt(E),
        "b1": 0.01 * jax.random.normal(keys[5], (4 * E,), jnp.float32),
        "w2": jax.random.normal(keys[6], (4 * E, E), jnp.float32)
              / math.sqrt(4 * E),
        "b2": 0.01 * jax.random.normal(keys[7], (E,), jnp.float32),
        # layer scale: module init is 1e-6*ones; random here so the branch is
        # actually exercised numerically by the test.
        "gamma": 0.5 * jax.random.normal(keys[8], (E,), jnp.float32),
    }


if __name__ == "__main__":
    key = jax.random.PRNGKey(0)
    k1, k2, k3, k4 = jax.random.split(key, 4)

    # ---- test 1: single row-tile path (H=W=8, E=128, lane-dense) ---------
    B, T, N, E = 2, 2, 64, 128
    x = jax.random.normal(k1, (B, T, N, E), jnp.float32)
    params = _make_params(E, k2)
    ref = jax.block_until_ready(ref_forward(x, params))

    out_f32 = jax.block_until_ready(convnext_block(x, params, use_bf16=False))
    assert out_f32.shape == (B, T, N, E) and out_f32.dtype == x.dtype
    np.testing.assert_allclose(np.asarray(out_f32), np.asarray(ref),
                               rtol=1e-3, atol=1e-3)

    out_bf16 = jax.block_until_ready(convnext_block(x, params, use_bf16=True))
    np.testing.assert_allclose(np.asarray(out_bf16), np.asarray(ref),
                               rtol=5e-2, atol=5e-2)

    # ---- test 2: multi row-tile path with halo DMA (H=W=24, 3 tiles) -----
    B2, T2, N2, E2 = 1, 2, 576, 128
    x2 = jax.random.normal(k3, (B2, T2, N2, E2), jnp.float32)
    params2 = _make_params(E2, k4)
    ref2 = jax.block_until_ready(ref_forward(x2, params2))
    out2 = jax.block_until_ready(
        convnext_block(x2, params2, use_bf16=False, row_tile=8))
    np.testing.assert_allclose(np.asarray(out2), np.asarray(ref2),
                               rtol=1e-3, atol=1e-3)

    print("KERNEL_OK")
</pallas_src>

<mosaic_0001>
module attributes {stable_mosaic.version = 11 : i64} {
  func.func @_convnext_kernel(%arg0: i32, %arg1: i32, %arg2: memref<4x8x8x128xf32, #tpu.memory_space<any>>, %arg3: memref<1x64x128xf32, #tpu.memory_space<vmem>>, %arg4: memref<7x896x128xf32, #tpu.memory_space<vmem>>, %arg5: memref<1x128xf32, #tpu.memory_space<vmem>>, %arg6: memref<1x128xf32, #tpu.memory_space<vmem>>, %arg7: memref<1x128xf32, #tpu.memory_space<vmem>>, %arg8: memref<128x512xf32, #tpu.memory_space<vmem>>, %arg9: memref<1x512xf32, #tpu.memory_space<vmem>>, %arg10: memref<512x128xf32, #tpu.memory_space<vmem>>, %arg11: memref<1x128xf32, #tpu.memory_space<vmem>>, %arg12: memref<1x128xf32, #tpu.memory_space<vmem>>, %arg13: memref<1x64x128xf32, #tpu.memory_space<vmem>>, %arg14: memref<15x16x128xf32, #tpu.memory_space<vmem>>) attributes {dimension_semantics = [#tpu.dimension_semantics<parallel>, #tpu.dimension_semantics<parallel>], iteration_bounds = array<i64: 4, 1>, scalar_prefetch = 0 : i64, scratch_operands = 1 : i64, tpu.core_type = #tpu.core_type<tc>, window_params = [{}, {transform_indices = @transform_1, window_bounds = array<i64: 1, 64, 128>}, {pipeline_mode = #tpu.pipeline_mode<synchronous>, transform_indices = @transform_2, window_bounds = array<i64: 7, 896, 128>}, {pipeline_mode = #tpu.pipeline_mode<synchronous>, transform_indices = @transform_3, window_bounds = array<i64: 1, 128>}, {pipeline_mode = #tpu.pipeline_mode<synchronous>, transform_indices = @transform_4, window_bounds = array<i64: 1, 128>}, {pipeline_mode = #tpu.pipeline_mode<synchronous>, transform_indices = @transform_5, window_bounds = array<i64: 1, 128>}, {pipeline_mode = #tpu.pipeline_mode<synchronous>, transform_indices = @transform_6, window_bounds = array<i64: 128, 512>}, {pipeline_mode = #tpu.pipeline_mode<synchronous>, transform_indices = @transform_7, window_bounds = array<i64: 1, 512>}, {pipeline_mode = #tpu.pipeline_mode<synchronous>, transform_indices = @transform_8, window_bounds = array<i64: 512, 128>}, {pipeline_mode = #tpu.pipeline_mode<synchronous>, transform_indices = @transform_9, window_bounds = array<i64: 1, 128>}, {pipeline_mode = #tpu.pipeline_mode<synchronous>, transform_indices = @transform_10, window_bounds = array<i64: 1, 128>}, {transform_indices = @transform_11, window_bounds = array<i64: 1, 64, 128>}]} {
    %cst = arith.constant 0.000000e+00 : f32
    %0 = vector.broadcast %cst : f32 to vector<15x3x128xf32>
    %c0 = arith.constant 0 : index
    %c0_0 = arith.constant 0 : index
    %c0_1 = arith.constant 0 : index
    %1 = vector.load %arg14[%c0, %c0_0, %c0_1] : memref<15x16x128xf32, #tpu.memory_space<vmem>>, vector<15x3x128xf32>
    tpu.vector_store %arg14[%c0, %c0_0, %c0_1], %0 {strides = array<i32>} : memref<15x16x128xf32, #tpu.memory_space<vmem>>, vector<15x3x128xf32>,
    %cst_2 = arith.constant 0.000000e+00 : f32
    %2 = vector.broadcast %cst_2 : f32 to vector<15x5x128xf32>
    %c0_3 = arith.constant 0 : index
    %c11 = arith.constant 11 : index
    %c0_4 = arith.constant 0 : index
    %3 = vector.load %arg14[%c0_3, %c11, %c0_4] : memref<15x16x128xf32, #tpu.memory_space<vmem>>, vector<15x5x128xf32>
    tpu.vector_store %arg14[%c0_3, %c11, %c0_4], %2 {strides = array<i32>} : memref<15x16x128xf32, #tpu.memory_space<vmem>>, vector<15x5x128xf32>,
    %cst_5 = arith.constant 0.000000e+00 : f32
    %4 = vector.broadcast %cst_5 : f32 to vector<16x128xf32>
    %c14 = arith.constant 14 : index
    %c0_6 = arith.constant 0 : index
    %c0_7 = arith.constant 0 : index
    %5 = vector.load %arg14[%c14, %c0_6, %c0_7] : memref<15x16x128xf32, #tpu.memory_space<vmem>>, vector<1x16x128xf32>
    %6 = vector.shape_cast %5 : vector<1x16x128xf32> to vector<16x128xf32>
    %7 = vector.shape_cast %4 : vector<16x128xf32> to vector<1x16x128xf32>
    tpu.vector_store %arg14[%c14, %c0_6, %c0_7], %7 {strides = array<i32>} : memref<15x16x128xf32, #tpu.memory_space<vmem>>, vector<1x16x128xf32>,
    %cst_8 = arith.constant 0.000000e+00 : f32
    %8 = vector.broadcast %cst_8 : f32 to vector<3x16x128xf32>
    %c0_9 = arith.constant 0 : index
    %c0_10 = arith.constant 0 : index
    %c0_11 = arith.constant 0 : index
    %9 = vector.load %arg14[%c0_9, %c0_10, %c0_11] : memref<15x16x128xf32, #tpu.memory_space<vmem>>, vector<3x16x128xf32>
    tpu.vector_store %arg14[%c0_9, %c0_10, %c0_11], %8 {strides = array<i32>} : memref<15x16x128xf32, #tpu.memory_space<vmem>>, vector<3x16x128xf32>,
    %cst_12 = arith.constant 0.000000e+00 : f32
    %10 = vector.broadcast %cst_12 : f32 to vector<3x16x128xf32>
    %c11_13 = arith.constant 11 : index
    %c0_14 = arith.constant 0 : index
    %c0_15 = arith.constant 0 : index
    %11 = vector.load %arg14[%c11_13, %c0_14, %c0_15] : memref<15x16x128xf32, #tpu.memory_space<vmem>>, vector<3x16x128xf32>
    tpu.vector_store %arg14[%c11_13, %c0_14, %c0_15], %10 {strides = array<i32>} : memref<15x16x128xf32, #tpu.memory_space<vmem>>, vector<3x16x128xf32>,
    "tpu.region"() ({
      %170 = tpu.sem_alloc : memref<!tpu.dma_semaphore, #tpu.memory_space<semaphore_mem>>
      %c0_i32 = arith.constant 0 : i32
      %c0_i32_93 = arith.constant 0 : i32
      %c0_i32_94 = arith.constant 0 : i32
      %171 = tpu.memref_slice %arg2[%arg0, %c0_i32, %c0_i32_93, %c0_i32_94] : memref<4x8x8x128xf32, #tpu.memory_space<any>> -> memref<1x8x8x128xf32, #tpu.memory_space<any>>
      %172 = tpu.memref_squeeze %171 : memref<1x8x8x128xf32, #tpu.memory_space<any>> -> memref<8x8x128xf32, #tpu.memory_space<any>>
      %c3_i32 = arith.constant 3 : i32
      %c3_i32_95 = arith.constant 3 : i32
      %c0_i32_96 = arith.constant 0 : i32
      %173 = tpu.memref_slice %arg14[%c3_i32, %c3_i32_95, %c0_i32_96] : memref<15x16x128xf32, #tpu.memory_space<vmem>> -> memref<8x8x128xf32, #tpu.memory_space<vmem>>
      tpu.enqueue_dma source(%172 : memref<8x8x128xf32, #tpu.memory_space<any>>) target(%173 : memref<8x8x128xf32, #tpu.memory_space<vmem>>) target_semaphore(%170 : memref<!tpu.dma_semaphore, #tpu.memory_space<semaphore_mem>>)
      %c0_i32_97 = arith.constant 0 : i32
      %c0_i32_98 = arith.constant 0 : i32
      %c0_i32_99 = arith.constant 0 : i32
      %174 = tpu.memref_slice %arg2[%arg0, %c0_i32_97, %c0_i32_98, %c0_i32_99] : memref<4x8x8x128xf32, #tpu.memory_space<any>> -> memref<1x8x8x128xf32, #tpu.memory_space<any>>
      %175 = tpu.memref_squeeze %174 : memref<1x8x8x128xf32, #tpu.memory_space<any>> -> memref<8x8x128xf32, #tpu.memory_space<any>>
      %c3_i32_100 = arith.constant 3 : i32
      %c3_i32_101 = arith.constant 3 : i32
      %c0_i32_102 = arith.constant 0 : i32
      %176 = tpu.memref_slice %arg14[%c3_i32_100, %c3_i32_101, %c0_i32_102] : memref<15x16x128xf32, #tpu.memory_space<vmem>> -> memref<8x8x128xf32, #tpu.memory_space<vmem>>
      tpu.wait_dma2 semaphore(%170 : memref<!tpu.dma_semaphore, #tpu.memory_space<semaphore_mem>>) src(%175 : memref<8x8x128xf32, #tpu.memory_space<any>>) dst(%176 : memref<8x8x128xf32, #tpu.memory_space<vmem>>)
      tpu.yield
    }) : () -> ()
    %cst_16 = arith.constant 0.000000e+00 : f32
    %12 = vector.broadcast %cst_16 : f32 to vector<128x128xf32>
    %c0_17 = arith.constant 0 : index
    %c0_18 = arith.constant 0 : index
    %c0_19 = arith.constant 0 : index
    %13 = vector.load %arg14[%c0_17, %c0_18, %c0_19] : memref<15x16x128xf32, #tpu.memory_space<vmem>>, vector<9x16x128xf32>
    %14 = vector.shape_cast %13 : vector<9x16x128xf32> to vector<144x128xf32>
    %15 = vector.extract_strided_slice %14 {offsets = [0, 0], sizes = [128, 128], strides = [1, 1]} : vector<144x128xf32> to vector<128x128xf32>
    %16 = vector.extract_strided_slice %14 {offsets = [1, 0], sizes = [128, 128], strides = [1, 1]} : vector<144x128xf32> to vector<128x128xf32>
    %17 = vector.extract_strided_slice %14 {offsets = [2, 0], sizes = [128, 128], strides = [1, 1]} : vector<144x128xf32> to vector<128x128xf32>
    %18 = vector.extract_strided_slice %14 {offsets = [3, 0], sizes = [128, 128], strides = [1, 1]} : vector<144x128xf32> to vector<128x128xf32>
    %19 = vector.extract_strided_slice %14 {offsets = [4, 0], sizes = [128, 128], strides = [1, 1]} : vector<144x128xf32> to vector<128x128xf32>
    %20 = vector.extract_strided_slice %14 {offsets = [5, 0], sizes = [128, 128], strides = [1, 1]} : vector<144x128xf32> to vector<128x128xf32>
    %21 = vector.extract_strided_slice %14 {offsets = [6, 0], sizes = [128, 128], strides = [1, 1]} : vector<144x128xf32> to vector<128x128xf32>
    %22 = tpu.concatenate %15, %16, %17, %18, %19, %20, %21 in 1 : vector<128x128xf32>, vector<128x128xf32>, vector<128x128xf32>, vector<128x128xf32>, vector<128x128xf32>, vector<128x128xf32>, vector<128x128xf32> -> vector<128x896xf32>
    %c0_20 = arith.constant 0 : index
    %c0_21 = arith.constant 0 : index
    %c0_22 = arith.constant 0 : index
    %23 = vector.load %arg4[%c0_20, %c0_21, %c0_22] : memref<7x896x128xf32, #tpu.memory_space<vmem>>, vector<1x896x128xf32>
    %24 = vector.shape_cast %23 : vector<1x896x128xf32> to vector<896x128xf32>
    %cst_23 = arith.constant dense<0.000000e+00> : vector<128x128xf32>
    %25 = tpu.matmul %22, %24, %cst_23 {dimension_numbers = #tpu.dot_dimension_numbers<[1], [0], [0], [1], [0, 0, 1, 1], [], []>} : vector<128x896xf32>, vector<896x128xf32>, vector<128x128xf32> -> vector<128x128xf32>
    %26 = arith.addf %12, %25 : vector<128x128xf32>
    %c1 = arith.constant 1 : index
    %c0_24 = arith.constant 0 : index
    %c0_25 = arith.constant 0 : index
    %27 = vector.load %arg14[%c1, %c0_24, %c0_25] : memref<15x16x128xf32, #tpu.memory_space<vmem>>, vector<9x16x128xf32>
    %28 = vector.shape_cast %27 : vector<9x16x128xf32> to vector<144x128xf32>
    %29 = vector.extract_strided_slice %28 {offsets = [0, 0], sizes = [128, 128], strides = [1, 1]} : vector<144x128xf32> to vector<128x128xf32>
    %30 = vector.extract_strided_slice %28 {offsets = [1, 0], sizes = [128, 128], strides = [1, 1]} : vector<144x128xf32> to vector<128x128xf32>
    %31 = vector.extract_strided_slice %28 {offsets = [2, 0], sizes = [128, 128], strides = [1, 1]} : vector<144x128xf32> to vector<128x128xf32>
    %32 = vector.extract_strided_slice %28 {offsets = [3, 0], sizes = [128, 128], strides = [1, 1]} : vector<144x128xf32> to vector<128x128xf32>
    %33 = vector.extract_strided_slice %28 {offsets = [4, 0], sizes = [128, 128], strides = [1, 1]} : vector<144x128xf32> to vector<128x128xf32>
    %34 = vector.extract_strided_slice %28 {offsets = [5, 0], sizes = [128, 128], strides = [1, 1]} : vector<144x128xf32> to vector<128x128xf32>
    %35 = vector.extract_strided_slice %28 {offsets = [6, 0], sizes = [128, 128], strides = [1, 1]} : vector<144x128xf32> to vector<128x128xf32>
    %36 = tpu.concatenate %29, %30, %31, %32, %33, %34, %35 in 1 : vector<128x128xf32>, vector<128x128xf32>, vector<128x128xf32>, vector<128x128xf32>, vector<128x128xf32>, vector<128x128xf32>, vector<128x128xf32> -> vector<128x896xf32>
    %c1_26 = arith.constant 1 : index
    %c0_27 = arith.constant 0 : index
    %c0_28 = arith.constant 0 : index
    %37 = vector.load %arg4[%c1_26, %c0_27, %c0_28] : memref<7x896x128xf32, #tpu.memory_space<vmem>>, vector<1x896x128xf32>
    %38 = vector.shape_cast %37 : vector<1x896x128xf32> to vector<896x128xf32>
    %cst_29 = arith.constant dense<0.000000e+00> : vector<128x128xf32>
    %39 = tpu.matmul %36, %38, %cst_29 {dimension_numbers = #tpu.dot_dimension_numbers<[1], [0], [0], [1], [0, 0, 1, 1], [], []>} : vector<128x896xf32>, vector<896x128xf32>, vector<128x128xf32> -> vector<128x128xf32>
    %40 = arith.addf %26, %39 : vector<128x128xf32>
    %c2 = arith.constant 2 : index
    %c0_30 = arith.constant 0 : index
    %c0_31 = arith.constant 0 : index
    %41 = vector.load %arg14[%c2, %c0_30, %c0_31] : memref<15x16x128xf32, #tpu.memory_space<vmem>>, vector<9x16x128xf32>
    %42 = vector.shape_cast %41 : vector<9x16x128xf32> to vector<144x128xf32>
    %43 = vector.extract_strided_slice %42 {offsets = [0, 0], sizes = [128, 128], strides = [1, 1]} : vector<144x128xf32> to vector<128x128xf32>
    %44 = vector.extract_strided_slice %42 {offsets = [1, 0], sizes = [128, 128], strides = [1, 1]} : vector<144x128xf32> to vector<128x128xf32>
    %45 = vector.extract_strided_slice %42 {offsets = [2, 0], sizes = [128, 128], strides = [1, 1]} : vector<144x128xf32> to vector<128x128xf32>
    %46 = vector.extract_strided_slice %42 {offsets = [3, 0], sizes = [128, 128], strides = [1, 1]} : vector<144x128xf32> to vector<128x128xf32>
    %47 = vector.extract_strided_slice %42 {offsets = [4, 0], sizes = [128, 128], strides = [1, 1]} : vector<144x128xf32> to vector<128x128xf32>
    %48 = vector.extract_strided_slice %42 {offsets = [5, 0], sizes = [128, 128], strides = [1, 1]} : vector<144x128xf32> to vector<128x128xf32>
    %49 = vector.extract_strided_slice %42 {offsets = [6, 0], sizes = [128, 128], strides = [1, 1]} : vector<144x128xf32> to vector<128x128xf32>
    %50 = tpu.concatenate %43, %44, %45, %46, %47, %48, %49 in 1 : vector<128x128xf32>, vector<128x128xf32>, vector<128x128xf32>, vector<128x128xf32>, vector<128x128xf32>, vector<128x128xf32>, vector<128x128xf32> -> vector<128x896xf32>
    %c2_32 = arith.constant 2 : index
    %c0_33 = arith.constant 0 : index
    %c0_34 = arith.constant 0 : index
    %51 = vector.load %arg4[%c2_32, %c0_33, %c0_34] : memref<7x896x128xf32, #tpu.memory_space<vmem>>, vector<1x896x128xf32>
    %52 = vector.shape_cast %51 : vector<1x896x128xf32> to vector<896x128xf32>
    %cst_35 = arith.constant dense<0.000000e+00> : vector<128x128xf32>
    %53 = tpu.matmul %50, %52, %cst_35 {dimension_numbers = #tpu.dot_dimension_numbers<[1], [0], [0], [1], [0, 0, 1, 1], [], []>} : vector<128x896xf32>, vector<896x128xf32>, vector<128x128xf32> -> vector<128x128xf32>
    %54 = arith.addf %40, %53 : vector<128x128xf32>
    %c3 = arith.constant 3 : index
    %c0_36 = arith.constant 0 : index
    %c0_37 = arith.constant 0 : index
    %55 = vector.load %arg14[%c3, %c0_36, %c0_37] : memref<15x16x128xf32, #tpu.memory_space<vmem>>, vector<9x16x128xf32>
    %56 = vector.shape_cast %55 : vector<9x16x128xf32> to vector<144x128xf32>
    %57 = vector.extract_strided_slice %56 {offsets = [0, 0], sizes = [128, 128], strides = [1, 1]} : vector<144x128xf32> to vector<128x128xf32>
    %58 = vector.extract_strided_slice %56 {offsets = [1, 0], sizes = [128, 128], strides = [1, 1]} : vector<144x128xf32> to vector<128x128xf32>
    %59 = vector.extract_strided_slice %56 {offsets = [2, 0], sizes = [128, 128], strides = [1, 1]} : vector<144x128xf32> to vector<128x128xf32>
    %60 = vector.extract_strided_slice %56 {offsets = [3, 0], sizes = [128, 128], strides = [1, 1]} : vector<144x128xf32> to vector<128x128xf32>
    %61 = vector.extract_strided_slice %56 {offsets = [4, 0], sizes = [128, 128], strides = [1, 1]} : vector<144x128xf32> to vector<128x128xf32>
    %62 = vector.extract_strided_slice %56 {offsets = [5, 0], sizes = [128, 128], strides = [1, 1]} : vector<144x128xf32> to vector<128x128xf32>
    %63 = vector.extract_strided_slice %56 {offsets = [6, 0], sizes = [128, 128], strides = [1, 1]} : vector<144x128xf32> to vector<128x128xf32>
    %64 = tpu.concatenate %57, %58, %59, %60, %61, %62, %63 in 1 : vector<128x128xf32>, vector<128x128xf32>, vector<128x128xf32>, vector<128x128xf32>, vector<128x128xf32>, vector<128x128xf32>, vector<128x128xf32> -> vector<128x896xf32>
    %c3_38 = arith.constant 3 : index
    %c0_39 = arith.constant 0 : index
    %c0_40 = arith.constant 0 : index
    %65 = vector.load %arg4[%c3_38, %c0_39, %c0_40] : memref<7x896x128xf32, #tpu.memory_space<vmem>>, vector<1x896x128xf32>
    %66 = vector.shape_cast %65 : vector<1x896x128xf32> to vector<896x128xf32>
    %cst_41 = arith.constant dense<0.000000e+00> : vector<128x128xf32>
    %67 = tpu.matmul %64, %66, %cst_41 {dimension_numbers = #tpu.dot_dimension_numbers<[1], [0], [0], [1], [0, 0, 1, 1], [], []>} : vector<128x896xf32>, vector<896x128xf32>, vector<128x128xf32> -> vector<128x128xf32>
    %68 = arith.addf %54, %67 : vector<128x128xf32>
    %c4 = arith.constant 4 : index
    %c0_42 = arith.constant 0 : index
    %c0_43 = arith.constant 0 : index
    %69 = vector.load %arg14[%c4, %c0_42, %c0_43] : memref<15x16x128xf32, #tpu.memory_space<vmem>>, vector<9x16x128xf32>
    %70 = vector.shape_cast %69 : vector<9x16x128xf32> to vector<144x128xf32>
    %71 = vector.extract_strided_slice %70 {offsets = [0, 0], sizes = [128, 128], strides = [1, 1]} : vector<144x128xf32> to vector<128x128xf32>
    %72 = vector.extract_strided_slice %70 {offsets = [1, 0], sizes = [128, 128], strides = [1, 1]} : vector<144x128xf32> to vector<128x128xf32>
    %73 = vector.extract_strided_slice %70 {offsets = [2, 0], sizes = [128, 128], strides = [1, 1]} : vector<144x128xf32> to vector<128x128xf32>
    %74 = vector.extract_strided_slice %70 {offsets = [3, 0], sizes = [128, 128], strides = [1, 1]} : vector<144x128xf32> to vector<128x128xf32>
    %75 = vector.extract_strided_slice %70 {offsets = [4, 0], sizes = [128, 128], strides = [1, 1]} : vector<144x128xf32> to vector<128x128xf32>
    %76 = vector.extract_strided_slice %70 {offsets = [5, 0], sizes = [128, 128], strides = [1, 1]} : vector<144x128xf32> to vector<128x128xf32>
    %77 = vector.extract_strided_slice %70 {offsets = [6, 0], sizes = [128, 128], strides = [1, 1]} : vector<144x128xf32> to vector<128x128xf32>
    %78 = tpu.concatenate %71, %72, %73, %74, %75, %76, %77 in 1 : vector<128x128xf32>, vector<128x128xf32>, vector<128x128xf32>, vector<128x128xf32>, vector<128x128xf32>, vector<128x128xf32>, vector<128x128xf32> -> vector<128x896xf32>
    %c4_44 = arith.constant 4 : index
    %c0_45 = arith.constant 0 : index
    %c0_46 = arith.constant 0 : index
    %79 = vector.load %arg4[%c4_44, %c0_45, %c0_46] : memref<7x896x128xf32, #tpu.memory_space<vmem>>, vector<1x896x128xf32>
    %80 = vector.shape_cast %79 : vector<1x896x128xf32> to vector<896x128xf32>
    %cst_47 = arith.constant dense<0.000000e+00> : vector<128x128xf32>
    %81 = tpu.matmul %78, %80, %cst_47 {dimension_numbers = #tpu.dot_dimension_numbers<[1], [0], [0], [1], [0, 0, 1, 1], [], []>} : vector<128x896xf32>, vector<896x128xf32>, vector<128x128xf32> -> vector<128x128xf32>
    %82 = arith.addf %68, %81 : vector<128x128xf32>
    %c5 = arith.constant 5 : index
    %c0_48 = arith.constant 0 : index
    %c0_49 = arith.constant 0 : index
    %83 = vector.load %arg14[%c5, %c0_48, %c0_49] : memref<15x16x128xf32, #tpu.memory_space<vmem>>, vector<9x16x128xf32>
    %84 = vector.shape_cast %83 : vector<9x16x128xf32> to vector<144x128xf32>
    %85 = vector.extract_strided_slice %84 {offsets = [0, 0], sizes = [128, 128], strides = [1, 1]} : vector<144x128xf32> to vector<128x128xf32>
    %86 = vector.extract_strided_slice %84 {offsets = [1, 0], sizes = [128, 128], strides = [1, 1]} : vector<144x128xf32> to vector<128x128xf32>
    %87 = vector.extract_strided_slice %84 {offsets = [2, 0], sizes = [128, 128], strides = [1, 1]} : vector<144x128xf32> to vector<128x128xf32>
    %88 = vector.extract_strided_slice %84 {offsets = [3, 0], sizes = [128, 128], strides = [1, 1]} : vector<144x128xf32> to vector<128x128xf32>
    %89 = vector.extract_strided_slice %84 {offsets = [4, 0], sizes = [128, 128], strides = [1, 1]} : vector<144x128xf32> to vector<128x128xf32>
    %90 = vector.extract_strided_slice %84 {offsets = [5, 0], sizes = [128, 128], strides = [1, 1]} : vector<144x128xf32> to vector<128x128xf32>
    %91 = vector.extract_strided_slice %84 {offsets = [6, 0], sizes = [128, 128], strides = [1, 1]} : vector<144x128xf32> to vector<128x128xf32>
    %92 = tpu.concatenate %85, %86, %87, %88, %89, %90, %91 in 1 : vector<128x128xf32>, vector<128x128xf32>, vector<128x128xf32>, vector<128x128xf32>, vector<128x128xf32>, vector<128x128xf32>, vector<128x128xf32> -> vector<128x896xf32>
    %c5_50 = arith.constant 5 : index
    %c0_51 = arith.constant 0 : index
    %c0_52 = arith.constant 0 : index
    %93 = vector.load %arg4[%c5_50, %c0_51, %c0_52] : memref<7x896x128xf32, #tpu.memory_space<vmem>>, vector<1x896x128xf32>
    %94 = vector.shape_cast %93 : vector<1x896x128xf32> to vector<896x128xf32>
    %cst_53 = arith.constant dense<0.000000e+00> : vector<128x128xf32>
    %95 = tpu.matmul %92, %94, %cst_53 {dimension_numbers = #tpu.dot_dimension_numbers<[1], [0], [0], [1], [0, 0, 1, 1], [], []>} : vector<128x896xf32>, vector<896x128xf32>, vector<128x128xf32> -> vector<128x128xf32>
    %96 = arith.addf %82, %95 : vector<128x128xf32>
    %c6 = arith.constant 6 : index
    %c0_54 = arith.constant 0 : index
    %c0_55 = arith.constant 0 : index
    %97 = vector.load %arg14[%c6, %c0_54, %c0_55] : memref<15x16x128xf32, #tpu.memory_space<vmem>>, vector<9x16x128xf32>
    %98 = vector.shape_cast %97 : vector<9x16x128xf32> to vector<144x128xf32>
    %99 = vector.extract_strided_slice %98 {offsets = [0, 0], sizes = [128, 128], strides = [1, 1]} : vector<144x128xf32> to vector<128x128xf32>
    %100 = vector.extract_strided_slice %98 {offsets = [1, 0], sizes = [128, 128], strides = [1, 1]} : vector<144x128xf32> to vector<128x128xf32>
    %101 = vector.extract_strided_slice %98 {offsets = [2, 0], sizes = [128, 128], strides = [1, 1]} : vector<144x128xf32> to vector<128x128xf32>
    %102 = vector.extract_strided_slice %98 {offsets = [3, 0], sizes = [128, 128], strides = [1, 1]} : vector<144x128xf32> to vector<128x128xf32>
    %103 = vector.extract_strided_slice %98 {offsets = [4, 0], sizes = [128, 128], strides = [1, 1]} : vector<144x128xf32> to vector<128x128xf32>
    %104 = vector.extract_strided_slice %98 {offsets = [5, 0], sizes = [128, 128], strides = [1, 1]} : vector<144x128xf32> to vector<128x128xf32>
    %105 = vector.extract_strided_slice %98 {offsets = [6, 0], sizes = [128, 128], strides = [1, 1]} : vector<144x128xf32> to vector<128x128xf32>
    %106 = tpu.concatenate %99, %100, %101, %102, %103, %104, %105 in 1 : vector<128x128xf32>, vector<128x128xf32>, vector<128x128xf32>, vector<128x128xf32>, vector<128x128xf32>, vector<128x128xf32>, vector<128x128xf32> -> vector<128x896xf32>
    %c6_56 = arith.constant 6 : index
    %c0_57 = arith.constant 0 : index
    %c0_58 = arith.constant 0 : index
    %107 = vector.load %arg4[%c6_56, %c0_57, %c0_58] : memref<7x896x128xf32, #tpu.memory_space<vmem>>, vector<1x896x128xf32>
    %108 = vector.shape_cast %107 : vector<1x896x128xf32> to vector<896x128xf32>
    %cst_59 = arith.constant dense<0.000000e+00> : vector<128x128xf32>
    %109 = tpu.matmul %106, %108, %cst_59 {dimension_numbers = #tpu.dot_dimension_numbers<[1], [0], [0], [1], [0, 0, 1, 1], [], []>} : vector<128x896xf32>, vector<896x128xf32>, vector<128x128xf32> -> vector<128x128xf32>
    %110 = arith.addf %96, %109 : vector<128x128xf32>
    %c0_60 = arith.constant 0 : index
    %c0_61 = arith.constant 0 : index
    %111 = vector.load %arg5[%c0_60, %c0_61] : memref<1x128xf32, #tpu.memory_space<vmem>>, vector<1x128xf32>
    %112 = vector.broadcast %111 : vector<1x128xf32> to vector<128x128xf32>
    %113 = arith.addf %110, %112 : vector<128x128xf32>
    %114 = vector.shape_cast %113 : vector<128x128xf32> to vector<8x16x128xf32>
    %115 = vector.extract_strided_slice %114 {offsets = [0, 0, 0], sizes = [8, 8, 128], strides = [1, 1, 1]} : vector<8x16x128xf32> to vector<8x8x128xf32>
    %116 = vector.shape_cast %115 : vector<8x8x128xf32> to vector<64x128xf32>
    %cst_62 = arith.constant dense<0.000000e+00> : vector<64xf32>
    %117 = vector.multi_reduction <add>, %116, %cst_62 [1] : vector<64x128xf32> to vector<64xf32>
    %118 = vector.shape_cast %117 : vector<64xf32> to vector<64x1xf32>
    %cst_63 = arith.constant 1.280000e+02 : f32
    %119 = vector.broadcast %cst_63 : f32 to vector<64x1xf32>
    %120 = arith.divf %118, %119 : vector<64x1xf32>
    %121 = arith.mulf %116, %116 : vector<64x128xf32>
    %cst_64 = arith.constant dense<0.000000e+00> : vector<64xf32>
    %122 = vector.multi_reduction <add>, %121, %cst_64 [1] : vector<64x128xf32> to vector<64xf32>
    %123 = vector.shape_cast %122 : vector<64xf32> to vector<64x1xf32>
    %cst_65 = arith.constant 1.280000e+02 : f32
    %124 = vector.broadcast %cst_65 : f32 to vector<64x1xf32>
    %125 = arith.divf %123, %124 : vector<64x1xf32>
    %126 = arith.mulf %120, %120 : vector<64x1xf32>
    %127 = arith.subf %125, %126 : vector<64x1xf32>
    %cst_66 = arith.constant 0.000000e+00 : f32
    %128 = vector.broadcast %cst_66 : f32 to vector<64x1xf32>
    %129 = arith.maximumf %127, %128 : vector<64x1xf32>
    %130 = vector.broadcast %120 : vector<64x1xf32> to vector<64x128xf32>
    %131 = arith.subf %116, %130 : vector<64x128xf32>
    %cst_67 = arith.constant 9.99999974E-6 : f32
    %132 = vector.broadcast %cst_67 : f32 to vector<64x1xf32>
    %133 = arith.addf %129, %132 : vector<64x1xf32>
    %134 = math.rsqrt %133 : vector<64x1xf32>
    %135 = vector.broadcast %134 : vector<64x1xf32> to vector<64x128xf32>
    %136 = arith.mulf %131, %135 : vector<64x128xf32>
    %c0_68 = arith.constant 0 : index
    %c0_69 = arith.constant 0 : index
    %137 = vector.load %arg6[%c0_68, %c0_69] : memref<1x128xf32, #tpu.memory_space<vmem>>, vector<1x128xf32>
    %138 = vector.broadcast %137 : vector<1x128xf32> to vector<64x128xf32>
    %139 = arith.mulf %136, %138 : vector<64x128xf32>
    %c0_70 = arith.constant 0 : index
    %c0_71 = arith.constant 0 : index
    %140 = vector.load %arg7[%c0_70, %c0_71] : memref<1x128xf32, #tpu.memory_space<vmem>>, vector<1x128xf32>
    %141 = vector.broadcast %140 : vector<1x128xf32> to vector<64x128xf32>
    %142 = arith.addf %139, %141 : vector<64x128xf32>
    %c0_72 = arith.constant 0 : index
    %c0_73 = arith.constant 0 : index
    %143 = vector.load %arg8[%c0_72, %c0_73] : memref<128x512xf32, #tpu.memory_space<vmem>>, vector<128x512xf32>
    %cst_74 = arith.constant dense<0.000000e+00> : vector<64x512xf32>
    %144 = tpu.matmul %142, %143, %cst_74 {dimension_numbers = #tpu.dot_dimension_numbers<[1], [0], [0], [1], [0, 0, 1, 1], [], []>} : vector<64x128xf32>, vector<128x512xf32>, vector<64x512xf32> -> vector<64x512xf32>
    %c0_75 = arith.constant 0 : index
    %c0_76 = arith.constant 0 : index
    %145 = vector.load %arg9[%c0_75, %c0_76] : memref<1x512xf32, #tpu.memory_space<vmem>>, vector<1x512xf32>
    %146 = vector.broadcast %145 : vector<1x512xf32> to vector<64x512xf32>
    %147 = arith.addf %144, %146 : vector<64x512xf32>
    %cst_77 = arith.constant 5.000000e-01 : f32
    %148 = vector.broadcast %cst_77 : f32 to vector<64x512xf32>
    %149 = arith.mulf %148, %147 : vector<64x512xf32>
    %cst_78 = arith.constant 0.707106769 : f32
    %150 = vector.broadcast %cst_78 : f32 to vector<64x512xf32>
    %151 = arith.mulf %147, %150 : vector<64x512xf32>
    %152 = math.erf %151 : vector<64x512xf32>
    %cst_79 = arith.constant 1.000000e+00 : f32
    %153 = vector.broadcast %cst_79 : f32 to vector<64x512xf32>
    %154 = arith.addf %153, %152 : vector<64x512xf32>
    %155 = arith.mulf %149, %154 : vector<64x512xf32>
    %c0_80 = arith.constant 0 : index
    %c0_81 = arith.constant 0 : index
    %156 = vector.load %arg10[%c0_80, %c0_81] : memref<512x128xf32, #tpu.memory_space<vmem>>, vector<512x128xf32>
    %cst_82 = arith.constant dense<0.000000e+00> : vector<64x128xf32>
    %157 = tpu.matmul %155, %156, %cst_82 {dimension_numbers = #tpu.dot_dimension_numbers<[1], [0], [0], [1], [0, 0, 1, 1], [], []>} : vector<64x512xf32>, vector<512x128xf32>, vector<64x128xf32> -> vector<64x128xf32>
    %c0_83 = arith.constant 0 : index
    %c0_84 = arith.constant 0 : index
    %158 = vector.load %arg11[%c0_83, %c0_84] : memref<1x128xf32, #tpu.memory_space<vmem>>, vector<1x128xf32>
    %159 = vector.broadcast %158 : vector<1x128xf32> to vector<64x128xf32>
    %160 = arith.addf %157, %159 : vector<64x128xf32>
    %c0_85 = arith.constant 0 : index
    %c0_86 = arith.constant 0 : index
    %161 = vector.load %arg12[%c0_85, %c0_86] : memref<1x128xf32, #tpu.memory_space<vmem>>, vector<1x128xf32>
    %162 = vector.broadcast %161 : vector<1x128xf32> to vector<64x128xf32>
    %163 = arith.mulf %160, %162 : vector<64x128xf32>
    %c0_87 = arith.constant 0 : index
    %c0_88 = arith.constant 0 : index
    %c0_89 = arith.constant 0 : index
    %164 = vector.load %arg3[%c0_87, %c0_88, %c0_89] : memref<1x64x128xf32, #tpu.memory_space<vmem>>, vector<1x64x128xf32>
    %165 = vector.shape_cast %164 : vector<1x64x128xf32> to vector<64x128xf32>
    %166 = arith.addf %165, %163 : vector<64x128xf32>
    %c0_90 = arith.constant 0 : index
    %c0_91 = arith.constant 0 : index
    %c0_92 = arith.constant 0 : index
    %167 = vector.load %arg13[%c0_90, %c0_91, %c0_92] : memref<1x64x128xf32, #tpu.memory_space<vmem>>, vector<1x64x128xf32>
    %168 = vector.shape_cast %167 : vector<1x64x128xf32> to vector<64x128xf32>
    %169 = vector.shape_cast %166 : vector<64x128xf32> to vector<1x64x128xf32>
    tpu.vector_store %arg13[%c0_90, %c0_91, %c0_92], %169 {strides = array<i32>} : memref<1x64x128xf32, #tpu.memory_space<vmem>>, vector<1x64x128xf32>,
    return
  }
  func.func @transform_1(%arg0: i32, %arg1: i32) -> (i32, i32, i32) {
    %c0_i32 = arith.constant 0 : i32
    %c0_i32_0 = arith.constant 0 : i32
    return %arg0, %arg1, %c0_i32 : i32, i32, i32
  }
  func.func @transform_2(%arg0: i32, %arg1: i32) -> (i32, i32, i32) {
    %c0_i32 = arith.constant 0 : i32
    %c0_i32_0 = arith.constant 0 : i32
    %c0_i32_1 = arith.constant 0 : i32
    %c0_i32_2 = arith.constant 0 : i32
    return %c0_i32, %c0_i32_0, %c0_i32_1 : i32, i32, i32
  }
  func.func @transform_3(%arg0: i32, %arg1: i32) -> (i32, i32) {
    %c0_i32 = arith.constant 0 : i32
    %c0_i32_0 = arith.constant 0 : i32
    %c0_i32_1 = arith.constant 0 : i32
    return %c0_i32, %c0_i32_0 : i32, i32
  }
  func.func @transform_4(%arg0: i32, %arg1: i32) -> (i32, i32) {
    %c0_i32 = arith.constant 0 : i32
    %c0_i32_0 = arith.constant 0 : i32
    %c0_i32_1 = arith.constant 0 : i32
    return %c0_i32, %c0_i32_0 : i32, i32
  }
  func.func @transform_5(%arg0: i32, %arg1: i32) -> (i32, i32) {
    %c0_i32 = arith.constant 0 : i32
    %c0_i32_0 = arith.constant 0 : i32
    %c0_i32_1 = arith.constant 0 : i32
    return %c0_i32, %c0_i32_0 : i32, i32
  }
  func.func @transform_6(%arg0: i32, %arg1: i32) -> (i32, i32) {
    %c0_i32 = arith.constant 0 : i32
    %c0_i32_0 = arith.constant 0 : i32
    %c0_i32_1 = arith.constant 0 : i32
    return %c0_i32, %c0_i32_0 : i32, i32
  }
  func.func @transform_7(%arg0: i32, %arg1: i32) -> (i32, i32) {
    %c0_i32 = arith.constant 0 : i32
    %c0_i32_0 = arith.constant 0 : i32
    %c0_i32_1 = arith.constant 0 : i32
    return %c0_i32, %c0_i32_0 : i32, i32
  }
  func.func @transform_8(%arg0: i32, %arg1: i32) -> (i32, i32) {
    %c0_i32 = arith.constant 0 : i32
    %c0_i32_0 = arith.constant 0 : i32
    %c0_i32_1 = arith.constant 0 : i32
    return %c0_i32, %c0_i32_0 : i32, i32
  }
  func.func @transform_9(%arg0: i32, %arg1: i32) -> (i32, i32) {
    %c0_i32 = arith.constant 0 : i32
    %c0_i32_0 = arith.constant 0 : i32
    %c0_i32_1 = arith.constant 0 : i32
    return %c0_i32, %c0_i32_0 : i32, i32
  }
  func.func @transform_10(%arg0: i32, %arg1: i32) -> (i32, i32) {
    %c0_i32 = arith.constant 0 : i32
    %c0_i32_0 = arith.constant 0 : i32
    %c0_i32_1 = arith.constant 0 : i32
    return %c0_i32, %c0_i32_0 : i32, i32
  }
  func.func @transform_11(%arg0: i32, %arg1: i32) -> (i32, i32, i32) {
    %c0_i32 = arith.constant 0 : i32
    %c0_i32_0 = arith.constant 0 : i32
    return %arg0, %arg1, %c0_i32 : i32, i32, i32
  }
}

</mosaic_0001>

<llo_original>
// kernel: tpu_custom_call.1
$region0: #{tpu_custom_call.1}
  #allocation0 [shape = 'u32[]', space=smem, size = 0x4, offset = 0x4, fixed_abs, tag = 'smem constant byte address 0x4 - core index']
  #allocation1 [shape = 'u32[144,128]{1,0:T(1,128)}', space=vmem, size = 0x12000, scoped, tag = 'internal scratch']
  #allocation2 [shape = 'f32[15,16,128]{2,1,0:T(8,128)}', space=vmem, size = 0x1e000, scoped, tag = 'scratch operand']
  #allocation22 [shape = 's32[]', space=sflag, size = 0x4, offset = 0, fixed_abs, tag = 'sflag constant byte address 0x0 - dummy sync flag']
  %s0 = inlined_call_operand.hbm [shape: f32[4,8,8,128], index: 0, kind: input, shape index: {}]
  %s1 = inlined_call_operand.hbm [shape: f32[4,64,128], index: 1, kind: input, shape index: {}]
  %s2 = inlined_call_operand.hbm [shape: f32[7,896,128], index: 2, kind: input, shape index: {}]
  %s3 = inlined_call_operand.hbm [shape: f32[1,128], index: 3, kind: input, shape index: {}]
  %s4 = inlined_call_operand.hbm [shape: f32[1,128], index: 4, kind: input, shape index: {}]
  %s5 = inlined_call_operand.hbm [shape: f32[1,128], index: 5, kind: input, shape index: {}]
  %s6 = inlined_call_operand.hbm [shape: f32[128,512], index: 6, kind: input, shape index: {}]
  %s7 = inlined_call_operand.hbm [shape: f32[1,512], index: 7, kind: input, shape index: {}]
  %s8 = inlined_call_operand.hbm [shape: f32[512,128], index: 8, kind: input, shape index: {}]
  %s9 = inlined_call_operand.hbm [shape: f32[1,128], index: 9, kind: input, shape index: {}]
  %s10 = inlined_call_operand.hbm [shape: f32[1,128], index: 10, kind: input, shape index: {}]
  %s11 = inlined_call_operand.hbm [shape: f32[4,64,128], index: 11, kind: output, shape index: {}]
  %s12 = sld [smem:[#allocation0]]
  $region114: #{tpu_custom_call.1} parent=0
    _
  %s14 = ssub.s32 1, %s12
  %s15 = scalar_select 0, %s14, %s12
  $region1: #{tpu_custom_call.1} parent=0
    #allocation3 [shape = 'u8[65536]{0}', space=vmem, size = 0x10000, scoped, tag = 'input window, operand 1']
    #allocation4 [shape = 's32[2]{0}', space=sflag, size = 0x8, scoped, tag = 'scoped memory for tpu_custom_call.1']
    #allocation5 [shape = 's32[2]{0}', space=sflag, size = 0x8, scoped, tag = 'scoped memory for tpu_custom_call.1']
    #allocation6 [shape = 'u8[3211264]{0}', space=vmem, size = 0x310000, scoped, tag = 'input window, operand 2, single buffered']
    #allocation7 [shape = 's32[1]{0}', space=sflag, size = 0x4, scoped, tag = 'scoped memory for tpu_custom_call.1']
    #allocation8 [shape = 'u8[512]{0}', space=vmem, size = 0x400, scoped, tag = 'input window, operand 3, single buffered']
    #allocation9 [shape = 'u8[512]{0}', space=vmem, size = 0x400, scoped, tag = 'input window, operand 4, single buffered']
    #allocation10 [shape = 's32[1]{0}', space=sflag, size = 0x4, scoped, tag = 'scoped memory for tpu_custom_call.1']
    #allocation11 [shape = 'u8[512]{0}', space=vmem, size = 0x400, scoped, tag = 'input window, operand 5, single buffered']
    #allocation12 [shape = 'u8[262144]{0}', space=vmem, size = 0x40000, scoped, tag = 'input window, operand 6, single buffered']
    #allocation13 [shape = 's32[1]{0}', space=sflag, size = 0x4, scoped, tag = 'scoped memory for tpu_custom_call.1']
    #allocation14 [shape = 'u8[2048]{0}', space=vmem, size = 0x800, scoped, tag = 'input window, operand 7, single buffered']
    #allocation15 [shape = 'u8[262144]{0}', space=vmem, size = 0x40000, scoped, tag = 'input window, operand 8, single buffered']
    #allocation16 [shape = 's32[1]{0}', space=sflag, size = 0x4, scoped, tag = 'scoped memory for tpu_custom_call.1']
    #allocation17 [shape = 'u8[512]{0}', space=vmem, size = 0x400, scoped, tag = 'input window, operand 9, single buffered']
    #allocation18 [shape = 'u8[512]{0}', space=vmem, size = 0x400, scoped, tag = 'input window, operand 10, single buffered']
    #allocation19 [shape = 's32[1]{0}', space=sflag, size = 0x4, scoped, tag = 'scoped memory for tpu_custom_call.1']
    #allocation20 [shape = 'u8[65536]{0}', space=vmem, size = 0x10000, scoped, tag = 'output window, operand 0']
    %16 = vsyncpa [#allocation4], 0
    %s17 = scalar_lea.sflag [#allocation4], 1
    %18 = vsyncpa %s17, 0
    %19 = vsyncpa [#allocation7], 0
    %20 = vsyncpa [#allocation10], 0
    %21 = vsyncpa [#allocation13], 0
    %22 = vsyncpa [#allocation16], 0
    %23 = vsyncpa [#allocation19], 0
    %24 = vsyncpa [#allocation5], 0
    %s25 = scalar_lea.sflag [#allocation5], 1
    %26 = vsyncpa %s25, 0
    loop: start=0, step=1, limit=6
    $region2: #{tpu_custom_call.1} parent=1 // loop_pre_header
      _
    $region3: #{tpu_custom_call.1} parent=1 // loop_header
      %s28 = sphi 0, %s32
      %p29 = scmp.ge.s32.totalorder %s28, 6
      %s35 = sphi 0, %s47
      %s36 = sphi 0, %s43
      %s37 = sphi 0, %s35
      %s38 = sphi 0, %s36
      %s39 = sphi 0, %s37
      %s40 = sphi 0, %s38
      %s52 = sphi 0, %s54
      %s55 = sphi 0, %s52
      %s56 = sphi 0, %s55
      %s72 = sphi 0, %s56
      %s76 = sphi 0, %s76
      %s78 = sphi 0, %s76
      %s79 = sphi 0, %s78
      %s93 = sphi 0, %s79
      %s97 = sphi 0, %s97
      %s99 = sphi 0, %s97
      %s100 = sphi 0, %s99
      %s114 = sphi 0, %s100
      %s118 = sphi 0, %s118
      %s120 = sphi 0, %s118
      %s121 = sphi 0, %s120
      %s135 = sphi 0, %s121
      %s139 = sphi 0, %s139
      %s141 = sphi 0, %s139
      %s142 = sphi 0, %s141
      %s156 = sphi 0, %s142
      %s160 = sphi 0, %s160
      %s162 = sphi 0, %s160
      %s163 = sphi 0, %s162
      %s177 = sphi 0, %s163
      %s181 = sphi 0, %s181
      %s183 = sphi 0, %s181
      %s184 = sphi 0, %s183
      %s198 = sphi 0, %s184
      %s202 = sphi 0, %s202
      %s204 = sphi 0, %s202
      %s205 = sphi 0, %s204
      %s219 = sphi 0, %s205
      %s223 = sphi 0, %s223
      %s225 = sphi 0, %s223
      %s226 = sphi 0, %s225
      %s240 = sphi 0, %s226
      %s244 = sphi 0, %s244
      %s246 = sphi 0, %s244
      %s247 = sphi 0, %s246
      %s261 = sphi 0, %s247
      %s269 = sphi 0, %s271
      %s272 = sphi 0, %s269
      %s273 = sphi 0, %s272
      %s289 = sphi 0, %s273
    $region4: #{tpu_custom_call.1} parent=1 // loop_header_branch
      %31 = sbr.rel (%p29) target = $region8
    $region5: #{tpu_custom_call.1} parent=1 // loop_body
      %s33 = ssub.s32 %s28, 1
      %s34 = ssub.s32 %s28, 2
      %s41 = sadd.s32 1, %s36
      %p42 = scmp.ge.s32.totalorder %s41, 1
      %s43 = scalar_select %p42, 0, %s41
      %s44 = sadd.s32 1, %s35
      %s45 = scalar_select %p42, %s44, %s35
      %p46 = scmp.ge.s32.totalorder %s45, 4
      %s47 = scalar_select %p46, 0, %s45
      %s48 = ssub.s32 %s35, %s47
      %s49 = ssub.s32 %s36, %s43
      %s50 = sor.u32 %s48, %s49
      %p51 = scmp.eq.s32.totalorder %s50, 0
      %s53 = sadd.s32 %s52, 1
      %s54 = scalar_select %p51, %s52, %s53
      %p57 = pneg %p51
      %p58 = scmp.eq.s32.totalorder %s28, 3
      %p59 = por %p57, %p58
      %p60 = scmp.ne.s32.totalorder %s52, %s55
      %p61 = scmp.eq.s32.totalorder %s28, 0
      %p62 = por %p60, %p61
      %p63 = scmp.ne.s32.totalorder %s52, %s55
      %p64 = scmp.eq.s32.totalorder %s33, 3
      %p65 = por %p63, %p64
      %p66 = scmp.ne.s32.totalorder %s55, %s56
      %p67 = scmp.eq.s32.totalorder %s33, 0
      %p68 = por %p66, %p67
      %p69 = scmp.ne.s32.totalorder %s55, %s56
      %p70 = scmp.eq.s32.totalorder %s34, 3
      %p71 = por %p69, %p70
      %p73 = scmp.ne.s32.totalorder %s56, %s72
      %p74 = scmp.eq.s32.totalorder %s34, 0
      %p75 = por %p73, %p74
      %s77 = sadd.s32 %s76, 1
      %p80 = scmp.eq.s32.totalorder %s28, 3
      %p81 = scmp.ne.s32.totalorder %s76, %s78
      %p82 = scmp.eq.s32.totalorder %s28, 0
      %p83 = por %p81, %p82
      %p84 = scmp.ne.s32.totalorder %s76, %s78
      %p85 = scmp.eq.s32.totalorder %s33, 3
      %p86 = por %p84, %p85
      %p87 = scmp.ne.s32.totalorder %s78, %s79
      %p88 = scmp.eq.s32.totalorder %s33, 0
      %p89 = por %p87, %p88
      %p90 = scmp.ne.s32.totalorder %s78, %s79
      %p91 = scmp.eq.s32.totalorder %s34, 3
      %p92 = por %p90, %p91
      %p94 = scmp.ne.s32.totalorder %s79, %s93
      %p95 = scmp.eq.s32.totalorder %s34, 0
      %p96 = por %p94, %p95
      %s98 = sadd.s32 %s97, 1
      %p101 = scmp.eq.s32.totalorder %s28, 3
      %p102 = scmp.ne.s32.totalorder %s97, %s99
      %p103 = scmp.eq.s32.totalorder %s28, 0
      %p104 = por %p102, %p103
      %p105 = scmp.ne.s32.totalorder %s97, %s99
      %p106 = scmp.eq.s32.totalorder %s33, 3
      %p107 = por %p105, %p106
      %p108 = scmp.ne.s32.totalorder %s99, %s100
      %p109 = scmp.eq.s32.totalorder %s33, 0
      %p110 = por %p108, %p109
      %p111 = scmp.ne.s32.totalorder %s99, %s100
      %p112 = scmp.eq.s32.totalorder %s34, 3
      %p113 = por %p111, %p112
      %p115 = scmp.ne.s32.totalorder %s100, %s114
      %p116 = scmp.eq.s32.totalorder %s34, 0
      %p117 = por %p115, %p116
      %s119 = sadd.s32 %s118, 1
      %p122 = scmp.eq.s32.totalorder %s28, 3
      %p123 = scmp.ne.s32.totalorder %s118, %s120
      %p124 = scmp.eq.s32.totalorder %s28, 0
      %p125 = por %p123, %p124
      %p126 = scmp.ne.s32.totalorder %s118, %s120
      %p127 = scmp.eq.s32.totalorder %s33, 3
      %p128 = por %p126, %p127
      %p129 = scmp.ne.s32.totalorder %s120, %s121
      %p130 = scmp.eq.s32.totalorder %s33, 0
      %p131 = por %p129, %p130
      %p132 = scmp.ne.s32.totalorder %s120, %s121
      %p133 = scmp.eq.s32.totalorder %s34, 3
      %p134 = por %p132, %p133
      %p136 = scmp.ne.s32.totalorder %s121, %s135
      %p137 = scmp.eq.s32.totalorder %s34, 0
      %p138 = por %p136, %p137
      %s140 = sadd.s32 %s139, 1
      %p143 = scmp.eq.s32.totalorder %s28, 3
      %p144 = scmp.ne.s32.totalorder %s139, %s141
      %p145 = scmp.eq.s32.totalorder %s28, 0
      %p146 = por %p144, %p145
      %p147 = scmp.ne.s32.totalorder %s139, %s141
      %p148 = scmp.eq.s32.totalorder %s33, 3
      %p149 = por %p147, %p148
      %p150 = scmp.ne.s32.totalorder %s141, %s142
      %p151 = scmp.eq.s32.totalorder %s33, 0
      %p152 = por %p150, %p151
      %p153 = scmp.ne.s32.totalorder %s141, %s142
      %p154 = scmp.eq.s32.totalorder %s34, 3
      %p155 = por %p153, %p154
      %p157 = scmp.ne.s32.totalorder %s142, %s156
      %p158 = scmp.eq.s32.totalorder %s34, 0
      %p159 = por %p157, %p158
      %s161 = sadd.s32 %s160, 1
      %p164 = scmp.eq.s32.totalorder %s28, 3
      %p165 = scmp.ne.s32.totalorder %s160, %s162
      %p166 = scmp.eq.s32.totalorder %s28, 0
      %p167 = por %p165, %p166
      %p168 = scmp.ne.s32.totalorder %s160, %s162
      %p169 = scmp.eq.s32.totalorder %s33, 3
      %p170 = por %p168, %p169
      %p171 = scmp.ne.s32.totalorder %s162, %s163
      %p172 = scmp.eq.s32.totalorder %s33, 0
      %p173 = por %p171, %p172
      %p174 = scmp.ne.s32.totalorder %s162, %s163
      %p175 = scmp.eq.s32.totalorder %s34, 3
      %p176 = por %p174, %p175
      %p178 = scmp.ne.s32.totalorder %s163, %s177
      %p179 = scmp.eq.s32.totalorder %s34, 0
      %p180 = por %p178, %p179
      %s182 = sadd.s32 %s181, 1
      %p185 = scmp.eq.s32.totalorder %s28, 3
      %p186 = scmp.ne.s32.totalorder %s181, %s183
      %p187 = scmp.eq.s32.totalorder %s28, 0
      %p188 = por %p186, %p187
      %p189 = scmp.ne.s32.totalorder %s181, %s183
      %p190 = scmp.eq.s32.totalorder %s33, 3
      %p191 = por %p189, %p190
      %p192 = scmp.ne.s32.totalorder %s183, %s184
      %p193 = scmp.eq.s32.totalorder %s33, 0
      %p194 = por %p192, %p193
      %p195 = scmp.ne.s32.totalorder %s183, %s184
      %p196 = scmp.eq.s32.totalorder %s34, 3
      %p197 = por %p195, %p196
      %p199 = scmp.ne.s32.totalorder %s184, %s198
      %p200 = scmp.eq.s32.totalorder %s34, 0
      %p201 = por %p199, %p200
      %s203 = sadd.s32 %s202, 1
      %p206 = scmp.eq.s32.totalorder %s28, 3
      %p207 = scmp.ne.s32.totalorder %s202, %s204
      %p208 = scmp.eq.s32.totalorder %s28, 0
      %p209 = por %p207, %p208
      %p210 = scmp.ne.s32.totalorder %s202, %s204
      %p211 = scmp.eq.s32.totalorder %s33, 3
      %p212 = por %p210, %p211
      %p213 = scmp.ne.s32.totalorder %s204, %s205
      %p214 = scmp.eq.s32.totalorder %s33, 0
      %p215 = por %p213, %p214
      %p216 = scmp.ne.s32.totalorder %s204, %s205
      %p217 = scmp.eq.s32.totalorder %s34, 3
      %p218 = por %p216, %p217
      %p220 = scmp.ne.s32.totalorder %s205, %s219
      %p221 = scmp.eq.s32.totalorder %s34, 0
      %p222 = por %p220, %p221
      %s224 = sadd.s32 %s223, 1
      %p227 = scmp.eq.s32.totalorder %s28, 3
      %p228 = scmp.ne.s32.totalorder %s223, %s225
      %p229 = scmp.eq.s32.totalorder %s28, 0
      %p230 = por %p228, %p229
      %p231 = scmp.ne.s32.totalorder %s223, %s225
      %p232 = scmp.eq.s32.totalorder %s33, 3
      %p233 = por %p231, %p232
      %p234 = scmp.ne.s32.totalorder %s225, %s226
      %p235 = scmp.eq.s32.totalorder %s33, 0
      %p236 = por %p234, %p235
      %p237 = scmp.ne.s32.totalorder %s225, %s226
      %p238 = scmp.eq.s32.totalorder %s34, 3
      %p239 = por %p237, %p238
      %p241 = scmp.ne.s32.totalorder %s226, %s240
      %p242 = scmp.eq.s32.totalorder %s34, 0
      %p243 = por %p241, %p242
      %s245 = sadd.s32 %s244, 1
      %p248 = scmp.eq.s32.totalorder %s28, 3
      %p249 = scmp.ne.s32.totalorder %s244, %s246
      %p250 = scmp.eq.s32.totalorder %s28, 0
      %p251 = por %p249, %p250
      %p252 = scmp.ne.s32.totalorder %s244, %s246
      %p253 = scmp.eq.s32.totalorder %s33, 3
      %p254 = por %p252, %p253
      %p255 = scmp.ne.s32.totalorder %s246, %s247
      %p256 = scmp.eq.s32.totalorder %s33, 0
      %p257 = por %p255, %p256
      %p258 = scmp.ne.s32.totalorder %s246, %s247
      %p259 = scmp.eq.s32.totalorder %s34, 3
      %p260 = por %p258, %p259
      %p262 = scmp.ne.s32.totalorder %s247, %s261
      %p263 = scmp.eq.s32.totalorder %s34, 0
      %p264 = por %p262, %p263
      %s265 = ssub.s32 %s35, %s47
      %s266 = ssub.s32 %s36, %s43
      %s267 = sor.u32 %s265, %s266
      %p268 = scmp.eq.s32.totalorder %s267, 0
      %s270 = sadd.s32 %s269, 1
      %s271 = scalar_select %p268, %s269, %s270
      %p274 = pneg %p268
      %p275 = scmp.eq.s32.totalorder %s28, 3
      %p276 = por %p274, %p275
      %p277 = scmp.ne.s32.totalorder %s269, %s272
      %p278 = scmp.eq.s32.totalorder %s28, 0
      %p279 = por %p277, %p278
      %p280 = scmp.ne.s32.totalorder %s269, %s272
      %p281 = scmp.eq.s32.totalorder %s33, 3
      %p282 = por %p280, %p281
      %p283 = scmp.ne.s32.totalorder %s272, %s273
      %p284 = scmp.eq.s32.totalorder %s33, 0
      %p285 = por %p283, %p284
      %p286 = scmp.ne.s32.totalorder %s272, %s273
      %p287 = scmp.eq.s32.totalorder %s34, 3
      %p288 = por %p286, %p287
      %p290 = scmp.ne.s32.totalorder %s273, %s289
      %p291 = scmp.eq.s32.totalorder %s34, 0
      %p292 = por %p290, %p291
      %p293 = scmp.le.s32.totalorder 1, %s28
      %p294 = scmp.lt.s32.totalorder %s28, 5
      %p295 = pnand %p293, %p294
      %p296 = pneg %p295
      // Predicated region
      $region9: #{tpu_custom_call.1} parent=5 // pred_check
        _
      $region10: #{tpu_custom_call.1} parent=5 // pred_check_branch
        %298 = sbr.rel (%p295) target = $region12
      $region11: #{tpu_custom_call.1} parent=5 // pred_region
        %s299 = ssub.s32 %s28, 1
        // Predicated region
        $region13: #{tpu_custom_call.1} parent=11 // pred_check
          %p300 = pneg %p89
        $region14: #{tpu_custom_call.1} parent=11 // pred_check_branch
          %302 = sbr.rel (%p300) target = $region16
        $region15: #{tpu_custom_call.1} parent=11 // pred_region
          %s304 = ssub.s32 100352, 100352
          %305 = vsyncadd [#allocation7], %s304
          %s306 = sshll.u32 [#allocation6], 4
          %s307 = int_to_ptr.vmem [resolvable:$true] %s306
          %312 = dma.hbm_to_vmem [thread:$0]  %s2, 100352, %s307, [#allocation7], 128, 128, 8
        $region16: #{tpu_custom_call.1} parent=11 // pred_fallthru
          _
        // Predicated region
        $region17: #{tpu_custom_call.1} parent=11 // pred_check
          %p313 = pneg %p110
        $region18: #{tpu_custom_call.1} parent=11 // pred_check_branch
          %315 = sbr.rel (%p313) target = $region20
        $region19: #{tpu_custom_call.1} parent=11 // pred_region
          %s317 = ssub.s32 16, 16
          %318 = vsyncadd [#allocation7], %s317
          %s320 = sshll.u32 [#allocation8], 4
          %s321 = int_to_ptr.vmem [resolvable:$true] %s320
          %323 = dma.hbm_to_vmem [thread:$0]  %s3, 16, %s321, [#allocation7]
        $region20: #{tpu_custom_call.1} parent=11 // pred_fallthru
          _
        // Predicated region
        $region21: #{tpu_custom_call.1} parent=11 // pred_check
          %p324 = pneg %p131
        $region22: #{tpu_custom_call.1} parent=11 // pred_check_branch
          %326 = sbr.rel (%p324) target = $region24
        $region23: #{tpu_custom_call.1} parent=11 // pred_region
          %s328 = ssub.s32 16, 16
          %329 = vsyncadd [#allocation10], %s328
          %s331 = sshll.u32 [#allocation9], 4
          %s332 = int_to_ptr.vmem [resolvable:$true] %s331
          %334 = dma.hbm_to_vmem [thread:$0]  %s4, 16, %s332, [#allocation10]
        $region24: #{tpu_custom_call.1} parent=11 // pred_fallthru
          _
        // Predicated region
        $region25: #{tpu_custom_call.1} parent=11 // pred_check
          %p335 = pneg %p152
        $region26: #{tpu_custom_call.1} parent=11 // pred_check_branch
          %337 = sbr.rel (%p335) target = $region28
        $region27: #{tpu_custom_call.1} parent=11 // pred_region
          %s339 = ssub.s32 16, 16
          %340 = vsyncadd [#allocation10], %s339
          %s342 = sshll.u32 [#allocation11], 4
          %s343 = int_to_ptr.vmem [resolvable:$true] %s342
          %345 = dma.hbm_to_vmem [thread:$0]  %s5, 16, %s343, [#allocation10]
        $region28: #{tpu_custom_call.1} parent=11 // pred_fallthru
          _
        // Predicated region
        $region29: #{tpu_custom_call.1} parent=11 // pred_check
          %p346 = pneg %p173
        $region30: #{tpu_custom_call.1} parent=11 // pred_check_branch
          %348 = sbr.rel (%p346) target = $region32
        $region31: #{tpu_custom_call.1} parent=11 // pred_region
          %s350 = ssub.s32 8192, 8192
          %351 = vsyncadd [#allocation13], %s350
          %s352 = sshll.u32 [#allocation12], 4
          %s353 = int_to_ptr.vmem [resolvable:$true] %s352
          %358 = dma.hbm_to_vmem [thread:$0]  %s6, 8192, %s353, [#allocation13], 512, 512, 32
        $region32: #{tpu_custom_call.1} parent=11 // pred_fallthru
          _
        // Predicated region
        $region33: #{tpu_custom_call.1} parent=11 // pred_check
          %p359 = pneg %p194
        $region34: #{tpu_custom_call.1} parent=11 // pred_check_branch
          %361 = sbr.rel (%p359) target = $region36
        $region35: #{tpu_custom_call.1} parent=11 // pred_region
          %s363 = ssub.s32 64, 64
          %364 = vsyncadd [#allocation13], %s363
          %s366 = sshll.u32 [#allocation14], 4
          %s367 = int_to_ptr.vmem [resolvable:$true] %s366
          %369 = dma.hbm_to_vmem [thread:$0]  %s7, 64, %s367, [#allocation13]
        $region36: #{tpu_custom_call.1} parent=11 // pred_fallthru
          _
        // Predicated region
        $region37: #{tpu_custom_call.1} parent=11 // pred_check
          %p370 = pneg %p215
        $region38: #{tpu_custom_call.1} parent=11 // pred_check_branch
          %372 = sbr.rel (%p370) target = $region40
        $region39: #{tpu_custom_call.1} parent=11 // pred_region
          %s374 = ssub.s32 8192, 8192
          %375 = vsyncadd [#allocation16], %s374
          %s376 = sshll.u32 [#allocation15], 4
          %s377 = int_to_ptr.vmem [resolvable:$true] %s376
          %382 = dma.hbm_to_vmem [thread:$0]  %s8, 8192, %s377, [#allocation16], 128, 128, 8
        $region40: #{tpu_custom_call.1} parent=11 // pred_fallthru
          _
        // Predicated region
        $region41: #{tpu_custom_call.1} parent=11 // pred_check
          %p383 = pneg %p236
        $region42: #{tpu_custom_call.1} parent=11 // pred_check_branch
          %385 = sbr.rel (%p383) target = $region44
        $region43: #{tpu_custom_call.1} parent=11 // pred_region
          %s387 = ssub.s32 16, 16
          %388 = vsyncadd [#allocation16], %s387
          %s390 = sshll.u32 [#allocation17], 4
          %s391 = int_to_ptr.vmem [resolvable:$true] %s390
          %393 = dma.hbm_to_vmem [thread:$0]  %s9, 16, %s391, [#allocation16]
        $region44: #{tpu_custom_call.1} parent=11 // pred_fallthru
          _
        // Predicated region
        $region45: #{tpu_custom_call.1} parent=11 // pred_check
          %p394 = pneg %p257
        $region46: #{tpu_custom_call.1} parent=11 // pred_check_branch
          %396 = sbr.rel (%p394) target = $region48
        $region47: #{tpu_custom_call.1} parent=11 // pred_region
          %s398 = ssub.s32 16, 16
          %399 = vsyncadd [#allocation19], %s398
          %s401 = sshll.u32 [#allocation18], 4
          %s402 = int_to_ptr.vmem [resolvable:$true] %s401
          %404 = dma.hbm_to_vmem [thread:$0]  %s10, 16, %s402, [#allocation19]
        $region48: #{tpu_custom_call.1} parent=11 // pred_fallthru
          _
      $region12: #{tpu_custom_call.1} parent=5 // pred_fallthru
        _
      %p405 = scmp.lt.s32.totalorder %s28, 4
      // Predicated region
      $region49: #{tpu_custom_call.1} parent=5 // pred_check
        %p406 = pneg %p405
      $region50: #{tpu_custom_call.1} parent=5 // pred_check_branch
        %408 = sbr.rel (%p406) target = $region52
      $region51: #{tpu_custom_call.1} parent=5 // pred_region
        // Predicated region
        $region53: #{tpu_custom_call.1} parent=51 // pred_check
          %p409 = pneg %p62
        $region54: #{tpu_custom_call.1} parent=51 // pred_check_branch
          %411 = sbr.rel (%p409) target = $region56
        $region55: #{tpu_custom_call.1} parent=51 // pred_region
          %s412 = sand.u32 %s52, 1
          %s413 = scalar_lea.sflag [#allocation4], %s412
          %s414 = sand.u32 %s52, 1
          %s415 = smul.addr %s414, 64
          %s416 = scalar_lea.vmem [#allocation3], %s415
          %s417 = smul.u32 8, %s36
          %s419 = ssub.s32 1024, 1024
          %420 = vsyncadd %s413, %s419
          %s421 = smul.addr %s35, 8
          %s422 = sadd.s32 %s417, %s421
          %s423 = smul.addr %s422, 128
          %s424 = scalar_lea.hbm %s1, %s423
          %s425 = sshll.u32 %s416, 4
          %s426 = int_to_ptr.vmem [resolvable:$true] %s425
          %431 = dma.hbm_to_vmem [thread:$0]  %s424, 1024, %s426, %s413, 128, 128, 8
        $region56: #{tpu_custom_call.1} parent=51 // pred_fallthru
          _
      $region52: #{tpu_custom_call.1} parent=5 // pred_fallthru
        _
      %p432 = scmp.le.s32.totalorder 1, %s28
      %p433 = scmp.lt.s32.totalorder %s28, 5
      %p434 = pnand %p432, %p433
      %p435 = pneg %p434
      // Predicated region
      $region57: #{tpu_custom_call.1} parent=5 // pred_check
        _
      $region58: #{tpu_custom_call.1} parent=5 // pred_check_branch
        %437 = sbr.rel (%p434) target = $region60
      $region59: #{tpu_custom_call.1} parent=5 // pred_region
        %s438 = ssub.s32 %s28, 1
        %s439 = sand.u32 %s55, 1
        %s440 = scalar_lea.sflag [#allocation4], %s439
        %s441 = sand.u32 %s55, 1
        %s442 = smul.addr %s441, 64
        %s443 = scalar_lea.vmem [#allocation3], %s442
        // Predicated region
        $region61: #{tpu_custom_call.1} parent=59 // pred_check
          %p444 = pneg %p68
        $region62: #{tpu_custom_call.1} parent=59 // pred_check_branch
          %446 = sbr.rel (%p444) target = $region64
        $region63: #{tpu_custom_call.1} parent=59 // pred_region
          %447 = dma.done %s440, 1024
        $region64: #{tpu_custom_call.1} parent=59 // pred_fallthru
          _
        // Predicated region
        $region65: #{tpu_custom_call.1} parent=59 // pred_check
          %p448 = pneg %p89
        $region66: #{tpu_custom_call.1} parent=59 // pred_check_branch
          %450 = sbr.rel (%p448) target = $region68
        $region67: #{tpu_custom_call.1} parent=59 // pred_region
          %451 = dma.done [#allocation7], 100352
        $region68: #{tpu_custom_call.1} parent=59 // pred_fallthru
          _
        // Predicated region
        $region69: #{tpu_custom_call.1} parent=59 // pred_check
          %p452 = pneg %p110
        $region70: #{tpu_custom_call.1} parent=59 // pred_check_branch
          %454 = sbr.rel (%p452) target = $region72
        $region71: #{tpu_custom_call.1} parent=59 // pred_region
          %455 = dma.done [#allocation7], 16
        $region72: #{tpu_custom_call.1} parent=59 // pred_fallthru
          _
        // Predicated region
        $region73: #{tpu_custom_call.1} parent=59 // pred_check
          %p456 = pneg %p131
        $region74: #{tpu_custom_call.1} parent=59 // pred_check_branch
          %458 = sbr.rel (%p456) target = $region76
        $region75: #{tpu_custom_call.1} parent=59 // pred_region
          %459 = dma.done [#allocation10], 16
        $region76: #{tpu_custom_call.1} parent=59 // pred_fallthru
          _
        // Predicated region
        $region77: #{tpu_custom_call.1} parent=59 // pred_check
          %p460 = pneg %p152
        $region78: #{tpu_custom_call.1} parent=59 // pred_check_branch
          %462 = sbr.rel (%p460) target = $region80
        $region79: #{tpu_custom_call.1} parent=59 // pred_region
          %463 = dma.done [#allocation10], 16
        $region80: #{tpu_custom_call.1} parent=59 // pred_fallthru
          _
        // Predicated region
        $region81: #{tpu_custom_call.1} parent=59 // pred_check
          %p464 = pneg %p173
        $region82: #{tpu_custom_call.1} parent=59 // pred_check_branch
          %466 = sbr.rel (%p464) target = $region84
        $region83: #{tpu_custom_call.1} parent=59 // pred_region
          %467 = dma.done [#allocation13], 8192
        $region84: #{tpu_custom_call.1} parent=59 // pred_fallthru
          _
        // Predicated region
        $region85: #{tpu_custom_call.1} parent=59 // pred_check
          %p468 = pneg %p194
        $region86: #{tpu_custom_call.1} parent=59 // pred_check_branch
          %470 = sbr.rel (%p468) target = $region88
        $region87: #{tpu_custom_call.1} parent=59 // pred_region
          %471 = dma.done [#allocation13], 64
        $region88: #{tpu_custom_call.1} parent=59 // pred_fallthru
          _
        // Predicated region
        $region89: #{tpu_custom_call.1} parent=59 // pred_check
          %p472 = pneg %p215
        $region90: #{tpu_custom_call.1} parent=59 // pred_check_branch
          %474 = sbr.rel (%p472) target = $region92
        $region91: #{tpu_custom_call.1} parent=59 // pred_region
          %475 = dma.done [#allocation16], 8192
        $region92: #{tpu_custom_call.1} parent=59 // pred_fallthru
          _
        // Predicated region
        $region93: #{tpu_custom_call.1} parent=59 // pred_check
          %p476 = pneg %p236
        $region94: #{tpu_custom_call.1} parent=59 // pred_check_branch
          %478 = sbr.rel (%p476) target = $region96
        $region95: #{tpu_custom_call.1} parent=59 // pred_region
          %479 = dma.done [#allocation16], 16
        $region96: #{tpu_custom_call.1} parent=59 // pred_fallthru
          _
        // Predicated region
        $region97: #{tpu_custom_call.1} parent=59 // pred_check
          %p480 = pneg %p257
        $region98: #{tpu_custom_call.1} parent=59 // pred_check_branch
          %482 = sbr.rel (%p480) target = $region100
        $region99: #{tpu_custom_call.1} parent=59 // pred_region
          %483 = dma.done [#allocation19], 16
        $region100: #{tpu_custom_call.1} parent=59 // pred_fallthru
          _
        %s484 = sand.u32 %s55, 1
        %s485 = scalar_lea.sflag [#allocation4], %s484
        %s486 = sand.u32 %s55, 1
        %s487 = smul.addr %s486, 64
        %s488 = scalar_lea.vmem [#allocation3], %s487
        %p489 = pneg %p68
        %p490 = pneg %p65
        %p491 = pneg %p89
        %p492 = pneg %p86
        %p493 = pneg %p110
        %p494 = pneg %p107
        %p495 = pneg %p131
        %p496 = pneg %p128
        %p497 = pneg %p152
        %p498 = pneg %p149
        %p499 = pneg %p173
        %p500 = pneg %p170
        %p501 = pneg %p194
        %p502 = pneg %p191
        %p503 = pneg %p215
        %p504 = pneg %p212
        %p505 = pneg %p236
        %p506 = pneg %p233
        %p507 = pneg %p257
        %p508 = pneg %p254
        %p509 = pneg %p285
        %p510 = pneg %p282
        %s511 = sand.u32 %s272, 1
        %s512 = scalar_lea.sflag [#allocation5], %s511
        %s513 = sand.u32 %s272, 1
        %s514 = smul.addr %s513, 64
        %s515 = scalar_lea.vmem [#allocation20], %s514
        %s516 = smul.u32 8, %s38
        %s517 = smul.u32 8, %s38
        %518 = vst [vmem:[#allocation2] sm:$0x7] 0.0
        %519 = vst [vmem:[#allocation2 + $0x10] sm:$0x7] 0.0
        %520 = vst [vmem:[#allocation2 + $0x20] sm:$0x7] 0.0
        %521 = vst [vmem:[#allocation2 + $0x30] sm:$0x7] 0.0
        %522 = vst [vmem:[#allocation2 + $0x40] sm:$0x7] 0.0
        %523 = vst [vmem:[#allocation2 + $0x50] sm:$0x7] 0.0
        %524 = vst [vmem:[#allocation2 + $0x60] sm:$0x7] 0.0
        %525 = vst [vmem:[#allocation2 + $0x70] sm:$0x7] 0.0
        %526 = vst [vmem:[#allocation2 + $0x80] sm:$0x7] 0.0
        %527 = vst [vmem:[#allocation2 + $0x90] sm:$0x7] 0.0
        %528 = vst [vmem:[#allocation2 + $0xa0] sm:$0x7] 0.0
        %529 = vst [vmem:[#allocation2 + $0xb0] sm:$0x7] 0.0
        %530 = vst [vmem:[#allocation2 + $0xc0] sm:$0x7] 0.0
        %531 = vst [vmem:[#allocation2 + $0xd0] sm:$0x7] 0.0
        %532 = vst [vmem:[#allocation2 + $0xe0] sm:$0x7] 0.0
        %533 = vst [vmem:[#allocation2 + $0xb] sm:$0x1f] 0.0
        %534 = vst [vmem:[#allocation2 + $0x1b] sm:$0x1f] 0.0
        %535 = vst [vmem:[#allocation2 + $0x2b] sm:$0x1f] 0.0
        %536 = vst [vmem:[#allocation2 + $0x3b] sm:$0x1f] 0.0
        %537 = vst [vmem:[#allocation2 + $0x4b] sm:$0x1f] 0.0
        %538 = vst [vmem:[#allocation2 + $0x5b] sm:$0x1f] 0.0
        %539 = vst [vmem:[#allocation2 + $0x6b] sm:$0x1f] 0.0
        %540 = vst [vmem:[#allocation2 + $0x7b] sm:$0x1f] 0.0
        %541 = vst [vmem:[#allocation2 + $0x8b] sm:$0x1f] 0.0
        %542 = vst [vmem:[#allocation2 + $0x9b] sm:$0x1f] 0.0
        %543 = vst [vmem:[#allocation2 + $0xab] sm:$0x1f] 0.0
        %544 = vst [vmem:[#allocation2 + $0xbb] sm:$0x1f] 0.0
        %545 = vst [vmem:[#allocation2 + $0xcb] sm:$0x1f] 0.0
        %546 = vst [vmem:[#allocation2 + $0xdb] sm:$0x1f] 0.0
        %547 = vst [vmem:[#allocation2 + $0xeb] sm:$0x1f] 0.0
        %s548 = scalar_lea.vmem [#allocation2], 224
        %549 = vst [vmem:[%s548] sm:$0xff] 0.0
        %550 = vst [vmem:[%s548 + $0x8] sm:$0xff] 0.0
        %551 = vst [vmem:[#allocation2] sm:$0xff] 0.0
        %552 = vst [vmem:[#allocation2 + $0x8] sm:$0xff] 0.0
        %553 = vst [vmem:[#allocation2 + $0x10] sm:$0xff] 0.0
        %554 = vst [vmem:[#allocation2 + $0x18] sm:$0xff] 0.0
        %555 = vst [vmem:[#allocation2 + $0x20] sm:$0xff] 0.0
        %556 = vst [vmem:[#allocation2 + $0x28] sm:$0xff] 0.0
        %s557 = scalar_lea.vmem [#allocation2], 176
        %558 = vst [vmem:[%s557] sm:$0xff] 0.0
        %559 = vst [vmem:[%s557 + $0x8] sm:$0xff] 0.0
        %560 = vst [vmem:[%s557 + $0x10] sm:$0xff] 0.0
        %561 = vst [vmem:[%s557 + $0x18] sm:$0xff] 0.0
        %562 = vst [vmem:[%s557 + $0x20] sm:$0xff] 0.0
        %563 = vst [vmem:[%s557 + $0x28] sm:$0xff] 0.0
        $region101: #{tpu_custom_call.1} parent=59
          #allocation21 [shape = 's32[1]{0}', space=sflag, size = 0x4, scoped, tag = 'scoped memory for tpu_custom_call.1']
          %s564 = smul.u32 %s37, 64
          %s565 = smul.addr %s564, 16
          %s566 = scalar_lea.hbm %s0, %s565
          %s567 = scalar_lea.vmem [#allocation2], 51
          %s569 = sshll.u32 %s567, 4
          %s570 = int_to_ptr.vmem [resolvable:$true] %s569
          %572 = dma.hbm_to_vmem [thread:$0]  %s566, 1024, %s570, [#allocation21], 128, 256, 8
          %s573 = smul.u32 8, 8
          %s574 = smul.u32 %s573, 1
          %s575 = sshll.u32 %s574, 4
          %576 = dma.done [#allocation21], %s575
        %v577 = vld [vmem:[#allocation2] sm:$0xff]
        %v578 = vld [vmem:[#allocation2 + $0x8] sm:$0xff]
        %v579 = vld [vmem:[#allocation2 + $0x10] sm:$0xff]
        %v580 = vld [vmem:[#allocation2 + $0x18] sm:$0xff]
        %v581 = vld [vmem:[#allocation2 + $0x20] sm:$0xff]
        %v582 = vld [vmem:[#allocation2 + $0x28] sm:$0xff]
        %v583 = vld [vmem:[#allocation2 + $0x30] sm:$0xff]
        %v584 = vld [vmem:[#allocation2 + $0x38] sm:$0xff]
        %v585 = vld [vmem:[#allocation2 + $0x40] sm:$0xff]
        %v586 = vld [vmem:[#allocation2 + $0x48] sm:$0xff]
        %v587 = vld [vmem:[#allocation2 + $0x50] sm:$0xff]
        %v588 = vld [vmem:[#allocation2 + $0x58] sm:$0xff]
        %v589 = vld [vmem:[#allocation2 + $0x60] sm:$0xff]
        %v590 = vld [vmem:[#allocation2 + $0x68] sm:$0xff]
        %v591 = vld [vmem:[#allocation2 + $0x70] sm:$0xff]
        %v592 = vld [vmem:[#allocation2 + $0x78] sm:$0xff]
        %v593 = vld [vmem:[#allocation2 + $0x80] sm:$0xff]
        %vm611 = vcmask 1046528
        %v612 = vrot.slane %v577, 1
        %v613 = vrot.slane %v578, 1
        %v614 = vsel %vm611, %v612, %v613
        %v615 = vrot.slane %v579, 1
        %v616 = vsel %vm611, %v613, %v615
        %v617 = vrot.slane %v580, 1
        %v618 = vsel %vm611, %v615, %v617
        %v619 = vrot.slane %v581, 1
        %v620 = vsel %vm611, %v617, %v619
        %v621 = vrot.slane %v582, 1
        %v622 = vsel %vm611, %v619, %v621
        %v623 = vrot.slane %v583, 1
        %v624 = vsel %vm611, %v621, %v623
        %v625 = vrot.slane %v584, 1
        %v626 = vsel %vm611, %v623, %v625
        %v627 = vrot.slane %v585, 1
        %v628 = vsel %vm611, %v625, %v627
        %v629 = vrot.slane %v586, 1
        %v630 = vsel %vm611, %v627, %v629
        %v631 = vrot.slane %v587, 1
        %v632 = vsel %vm611, %v629, %v631
        %v633 = vrot.slane %v588, 1
        %v634 = vsel %vm611, %v631, %v633
        %v635 = vrot.slane %v589, 1
        %v636 = vsel %vm611, %v633, %v635
        %v637 = vrot.slane %v590, 1
        %v638 = vsel %vm611, %v635, %v637
        %v639 = vrot.slane %v591, 1
        %v640 = vsel %vm611, %v637, %v639
        %v641 = vrot.slane %v592, 1
        %v642 = vsel %vm611, %v639, %v641
        %v643 = vrot.slane %v593, 1
        %v644 = vsel %vm611, %v641, %v643
        %vm661 = vcmask 1045504
        %v662 = vrot.slane %v577, 2
        %v663 = vrot.slane %v578, 2
        %v664 = vsel %vm661, %v662, %v663
        %v665 = vrot.slane %v579, 2
        %v666 = vsel %vm661, %v663, %v665
        %v667 = vrot.slane %v580, 2
        %v668 = vsel %vm661, %v665, %v667
        %v669 = vrot.slane %v581, 2
        %v670 = vsel %vm661, %v667, %v669
        %v671 = vrot.slane %v582, 2
        %v672 = vsel %vm661, %v669, %v671
        %v673 = vrot.slane %v583, 2
        %v674 = vsel %vm661, %v671, %v673
        %v675 = vrot.slane %v584, 2
        %v676 = vsel %vm661, %v673, %v675
        %v677 = vrot.slane %v585, 2
        %v678 = vsel %vm661, %v675, %v677
        %v679 = vrot.slane %v586, 2
        %v680 = vsel %vm661, %v677, %v679
        %v681 = vrot.slane %v587, 2
        %v682 = vsel %vm661, %v679, %v681
        %v683 = vrot.slane %v588, 2
        %v684 = vsel %vm661, %v681, %v683
        %v685 = vrot.slane %v589, 2
        %v686 = vsel %vm661, %v683, %v685
        %v687 = vrot.slane %v590, 2
        %v688 = vsel %vm661, %v685, %v687
        %v689 = vrot.slane %v591, 2
        %v690 = vsel %vm661, %v687, %v689
        %v691 = vrot.slane %v592, 2
        %v692 = vsel %vm661, %v689, %v691
        %v693 = vrot.slane %v593, 2
        %v694 = vsel %vm661, %v691, %v693
        %vm711 = vcmask 1044480
        %v712 = vrot.slane %v577, 3
        %v713 = vrot.slane %v578, 3
        %v714 = vsel %vm711, %v712, %v713
        %v715 = vrot.slane %v579, 3
        %v716 = vsel %vm711, %v713, %v715
        %v717 = vrot.slane %v580, 3
        %v718 = vsel %vm711, %v715, %v717
        %v719 = vrot.slane %v581, 3
        %v720 = vsel %vm711, %v717, %v719
        %v721 = vrot.slane %v582, 3
        %v722 = vsel %vm711, %v719, %v721
        %v723 = vrot.slane %v583, 3
        %v724 = vsel %vm711, %v721, %v723
        %v725 = vrot.slane %v584, 3
        %v726 = vsel %vm711, %v723, %v725
        %v727 = vrot.slane %v585, 3
        %v728 = vsel %vm711, %v725, %v727
        %v729 = vrot.slane %v586, 3
        %v730 = vsel %vm711, %v727, %v729
        %v731 = vrot.slane %v587, 3
        %v732 = vsel %vm711, %v729, %v731
        %v733 = vrot.slane %v588, 3
        %v734 = vsel %vm711, %v731, %v733
        %v735 = vrot.slane %v589, 3
        %v736 = vsel %vm711, %v733, %v735
        %v737 = vrot.slane %v590, 3
        %v738 = vsel %vm711, %v735, %v737
        %v739 = vrot.slane %v591, 3
        %v740 = vsel %vm711, %v737, %v739
        %v741 = vrot.slane %v592, 3
        %v742 = vsel %vm711, %v739, %v741
        %v743 = vrot.slane %v593, 3
        %v744 = vsel %vm711, %v741, %v743
        %vm761 = vcmask 1043456
        %v762 = vrot.slane %v577, 4
        %v763 = vrot.slane %v578, 4
        %v764 = vsel %vm761, %v762, %v763
        %v765 = vrot.slane %v579, 4
        %v766 = vsel %vm761, %v763, %v765
        %v767 = vrot.slane %v580, 4
        %v768 = vsel %vm761, %v765, %v767
        %v769 = vrot.slane %v581, 4
        %v770 = vsel %vm761, %v767, %v769
        %v771 = vrot.slane %v582, 4
        %v772 = vsel %vm761, %v769, %v771
        %v773 = vrot.slane %v583, 4
        %v774 = vsel %vm761, %v771, %v773
        %v775 = vrot.slane %v584, 4
        %v776 = vsel %vm761, %v773, %v775
        %v777 = vrot.slane %v585, 4
        %v778 = vsel %vm761, %v775, %v777
        %v779 = vrot.slane %v586, 4
        %v780 = vsel %vm761, %v777, %v779
        %v781 = vrot.slane %v587, 4
        %v782 = vsel %vm761, %v779, %v781
        %v783 = vrot.slane %v588, 4
        %v784 = vsel %vm761, %v781, %v783
        %v785 = vrot.slane %v589, 4
        %v786 = vsel %vm761, %v783, %v785
        %v787 = vrot.slane %v590, 4
        %v788 = vsel %vm761, %v785, %v787
        %v789 = vrot.slane %v591, 4
        %v790 = vsel %vm761, %v787, %v789
        %v791 = vrot.slane %v592, 4
        %v792 = vsel %vm761, %v789, %v791
        %v793 = vrot.slane %v593, 4
        %v794 = vsel %vm761, %v791, %v793
        %vm811 = vcmask 1042432
        %v812 = vrot.slane %v577, 5
        %v813 = vrot.slane %v578, 5
        %v814 = vsel %vm811, %v812, %v813
        %v815 = vrot.slane %v579, 5
        %v816 = vsel %vm811, %v813, %v815
        %v817 = vrot.slane %v580, 5
        %v818 = vsel %vm811, %v815, %v817
        %v819 = vrot.slane %v581, 5
        %v820 = vsel %vm811, %v817, %v819
        %v821 = vrot.slane %v582, 5
        %v822 = vsel %vm811, %v819, %v821
        %v823 = vrot.slane %v583, 5
        %v824 = vsel %vm811, %v821, %v823
        %v825 = vrot.slane %v584, 5
        %v826 = vsel %vm811, %v823, %v825
        %v827 = vrot.slane %v585, 5
        %v828 = vsel %vm811, %v825, %v827
        %v829 = vrot.slane %v586, 5
        %v830 = vsel %vm811, %v827, %v829
        %v831 = vrot.slane %v587, 5
        %v832 = vsel %vm811, %v829, %v831
        %v833 = vrot.slane %v588, 5
        %v834 = vsel %vm811, %v831, %v833
        %v835 = vrot.slane %v589, 5
        %v836 = vsel %vm811, %v833, %v835
        %v837 = vrot.slane %v590, 5
        %v838 = vsel %vm811, %v835, %v837
        %v839 = vrot.slane %v591, 5
        %v840 = vsel %vm811, %v837, %v839
        %v841 = vrot.slane %v592, 5
        %v842 = vsel %vm811, %v839, %v841
        %v843 = vrot.slane %v593, 5
        %v844 = vsel %vm811, %v841, %v843
        %vm861 = vcmask 1041408
        %v862 = vrot.slane %v577, 6
        %v863 = vrot.slane %v578, 6
        %v864 = vsel %vm861, %v862, %v863
        %v865 = vrot.slane %v579, 6
        %v866 = vsel %vm861, %v863, %v865
        %v867 = vrot.slane %v580, 6
        %v868 = vsel %vm861, %v865, %v867
        %v869 = vrot.slane %v581, 6
        %v870 = vsel %vm861, %v867, %v869
        %v871 = vrot.slane %v582, 6
        %v872 = vsel %vm861, %v869, %v871
        %v873 = vrot.slane %v583, 6
        %v874 = vsel %vm861, %v871, %v873
        %v875 = vrot.slane %v584, 6
        %v876 = vsel %vm861, %v873, %v875
        %v877 = vrot.slane %v585, 6
        %v878 = vsel %vm861, %v875, %v877
        %v879 = vrot.slane %v586, 6
        %v880 = vsel %vm861, %v877, %v879
        %v881 = vrot.slane %v587, 6
        %v882 = vsel %vm861, %v879, %v881
        %v883 = vrot.slane %v588, 6
        %v884 = vsel %vm861, %v881, %v883
        %v885 = vrot.slane %v589, 6
        %v886 = vsel %vm861, %v883, %v885
        %v887 = vrot.slane %v590, 6
        %v888 = vsel %vm861, %v885, %v887
        %v889 = vrot.slane %v591, 6
        %v890 = vsel %vm861, %v887, %v889
        %v891 = vrot.slane %v592, 6
        %v892 = vsel %vm861, %v889, %v891
        %v893 = vrot.slane %v593, 6
        %v894 = vsel %vm861, %v891, %v893
        %v911 = vld [vmem:[#allocation6] sm:$0xff]
        %v912 = vld [vmem:[#allocation6 + $0x8] sm:$0xff]
        %v913 = vld [vmem:[#allocation6 + $0x10] sm:$0xff]
        %v914 = vld [vmem:[#allocation6 + $0x18] sm:$0xff]
        %v915 = vld [vmem:[#allocation6 + $0x20] sm:$0xff]
        %v916 = vld [vmem:[#allocation6 + $0x28] sm:$0xff]
        %v917 = vld [vmem:[#allocation6 + $0x30] sm:$0xff]
        %v918 = vld [vmem:[#allocation6 + $0x38] sm:$0xff]
        %v919 = vld [vmem:[#allocation6 + $0x40] sm:$0xff]
        %v920 = vld [vmem:[#allocation6 + $0x48] sm:$0xff]
        %v921 = vld [vmem:[#allocation6 + $0x50] sm:$0xff]
        %v922 = vld [vmem:[#allocation6 + $0x58] sm:$0xff]
        %v923 = vld [vmem:[#allocation6 + $0x60] sm:$0xff]
        %v924 = vld [vmem:[#allocation6 + $0x68] sm:$0xff]
        %v925 = vld [vmem:[#allocation6 + $0x70] sm:$0xff]
        %v926 = vld [vmem:[#allocation6 + $0x78] sm:$0xff]
        %v927 = vld [vmem:[#allocation6 + $0x80] sm:$0xff]
        %v928 = vld [vmem:[#allocation6 + $0x88] sm:$0xff]
        %v929 = vld [vmem:[#allocation6 + $0x90] sm:$0xff]
        %v930 = vld [vmem:[#allocation6 + $0x98] sm:$0xff]
        %v931 = vld [vmem:[#allocation6 + $0xa0] sm:$0xff]
        %v932 = vld [vmem:[#allocation6 + $0xa8] sm:$0xff]
        %v933 = vld [vmem:[#allocation6 + $0xb0] sm:$0xff]
        %v934 = vld [vmem:[#allocation6 + $0xb8] sm:$0xff]
        %v935 = vld [vmem:[#allocation6 + $0xc0] sm:$0xff]
        %v936 = vld [vmem:[#allocation6 + $0xc8] sm:$0xff]
        %v937 = vld [vmem:[#allocation6 + $0xd0] sm:$0xff]
        %v938 = vld [vmem:[#allocation6 + $0xd8] sm:$0xff]
        %v939 = vld [vmem:[#allocation6 + $0xe0] sm:$0xff]
        %v940 = vld [vmem:[#allocation6 + $0xe8] sm:$0xff]
        %v941 = vld [vmem:[#allocation6 + $0xf0] sm:$0xff]
        %v942 = vld [vmem:[#allocation6 + $0xf8] sm:$0xff]
        %v943 = vld [vmem:[#allocation6 + $0x100] sm:$0xff]
        %v944 = vld [vmem:[#allocation6 + $0x108] sm:$0xff]
        %v945 = vld [vmem:[#allocation6 + $0x110] sm:$0xff]
        %v946 = vld [vmem:[#allocation6 + $0x118] sm:$0xff]
        %v947 = vld [vmem:[#allocation6 + $0x120] sm:$0xff]
        %v948 = vld [vmem:[#allocation6 + $0x128] sm:$0xff]
        %v949 = vld [vmem:[#allocation6 + $0x130] sm:$0xff]
        %v950 = vld [vmem:[#allocation6 + $0x138] sm:$0xff]
        %v951 = vld [vmem:[#allocation6 + $0x140] sm:$0xff]
        %v952 = vld [vmem:[#allocation6 + $0x148] sm:$0xff]
        %v953 = vld [vmem:[#allocation6 + $0x150] sm:$0xff]
        %v954 = vld [vmem:[#allocation6 + $0x158] sm:$0xff]
        %v955 = vld [vmem:[#allocation6 + $0x160] sm:$0xff]
        %v956 = vld [vmem:[#allocation6 + $0x168] sm:$0xff]
        %v957 = vld [vmem:[#allocation6 + $0x170] sm:$0xff]
        %v958 = vld [vmem:[#allocation6 + $0x178] sm:$0xff]
        %v959 = vld [vmem:[#allocation6 + $0x180] sm:$0xff]
        %v960 = vld [vmem:[#allocation6 + $0x188] sm:$0xff]
        %v961 = vld [vmem:[#allocation6 + $0x190] sm:$0xff]
        %v962 = vld [vmem:[#allocation6 + $0x198] sm:$0xff]
        %v963 = vld [vmem:[#allocation6 + $0x1a0] sm:$0xff]
        %v964 = vld [vmem:[#allocation6 + $0x1a8] sm:$0xff]
        %v965 = vld [vmem:[#allocation6 + $0x1b0] sm:$0xff]
        %v966 = vld [vmem:[#allocation6 + $0x1b8] sm:$0xff]
        %v967 = vld [vmem:[#allocation6 + $0x1c0] sm:$0xff]
        %v968 = vld [vmem:[#allocation6 + $0x1c8] sm:$0xff]
        %v969 = vld [vmem:[#allocation6 + $0x1d0] sm:$0xff]
        %v970 = vld [vmem:[#allocation6 + $0x1d8] sm:$0xff]
        %v971 = vld [vmem:[#allocation6 + $0x1e0] sm:$0xff]
        %v972 = vld [vmem:[#allocation6 + $0x1e8] sm:$0xff]
        %v973 = vld [vmem:[#allocation6 + $0x1f0] sm:$0xff]
        %v974 = vld [vmem:[#allocation6 + $0x1f8] sm:$0xff]
        %v975 = vld [vmem:[#allocation6 + $0x200] sm:$0xff]
        %v976 = vld [vmem:[#allocation6 + $0x208] sm:$0xff]
        %v977 = vld [vmem:[#allocation6 + $0x210] sm:$0xff]
        %v978 = vld [vmem:[#allocation6 + $0x218] sm:$0xff]
        %v979 = vld [vmem:[#allocation6 + $0x220] sm:$0xff]
        %v980 = vld [vmem:[#allocation6 + $0x228] sm:$0xff]
        %v981 = vld [vmem:[#allocation6 + $0x230] sm:$0xff]
        %v982 = vld [vmem:[#allocation6 + $0x238] sm:$0xff]
        %v983 = vld [vmem:[#allocation6 + $0x240] sm:$0xff]
        %v984 = vld [vmem:[#allocation6 + $0x248] sm:$0xff]
        %v985 = vld [vmem:[#allocation6 + $0x250] sm:$0xff]
        %v986 = vld [vmem:[#allocation6 + $0x258] sm:$0xff]
        %v987 = vld [vmem:[#allocation6 + $0x260] sm:$0xff]
        %v988 = vld [vmem:[#allocation6 + $0x268] sm:$0xff]
        %v989 = vld [vmem:[#allocation6 + $0x270] sm:$0xff]
        %v990 = vld [vmem:[#allocation6 + $0x278] sm:$0xff]
        %v991 = vld [vmem:[#allocation6 + $0x280] sm:$0xff]
        %v992 = vld [vmem:[#allocation6 + $0x288] sm:$0xff]
        %v993 = vld [vmem:[#allocation6 + $0x290] sm:$0xff]
        %v994 = vld [vmem:[#allocation6 + $0x298] sm:$0xff]
        %v995 = vld [vmem:[#allocation6 + $0x2a0] sm:$0xff]
        %v996 = vld [vmem:[#allocation6 + $0x2a8] sm:$0xff]
        %v997 = vld [vmem:[#allocation6 + $0x2b0] sm:$0xff]
        %v998 = vld [vmem:[#allocation6 + $0x2b8] sm:$0xff]
        %v999 = vld [vmem:[#allocation6 + $0x2c0] sm:$0xff]
        %v1000 = vld [vmem:[#allocation6 + $0x2c8] sm:$0xff]
        %v1001 = vld [vmem:[#allocation6 + $0x2d0] sm:$0xff]
        %v1002 = vld [vmem:[#allocation6 + $0x2d8] sm:$0xff]
        %v1003 = vld [vmem:[#allocation6 + $0x2e0] sm:$0xff]
        %v1004 = vld [vmem:[#allocation6 + $0x2e8] sm:$0xff]
        %v1005 = vld [vmem:[#allocation6 + $0x2f0] sm:$0xff]
        %v1006 = vld [vmem:[#allocation6 + $0x2f8] sm:$0xff]
        %v1007 = vld [vmem:[#allocation6 + $0x300] sm:$0xff]
        %v1008 = vld [vmem:[#allocation6 + $0x308] sm:$0xff]
        %v1009 = vld [vmem:[#allocation6 + $0x310] sm:$0xff]
        %v1010 = vld [vmem:[#allocation6 + $0x318] sm:$0xff]
        %v1011 = vld [vmem:[#allocation6 + $0x320] sm:$0xff]
        %v1012 = vld [vmem:[#allocation6 + $0x328] sm:$0xff]
        %v1013 = vld [vmem:[#allocation6 + $0x330] sm:$0xff]
        %v1014 = vld [vmem:[#allocation6 + $0x338] sm:$0xff]
        %v1015 = vld [vmem:[#allocation6 + $0x340] sm:$0xff]
        %v1016 = vld [vmem:[#allocation6 + $0x348] sm:$0xff]
        %v1017 = vld [vmem:[#allocation6 + $0x350] sm:$0xff]
        %v1018 = vld [vmem:[#allocation6 + $0x358] sm:$0xff]
        %v1019 = vld [vmem:[#allocation6 + $0x360] sm:$0xff]
        %v1020 = vld [vmem:[#allocation6 + $0x368] sm:$0xff]
        %v1021 = vld [vmem:[#allocation6 + $0x370] sm:$0xff]
        %v1022 = vld [vmem:[#allocation6 + $0x378] sm:$0xff]
        %s1023 = scalar_lea.vmem [#allocation2], 16
        %v1024 = vld [vmem:[%s1023] sm:$0xff]
        %v1025 = vld [vmem:[%s1023 + $0x8] sm:$0xff]
        %v1026 = vld [vmem:[%s1023 + $0x10] sm:$0xff]
        %v1027 = vld [vmem:[%s1023 + $0x18] sm:$0xff]
        %v1028 = vld [vmem:[%s1023 + $0x20] sm:$0xff]
        %v1029 = vld [vmem:[%s1023 + $0x28] sm:$0xff]
        %v1030 = vld [vmem:[%s1023 + $0x30] sm:$0xff]
        %v1031 = vld [vmem:[%s1023 + $0x38] sm:$0xff]
        %v1032 = vld [vmem:[%s1023 + $0x40] sm:$0xff]
        %v1033 = vld [vmem:[%s1023 + $0x48] sm:$0xff]
        %v1034 = vld [vmem:[%s1023 + $0x50] sm:$0xff]
        %v1035 = vld [vmem:[%s1023 + $0x58] sm:$0xff]
        %v1036 = vld [vmem:[%s1023 + $0x60] sm:$0xff]
        %v1037 = vld [vmem:[%s1023 + $0x68] sm:$0xff]
        %v1038 = vld [vmem:[%s1023 + $0x70] sm:$0xff]
        %v1039 = vld [vmem:[%s1023 + $0x78] sm:$0xff]
        %v1040 = vld [vmem:[%s1023 + $0x80] sm:$0xff]
        %v1058 = vrot.slane %v1024, 1
        %v1059 = vrot.slane %v1025, 1
        %v1060 = vsel %vm611, %v1058, %v1059
        %v1061 = vrot.slane %v1026, 1
        %v1062 = vsel %vm611, %v1059, %v1061
        %v1063 = vrot.slane %v1027, 1
        %v1064 = vsel %vm611, %v1061, %v1063
        %v1065 = vrot.slane %v1028, 1
        %v1066 = vsel %vm611, %v1063, %v1065
        %v1067 = vrot.slane %v1029, 1
        %v1068 = vsel %vm611, %v1065, %v1067
        %v1069 = vrot.slane %v1030, 1
        %v1070 = vsel %vm611, %v1067, %v1069
        %v1071 = vrot.slane %v1031, 1
        %v1072 = vsel %vm611, %v1069, %v1071
        %v1073 = vrot.slane %v1032, 1
        %v1074 = vsel %vm611, %v1071, %v1073
        %v1075 = vrot.slane %v1033, 1
        %v1076 = vsel %vm611, %v1073, %v1075
        %v1077 = vrot.slane %v1034, 1
        %v1078 = vsel %vm611, %v1075, %v1077
        %v1079 = vrot.slane %v1035, 1
        %v1080 = vsel %vm611, %v1077, %v1079
        %v1081 = vrot.slane %v1036, 1
        %v1082 = vsel %vm611, %v1079, %v1081
        %v1083 = vrot.slane %v1037, 1
        %v1084 = vsel %vm611, %v1081, %v1083
        %v1085 = vrot.slane %v1038, 1
        %v1086 = vsel %vm611, %v1083, %v1085
        %v1087 = vrot.slane %v1039, 1
        %v1088 = vsel %vm611, %v1085, %v1087
        %v1089 = vrot.slane %v1040, 1
        %v1090 = vsel %vm611, %v1087, %v1089
        %v1107 = vrot.slane %v1024, 2
        %v1108 = vrot.slane %v1025, 2
        %v1109 = vsel %vm661, %v1107, %v1108
        %v1110 = vrot.slane %v1026, 2
        %v1111 = vsel %vm661, %v1108, %v1110
        %v1112 = vrot.slane %v1027, 2
        %v1113 = vsel %vm661, %v1110, %v1112
        %v1114 = vrot.slane %v1028, 2
        %v1115 = vsel %vm661, %v1112, %v1114
        %v1116 = vrot.slane %v1029, 2
        %v1117 = vsel %vm661, %v1114, %v1116
        %v1118 = vrot.slane %v1030, 2
        %v1119 = vsel %vm661, %v1116, %v1118
        %v1120 = vrot.slane %v1031, 2
        %v1121 = vsel %vm661, %v1118, %v1120
        %v1122 = vrot.slane %v1032, 2
        %v1123 = vsel %vm661, %v1120, %v1122
        %v1124 = vrot.slane %v1033, 2
        %v1125 = vsel %vm661, %v1122, %v1124
        %v1126 = vrot.slane %v1034, 2
        %v1127 = vsel %vm661, %v1124, %v1126
        %v1128 = vrot.slane %v1035, 2
        %v1129 = vsel %vm661, %v1126, %v1128
        %v1130 = vrot.slane %v1036, 2
        %v1131 = vsel %vm661, %v1128, %v1130
        %v1132 = vrot.slane %v1037, 2
        %v1133 = vsel %vm661, %v1130, %v1132
        %v1134 = vrot.slane %v1038, 2
        %v1135 = vsel %vm661, %v1132, %v1134
        %v1136 = vrot.slane %v1039, 2
        %v1137 = vsel %vm661, %v1134, %v1136
        %v1138 = vrot.slane %v1040, 2
        %v1139 = vsel %vm661, %v1136, %v1138
        %v1156 = vrot.slane %v1024, 3
        %v1157 = vrot.slane %v1025, 3
        %v1158 = vsel %vm711, %v1156, %v1157
        %v1159 = vrot.slane %v1026, 3
        %v1160 = vsel %vm711, %v1157, %v1159
        %v1161 = vrot.slane %v1027, 3
        %v1162 = vsel %vm711, %v1159, %v1161
        %v1163 = vrot.slane %v1028, 3
        %v1164 = vsel %vm711, %v1161, %v1163
        %v1165 = vrot.slane %v1029, 3
        %v1166 = vsel %vm711, %v1163, %v1165
        %v1167 = vrot.slane %v1030, 3
        %v1168 = vsel %vm711, %v1165, %v1167
        %v1169 = vrot.slane %v1031, 3
        %v1170 = vsel %vm711, %v1167, %v1169
        %v1171 = vrot.slane %v1032, 3
        %v1172 = vsel %vm711, %v1169, %v1171
        %v1173 = vrot.slane %v1033, 3
        %v1174 = vsel %vm711, %v1171, %v1173
        %v1175 = vrot.slane %v1034, 3
        %v1176 = vsel %vm711, %v1173, %v1175
        %v1177 = vrot.slane %v1035, 3
        %v1178 = vsel %vm711, %v1175, %v1177
        %v1179 = vrot.slane %v1036, 3
        %v1180 = vsel %vm711, %v1177, %v1179
        %v1181 = vrot.slane %v1037, 3
        %v1182 = vsel %vm711, %v1179, %v1181
        %v1183 = vrot.slane %v1038, 3
        %v1184 = vsel %vm711, %v1181, %v1183
        %v1185 = vrot.slane %v1039, 3
        %v1186 = vsel %vm711, %v1183, %v1185
        %v1187 = vrot.slane %v1040, 3
        %v1188 = vsel %vm711, %v1185, %v1187
        %v1205 = vrot.slane %v1024, 4
        %v1206 = vrot.slane %v1025, 4
        %v1207 = vsel %vm761, %v1205, %v1206
        %v1208 = vrot.slane %v1026, 4
        %v1209 = vsel %vm761, %v1206, %v1208
        %v1210 = vrot.slane %v1027, 4
        %v1211 = vsel %vm761, %v1208, %v1210
        %v1212 = vrot.slane %v1028, 4
        %v1213 = vsel %vm761, %v1210, %v1212
        %v1214 = vrot.slane %v1029, 4
        %v1215 = vsel %vm761, %v1212, %v1214
        %v1216 = vrot.slane %v1030, 4
        %v1217 = vsel %vm761, %v1214, %v1216
        %v1218 = vrot.slane %v1031, 4
        %v1219 = vsel %vm761, %v1216, %v1218
        %v1220 = vrot.slane %v1032, 4
        %v1221 = vsel %vm761, %v1218, %v1220
        %v1222 = vrot.slane %v1033, 4
        %v1223 = vsel %vm761, %v1220, %v1222
        %v1224 = vrot.slane %v1034, 4
        %v1225 = vsel %vm761, %v1222, %v1224
        %v1226 = vrot.slane %v1035, 4
        %v1227 = vsel %vm761, %v1224, %v1226
        %v1228 = vrot.slane %v1036, 4
        %v1229 = vsel %vm761, %v1226, %v1228
        %v1230 = vrot.slane %v1037, 4
        %v1231 = vsel %vm761, %v1228, %v1230
        %v1232 = vrot.slane %v1038, 4
        %v1233 = vsel %vm761, %v1230, %v1232
        %v1234 = vrot.slane %v1039, 4
        %v1235 = vsel %vm761, %v1232, %v1234
        %v1236 = vrot.slane %v1040, 4
        %v1237 = vsel %vm761, %v1234, %v1236
        %v1254 = vrot.slane %v1024, 5
        %v1255 = vrot.slane %v1025, 5
        %v1256 = vsel %vm811, %v1254, %v1255
        %v1257 = vrot.slane %v1026, 5
        %v1258 = vsel %vm811, %v1255, %v1257
        %v1259 = vrot.slane %v1027, 5
        %v1260 = vsel %vm811, %v1257, %v1259
        %v1261 = vrot.slane %v1028, 5
        %v1262 = vsel %vm811, %v1259, %v1261
        %v1263 = vrot.slane %v1029, 5
        %v1264 = vsel %vm811, %v1261, %v1263
        %v1265 = vrot.slane %v1030, 5
        %v1266 = vsel %vm811, %v1263, %v1265
        %v1267 = vrot.slane %v1031, 5
        %v1268 = vsel %vm811, %v1265, %v1267
        %v1269 = vrot.slane %v1032, 5
        %v1270 = vsel %vm811, %v1267, %v1269
        %v1271 = vrot.slane %v1033, 5
        %v1272 = vsel %vm811, %v1269, %v1271
        %v1273 = vrot.slane %v1034, 5
        %v1274 = vsel %vm811, %v1271, %v1273
        %v1275 = vrot.slane %v1035, 5
        %v1276 = vsel %vm811, %v1273, %v1275
        %v1277 = vrot.slane %v1036, 5
        %v1278 = vsel %vm811, %v1275, %v1277
        %v1279 = vrot.slane %v1037, 5
        %v1280 = vsel %vm811, %v1277, %v1279
        %v1281 = vrot.slane %v1038, 5
        %v1282 = vsel %vm811, %v1279, %v1281
        %v1283 = vrot.slane %v1039, 5
        %v1284 = vsel %vm811, %v1281, %v1283
        %v1285 = vrot.slane %v1040, 5
        %v1286 = vsel %vm811, %v1283, %v1285
        %v1303 = vrot.slane %v1024, 6
        %v1304 = vrot.slane %v1025, 6
        %v1305 = vsel %vm861, %v1303, %v1304
        %v1306 = vrot.slane %v1026, 6
        %v1307 = vsel %vm861, %v1304, %v1306
        %v1308 = vrot.slane %v1027, 6
        %v1309 = vsel %vm861, %v1306, %v1308
        %v1310 = vrot.slane %v1028, 6
        %v1311 = vsel %vm861, %v1308, %v1310
        %v1312 = vrot.slane %v1029, 6
        %v1313 = vsel %vm861, %v1310, %v1312
        %v1314 = vrot.slane %v1030, 6
        %v1315 = vsel %vm861, %v1312, %v1314
        %v1316 = vrot.slane %v1031, 6
        %v1317 = vsel %vm861, %v1314, %v1316
        %v1318 = vrot.slane %v1032, 6
        %v1319 = vsel %vm861, %v1316, %v1318
        %v1320 = vrot.slane %v1033, 6
        %v1321 = vsel %vm861, %v1318, %v1320
        %v1322 = vrot.slane %v1034, 6
        %v1323 = vsel %vm861, %v1320, %v1322
        %v1324 = vrot.slane %v1035, 6
        %v1325 = vsel %vm861, %v1322, %v1324
        %v1326 = vrot.slane %v1036, 6
        %v1327 = vsel %vm861, %v1324, %v1326
        %v1328 = vrot.slane %v1037, 6
        %v1329 = vsel %vm861, %v1326, %v1328
        %v1330 = vrot.slane %v1038, 6
        %v1331 = vsel %vm861, %v1328, %v1330
        %v1332 = vrot.slane %v1039, 6
        %v1333 = vsel %vm861, %v1330, %v1332
        %v1334 = vrot.slane %v1040, 6
        %v1335 = vsel %vm861, %v1332, %v1334
        %s1352 = scalar_lea.vmem [#allocation6], 896
        %v1353 = vld [vmem:[%s1352] sm:$0xff]
        %v1354 = vld [vmem:[%s1352 + $0x8] sm:$0xff]
        %v1355 = vld [vmem:[%s1352 + $0x10] sm:$0xff]
        %v1356 = vld [vmem:[%s1352 + $0x18] sm:$0xff]
        %v1357 = vld [vmem:[%s1352 + $0x20] sm:$0xff]
        %v1358 = vld [vmem:[%s1352 + $0x28] sm:$0xff]
        %v1359 = vld [vmem:[%s1352 + $0x30] sm:$0xff]
        %v1360 = vld [vmem:[%s1352 + $0x38] sm:$0xff]
        %v1361 = vld [vmem:[%s1352 + $0x40] sm:$0xff]
        %v1362 = vld [vmem:[%s1352 + $0x48] sm:$0xff]
        %v1363 = vld [vmem:[%s1352 + $0x50] sm:$0xff]
        %v1364 = vld [vmem:[%s1352 + $0x58] sm:$0xff]
        %v1365 = vld [vmem:[%s1352 + $0x60] sm:$0xff]
        %v1366 = vld [vmem:[%s1352 + $0x68] sm:$0xff]
        %v1367 = vld [vmem:[%s1352 + $0x70] sm:$0xff]
        %v1368 = vld [vmem:[%s1352 + $0x78] sm:$0xff]
        %v1369 = vld [vmem:[%s1352 + $0x80] sm:$0xff]
        %v1370 = vld [vmem:[%s1352 + $0x88] sm:$0xff]
        %v1371 = vld [vmem:[%s1352 + $0x90] sm:$0xff]
        %v1372 = vld [vmem:[%s1352 + $0x98] sm:$0xff]
        %v1373 = vld [vmem:[%s1352 + $0xa0] sm:$0xff]
        %v1374 = vld [vmem:[%s1352 + $0xa8] sm:$0xff]
        %v1375 = vld [vmem:[%s1352 + $0xb0] sm:$0xff]
        %v1376 = vld [vmem:[%s1352 + $0xb8] sm:$0xff]
        %v1377 = vld [vmem:[%s1352 + $0xc0] sm:$0xff]
        %v1378 = vld [vmem:[%s1352 + $0xc8] sm:$0xff]
        %v1379 = vld [vmem:[%s1352 + $0xd0] sm:$0xff]
        %v1380 = vld [vmem:[%s1352 + $0xd8] sm:$0xff]
        %v1381 = vld [vmem:[%s1352 + $0xe0] sm:$0xff]
        %v1382 = vld [vmem:[%s1352 + $0xe8] sm:$0xff]
        %v1383 = vld [vmem:[%s1352 + $0xf0] sm:$0xff]
        %v1384 = vld [vmem:[%s1352 + $0xf8] sm:$0xff]
        %v1385 = vld [vmem:[%s1352 + $0x100] sm:$0xff]
        %v1386 = vld [vmem:[%s1352 + $0x108] sm:$0xff]
        %v1387 = vld [vmem:[%s1352 + $0x110] sm:$0xff]
        %v1388 = vld [vmem:[%s1352 + $0x118] sm:$0xff]
        %v1389 = vld [vmem:[%s1352 + $0x120] sm:$0xff]
        %v1390 = vld [vmem:[%s1352 + $0x128] sm:$0xff]
        %v1391 = vld [vmem:[%s1352 + $0x130] sm:$0xff]
        %v1392 = vld [vmem:[%s1352 + $0x138] sm:$0xff]
        %v1393 = vld [vmem:[%s1352 + $0x140] sm:$0xff]
        %v1394 = vld [vmem:[%s1352 + $0x148] sm:$0xff]
        %v1395 = vld [vmem:[%s1352 + $0x150] sm:$0xff]
        %v1396 = vld [vmem:[%s1352 + $0x158] sm:$0xff]
        %v1397 = vld [vmem:[%s1352 + $0x160] sm:$0xff]
        %v1398 = vld [vmem:[%s1352 + $0x168] sm:$0xff]
        %v1399 = vld [vmem:[%s1352 + $0x170] sm:$0xff]
        %v1400 = vld [vmem:[%s1352 + $0x178] sm:$0xff]
        %v1401 = vld [vmem:[%s1352 + $0x180] sm:$0xff]
        %v1402 = vld [vmem:[%s1352 + $0x188] sm:$0xff]
        %v1403 = vld [vmem:[%s1352 + $0x190] sm:$0xff]
        %v1404 = vld [vmem:[%s1352 + $0x198] sm:$0xff]
        %v1405 = vld [vmem:[%s1352 + $0x1a0] sm:$0xff]
        %v1406 = vld [vmem:[%s1352 + $0x1a8] sm:$0xff]
        %v1407 = vld [vmem:[%s1352 + $0x1b0] sm:$0xff]
        %v1408 = vld [vmem:[%s1352 + $0x1b8] sm:$0xff]
        %v1409 = vld [vmem:[%s1352 + $0x1c0] sm:$0xff]
        %v1410 = vld [vmem:[%s1352 + $0x1c8] sm:$0xff]
        %v1411 = vld [vmem:[%s1352 + $0x1d0] sm:$0xff]
        %v1412 = vld [vmem:[%s1352 + $0x1d8] sm:$0xff]
        %v1413 = vld [vmem:[%s1352 + $0x1e0] sm:$0xff]
        %v1414 = vld [vmem:[%s1352 + $0x1e8] sm:$0xff]
        %v1415 = vld [vmem:[%s1352 + $0x1f0] sm:$0xff]
        %v1416 = vld [vmem:[%s1352 + $0x1f8] sm:$0xff]
        %v1417 = vld [vmem:[%s1352 + $0x200] sm:$0xff]
        %v1418 = vld [vmem:[%s1352 + $0x208] sm:$0xff]
        %v1419 = vld [vmem:[%s1352 + $0x210] sm:$0xff]
        %v1420 = vld [vmem:[%s1352 + $0x218] sm:$0xff]
        %v1421 = vld [vmem:[%s1352 + $0x220] sm:$0xff]
        %v1422 = vld [vmem:[%s1352 + $0x228] sm:$0xff]
        %v1423 = vld [vmem:[%s1352 + $0x230] sm:$0xff]
        %v1424 = vld [vmem:[%s1352 + $0x238] sm:$0xff]
        %v1425 = vld [vmem:[%s1352 + $0x240] sm:$0xff]
        %v1426 = vld [vmem:[%s1352 + $0x248] sm:$0xff]
        %v1427 = vld [vmem:[%s1352 + $0x250] sm:$0xff]
        %v1428 = vld [vmem:[%s1352 + $0x258] sm:$0xff]
        %v1429 = vld [vmem:[%s1352 + $0x260] sm:$0xff]
        %v1430 = vld [vmem:[%s1352 + $0x268] sm:$0xff]
        %v1431 = vld [vmem:[%s1352 + $0x270] sm:$0xff]
        %v1432 = vld [vmem:[%s1352 + $0x278] sm:$0xff]
        %v1433 = vld [vmem:[%s1352 + $0x280] sm:$0xff]
        %v1434 = vld [vmem:[%s1352 + $0x288] sm:$0xff]
        %v1435 = vld [vmem:[%s1352 + $0x290] sm:$0xff]
        %v1436 = vld [vmem:[%s1352 + $0x298] sm:$0xff]
        %v1437 = vld [vmem:[%s1352 + $0x2a0] sm:$0xff]
        %v1438 = vld [vmem:[%s1352 + $0x2a8] sm:$0xff]
        %v1439 = vld [vmem:[%s1352 + $0x2b0] sm:$0xff]
        %v1440 = vld [vmem:[%s1352 + $0x2b8] sm:$0xff]
        %v1441 = vld [vmem:[%s1352 + $0x2c0] sm:$0xff]
        %v1442 = vld [vmem:[%s1352 + $0x2c8] sm:$0xff]
        %v1443 = vld [vmem:[%s1352 + $0x2d0] sm:$0xff]
        %v1444 = vld [vmem:[%s1352 + $0x2d8] sm:$0xff]
        %v1445 = vld [vmem:[%s1352 + $0x2e0] sm:$0xff]
        %v1446 = vld [vmem:[%s1352 + $0x2e8] sm:$0xff]
        %v1447 = vld [vmem:[%s1352 + $0x2f0] sm:$0xff]
        %v1448 = vld [vmem:[%s1352 + $0x2f8] sm:$0xff]
        %v1449 = vld [vmem:[%s1352 + $0x300] sm:$0xff]
        %v1450 = vld [vmem:[%s1352 + $0x308] sm:$0xff]
        %v1451 = vld [vmem:[%s1352 + $0x310] sm:$0xff]
        %v1452 = vld [vmem:[%s1352 + $0x318] sm:$0xff]
        %v1453 = vld [vmem:[%s1352 + $0x320] sm:$0xff]
        %v1454 = vld [vmem:[%s1352 + $0x328] sm:$0xff]
        %v1455 = vld [vmem:[%s1352 + $0x330] sm:$0xff]
        %v1456 = vld [vmem:[%s1352 + $0x338] sm:$0xff]
        %v1457 = vld [vmem:[%s1352 + $0x340] sm:$0xff]
        %v1458 = vld [vmem:[%s1352 + $0x348] sm:$0xff]
        %v1459 = vld [vmem:[%s1352 + $0x350] sm:$0xff]
        %v1460 = vld [vmem:[%s1352 + $0x358] sm:$0xff]
        %v1461 = vld [vmem:[%s1352 + $0x360] sm:$0xff]
        %v1462 = vld [vmem:[%s1352 + $0x368] sm:$0xff]
        %v1463 = vld [vmem:[%s1352 + $0x370] sm:$0xff]
        %v1464 = vld [vmem:[%s1352 + $0x378] sm:$0xff]
        %1465 = vmatprep.subr.mxu0 0.0
        %1466 = vmatpush1.msra.mxu0 %v1353
        %1467 = vmatprep.subr.mxu0 0.0
        %1468 = vmatpush1.msra.mxu0 %v1354
        %1469 = vmatprep.subr.mxu0 0.0
        %1470 = vmatpush1.msra.mxu0 %v1355
        %1471 = vmatprep.subr.mxu0 0.0
        %1472 = vmatpush1.msra.mxu0 %v1356
        %1473 = vmatprep.subr.mxu0 0.0
        %1474 = vmatpush1.msra.mxu0 %v1357
        %1475 = vmatprep.subr.mxu0 0.0
        %1476 = vmatpush1.msra.mxu0 %v1358
        %1477 = vmatprep.subr.mxu0 0.0
        %1478 = vmatpush1.msra.mxu0 %v1359
        %1479 = vmatprep.subr.mxu0 0.0
        %1480 = vmatpush1.msra.mxu0 %v1360
        %1481 = vmatprep.subr.mxu0 0.0
        %1482 = vmatpush1.msra.mxu0 %v1361
        %1483 = vmatprep.subr.mxu0 0.0
        %1484 = vmatpush1.msra.mxu0 %v1362
        %1485 = vmatprep.subr.mxu0 0.0
        %1486 = vmatpush1.msra.mxu0 %v1363
        %1487 = vmatprep.subr.mxu0 0.0
        %1488 = vmatpush1.msra.mxu0 %v1364
        %1489 = vmatprep.subr.mxu0 0.0
        %1490 = vmatpush1.msra.mxu0 %v1365
        %1491 = vmatprep.subr.mxu0 0.0
        %1492 = vmatpush1.msra.mxu0 %v1366
        %1493 = vmatprep.subr.mxu0 0.0
        %1494 = vmatpush1.msra.mxu0 %v1367
        %1495 = vmatprep.subr.mxu0 0.0
        %1496 = vmatpush1.msra.mxu0 %v1368
        %1497 = vmatprep.subr.mxu0 0.0
        %1498 = vmatpush1.msra.mxu0 %v1369
        %1499 = vmatprep.subr.mxu0 0.0
        %1500 = vmatpush1.msra.mxu0 %v1370
        %1501 = vmatprep.subr.mxu0 0.0
        %1502 = vmatpush1.msra.mxu0 %v1371
        %1503 = vmatprep.subr.mxu0 0.0
        %1504 = vmatpush1.msra.mxu0 %v1372
        %1505 = vmatprep.subr.mxu0 0.0
        %1506 = vmatpush1.msra.mxu0 %v1373
        %1507 = vmatprep.subr.mxu0 0.0
        %1508 = vmatpush1.msra.mxu0 %v1374
        %1509 = vmatprep.subr.mxu0 0.0
        %1510 = vmatpush1.msra.mxu0 %v1375
        %1511 = vmatprep.subr.mxu0 0.0
        %1512 = vmatpush1.msra.mxu0 %v1376
        %1513 = vmatprep.subr.mxu0 0.0
        %1514 = vmatpush1.msra.mxu0 %v1377
        %1515 = vmatprep.subr.mxu0 0.0
        %1516 = vmatpush1.msra.mxu0 %v1378
        %1517 = vmatprep.subr.mxu0 0.0
        %1518 = vmatpush1.msra.mxu0 %v1379
        %1519 = vmatprep.subr.mxu0 0.0
        %1520 = vmatpush1.msra.mxu0 %v1380
        %1521 = vmatprep.subr.mxu0 0.0
        %1522 = vmatpush1.msra.mxu0 %v1381
        %1523 = vmatprep.subr.mxu0 0.0
        %1524 = vmatpush1.msra.mxu0 %v1382
        %1525 = vmatprep.subr.mxu0 0.0
        %1526 = vmatpush1.msra.mxu0 %v1383
        %1527 = vmatprep.subr.mxu0 0.0
        %1528 = vmatpush1.msra.mxu0 %v1384
        %1529 = vmatprep.mubr.f32.mxu0 %v1060
        %1530 = vmatmul.mubr.f32.gmra.mrb[0].mxu0 %v1024
        %v1531 = vpop.f32.mrb[0].mxu0
        %v1532 = vadd.f32 0.0, %v1531
        %v1533 = vpop.f32.mrb[0].mxu0
        %1534 = vmatprep.mubr.f32.mxu0 %v1062
        %1535 = vmatmul.mubr.f32.gmra.mrb[0].mxu0 %v1025
        %v1536 = vpop.f32.mrb[0].mxu0
        %v1537 = vpop.f32.mrb[0].mxu0
        %1538 = vmatprep.mubr.f32.mxu0 %v1064
        %1539 = vmatmul.mubr.f32.gmra.mrb[0].mxu0 %v1026
        %v1540 = vpop.f32.mrb[0].mxu0
        %v1541 = vadd.f32 0.0, %v1540
        %v1542 = vpop.f32.mrb[0].mxu0
        %1543 = vmatprep.mubr.f32.mxu0 %v1066
        %1544 = vmatmul.mubr.f32.gmra.mrb[0].mxu0 %v1027
        %v1545 = vpop.f32.mrb[0].mxu0
        %v1546 = vpop.f32.mrb[0].mxu0
        %1547 = vmatprep.mubr.f32.mxu0 %v1068
        %1548 = vmatmul.mubr.f32.gmra.mrb[0].mxu0 %v1028
        %v1549 = vpop.f32.mrb[0].mxu0
        %v1550 = vadd.f32 0.0, %v1549
        %v1551 = vpop.f32.mrb[0].mxu0
        %1552 = vmatprep.mubr.f32.mxu0 %v1070
        %1553 = vmatmul.mubr.f32.gmra.mrb[0].mxu0 %v1029
        %v1554 = vpop.f32.mrb[0].mxu0
        %v1555 = vpop.f32.mrb[0].mxu0
        %1556 = vmatprep.mubr.f32.mxu0 %v1072
        %1557 = vmatmul.mubr.f32.gmra.mrb[0].mxu0 %v1030
        %v1558 = vpop.f32.mrb[0].mxu0
        %v1559 = vadd.f32 0.0, %v1558
        %v1560 = vpop.f32.mrb[0].mxu0
        %1561 = vmatprep.mubr.f32.mxu0 %v1074
        %1562 = vmatmul.mubr.f32.gmra.mrb[0].mxu0 %v1031
        %v1563 = vpop.f32.mrb[0].mxu0
        %v1564 = vpop.f32.mrb[0].mxu0
        %1565 = vmatprep.mubr.f32.mxu0 %v1076
        %1566 = vmatmul.mubr.f32.gmra.mrb[0].mxu0 %v1032
        %v1567 = vpop.f32.mrb[0].mxu0
        %v1568 = vadd.f32 0.0, %v1567
        %v1569 = vpop.f32.mrb[0].mxu0
        %1570 = vmatprep.mubr.f32.mxu0 %v1078
        %1571 = vmatmul.mubr.f32.gmra.mrb[0].mxu0 %v1033
        %v1572 = vpop.f32.mrb[0].mxu0
        %v1573 = vpop.f32.mrb[0].mxu0
        %1574 = vmatprep.mubr.f32.mxu0 %v1080
        %1575 = vmatmul.mubr.f32.gmra.mrb[0].mxu0 %v1034
        %v1576 = vpop.f32.mrb[0].mxu0
        %v1577 = vadd.f32 0.0, %v1576
        %v1578 = vpop.f32.mrb[0].mxu0
        %1579 = vmatprep.mubr.f32.mxu0 %v1082
        %1580 = vmatmul.mubr.f32.gmra.mrb[0].mxu0 %v1035
        %v1581 = vpop.f32.mrb[0].mxu0
        %v1582 = vpop.f32.mrb[0].mxu0
        %1583 = vmatprep.mubr.f32.mxu0 %v1084
        %1584 = vmatmul.mubr.f32.gmra.mrb[0].mxu0 %v1036
        %v1585 = vpop.f32.mrb[0].mxu0
        %v1586 = vadd.f32 0.0, %v1585
        %v1587 = vpop.f32.mrb[0].mxu0
        %1588 = vmatprep.mubr.f32.mxu0 %v1086
        %1589 = vmatmul.mubr.f32.gmra.mrb[0].mxu0 %v1037
        %v1590 = vpop.f32.mrb[0].mxu0
        %v1591 = vpop.f32.mrb[0].mxu0
        %1592 = vmatprep.mubr.f32.mxu0 %v1088
        %1593 = vmatmul.mubr.f32.gmra.mrb[0].mxu0 %v1038
        %v1594 = vpop.f32.mrb[0].mxu0
        %v1595 = vadd.f32 0.0, %v1594
        %v1596 = vpop.f32.mrb[0].mxu0
        %1597 = vmatprep.mubr.f32.mxu0 %v1090
        %1598 = vmatmul.mubr.f32.gmra.mrb[0].mxu0 %v1039
        %v1599 = vpop.f32.mrb[0].mxu0
        %v1600 = vpop.f32.mrb[0].mxu0
        %1601 = vdwg.mxu0
        %1602 = vmatprep.subr.mxu0 0.0
        %1603 = vmatpush1.msra.mxu0 %v1385
        %1604 = vmatprep.subr.mxu0 0.0
        %1605 = vmatpush1.msra.mxu0 %v1386
        %1606 = vmatprep.subr.mxu0 0.0
        %1607 = vmatpush1.msra.mxu0 %v1387
        %1608 = vmatprep.subr.mxu0 0.0
        %1609 = vmatpush1.msra.mxu0 %v1388
        %1610 = vmatprep.subr.mxu0 0.0
        %1611 = vmatpush1.msra.mxu0 %v1389
        %1612 = vmatprep.subr.mxu0 0.0
        %1613 = vmatpush1.msra.mxu0 %v1390
        %1614 = vmatprep.subr.mxu0 0.0
        %1615 = vmatpush1.msra.mxu0 %v1391
        %1616 = vmatprep.subr.mxu0 0.0
        %1617 = vmatpush1.msra.mxu0 %v1392
        %1618 = vmatprep.subr.mxu0 0.0
        %1619 = vmatpush1.msra.mxu0 %v1393
        %1620 = vmatprep.subr.mxu0 0.0
        %1621 = vmatpush1.msra.mxu0 %v1394
        %1622 = vmatprep.subr.mxu0 0.0
        %1623 = vmatpush1.msra.mxu0 %v1395
        %1624 = vmatprep.subr.mxu0 0.0
        %1625 = vmatpush1.msra.mxu0 %v1396
        %1626 = vmatprep.subr.mxu0 0.0
        %1627 = vmatpush1.msra.mxu0 %v1397
        %1628 = vmatprep.subr.mxu0 0.0
        %1629 = vmatpush1.msra.mxu0 %v1398
        %1630 = vmatprep.subr.mxu0 0.0
        %1631 = vmatpush1.msra.mxu0 %v1399
        %1632 = vmatprep.subr.mxu0 0.0
        %1633 = vmatpush1.msra.mxu0 %v1400
        %1634 = vmatprep.subr.mxu0 0.0
        %1635 = vmatpush1.msra.mxu0 %v1401
        %1636 = vmatprep.subr.mxu0 0.0
        %1637 = vmatpush1.msra.mxu0 %v1402
        %1638 = vmatprep.subr.mxu0 0.0
        %1639 = vmatpush1.msra.mxu0 %v1403
        %1640 = vmatprep.subr.mxu0 0.0
        %1641 = vmatpush1.msra.mxu0 %v1404
        %1642 = vmatprep.subr.mxu0 0.0
        %1643 = vmatpush1.msra.mxu0 %v1405
        %1644 = vmatprep.subr.mxu0 0.0
        %1645 = vmatpush1.msra.mxu0 %v1406
        %1646 = vmatprep.subr.mxu0 0.0
        %1647 = vmatpush1.msra.mxu0 %v1407
        %1648 = vmatprep.subr.mxu0 0.0
        %1649 = vmatpush1.msra.mxu0 %v1408
        %1650 = vmatprep.subr.mxu0 0.0
        %1651 = vmatpush1.msra.mxu0 %v1409
        %1652 = vmatprep.subr.mxu0 0.0
        %1653 = vmatpush1.msra.mxu0 %v1410
        %1654 = vmatprep.subr.mxu0 0.0
        %1655 = vmatpush1.msra.mxu0 %v1411
        %1656 = vmatprep.subr.mxu0 0.0
        %1657 = vmatpush1.msra.mxu0 %v1412
        %1658 = vmatprep.subr.mxu0 0.0
        %1659 = vmatpush1.msra.mxu0 %v1413
        %1660 = vmatprep.subr.mxu0 0.0
        %1661 = vmatpush1.msra.mxu0 %v1414
        %1662 = vmatprep.subr.mxu0 0.0
        %1663 = vmatpush1.msra.mxu0 %v1415
        %1664 = vmatprep.subr.mxu0 0.0
        %1665 = vmatpush1.msra.mxu0 %v1416
        %1666 = vmatprep.mubr.f32.mxu0 %v1158
        %1667 = vmatmul.mubr.f32.gmra.mrb[0].mxu0 %v1109
        %v1668 = vpop.f32.mrb[0].mxu0
        %v1669 = vadd.f32 %v1532, %v1668
        %v1670 = vpop.f32.mrb[0].mxu0
        %1671 = vmatprep.mubr.f32.mxu0 %v1160
        %1672 = vmatmul.mubr.f32.gmra.mrb[0].mxu0 %v1111
        %v1673 = vpop.f32.mrb[0].mxu0
        %v1674 = vpop.f32.mrb[0].mxu0
        %1675 = vmatprep.mubr.f32.mxu0 %v1162
        %1676 = vmatmul.mubr.f32.gmra.mrb[0].mxu0 %v1113
        %v1677 = vpop.f32.mrb[0].mxu0
        %v1678 = vadd.f32 %v1541, %v1677
        %v1679 = vpop.f32.mrb[0].mxu0
        %1680 = vmatprep.mubr.f32.mxu0 %v1164
        %1681 = vmatmul.mubr.f32.gmra.mrb[0].mxu0 %v1115
        %v1682 = vpop.f32.mrb[0].mxu0
        %v1683 = vpop.f32.mrb[0].mxu0
        %1684 = vmatprep.mubr.f32.mxu0 %v1166
        %1685 = vmatmul.mubr.f32.gmra.mrb[0].mxu0 %v1117
        %v1686 = vpop.f32.mrb[0].mxu0
        %v1687 = vadd.f32 %v1550, %v1686
        %v1688 = vpop.f32.mrb[0].mxu0
        %1689 = vmatprep.mubr.f32.mxu0 %v1168
        %1690 = vmatmul.mubr.f32.gmra.mrb[0].mxu0 %v1119
        %v1691 = vpop.f32.mrb[0].mxu0
        %v1692 = vpop.f32.mrb[0].mxu0
        %1693 = vmatprep.mubr.f32.mxu0 %v1170
        %1694 = vmatmul.mubr.f32.gmra.mrb[0].mxu0 %v1121
        %v1695 = vpop.f32.mrb[0].mxu0
        %v1696 = vadd.f32 %v1559, %v1695
        %v1697 = vpop.f32.mrb[0].mxu0
        %1698 = vmatprep.mubr.f32.mxu0 %v1172
        %1699 = vmatmul.mubr.f32.gmra.mrb[0].mxu0 %v1123
        %v1700 = vpop.f32.mrb[0].mxu0
        %v1701 = vpop.f32.mrb[0].mxu0
        %1702 = vmatprep.mubr.f32.mxu0 %v1174
        %1703 = vmatmul.mubr.f32.gmra.mrb[0].mxu0 %v1125
        %v1704 = vpop.f32.mrb[0].mxu0
        %v1705 = vadd.f32 %v1568, %v1704
        %v1706 = vpop.f32.mrb[0].mxu0
        %1707 = vmatprep.mubr.f32.mxu0 %v1176
        %1708 = vmatmul.mubr.f32.gmra.mrb[0].mxu0 %v1127
        %v1709 = vpop.f32.mrb[0].mxu0
        %v1710 = vpop.f32.mrb[0].mxu0
        %1711 = vmatprep.mubr.f32.mxu0 %v1178
        %1712 = vmatmul.mubr.f32.gmra.mrb[0].mxu0 %v1129
        %v1713 = vpop.f32.mrb[0].mxu0
        %v1714 = vadd.f32 %v1577, %v1713
        %v1715 = vpop.f32.mrb[0].mxu0
        %1716 = vmatprep.mubr.f32.mxu0 %v1180
        %1717 = vmatmul.mubr.f32.gmra.mrb[0].mxu0 %v1131
        %v1718 = vpop.f32.mrb[0].mxu0
        %v1719 = vpop.f32.mrb[0].mxu0
        %1720 = vmatprep.mubr.f32.mxu0 %v1182
        %1721 = vmatmul.mubr.f32.gmra.mrb[0].mxu0 %v1133
        %v1722 = vpop.f32.mrb[0].mxu0
        %v1723 = vadd.f32 %v1586, %v1722
        %v1724 = vpop.f32.mrb[0].mxu0
        %1725 = vmatprep.mubr.f32.mxu0 %v1184
        %1726 = vmatmul.mubr.f32.gmra.mrb[0].mxu0 %v1135
        %v1727 = vpop.f32.mrb[0].mxu0
        %v1728 = vpop.f32.mrb[0].mxu0
        %1729 = vmatprep.mubr.f32.mxu0 %v1186
        %1730 = vmatmul.mubr.f32.gmra.mrb[0].mxu0 %v1137
        %v1731 = vpop.f32.mrb[0].mxu0
        %v1732 = vadd.f32 %v1595, %v1731
        %v1733 = vpop.f32.mrb[0].mxu0
        %1734 = vmatprep.mubr.f32.mxu0 %v1188
        %1735 = vmatmul.mubr.f32.gmra.mrb[0].mxu0 %v1139
        %v1736 = vpop.f32.mrb[0].mxu0
        %v1737 = vpop.f32.mrb[0].mxu0
        %1738 = vdwg.mxu0
        %1739 = vmatprep.subr.mxu0 0.0
        %1740 = vmatpush1.msra.mxu0 %v1417
        %1741 = vmatprep.subr.mxu0 0.0
        %1742 = vmatpush1.msra.mxu0 %v1418
        %1743 = vmatprep.subr.mxu0 0.0
        %1744 = vmatpush1.msra.mxu0 %v1419
        %1745 = vmatprep.subr.mxu0 0.0
        %1746 = vmatpush1.msra.mxu0 %v1420
        %1747 = vmatprep.subr.mxu0 0.0
        %1748 = vmatpush1.msra.mxu0 %v1421
        %1749 = vmatprep.subr.mxu0 0.0
        %1750 = vmatpush1.msra.mxu0 %v1422
        %1751 = vmatprep.subr.mxu0 0.0
        %1752 = vmatpush1.msra.mxu0 %v1423
        %1753 = vmatprep.subr.mxu0 0.0
        %1754 = vmatpush1.msra.mxu0 %v1424
        %1755 = vmatprep.subr.mxu0 0.0
        %1756 = vmatpush1.msra.mxu0 %v1425
        %1757 = vmatprep.subr.mxu0 0.0
        %1758 = vmatpush1.msra.mxu0 %v1426
        %1759 = vmatprep.subr.mxu0 0.0
        %1760 = vmatpush1.msra.mxu0 %v1427
        %1761 = vmatprep.subr.mxu0 0.0
        %1762 = vmatpush1.msra.mxu0 %v1428
        %1763 = vmatprep.subr.mxu0 0.0
        %1764 = vmatpush1.msra.mxu0 %v1429
        %1765 = vmatprep.subr.mxu0 0.0
        %1766 = vmatpush1.msra.mxu0 %v1430
        %1767 = vmatprep.subr.mxu0 0.0
        %1768 = vmatpush1.msra.mxu0 %v1431
        %1769 = vmatprep.subr.mxu0 0.0
        %1770 = vmatpush1.msra.mxu0 %v1432
        %1771 = vmatprep.subr.mxu0 0.0
        %1772 = vmatpush1.msra.mxu0 %v1433
        %1773 = vmatprep.subr.mxu0 0.0
        %1774 = vmatpush1.msra.mxu0 %v1434
        %1775 = vmatprep.subr.mxu0 0.0
        %1776 = vmatpush1.msra.mxu0 %v1435
        %1777 = vmatprep.subr.mxu0 0.0
        %1778 = vmatpush1.msra.mxu0 %v1436
        %1779 = vmatprep.subr.mxu0 0.0
        %1780 = vmatpush1.msra.mxu0 %v1437
        %1781 = vmatprep.subr.mxu0 0.0
        %1782 = vmatpush1.msra.mxu0 %v1438
        %1783 = vmatprep.subr.mxu0 0.0
        %1784 = vmatpush1.msra.mxu0 %v1439
        %1785 = vmatprep.subr.mxu0 0.0
        %1786 = vmatpush1.msra.mxu0 %v1440
        %1787 = vmatprep.subr.mxu0 0.0
        %1788 = vmatpush1.msra.mxu0 %v1441
        %1789 = vmatprep.subr.mxu0 0.0
        %1790 = vmatpush1.msra.mxu0 %v1442
        %1791 = vmatprep.subr.mxu0 0.0
        %1792 = vmatpush1.msra.mxu0 %v1443
        %1793 = vmatprep.subr.mxu0 0.0
        %1794 = vmatpush1.msra.mxu0 %v1444
        %1795 = vmatprep.subr.mxu0 0.0
        %1796 = vmatpush1.msra.mxu0 %v1445
        %1797 = vmatprep.subr.mxu0 0.0
        %1798 = vmatpush1.msra.mxu0 %v1446
        %1799 = vmatprep.subr.mxu0 0.0
        %1800 = vmatpush1.msra.mxu0 %v1447
        %1801 = vmatprep.subr.mxu0 0.0
        %1802 = vmatpush1.msra.mxu0 %v1448
        %1803 = vmatprep.mubr.f32.mxu0 %v1256
        %1804 = vmatmul.mubr.f32.gmra.mrb[0].mxu0 %v1207
        %v1805 = vpop.f32.mrb[0].mxu0
        %v1806 = vadd.f32 %v1669, %v1805
        %v1807 = vpop.f32.mrb[0].mxu0
        %1808 = vmatprep.mubr.f32.mxu0 %v1258
        %1809 = vmatmul.mubr.f32.gmra.mrb[0].mxu0 %v1209
        %v1810 = vpop.f32.mrb[0].mxu0
        %v1811 = vpop.f32.mrb[0].mxu0
        %1812 = vmatprep.mubr.f32.mxu0 %v1260
        %1813 = vmatmul.mubr.f32.gmra.mrb[0].mxu0 %v1211
        %v1814 = vpop.f32.mrb[0].mxu0
        %v1815 = vadd.f32 %v1678, %v1814
        %v1816 = vpop.f32.mrb[0].mxu0
        %1817 = vmatprep.mubr.f32.mxu0 %v1262
        %1818 = vmatmul.mubr.f32.gmra.mrb[0].mxu0 %v1213
        %v1819 = vpop.f32.mrb[0].mxu0
        %v1820 = vpop.f32.mrb[0].mxu0
        %1821 = vmatprep.mubr.f32.mxu0 %v1264
        %1822 = vmatmul.mubr.f32.gmra.mrb[0].mxu0 %v1215
        %v1823 = vpop.f32.mrb[0].mxu0
        %v1824 = vadd.f32 %v1687, %v1823
        %v1825 = vpop.f32.mrb[0].mxu0
        %1826 = vmatprep.mubr.f32.mxu0 %v1266
        %1827 = vmatmul.mubr.f32.gmra.mrb[0].mxu0 %v1217
        %v1828 = vpop.f32.mrb[0].mxu0
        %v1829 = vpop.f32.mrb[0].mxu0
        %1830 = vmatprep.mubr.f32.mxu0 %v1268
        %1831 = vmatmul.mubr.f32.gmra.mrb[0].mxu0 %v1219
        %v1832 = vpop.f32.mrb[0].mxu0
        %v1833 = vadd.f32 %v1696, %v1832
        %v1834 = vpop.f32.mrb[0].mxu0
        %1835 = vmatprep.mubr.f32.mxu0 %v1270
        %1836 = vmatmul.mubr.f32.gmra.mrb[0].mxu0 %v1221
        %v1837 = vpop.f32.mrb[0].mxu0
        %v1838 = vpop.f32.mrb[0].mxu0
        %1839 = vmatprep.mubr.f32.mxu0 %v1272
        %1840 = vmatmul.mubr.f32.gmra.mrb[0].mxu0 %v1223
        %v1841 = vpop.f32.mrb[0].mxu0
        %v1842 = vadd.f32 %v1705, %v1841
        %v1843 = vpop.f32.mrb[0].mxu0
        %1844 = vmatprep.mubr.f32.mxu0 %v1274
        %1845 = vmatmul.mubr.f32.gmra.mrb[0].mxu0 %v1225
        %v1846 = vpop.f32.mrb[0].mxu0
        %v1847 = vpop.f32.mrb[0].mxu0
        %1848 = vmatprep.mubr.f32.mxu0 %v1276
        %1849 = vmatmul.mubr.f32.gmra.mrb[0].mxu0 %v1227
        %v1850 = vpop.f32.mrb[0].mxu0
        %v1851 = vadd.f32 %v1714, %v1850
        %v1852 = vpop.f32.mrb[0].mxu0
        %1853 = vmatprep.mubr.f32.mxu0 %v1278
        %1854 = vmatmul.mubr.f32.gmra.mrb[0].mxu0 %v1229
        %v1855 = vpop.f32.mrb[0].mxu0
        %v1856 = vpop.f32.mrb[0].mxu0
        %1857 = vmatprep.mubr.f32.mxu0 %v1280
        %1858 = vmatmul.mubr.f32.gmra.mrb[0].mxu0 %v1231
        %v1859 = vpop.f32.mrb[0].mxu0
        %v1860 = vadd.f32 %v1723, %v1859
        %v1861 = vpop.f32.mrb[0].mxu0
        %1862 = vmatprep.mubr.f32.mxu0 %v1282
        %1863 = vmatmul.mubr.f32.gmra.mrb[0].mxu0 %v1233
        %v1864 = vpop.f32.mrb[0].mxu0
        %v1865 = vpop.f32.mrb[0].mxu0
        %1866 = vmatprep.mubr.f32.mxu0 %v1284
        %1867 = vmatmul.mubr.f32.gmra.mrb[0].mxu0 %v1235
        %v1868 = vpop.f32.mrb[0].mxu0
        %v1869 = vadd.f32 %v1732, %v1868
        %v1870 = vpop.f32.mrb[0].mxu0
        %1871 = vmatprep.mubr.f32.mxu0 %v1286
        %1872 = vmatmul.mubr.f32.gmra.mrb[0].mxu0 %v1237
        %v1873 = vpop.f32.mrb[0].mxu0
        %v1874 = vpop.f32.mrb[0].mxu0
        %1875 = vdwg.mxu0
        %1876 = vmatprep.subr.mxu0 0.0
        %1877 = vmatpush1.msra.mxu0 %v1449
        %1878 = vmatprep.subr.mxu0 0.0
        %1879 = vmatpush1.msra.mxu0 %v1450
        %1880 = vmatprep.subr.mxu0 0.0
        %1881 = vmatpush1.msra.mxu0 %v1451
        %1882 = vmatprep.subr.mxu0 0.0
        %1883 = vmatpush1.msra.mxu0 %v1452
        %1884 = vmatprep.subr.mxu0 0.0
        %1885 = vmatpush1.msra.mxu0 %v1453
        %1886 = vmatprep.subr.mxu0 0.0
        %1887 = vmatpush1.msra.mxu0 %v1454
        %1888 = vmatprep.subr.mxu0 0.0
        %1889 = vmatpush1.msra.mxu0 %v1455
        %1890 = vmatprep.subr.mxu0 0.0
        %1891 = vmatpush1.msra.mxu0 %v1456
        %1892 = vmatprep.subr.mxu0 0.0
        %1893 = vmatpush1.msra.mxu0 %v1457
        %1894 = vmatprep.subr.mxu0 0.0
        %1895 = vmatpush1.msra.mxu0 %v1458
        %1896 = vmatprep.subr.mxu0 0.0
        %1897 = vmatpush1.msra.mxu0 %v1459
        %1898 = vmatprep.subr.mxu0 0.0
        %1899 = vmatpush1.msra.mxu0 %v1460
        %1900 = vmatprep.subr.mxu0 0.0
        %1901 = vmatpush1.msra.mxu0 %v1461
        %1902 = vmatprep.subr.mxu0 0.0
        %1903 = vmatpush1.msra.mxu0 %v1462
        %1904 = vmatprep.subr.mxu0 0.0
        %1905 = vmatpush1.msra.mxu0 %v1463
        %1906 = vmatprep.subr.mxu0 0.0
        %1907 = vmatpush1.msra.mxu0 %v1464
        %1908 = vmatprep.subr.mxu0 0.0
        %1909 = vmatpush1.msra.mxu0 0.0
        %1910 = vmatprep.subr.mxu0 0.0
        %1911 = vmatpush1.msra.mxu0 0.0
        %1912 = vmatprep.subr.mxu0 0.0
        %1913 = vmatpush1.msra.mxu0 0.0
        %1914 = vmatprep.subr.mxu0 0.0
        %1915 = vmatpush1.msra.mxu0 0.0
        %1916 = vmatprep.subr.mxu0 0.0
        %1917 = vmatpush1.msra.mxu0 0.0
        %1918 = vmatprep.subr.mxu0 0.0
        %1919 = vmatpush1.msra.mxu0 0.0
        %1920 = vmatprep.subr.mxu0 0.0
        %1921 = vmatpush1.msra.mxu0 0.0
        %1922 = vmatprep.subr.mxu0 0.0
        %1923 = vmatpush1.msra.mxu0 0.0
        %1924 = vmatprep.subr.mxu0 0.0
        %1925 = vmatpush1.msra.mxu0 0.0
        %1926 = vmatprep.subr.mxu0 0.0
        %1927 = vmatpush1.msra.mxu0 0.0
        %1928 = vmatprep.subr.mxu0 0.0
        %1929 = vmatpush1.msra.mxu0 0.0
        %1930 = vmatprep.subr.mxu0 0.0
        %1931 = vmatpush1.msra.mxu0 0.0
        %1932 = vmatprep.subr.mxu0 0.0
        %1933 = vmatpush1.msra.mxu0 0.0
        %1934 = vmatprep.subr.mxu0 0.0
        %1935 = vmatpush1.msra.mxu0 0.0
        %1936 = vmatprep.subr.mxu0 0.0
        %1937 = vmatpush1.msra.mxu0 0.0
        %1938 = vmatprep.subr.mxu0 0.0
        %1939 = vmatpush1.msra.mxu0 0.0
        %1940 = vmatprep.mubr.f32.mxu0 0.0
        %1941 = vmatmul.mubr.f32.gmra.mrb[0].mxu0 %v1305
        %v1942 = vpop.f32.mrb[0].mxu0
        %v1943 = vadd.f32 %v1806, %v1942
        %v1944 = vpop.f32.mrb[0].mxu0
        %1945 = vmatprep.mubr.f32.mxu0 0.0
        %1946 = vmatmul.mubr.f32.gmra.mrb[0].mxu0 %v1307
        %v1947 = vpop.f32.mrb[0].mxu0
        %v1948 = vpop.f32.mrb[0].mxu0
        %1949 = vmatprep.mubr.f32.mxu0 0.0
        %1950 = vmatmul.mubr.f32.gmra.mrb[0].mxu0 %v1309
        %v1951 = vpop.f32.mrb[0].mxu0
        %v1952 = vadd.f32 %v1815, %v1951
        %v1953 = vpop.f32.mrb[0].mxu0
        %1954 = vmatprep.mubr.f32.mxu0 0.0
        %1955 = vmatmul.mubr.f32.gmra.mrb[0].mxu0 %v1311
        %v1956 = vpop.f32.mrb[0].mxu0
        %v1957 = vpop.f32.mrb[0].mxu0
        %1958 = vmatprep.mubr.f32.mxu0 0.0
        %1959 = vmatmul.mubr.f32.gmra.mrb[0].mxu0 %v1313
        %v1960 = vpop.f32.mrb[0].mxu0
        %v1961 = vadd.f32 %v1824, %v1960
        %v1962 = vpop.f32.mrb[0].mxu0
        %1963 = vmatprep.mubr.f32.mxu0 0.0
        %1964 = vmatmul.mubr.f32.gmra.mrb[0].mxu0 %v1315
        %v1965 = vpop.f32.mrb[0].mxu0
        %v1966 = vpop.f32.mrb[0].mxu0
        %1967 = vmatprep.mubr.f32.mxu0 0.0
        %1968 = vmatmul.mubr.f32.gmra.mrb[0].mxu0 %v1317
        %v1969 = vpop.f32.mrb[0].mxu0
        %v1970 = vadd.f32 %v1833, %v1969
        %v1971 = vpop.f32.mrb[0].mxu0
        %1972 = vmatprep.mubr.f32.mxu0 0.0
        %1973 = vmatmul.mubr.f32.gmra.mrb[0].mxu0 %v1319
        %v1974 = vpop.f32.mrb[0].mxu0
        %v1975 = vpop.f32.mrb[0].mxu0
        %1976 = vmatprep.mubr.f32.mxu0 0.0
        %1977 = vmatmul.mubr.f32.gmra.mrb[0].mxu0 %v1321
        %v1978 = vpop.f32.mrb[0].mxu0
        %v1979 = vadd.f32 %v1842, %v1978
        %v1980 = vpop.f32.mrb[0].mxu0
        %1981 = vmatprep.mubr.f32.mxu0 0.0
        %1982 = vmatmul.mubr.f32.gmra.mrb[0].mxu0 %v1323
        %v1983 = vpop.f32.mrb[0].mxu0
        %v1984 = vpop.f32.mrb[0].mxu0
        %1985 = vmatprep.mubr.f32.mxu0 0.0
        %1986 = vmatmul.mubr.f32.gmra.mrb[0].mxu0 %v1325
        %v1987 = vpop.f32.mrb[0].mxu0
        %v1988 = vadd.f32 %v1851, %v1987
        %v1989 = vpop.f32.mrb[0].mxu0
        %1990 = vmatprep.mubr.f32.mxu0 0.0
        %1991 = vmatmul.mubr.f32.gmra.mrb[0].mxu0 %v1327
        %v1992 = vpop.f32.mrb[0].mxu0
        %v1993 = vpop.f32.mrb[0].mxu0
        %1994 = vmatprep.mubr.f32.mxu0 0.0
        %1995 = vmatmul.mubr.f32.gmra.mrb[0].mxu0 %v1329
        %v1996 = vpop.f32.mrb[0].mxu0
        %v1997 = vadd.f32 %v1860, %v1996
        %v1998 = vpop.f32.mrb[0].mxu0
        %1999 = vmatprep.mubr.f32.mxu0 0.0
        %2000 = vmatmul.mubr.f32.gmra.mrb[0].mxu0 %v1331
        %v2001 = vpop.f32.mrb[0].mxu0
        %v2002 = vpop.f32.mrb[0].mxu0
        %2003 = vmatprep.mubr.f32.mxu0 0.0
        %2004 = vmatmul.mubr.f32.gmra.mrb[0].mxu0 %v1333
        %v2005 = vpop.f32.mrb[0].mxu0
        %v2006 = vadd.f32 %v1869, %v2005
        %v2007 = vpop.f32.mrb[0].mxu0
        %2008 = vmatprep.mubr.f32.mxu0 0.0
        %2009 = vmatmul.mubr.f32.gmra.mrb[0].mxu0 %v1335
        %v2010 = vpop.f32.mrb[0].mxu0
        %v2011 = vpop.f32.mrb[0].mxu0
        %2012 = vdwg.mxu0
        %2013 = vmatprep.subr.mxu0 0.0
        %2014 = vmatpush1.msra.mxu0 %v911
        %2015 = vmatprep.subr.mxu0 0.0
        %2016 = vmatpush1.msra.mxu0 %v912
        %2017 = vmatprep.subr.mxu0 0.0
        %2018 = vmatpush1.msra.mxu0 %v913
        %2019 = vmatprep.subr.mxu0 0.0
        %2020 = vmatpush1.msra.mxu0 %v914
        %2021 = vmatprep.subr.mxu0 0.0
        %2022 = vmatpush1.msra.mxu0 %v915
        %2023 = vmatprep.subr.mxu0 0.0
        %2024 = vmatpush1.msra.mxu0 %v916
        %2025 = vmatprep.subr.mxu0 0.0
        %2026 = vmatpush1.msra.mxu0 %v917
        %2027 = vmatprep.subr.mxu0 0.0
        %2028 = vmatpush1.msra.mxu0 %v918
        %2029 = vmatprep.subr.mxu0 0.0
        %2030 = vmatpush1.msra.mxu0 %v919
        %2031 = vmatprep.subr.mxu0 0.0
        %2032 = vmatpush1.msra.mxu0 %v920
        %2033 = vmatprep.subr.mxu0 0.0
        %2034 = vmatpush1.msra.mxu0 %v921
        %2035 = vmatprep.subr.mxu0 0.0
        %2036 = vmatpush1.msra.mxu0 %v922
        %2037 = vmatprep.subr.mxu0 0.0
        %2038 = vmatpush1.msra.mxu0 %v923
        %2039 = vmatprep.subr.mxu0 0.0
        %2040 = vmatpush1.msra.mxu0 %v924
        %2041 = vmatprep.subr.mxu0 0.0
        %2042 = vmatpush1.msra.mxu0 %v925
        %2043 = vmatprep.subr.mxu0 0.0
        %2044 = vmatpush1.msra.mxu0 %v926
        %2045 = vmatprep.subr.mxu0 0.0
        %2046 = vmatpush1.msra.mxu0 %v927
        %2047 = vmatprep.subr.mxu0 0.0
        %2048 = vmatpush1.msra.mxu0 %v928
        %2049 = vmatprep.subr.mxu0 0.0
        %2050 = vmatpush1.msra.mxu0 %v929
        %2051 = vmatprep.subr.mxu0 0.0
        %2052 = vmatpush1.msra.mxu0 %v930
        %2053 = vmatprep.subr.mxu0 0.0
        %2054 = vmatpush1.msra.mxu0 %v931
        %2055 = vmatprep.subr.mxu0 0.0
        %2056 = vmatpush1.msra.mxu0 %v932
        %2057 = vmatprep.subr.mxu0 0.0
        %2058 = vmatpush1.msra.mxu0 %v933
        %2059 = vmatprep.subr.mxu0 0.0
        %2060 = vmatpush1.msra.mxu0 %v934
        %2061 = vmatprep.subr.mxu0 0.0
        %2062 = vmatpush1.msra.mxu0 %v935
        %2063 = vmatprep.subr.mxu0 0.0
        %2064 = vmatpush1.msra.mxu0 %v936
        %2065 = vmatprep.subr.mxu0 0.0
        %2066 = vmatpush1.msra.mxu0 %v937
        %2067 = vmatprep.subr.mxu0 0.0
        %2068 = vmatpush1.msra.mxu0 %v938
        %2069 = vmatprep.subr.mxu0 0.0
        %2070 = vmatpush1.msra.mxu0 %v939
        %2071 = vmatprep.subr.mxu0 0.0
        %2072 = vmatpush1.msra.mxu0 %v940
        %2073 = vmatprep.subr.mxu0 0.0
        %2074 = vmatpush1.msra.mxu0 %v941
        %2075 = vmatprep.subr.mxu0 0.0
        %2076 = vmatpush1.msra.mxu0 %v942
        %2077 = vmatprep.mubr.f32.mxu0 %v614
        %2078 = vmatmul.mubr.f32.gmra.mrb[0].mxu0 %v577
        %v2079 = vpop.f32.mrb[0].mxu0
        %v2080 = vadd.f32 %v1943, %v2079
        %v2081 = vpop.f32.mrb[0].mxu0
        %2082 = vmatprep.mubr.f32.mxu0 %v616
        %2083 = vmatmul.mubr.f32.gmra.mrb[0].mxu0 %v578
        %v2084 = vpop.f32.mrb[0].mxu0
        %v2085 = vpop.f32.mrb[0].mxu0
        %2086 = vmatprep.mubr.f32.mxu0 %v618
        %2087 = vmatmul.mubr.f32.gmra.mrb[0].mxu0 %v579
        %v2088 = vpop.f32.mrb[0].mxu0
        %v2089 = vadd.f32 %v1952, %v2088
        %v2090 = vpop.f32.mrb[0].mxu0
        %2091 = vmatprep.mubr.f32.mxu0 %v620
        %2092 = vmatmul.mubr.f32.gmra.mrb[0].mxu0 %v580
        %v2093 = vpop.f32.mrb[0].mxu0
        %v2094 = vpop.f32.mrb[0].mxu0
        %2095 = vmatprep.mubr.f32.mxu0 %v622
        %2096 = vmatmul.mubr.f32.gmra.mrb[0].mxu0 %v581
        %v2097 = vpop.f32.mrb[0].mxu0
        %v2098 = vadd.f32 %v1961, %v2097
        %v2099 = vpop.f32.mrb[0].mxu0
        %2100 = vmatprep.mubr.f32.mxu0 %v624
        %2101 = vmatmul.mubr.f32.gmra.mrb[0].mxu0 %v582
        %v2102 = vpop.f32.mrb[0].mxu0
        %v2103 = vpop.f32.mrb[0].mxu0
        %2104 = vmatprep.mubr.f32.mxu0 %v626
        %2105 = vmatmul.mubr.f32.gmra.mrb[0].mxu0 %v583
        %v2106 = vpop.f32.mrb[0].mxu0
        %v2107 = vadd.f32 %v1970, %v2106
        %v2108 = vpop.f32.mrb[0].mxu0
        %2109 = vmatprep.mubr.f32.mxu0 %v628
        %2110 = vmatmul.mubr.f32.gmra.mrb[0].mxu0 %v584
        %v2111 = vpop.f32.mrb[0].mxu0
        %v2112 = vpop.f32.mrb[0].mxu0
        %2113 = vmatprep.mubr.f32.mxu0 %v630
        %2114 = vmatmul.mubr.f32.gmra.mrb[0].mxu0 %v585
        %v2115 = vpop.f32.mrb[0].mxu0
        %v2116 = vadd.f32 %v1979, %v2115
        %v2117 = vpop.f32.mrb[0].mxu0
        %2118 = vmatprep.mubr.f32.mxu0 %v632
        %2119 = vmatmul.mubr.f32.gmra.mrb[0].mxu0 %v586
        %v2120 = vpop.f32.mrb[0].mxu0
        %v2121 = vpop.f32.mrb[0].mxu0
        %2122 = vmatprep.mubr.f32.mxu0 %v634
        %2123 = vmatmul.mubr.f32.gmra.mrb[0].mxu0 %v587
        %v2124 = vpop.f32.mrb[0].mxu0
        %v2125 = vadd.f32 %v1988, %v2124
        %v2126 = vpop.f32.mrb[0].mxu0
        %2127 = vmatprep.mubr.f32.mxu0 %v636
        %2128 = vmatmul.mubr.f32.gmra.mrb[0].mxu0 %v588
        %v2129 = vpop.f32.mrb[0].mxu0
        %v2130 = vpop.f32.mrb[0].mxu0
        %2131 = vmatprep.mubr.f32.mxu0 %v638
        %2132 = vmatmul.mubr.f32.gmra.mrb[0].mxu0 %v589
        %v2133 = vpop.f32.mrb[0].mxu0
        %v2134 = vadd.f32 %v1997, %v2133
        %v2135 = vpop.f32.mrb[0].mxu0
        %2136 = vmatprep.mubr.f32.mxu0 %v640
        %2137 = vmatmul.mubr.f32.gmra.mrb[0].mxu0 %v590
        %v2138 = vpop.f32.mrb[0].mxu0
        %v2139 = vpop.f32.mrb[0].mxu0
        %2140 = vmatprep.mubr.f32.mxu0 %v642
        %2141 = vmatmul.mubr.f32.gmra.mrb[0].mxu0 %v591
        %v2142 = vpop.f32.mrb[0].mxu0
        %v2143 = vadd.f32 %v2006, %v2142
        %v2144 = vpop.f32.mrb[0].mxu0
        %2145 = vmatprep.mubr.f32.mxu0 %v644
        %2146 = vmatmul.mubr.f32.gmra.mrb[0].mxu0 %v592
        %v2147 = vpop.f32.mrb[0].mxu0
        %v2148 = vpop.f32.mrb[0].mxu0
        %2149 = vdwg.mxu0
        %2150 = vmatprep.subr.mxu0 0.0
        %2151 = vmatpush1.msra.mxu0 %v943
        %2152 = vmatprep.subr.mxu0 0.0
        %2153 = vmatpush1.msra.mxu0 %v944
        %2154 = vmatprep.subr.mxu0 0.0
        %2155 = vmatpush1.msra.mxu0 %v945
        %2156 = vmatprep.subr.mxu0 0.0
        %2157 = vmatpush1.msra.mxu0 %v946
        %2158 = vmatprep.subr.mxu0 0.0
        %2159 = vmatpush1.msra.mxu0 %v947
        %2160 = vmatprep.subr.mxu0 0.0
        %2161 = vmatpush1.msra.mxu0 %v948
        %2162 = vmatprep.subr.mxu0 0.0
        %2163 = vmatpush1.msra.mxu0 %v949
        %2164 = vmatprep.subr.mxu0 0.0
        %2165 = vmatpush1.msra.mxu0 %v950
        %2166 = vmatprep.subr.mxu0 0.0
        %2167 = vmatpush1.msra.mxu0 %v951
        %2168 = vmatprep.subr.mxu0 0.0
        %2169 = vmatpush1.msra.mxu0 %v952
        %2170 = vmatprep.subr.mxu0 0.0
        %2171 = vmatpush1.msra.mxu0 %v953
        %2172 = vmatprep.subr.mxu0 0.0
        %2173 = vmatpush1.msra.mxu0 %v954
        %2174 = vmatprep.subr.mxu0 0.0
        %2175 = vmatpush1.msra.mxu0 %v955
        %2176 = vmatprep.subr.mxu0 0.0
        %2177 = vmatpush1.msra.mxu0 %v956
        %2178 = vmatprep.subr.mxu0 0.0
        %2179 = vmatpush1.msra.mxu0 %v957
        %2180 = vmatprep.subr.mxu0 0.0
        %2181 = vmatpush1.msra.mxu0 %v958
        %2182 = vmatprep.subr.mxu0 0.0
        %2183 = vmatpush1.msra.mxu0 %v959
        %2184 = vmatprep.subr.mxu0 0.0
        %2185 = vmatpush1.msra.mxu0 %v960
        %2186 = vmatprep.subr.mxu0 0.0
        %2187 = vmatpush1.msra.mxu0 %v961
        %2188 = vmatprep.subr.mxu0 0.0
        %2189 = vmatpush1.msra.mxu0 %v962
        %2190 = vmatprep.subr.mxu0 0.0
        %2191 = vmatpush1.msra.mxu0 %v963
        %2192 = vmatprep.subr.mxu0 0.0
        %2193 = vmatpush1.msra.mxu0 %v964
        %2194 = vmatprep.subr.mxu0 0.0
        %2195 = vmatpush1.msra.mxu0 %v965
        %2196 = vmatprep.subr.mxu0 0.0
        %2197 = vmatpush1.msra.mxu0 %v966
        %2198 = vmatprep.subr.mxu0 0.0
        %2199 = vmatpush1.msra.mxu0 %v967
        %2200 = vmatprep.subr.mxu0 0.0
        %2201 = vmatpush1.msra.mxu0 %v968
        %2202 = vmatprep.subr.mxu0 0.0
        %2203 = vmatpush1.msra.mxu0 %v969
        %2204 = vmatprep.subr.mxu0 0.0
        %2205 = vmatpush1.msra.mxu0 %v970
        %2206 = vmatprep.subr.mxu0 0.0
        %2207 = vmatpush1.msra.mxu0 %v971
        %2208 = vmatprep.subr.mxu0 0.0
        %2209 = vmatpush1.msra.mxu0 %v972
        %2210 = vmatprep.subr.mxu0 0.0
        %2211 = vmatpush1.msra.mxu0 %v973
        %2212 = vmatprep.subr.mxu0 0.0
        %2213 = vmatpush1.msra.mxu0 %v974
        %2214 = vmatprep.mubr.f32.mxu0 %v714
        %2215 = vmatmul.mubr.f32.gmra.mrb[0].mxu0 %v664
        %v2216 = vpop.f32.mrb[0].mxu0
        %v2217 = vadd.f32 %v2080, %v2216
        %v2218 = vpop.f32.mrb[0].mxu0
        %2219 = vmatprep.mubr.f32.mxu0 %v716
        %2220 = vmatmul.mubr.f32.gmra.mrb[0].mxu0 %v666
        %v2221 = vpop.f32.mrb[0].mxu0
        %v2222 = vpop.f32.mrb[0].mxu0
        %2223 = vmatprep.mubr.f32.mxu0 %v718
        %2224 = vmatmul.mubr.f32.gmra.mrb[0].mxu0 %v668
        %v2225 = vpop.f32.mrb[0].mxu0
        %v2226 = vadd.f32 %v2089, %v2225
        %v2227 = vpop.f32.mrb[0].mxu0
        %2228 = vmatprep.mubr.f32.mxu0 %v720
        %2229 = vmatmul.mubr.f32.gmra.mrb[0].mxu0 %v670
        %v2230 = vpop.f32.mrb[0].mxu0
        %v2231 = vpop.f32.mrb[0].mxu0
        %2232 = vmatprep.mubr.f32.mxu0 %v722
        %2233 = vmatmul.mubr.f32.gmra.mrb[0].mxu0 %v672
        %v2234 = vpop.f32.mrb[0].mxu0
        %v2235 = vadd.f32 %v2098, %v2234
        %v2236 = vpop.f32.mrb[0].mxu0
        %2237 = vmatprep.mubr.f32.mxu0 %v724
        %2238 = vmatmul.mubr.f32.gmra.mrb[0].mxu0 %v674
        %v2239 = vpop.f32.mrb[0].mxu0
        %v2240 = vpop.f32.mrb[0].mxu0
        %2241 = vmatprep.mubr.f32.mxu0 %v726
        %2242 = vmatmul.mubr.f32.gmra.mrb[0].mxu0 %v676
        %v2243 = vpop.f32.mrb[0].mxu0
        %v2244 = vadd.f32 %v2107, %v2243
        %v2245 = vpop.f32.mrb[0].mxu0
        %2246 = vmatprep.mubr.f32.mxu0 %v728
        %2247 = vmatmul.mubr.f32.gmra.mrb[0].mxu0 %v678
        %v2248 = vpop.f32.mrb[0].mxu0
        %v2249 = vpop.f32.mrb[0].mxu0
        %2250 = vmatprep.mubr.f32.mxu0 %v730
        %2251 = vmatmul.mubr.f32.gmra.mrb[0].mxu0 %v680
        %v2252 = vpop.f32.mrb[0].mxu0
        %v2253 = vadd.f32 %v2116, %v2252
        %v2254 = vpop.f32.mrb[0].mxu0
        %2255 = vmatprep.mubr.f32.mxu0 %v732
        %2256 = vmatmul.mubr.f32.gmra.mrb[0].mxu0 %v682
        %v2257 = vpop.f32.mrb[0].mxu0
        %v2258 = vpop.f32.mrb[0].mxu0
        %2259 = vmatprep.mubr.f32.mxu0 %v734
        %2260 = vmatmul.mubr.f32.gmra.mrb[0].mxu0 %v684
        %v2261 = vpop.f32.mrb[0].mxu0
        %v2262 = vadd.f32 %v2125, %v2261
        %v2263 = vpop.f32.mrb[0].mxu0
        %2264 = vmatprep.mubr.f32.mxu0 %v736
        %2265 = vmatmul.mubr.f32.gmra.mrb[0].mxu0 %v686
        %v2266 = vpop.f32.mrb[0].mxu0
        %v2267 = vpop.f32.mrb[0].mxu0
        %2268 = vmatprep.mubr.f32.mxu0 %v738
        %2269 = vmatmul.mubr.f32.gmra.mrb[0].mxu0 %v688
        %v2270 = vpop.f32.mrb[0].mxu0
        %v2271 = vadd.f32 %v2134, %v2270
        %v2272 = vpop.f32.mrb[0].mxu0
        %2273 = vmatprep.mubr.f32.mxu0 %v740
        %2274 = vmatmul.mubr.f32.gmra.mrb[0].mxu0 %v690
        %v2275 = vpop.f32.mrb[0].mxu0
        %v2276 = vpop.f32.mrb[0].mxu0
        %2277 = vmatprep.mubr.f32.mxu0 %v742
        %2278 = vmatmul.mubr.f32.gmra.mrb[0].mxu0 %v692
        %v2279 = vpop.f32.mrb[0].mxu0
        %v2280 = vadd.f32 %v2143, %v2279
        %v2281 = vpop.f32.mrb[0].mxu0
        %2282 = vmatprep.mubr.f32.mxu0 %v744
        %2283 = vmatmul.mubr.f32.gmra.mrb[0].mxu0 %v694
        %v2284 = vpop.f32.mrb[0].mxu0
        %v2285 = vpop.f32.mrb[0].mxu0
        %2286 = vdwg.mxu0
        %2287 = vmatprep.subr.mxu0 0.0
        %2288 = vmatpush1.msra.mxu0 %v975
        %2289 = vmatprep.subr.mxu0 0.0
        %2290 = vmatpush1.msra.mxu0 %v976
        %2291 = vmatprep.subr.mxu0 0.0
        %2292 = vmatpush1.msra.mxu0 %v977
        %2293 = vmatprep.subr.mxu0 0.0
        %2294 = vmatpush1.msra.mxu0 %v978
        %2295 = vmatprep.subr.mxu0 0.0
        %2296 = vmatpush1.msra.mxu0 %v979
        %2297 = vmatprep.subr.mxu0 0.0
        %2298 = vmatpush1.msra.mxu0 %v980
        %2299 = vmatprep.subr.mxu0 0.0
        %2300 = vmatpush1.msra.mxu0 %v981
        %2301 = vmatprep.subr.mxu0 0.0
        %2302 = vmatpush1.msra.mxu0 %v982
        %2303 = vmatprep.subr.mxu0 0.0
        %2304 = vmatpush1.msra.mxu0 %v983
        %2305 = vmatprep.subr.mxu0 0.0
        %2306 = vmatpush1.msra.mxu0 %v984
        %2307 = vmatprep.subr.mxu0 0.0
        %2308 = vmatpush1.msra.mxu0 %v985
        %2309 = vmatprep.subr.mxu0 0.0
        %2310 = vmatpush1.msra.mxu0 %v986
        %2311 = vmatprep.subr.mxu0 0.0
        %2312 = vmatpush1.msra.mxu0 %v987
        %2313 = vmatprep.subr.mxu0 0.0
        %2314 = vmatpush1.msra.mxu0 %v988
        %2315 = vmatprep.subr.mxu0 0.0
        %2316 = vmatpush1.msra.mxu0 %v989
        %2317 = vmatprep.subr.mxu0 0.0
        %2318 = vmatpush1.msra.mxu0 %v990
        %2319 = vmatprep.subr.mxu0 0.0
        %2320 = vmatpush1.msra.mxu0 %v991
        %2321 = vmatprep.subr.mxu0 0.0
        %2322 = vmatpush1.msra.mxu0 %v992
        %2323 = vmatprep.subr.mxu0 0.0
        %2324 = vmatpush1.msra.mxu0 %v993
        %2325 = vmatprep.subr.mxu0 0.0
        %2326 = vmatpush1.msra.mxu0 %v994
        %2327 = vmatprep.subr.mxu0 0.0
        %2328 = vmatpush1.msra.mxu0 %v995
        %2329 = vmatprep.subr.mxu0 0.0
        %2330 = vmatpush1.msra.mxu0 %v996
        %2331 = vmatprep.subr.mxu0 0.0
        %2332 = vmatpush1.msra.mxu0 %v997
        %2333 = vmatprep.subr.mxu0 0.0
        %2334 = vmatpush1.msra.mxu0 %v998
        %2335 = vmatprep.subr.mxu0 0.0
        %2336 = vmatpush1.msra.mxu0 %v999
        %2337 = vmatprep.subr.mxu0 0.0
        %2338 = vmatpush1.msra.mxu0 %v1000
        %2339 = vmatprep.subr.mxu0 0.0
        %2340 = vmatpush1.msra.mxu0 %v1001
        %2341 = vmatprep.subr.mxu0 0.0
        %2342 = vmatpush1.msra.mxu0 %v1002
        %2343 = vmatprep.subr.mxu0 0.0
        %2344 = vmatpush1.msra.mxu0 %v1003
        %2345 = vmatprep.subr.mxu0 0.0
        %2346 = vmatpush1.msra.mxu0 %v1004
        %2347 = vmatprep.subr.mxu0 0.0
        %2348 = vmatpush1.msra.mxu0 %v1005
        %2349 = vmatprep.subr.mxu0 0.0
        %2350 = vmatpush1.msra.mxu0 %v1006
        %2351 = vmatprep.mubr.f32.mxu0 %v814
        %2352 = vmatmul.mubr.f32.gmra.mrb[0].mxu0 %v764
        %v2353 = vpop.f32.mrb[0].mxu0
        %v2354 = vadd.f32 %v2217, %v2353
        %v2355 = vpop.f32.mrb[0].mxu0
        %2356 = vmatprep.mubr.f32.mxu0 %v816
        %2357 = vmatmul.mubr.f32.gmra.mrb[0].mxu0 %v766
        %v2358 = vpop.f32.mrb[0].mxu0
        %v2359 = vpop.f32.mrb[0].mxu0
        %2360 = vmatprep.mubr.f32.mxu0 %v818
        %2361 = vmatmul.mubr.f32.gmra.mrb[0].mxu0 %v768
        %v2362 = vpop.f32.mrb[0].mxu0
        %v2363 = vadd.f32 %v2226, %v2362
        %v2364 = vpop.f32.mrb[0].mxu0
        %2365 = vmatprep.mubr.f32.mxu0 %v820
        %2366 = vmatmul.mubr.f32.gmra.mrb[0].mxu0 %v770
        %v2367 = vpop.f32.mrb[0].mxu0
        %v2368 = vpop.f32.mrb[0].mxu0
        %2369 = vmatprep.mubr.f32.mxu0 %v822
        %2370 = vmatmul.mubr.f32.gmra.mrb[0].mxu0 %v772
        %v2371 = vpop.f32.mrb[0].mxu0
        %v2372 = vadd.f32 %v2235, %v2371
        %v2373 = vpop.f32.mrb[0].mxu0
        %2374 = vmatprep.mubr.f32.mxu0 %v824
        %2375 = vmatmul.mubr.f32.gmra.mrb[0].mxu0 %v774
        %v2376 = vpop.f32.mrb[0].mxu0
        %v2377 = vpop.f32.mrb[0].mxu0
        %2378 = vmatprep.mubr.f32.mxu0 %v826
        %2379 = vmatmul.mubr.f32.gmra.mrb[0].mxu0 %v776
        %v2380 = vpop.f32.mrb[0].mxu0
        %v2381 = vadd.f32 %v2244, %v2380
        %v2382 = vpop.f32.mrb[0].mxu0
        %2383 = vmatprep.mubr.f32.mxu0 %v828
        %2384 = vmatmul.mubr.f32.gmra.mrb[0].mxu0 %v778
        %v2385 = vpop.f32.mrb[0].mxu0
        %v2386 = vpop.f32.mrb[0].mxu0
        %2387 = vmatprep.mubr.f32.mxu0 %v830
        %2388 = vmatmul.mubr.f32.gmra.mrb[0].mxu0 %v780
        %v2389 = vpop.f32.mrb[0].mxu0
        %v2390 = vadd.f32 %v2253, %v2389
        %v2391 = vpop.f32.mrb[0].mxu0
        %2392 = vmatprep.mubr.f32.mxu0 %v832
        %2393 = vmatmul.mubr.f32.gmra.mrb[0].mxu0 %v782
        %v2394 = vpop.f32.mrb[0].mxu0
        %v2395 = vpop.f32.mrb[0].mxu0
        %2396 = vmatprep.mubr.f32.mxu0 %v834
        %2397 = vmatmul.mubr.f32.gmra.mrb[0].mxu0 %v784
        %v2398 = vpop.f32.mrb[0].mxu0
        %v2399 = vadd.f32 %v2262, %v2398
        %v2400 = vpop.f32.mrb[0].mxu0
        %2401 = vmatprep.mubr.f32.mxu0 %v836
        %2402 = vmatmul.mubr.f32.gmra.mrb[0].mxu0 %v786
        %v2403 = vpop.f32.mrb[0].mxu0
        %v2404 = vpop.f32.mrb[0].mxu0
        %2405 = vmatprep.mubr.f32.mxu0 %v838
        %2406 = vmatmul.mubr.f32.gmra.mrb[0].mxu0 %v788
        %v2407 = vpop.f32.mrb[0].mxu0
        %v2408 = vadd.f32 %v2271, %v2407
        %v2409 = vpop.f32.mrb[0].mxu0
        %2410 = vmatprep.mubr.f32.mxu0 %v840
        %2411 = vmatmul.mubr.f32.gmra.mrb[0].mxu0 %v790
        %v2412 = vpop.f32.mrb[0].mxu0
        %v2413 = vpop.f32.mrb[0].mxu0
        %2414 = vmatprep.mubr.f32.mxu0 %v842
        %2415 = vmatmul.mubr.f32.gmra.mrb[0].mxu0 %v792
        %v2416 = vpop.f32.mrb[0].mxu0
        %v2417 = vadd.f32 %v2280, %v2416
        %v2418 = vpop.f32.mrb[0].mxu0
        %2419 = vmatprep.mubr.f32.mxu0 %v844
        %2420 = vmatmul.mubr.f32.gmra.mrb[0].mxu0 %v794
        %v2421 = vpop.f32.mrb[0].mxu0
        %v2422 = vpop.f32.mrb[0].mxu0
        %2423 = vdwg.mxu0
        %2424 = vmatprep.subr.mxu0 0.0
        %2425 = vmatpush1.msra.mxu0 %v1007
        %2426 = vmatprep.subr.mxu0 0.0
        %2427 = vmatpush1.msra.mxu0 %v1008
        %2428 = vmatprep.subr.mxu0 0.0
        %2429 = vmatpush1.msra.mxu0 %v1009
        %2430 = vmatprep.subr.mxu0 0.0
        %2431 = vmatpush1.msra.mxu0 %v1010
        %2432 = vmatprep.subr.mxu0 0.0
        %2433 = vmatpush1.msra.mxu0 %v1011
        %2434 = vmatprep.subr.mxu0 0.0
        %2435 = vmatpush1.msra.mxu0 %v1012
        %2436 = vmatprep.subr.mxu0 0.0
        %2437 = vmatpush1.msra.mxu0 %v1013
        %2438 = vmatprep.subr.mxu0 0.0
        %2439 = vmatpush1.msra.mxu0 %v1014
        %2440 = vmatprep.subr.mxu0 0.0
        %2441 = vmatpush1.msra.mxu0 %v1015
        %2442 = vmatprep.subr.mxu0 0.0
        %2443 = vmatpush1.msra.mxu0 %v1016
        %2444 = vmatprep.subr.mxu0 0.0
        %2445 = vmatpush1.msra.mxu0 %v1017
        %2446 = vmatprep.subr.mxu0 0.0
        %2447 = vmatpush1.msra.mxu0 %v1018
        %2448 = vmatprep.subr.mxu0 0.0
        %2449 = vmatpush1.msra.mxu0 %v1019
        %2450 = vmatprep.subr.mxu0 0.0
        %2451 = vmatpush1.msra.mxu0 %v1020
        %2452 = vmatprep.subr.mxu0 0.0
        %2453 = vmatpush1.msra.mxu0 %v1021
        %2454 = vmatprep.subr.mxu0 0.0
        %2455 = vmatpush1.msra.mxu0 %v1022
        %2456 = vmatprep.subr.mxu0 0.0
        %2457 = vmatpush1.msra.mxu0 0.0
        %2458 = vmatprep.subr.mxu0 0.0
        %2459 = vmatpush1.msra.mxu0 0.0
        %2460 = vmatprep.subr.mxu0 0.0
        %2461 = vmatpush1.msra.mxu0 0.0
        %2462 = vmatprep.subr.mxu0 0.0
        %2463 = vmatpush1.msra.mxu0 0.0
        %2464 = vmatprep.subr.mxu0 0.0
        %2465 = vmatpush1.msra.mxu0 0.0
        %2466 = vmatprep.subr.mxu0 0.0
        %2467 = vmatpush1.msra.mxu0 0.0
        %2468 = vmatprep.subr.mxu0 0.0
        %2469 = vmatpush1.msra.mxu0 0.0
        %2470 = vmatprep.subr.mxu0 0.0
        %2471 = vmatpush1.msra.mxu0 0.0
        %2472 = vmatprep.subr.mxu0 0.0
        %2473 = vmatpush1.msra.mxu0 0.0
        %2474 = vmatprep.subr.mxu0 0.0
        %2475 = vmatpush1.msra.mxu0 0.0
        %2476 = vmatprep.subr.mxu0 0.0
        %2477 = vmatpush1.msra.mxu0 0.0
        %2478 = vmatprep.subr.mxu0 0.0
        %2479 = vmatpush1.msra.mxu0 0.0
        %2480 = vmatprep.subr.mxu0 0.0
        %2481 = vmatpush1.msra.mxu0 0.0
        %2482 = vmatprep.subr.mxu0 0.0
        %2483 = vmatpush1.msra.mxu0 0.0
        %2484 = vmatprep.subr.mxu0 0.0
        %2485 = vmatpush1.msra.mxu0 0.0
        %2486 = vmatprep.subr.mxu0 0.0
        %2487 = vmatpush1.msra.mxu0 0.0
        %2488 = vmatprep.mubr.f32.mxu0 0.0
        %2489 = vmatmul.mubr.f32.gmra.mrb[0].mxu0 %v864
        %v2490 = vpop.f32.mrb[0].mxu0
        %v2491 = vadd.f32 %v2354, %v2490
        %v2492 = vpop.f32.mrb[0].mxu0
        %2493 = vmatprep.mubr.f32.mxu0 0.0
        %2494 = vmatmul.mubr.f32.gmra.mrb[0].mxu0 %v866
        %v2495 = vpop.f32.mrb[0].mxu0
        %v2496 = vpop.f32.mrb[0].mxu0
        %2497 = vmatprep.mubr.f32.mxu0 0.0
        %2498 = vmatmul.mubr.f32.gmra.mrb[0].mxu0 %v868
        %v2499 = vpop.f32.mrb[0].mxu0
        %v2500 = vadd.f32 %v2363, %v2499
        %v2501 = vpop.f32.mrb[0].mxu0
        %2502 = vmatprep.mubr.f32.mxu0 0.0
        %2503 = vmatmul.mubr.f32.gmra.mrb[0].mxu0 %v870
        %v2504 = vpop.f32.mrb[0].mxu0
        %v2505 = vpop.f32.mrb[0].mxu0
        %2506 = vmatprep.mubr.f32.mxu0 0.0
        %2507 = vmatmul.mubr.f32.gmra.mrb[0].mxu0 %v872
        %v2508 = vpop.f32.mrb[0].mxu0
        %v2509 = vadd.f32 %v2372, %v2508
        %v2510 = vpop.f32.mrb[0].mxu0
        %2511 = vmatprep.mubr.f32.mxu0 0.0
        %2512 = vmatmul.mubr.f32.gmra.mrb[0].mxu0 %v874
        %v2513 = vpop.f32.mrb[0].mxu0
        %v2514 = vpop.f32.mrb[0].mxu0
        %2515 = vmatprep.mubr.f32.mxu0 0.0
        %2516 = vmatmul.mubr.f32.gmra.mrb[0].mxu0 %v876
        %v2517 = vpop.f32.mrb[0].mxu0
        %v2518 = vadd.f32 %v2381, %v2517
        %v2519 = vpop.f32.mrb[0].mxu0
        %2520 = vmatprep.mubr.f32.mxu0 0.0
        %2521 = vmatmul.mubr.f32.gmra.mrb[0].mxu0 %v878
        %v2522 = vpop.f32.mrb[0].mxu0
        %v2523 = vpop.f32.mrb[0].mxu0
        %2524 = vmatprep.mubr.f32.mxu0 0.0
        %2525 = vmatmul.mubr.f32.gmra.mrb[0].mxu0 %v880
        %v2526 = vpop.f32.mrb[0].mxu0
        %v2527 = vadd.f32 %v2390, %v2526
        %v2528 = vpop.f32.mrb[0].mxu0
        %2529 = vmatprep.mubr.f32.mxu0 0.0
        %2530 = vmatmul.mubr.f32.gmra.mrb[0].mxu0 %v882
        %v2531 = vpop.f32.mrb[0].mxu0
        %v2532 = vpop.f32.mrb[0].mxu0
        %2533 = vmatprep.mubr.f32.mxu0 0.0
        %2534 = vmatmul.mubr.f32.gmra.mrb[0].mxu0 %v884
        %v2535 = vpop.f32.mrb[0].mxu0
        %v2536 = vadd.f32 %v2399, %v2535
        %v2537 = vpop.f32.mrb[0].mxu0
        %2538 = vmatprep.mubr.f32.mxu0 0.0
        %2539 = vmatmul.mubr.f32.gmra.mrb[0].mxu0 %v886
        %v2540 = vpop.f32.mrb[0].mxu0
        %v2541 = vpop.f32.mrb[0].mxu0
        %2542 = vmatprep.mubr.f32.mxu0 0.0
        %2543 = vmatmul.mubr.f32.gmra.mrb[0].mxu0 %v888
        %v2544 = vpop.f32.mrb[0].mxu0
        %v2545 = vadd.f32 %v2408, %v2544
        %v2546 = vpop.f32.mrb[0].mxu0
        %2547 = vmatprep.mubr.f32.mxu0 0.0
        %2548 = vmatmul.mubr.f32.gmra.mrb[0].mxu0 %v890
        %v2549 = vpop.f32.mrb[0].mxu0
        %v2550 = vpop.f32.mrb[0].mxu0
        %2551 = vmatprep.mubr.f32.mxu0 0.0
        %2552 = vmatmul.mubr.f32.gmra.mrb[0].mxu0 %v892
        %v2553 = vpop.f32.mrb[0].mxu0
        %v2554 = vadd.f32 %v2417, %v2553
        %v2555 = vpop.f32.mrb[0].mxu0
        %2556 = vmatprep.mubr.f32.mxu0 0.0
        %2557 = vmatmul.mubr.f32.gmra.mrb[0].mxu0 %v894
        %v2558 = vpop.f32.mrb[0].mxu0
        %v2559 = vpop.f32.mrb[0].mxu0
        %2560 = vdwg.mxu0
        %s2561 = scalar_lea.vmem [#allocation2], 32
        %v2562 = vld [vmem:[%s2561] sm:$0xff]
        %v2563 = vld [vmem:[%s2561 + $0x8] sm:$0xff]
        %v2564 = vld [vmem:[%s2561 + $0x10] sm:$0xff]
        %v2565 = vld [vmem:[%s2561 + $0x18] sm:$0xff]
        %v2566 = vld [vmem:[%s2561 + $0x20] sm:$0xff]
        %v2567 = vld [vmem:[%s2561 + $0x28] sm:$0xff]
        %v2568 = vld [vmem:[%s2561 + $0x30] sm:$0xff]
        %v2569 = vld [vmem:[%s2561 + $0x38] sm:$0xff]
        %v2570 = vld [vmem:[%s2561 + $0x40] sm:$0xff]
        %v2571 = vld [vmem:[%s2561 + $0x48] sm:$0xff]
        %v2572 = vld [vmem:[%s2561 + $0x50] sm:$0xff]
        %v2573 = vld [vmem:[%s2561 + $0x58] sm:$0xff]
        %v2574 = vld [vmem:[%s2561 + $0x60] sm:$0xff]
        %v2575 = vld [vmem:[%s2561 + $0x68] sm:$0xff]
        %v2576 = vld [vmem:[%s2561 + $0x70] sm:$0xff]
        %v2577 = vld [vmem:[%s2561 + $0x78] sm:$0xff]
        %v2578 = vld [vmem:[%s2561 + $0x80] sm:$0xff]
        %v2596 = vrot.slane %v2562, 1
        %v2597 = vrot.slane %v2563, 1
        %v2598 = vsel %vm611, %v2596, %v2597
        %v2599 = vrot.slane %v2564, 1
        %v2600 = vsel %vm611, %v2597, %v2599
        %v2601 = vrot.slane %v2565, 1
        %v2602 = vsel %vm611, %v2599, %v2601
        %v2603 = vrot.slane %v2566, 1
        %v2604 = vsel %vm611, %v2601, %v2603
        %v2605 = vrot.slane %v2567, 1
        %v2606 = vsel %vm611, %v2603, %v2605
        %v2607 = vrot.slane %v2568, 1
        %v2608 = vsel %vm611, %v2605, %v2607
        %v2609 = vrot.slane %v2569, 1
        %v2610 = vsel %vm611, %v2607, %v2609
        %v2611 = vrot.slane %v2570, 1
        %v2612 = vsel %vm611, %v2609, %v2611
        %v2613 = vrot.slane %v2571, 1
        %v2614 = vsel %vm611, %v2611, %v2613
        %v2615 = vrot.slane %v2572, 1
        %v2616 = vsel %vm611, %v2613, %v2615
        %v2617 = vrot.slane %v2573, 1
        %v2618 = vsel %vm611, %v2615, %v2617
        %v2619 = vrot.slane %v2574, 1
        %v2620 = vsel %vm611, %v2617, %v2619
        %v2621 = vrot.slane %v2575, 1
        %v2622 = vsel %vm611, %v2619, %v2621
        %v2623 = vrot.slane %v2576, 1
        %v2624 = vsel %vm611, %v2621, %v2623
        %v2625 = vrot.slane %v2577, 1
        %v2626 = vsel %vm611, %v2623, %v2625
        %v2627 = vrot.slane %v2578, 1
        %v2628 = vsel %vm611, %v2625, %v2627
        %v2645 = vrot.slane %v2562, 2
        %v2646 = vrot.slane %v2563, 2
        %v2647 = vsel %vm661, %v2645, %v2646
        %v2648 = vrot.slane %v2564, 2
        %v2649 = vsel %vm661, %v2646, %v2648
        %v2650 = vrot.slane %v2565, 2
        %v2651 = vsel %vm661, %v2648, %v2650
        %v2652 = vrot.slane %v2566, 2
        %v2653 = vsel %vm661, %v2650, %v2652
        %v2654 = vrot.slane %v2567, 2
        %v2655 = vsel %vm661, %v2652, %v2654
        %v2656 = vrot.slane %v2568, 2
        %v2657 = vsel %vm661, %v2654, %v2656
        %v2658 = vrot.slane %v2569, 2
        %v2659 = vsel %vm661, %v2656, %v2658
        %v2660 = vrot.slane %v2570, 2
        %v2661 = vsel %vm661, %v2658, %v2660
        %v2662 = vrot.slane %v2571, 2
        %v2663 = vsel %vm661, %v2660, %v2662
        %v2664 = vrot.slane %v2572, 2
        %v2665 = vsel %vm661, %v2662, %v2664
        %v2666 = vrot.slane %v2573, 2
        %v2667 = vsel %vm661, %v2664, %v2666
        %v2668 = vrot.slane %v2574, 2
        %v2669 = vsel %vm661, %v2666, %v2668
        %v2670 = vrot.slane %v2575, 2
        %v2671 = vsel %vm661, %v2668, %v2670
        %v2672 = vrot.slane %v2576, 2
        %v2673 = vsel %vm661, %v2670, %v2672
        %v2674 = vrot.slane %v2577, 2
        %v2675 = vsel %vm661, %v2672, %v2674
        %v2676 = vrot.slane %v2578, 2
        %v2677 = vsel %vm661, %v2674, %v2676
        %v2694 = vrot.slane %v2562, 3
        %v2695 = vrot.slane %v2563, 3
        %v2696 = vsel %vm711, %v2694, %v2695
        %v2697 = vrot.slane %v2564, 3
        %v2698 = vsel %vm711, %v2695, %v2697
        %v2699 = vrot.slane %v2565, 3
        %v2700 = vsel %vm711, %v2697, %v2699
        %v2701 = vrot.slane %v2566, 3
        %v2702 = vsel %vm711, %v2699, %v2701
        %v2703 = vrot.slane %v2567, 3
        %v2704 = vsel %vm711, %v2701, %v2703
        %v2705 = vrot.slane %v2568, 3
        %v2706 = vsel %vm711, %v2703, %v2705
        %v2707 = vrot.slane %v2569, 3
        %v2708 = vsel %vm711, %v2705, %v2707
        %v2709 = vrot.slane %v2570, 3
        %v2710 = vsel %vm711, %v2707, %v2709
        %v2711 = vrot.slane %v2571, 3
        %v2712 = vsel %vm711, %v2709, %v2711
        %v2713 = vrot.slane %v2572, 3
        %v2714 = vsel %vm711, %v2711, %v2713
        %v2715 = vrot.slane %v2573, 3
        %v2716 = vsel %vm711, %v2713, %v2715
        %v2717 = vrot.slane %v2574, 3
        %v2718 = vsel %vm711, %v2715, %v2717
        %v2719 = vrot.slane %v2575, 3
        %v2720 = vsel %vm711, %v2717, %v2719
        %v2721 = vrot.slane %v2576, 3
        %v2722 = vsel %vm711, %v2719, %v2721
        %v2723 = vrot.slane %v2577, 3
        %v2724 = vsel %vm711, %v2721, %v2723
        %v2725 = vrot.slane %v2578, 3
        %v2726 = vsel %vm711, %v2723, %v2725
        %v2743 = vrot.slane %v2562, 4
        %v2744 = vrot.slane %v2563, 4
        %v2745 = vsel %vm761, %v2743, %v2744
        %v2746 = vrot.slane %v2564, 4
        %v2747 = vsel %vm761, %v2744, %v2746
        %v2748 = vrot.slane %v2565, 4
        %v2749 = vsel %vm761, %v2746, %v2748
        %v2750 = vrot.slane %v2566, 4
        %v2751 = vsel %vm761, %v2748, %v2750
        %v2752 = vrot.slane %v2567, 4
        %v2753 = vsel %vm761, %v2750, %v2752
        %v2754 = vrot.slane %v2568, 4
        %v2755 = vsel %vm761, %v2752, %v2754
        %v2756 = vrot.slane %v2569, 4
        %v2757 = vsel %vm761, %v2754, %v2756
        %v2758 = vrot.slane %v2570, 4
        %v2759 = vsel %vm761, %v2756, %v2758
        %v2760 = vrot.slane %v2571, 4
        %v2761 = vsel %vm761, %v2758, %v2760
        %v2762 = vrot.slane %v2572, 4
        %v2763 = vsel %vm761, %v2760, %v2762
        %v2764 = vrot.slane %v2573, 4
        %v2765 = vsel %vm761, %v2762, %v2764
        %v2766 = vrot.slane %v2574, 4
        %v2767 = vsel %vm761, %v2764, %v2766
        %v2768 = vrot.slane %v2575, 4
        %v2769 = vsel %vm761, %v2766, %v2768
        %v2770 = vrot.slane %v2576, 4
        %v2771 = vsel %vm761, %v2768, %v2770
        %v2772 = vrot.slane %v2577, 4
        %v2773 = vsel %vm761, %v2770, %v2772
        %v2774 = vrot.slane %v2578, 4
        %v2775 = vsel %vm761, %v2772, %v2774
        %v2792 = vrot.slane %v2562, 5
        %v2793 = vrot.slane %v2563, 5
        %v2794 = vsel %vm811, %v2792, %v2793
        %v2795 = vrot.slane %v2564, 5
        %v2796 = vsel %vm811, %v2793, %v2795
        %v2797 = vrot.slane %v2565, 5
        %v2798 = vsel %vm811, %v2795, %v2797
        %v2799 = vrot.slane %v2566, 5
        %v2800 = vsel %vm811, %v2797, %v2799
        %v2801 = vrot.slane %v2567, 5
        %v2802 = vsel %vm811, %v2799, %v2801
        %v2803 = vrot.slane %v2568, 5
        %v2804 = vsel %vm811, %v2801, %v2803
        %v2805 = vrot.slane %v2569, 5
        %v2806 = vsel %vm811, %v2803, %v2805
        %v2807 = vrot.slane %v2570, 5
        %v2808 = vsel %vm811, %v2805, %v2807
        %v2809 = vrot.slane %v2571, 5
        %v2810 = vsel %vm811, %v2807, %v2809
        %v2811 = vrot.slane %v2572, 5
        %v2812 = vsel %vm811, %v2809, %v2811
        %v2813 = vrot.slane %v2573, 5
        %v2814 = vsel %vm811, %v2811, %v2813
        %v2815 = vrot.slane %v2574, 5
        %v2816 = vsel %vm811, %v2813, %v2815
        %v2817 = vrot.slane %v2575, 5
        %v2818 = vsel %vm811, %v2815, %v2817
        %v2819 = vrot.slane %v2576, 5
        %v2820 = vsel %vm811, %v2817, %v2819
        %v2821 = vrot.slane %v2577, 5
        %v2822 = vsel %vm811, %v2819, %v2821
        %v2823 = vrot.slane %v2578, 5
        %v2824 = vsel %vm811, %v2821, %v2823
        %v2841 = vrot.slane %v2562, 6
        %v2842 = vrot.slane %v2563, 6
        %v2843 = vsel %vm861, %v2841, %v2842
        %v2844 = vrot.slane %v2564, 6
        %v2845 = vsel %vm861, %v2842, %v2844
        %v2846 = vrot.slane %v2565, 6
        %v2847 = vsel %vm861, %v2844, %v2846
        %v2848 = vrot.slane %v2566, 6
        %v2849 = vsel %vm861, %v2846, %v2848
        %v2850 = vrot.slane %v2567, 6
        %v2851 = vsel %vm861, %v2848, %v2850
        %v2852 = vrot.slane %v2568, 6
        %v2853 = vsel %vm861, %v2850, %v2852
        %v2854 = vrot.slane %v2569, 6
        %v2855 = vsel %vm861, %v2852, %v2854
        %v2856 = vrot.slane %v2570, 6
        %v2857 = vsel %vm861, %v2854, %v2856
        %v2858 = vrot.slane %v2571, 6
        %v2859 = vsel %vm861, %v2856, %v2858
        %v2860 = vrot.slane %v2572, 6
        %v2861 = vsel %vm861, %v2858, %v2860
        %v2862 = vrot.slane %v2573, 6
        %v2863 = vsel %vm861, %v2860, %v2862
        %v2864 = vrot.slane %v2574, 6
        %v2865 = vsel %vm861, %v2862, %v2864
        %v2866 = vrot.slane %v2575, 6
        %v2867 = vsel %vm861, %v2864, %v2866
        %v2868 = vrot.slane %v2576, 6
        %v2869 = vsel %vm861, %v2866, %v2868
        %v2870 = vrot.slane %v2577, 6
        %v2871 = vsel %vm861, %v2868, %v2870
        %v2872 = vrot.slane %v2578, 6
        %v2873 = vsel %vm861, %v2870, %v2872
        %s2890 = scalar_lea.vmem [#allocation6], 1792
        %v2891 = vld [vmem:[%s2890] sm:$0xff]
        %v2892 = vld [vmem:[%s2890 + $0x8] sm:$0xff]
        %v2893 = vld [vmem:[%s2890 + $0x10] sm:$0xff]
        %v2894 = vld [vmem:[%s2890 + $0x18] sm:$0xff]
        %v2895 = vld [vmem:[%s2890 + $0x20] sm:$0xff]
        %v2896 = vld [vmem:[%s2890 + $0x28] sm:$0xff]
        %v2897 = vld [vmem:[%s2890 + $0x30] sm:$0xff]
        %v2898 = vld [vmem:[%s2890 + $0x38] sm:$0xff]
        %v2899 = vld [vmem:[%s2890 + $0x40] sm:$0xff]
        %v2900 = vld [vmem:[%s2890 + $0x48] sm:$0xff]
        %v2901 = vld [vmem:[%s2890 + $0x50] sm:$0xff]
        %v2902 = vld [vmem:[%s2890 + $0x58] sm:$0xff]
        %v2903 = vld [vmem:[%s2890 + $0x60] sm:$0xff]
        %v2904 = vld [vmem:[%s2890 + $0x68] sm:$0xff]
        %v2905 = vld [vmem:[%s2890 + $0x70] sm:$0xff]
        %v2906 = vld [vmem:[%s2890 + $0x78] sm:$0xff]
        %v2907 = vld [vmem:[%s2890 + $0x80] sm:$0xff]
        %v2908 = vld [vmem:[%s2890 + $0x88] sm:$0xff]
        %v2909 = vld [vmem:[%s2890 + $0x90] sm:$0xff]
        %v2910 = vld [vmem:[%s2890 + $0x98] sm:$0xff]
        %v2911 = vld [vmem:[%s2890 + $0xa0] sm:$0xff]
        %v2912 = vld [vmem:[%s2890 + $0xa8] sm:$0xff]
        %v2913 = vld [vmem:[%s2890 + $0xb0] sm:$0xff]
        %v2914 = vld [vmem:[%s2890 + $0xb8] sm:$0xff]
        %v2915 = vld [vmem:[%s2890 + $0xc0] sm:$0xff]
        %v2916 = vld [vmem:[%s2890 + $0xc8] sm:$0xff]
        %v2917 = vld [vmem:[%s2890 + $0xd0] sm:$0xff]
        %v2918 = vld [vmem:[%s2890 + $0xd8] sm:$0xff]
        %v2919 = vld [vmem:[%s2890 + $0xe0] sm:$0xff]
        %v2920 = vld [vmem:[%s2890 + $0xe8] sm:$0xff]
        %v2921 = vld [vmem:[%s2890 + $0xf0] sm:$0xff]
        %v2922 = vld [vmem:[%s2890 + $0xf8] sm:$0xff]
        %v2923 = vld [vmem:[%s2890 + $0x100] sm:$0xff]
        %v2924 = vld [vmem:[%s2890 + $0x108] sm:$0xff]
        %v2925 = vld [vmem:[%s2890 + $0x110] sm:$0xff]
        %v2926 = vld [vmem:[%s2890 + $0x118] sm:$0xff]
        %v2927 = vld [vmem:[%s2890 + $0x120] sm:$0xff]
        %v2928 = vld [vmem:[%s2890 + $0x128] sm:$0xff]
        %v2929 = vld [vmem:[%s2890 + $0x130] sm:$0xff]
        %v2930 = vld [vmem:[%s2890 + $0x138] sm:$0xff]
        %v2931 = vld [vmem:[%s2890 + $0x140] sm:$0xff]
        %v2932 = vld [vmem:[%s2890 + $0x148] sm:$0xff]
        %v2933 = vld [vmem:[%s2890 + $0x150] sm:$0xff]
        %v2934 = vld [vmem:[%s2890 + $0x158] sm:$0xff]
        %v2935 = vld [vmem:[%s2890 + $0x160] sm:$0xff]
        %v2936 = vld [vmem:[%s2890 + $0x168] sm:$0xff]
        %v2937 = vld [vmem:[%s2890 + $0x170] sm:$0xff]
        %v2938 = vld [vmem:[%s2890 + $0x178] sm:$0xff]
        %v2939 = vld [vmem:[%s2890 + $0x180] sm:$0xff]
        %v2940 = vld [vmem:[%s2890 + $0x188] sm:$0xff]
        %v2941 = vld [vmem:[%s2890 + $0x190] sm:$0xff]
        %v2942 = vld [vmem:[%s2890 + $0x198] sm:$0xff]
        %v2943 = vld [vmem:[%s2890 + $0x1a0] sm:$0xff]
        %v2944 = vld [vmem:[%s2890 + $0x1a8] sm:$0xff]
        %v2945 = vld [vmem:[%s2890 + $0x1b0] sm:$0xff]
        %v2946 = vld [vmem:[%s2890 + $0x1b8] sm:$0xff]
        %v2947 = vld [vmem:[%s2890 + $0x1c0] sm:$0xff]
        %v2948 = vld [vmem:[%s2890 + $0x1c8] sm:$0xff]
        %v2949 = vld [vmem:[%s2890 + $0x1d0] sm:$0xff]
        %v2950 = vld [vmem:[%s2890 + $0x1d8] sm:$0xff]
        %v2951 = vld [vmem:[%s2890 + $0x1e0] sm:$0xff]
        %v2952 = vld [vmem:[%s2890 + $0x1e8] sm:$0xff]
        %v2953 = vld [vmem:[%s2890 + $0x1f0] sm:$0xff]
        %v2954 = vld [vmem:[%s2890 + $0x1f8] sm:$0xff]
        %v2955 = vld [vmem:[%s2890 + $0x200] sm:$0xff]
        %v2956 = vld [vmem:[%s2890 + $0x208] sm:$0xff]
        %v2957 = vld [vmem:[%s2890 + $0x210] sm:$0xff]
        %v2958 = vld [vmem:[%s2890 + $0x218] sm:$0xff]
        %v2959 = vld [vmem:[%s2890 + $0x220] sm:$0xff]
        %v2960 = vld [vmem:[%s2890 + $0x228] sm:$0xff]
        %v2961 = vld [vmem:[%s2890 + $0x230] sm:$0xff]
        %v2962 = vld [vmem:[%s2890 + $0x238] sm:$0xff]
        %v2963 = vld [vmem:[%s2890 + $0x240] sm:$0xff]
        %v2964 = vld [vmem:[%s2890 + $0x248] sm:$0xff]
        %v2965 = vld [vmem:[%s2890 + $0x250] sm:$0xff]
        %v2966 = vld [vmem:[%s2890 + $0x258] sm:$0xff]
        %v2967 = vld [vmem:[%s2890 + $0x260] sm:$0xff]
        %v2968 = vld [vmem:[%s2890 + $0x268] sm:$0xff]
        %v2969 = vld [vmem:[%s2890 + $0x270] sm:$0xff]
        %v2970 = vld [vmem:[%s2890 + $0x278] sm:$0xff]
        %v2971 = vld [vmem:[%s2890 + $0x280] sm:$0xff]
        %v2972 = vld [vmem:[%s2890 + $0x288] sm:$0xff]
        %v2973 = vld [vmem:[%s2890 + $0x290] sm:$0xff]
        %v2974 = vld [vmem:[%s2890 + $0x298] sm:$0xff]
        %v2975 = vld [vmem:[%s2890 + $0x2a0] sm:$0xff]
        %v2976 = vld [vmem:[%s2890 + $0x2a8] sm:$0xff]
        %v2977 = vld [vmem:[%s2890 + $0x2b0] sm:$0xff]
        %v2978 = vld [vmem:[%s2890 + $0x2b8] sm:$0xff]
        %v2979 = vld [vmem:[%s2890 + $0x2c0] sm:$0xff]
        %v2980 = vld [vmem:[%s2890 + $0x2c8] sm:$0xff]
        %v2981 = vld [vmem:[%s2890 + $0x2d0] sm:$0xff]
        %v2982 = vld [vmem:[%s2890 + $0x2d8] sm:$0xff]
        %v2983 = vld [vmem:[%s2890 + $0x2e0] sm:$0xff]
        %v2984 = vld [vmem:[%s2890 + $0x2e8] sm:$0xff]
        %v2985 = vld [vmem:[%s2890 + $0x2f0] sm:$0xff]
        %v2986 = vld [vmem:[%s2890 + $0x2f8] sm:$0xff]
        %v2987 = vld [vmem:[%s2890 + $0x300] sm:$0xff]
        %v2988 = vld [vmem:[%s2890 + $0x308] sm:$0xff]
        %v2989 = vld [vmem:[%s2890 + $0x310] sm:$0xff]
        %v2990 = vld [vmem:[%s2890 + $0x318] sm:$0xff]
        %v2991 = vld [vmem:[%s2890 + $0x320] sm:$0xff]
        %v2992 = vld [vmem:[%s2890 + $0x328] sm:$0xff]
        %v2993 = vld [vmem:[%s2890 + $0x330] sm:$0xff]
        %v2994 = vld [vmem:[%s2890 + $0x338] sm:$0xff]
        %v2995 = vld [vmem:[%s2890 + $0x340] sm:$0xff]
        %v2996 = vld [vmem:[%s2890 + $0x348] sm:$0xff]
        %v2997 = vld [vmem:[%s2890 + $0x350] sm:$0xff]
        %v2998 = vld [vmem:[%s2890 + $0x358] sm:$0xff]
        %v2999 = vld [vmem:[%s2890 + $0x360] sm:$0xff]
        %v3000 = vld [vmem:[%s2890 + $0x368] sm:$0xff]
        %v3001 = vld [vmem:[%s2890 + $0x370] sm:$0xff]
        %v3002 = vld [vmem:[%s2890 + $0x378] sm:$0xff]
        %3003 = vmatprep.subr.mxu0 0.0
        %3004 = vmatpush1.msra.mxu0 %v2891
        %3005 = vmatprep.subr.mxu0 0.0
        %3006 = vmatpush1.msra.mxu0 %v2892
        %3007 = vmatprep.subr.mxu0 0.0
        %3008 = vmatpush1.msra.mxu0 %v2893
        %3009 = vmatprep.subr.mxu0 0.0
        %3010 = vmatpush1.msra.mxu0 %v2894
        %3011 = vmatprep.subr.mxu0 0.0
        %3012 = vmatpush1.msra.mxu0 %v2895
        %3013 = vmatprep.subr.mxu0 0.0
        %3014 = vmatpush1.msra.mxu0 %v2896
        %3015 = vmatprep.subr.mxu0 0.0
        %3016 = vmatpush1.msra.mxu0 %v2897
        %3017 = vmatprep.subr.mxu0 0.0
        %3018 = vmatpush1.msra.mxu0 %v2898
        %3019 = vmatprep.subr.mxu0 0.0
        %3020 = vmatpush1.msra.mxu0 %v2899
        %3021 = vmatprep.subr.mxu0 0.0
        %3022 = vmatpush1.msra.mxu0 %v2900
        %3023 = vmatprep.subr.mxu0 0.0
        %3024 = vmatpush1.msra.mxu0 %v2901
        %3025 = vmatprep.subr.mxu0 0.0
        %3026 = vmatpush1.msra.mxu0 %v2902
        %3027 = vmatprep.subr.mxu0 0.0
        %3028 = vmatpush1.msra.mxu0 %v2903
        %3029 = vmatprep.subr.mxu0 0.0
        %3030 = vmatpush1.msra.mxu0 %v2904
        %3031 = vmatprep.subr.mxu0 0.0
        %3032 = vmatpush1.msra.mxu0 %v2905
        %3033 = vmatprep.subr.mxu0 0.0
        %3034 = vmatpush1.msra.mxu0 %v2906
        %3035 = vmatprep.subr.mxu0 0.0
        %3036 = vmatpush1.msra.mxu0 %v2907
        %3037 = vmatprep.subr.mxu0 0.0
        %3038 = vmatpush1.msra.mxu0 %v2908
        %3039 = vmatprep.subr.mxu0 0.0
        %3040 = vmatpush1.msra.mxu0 %v2909
        %3041 = vmatprep.subr.mxu0 0.0
        %3042 = vmatpush1.msra.mxu0 %v2910
        %3043 = vmatprep.subr.mxu0 0.0
        %3044 = vmatpush1.msra.mxu0 %v2911
        %3045 = vmatprep.subr.mxu0 0.0
        %3046 = vmatpush1.msra.mxu0 %v2912
        %3047 = vmatprep.subr.mxu0 0.0
        %3048 = vmatpush1.msra.mxu0 %v2913
        %3049 = vmatprep.subr.mxu0 0.0
        %3050 = vmatpush1.msra.mxu0 %v2914
        %3051 = vmatprep.subr.mxu0 0.0
        %3052 = vmatpush1.msra.mxu0 %v2915
        %3053 = vmatprep.subr.mxu0 0.0
        %3054 = vmatpush1.msra.mxu0 %v2916
        %3055 = vmatprep.subr.mxu0 0.0
        %3056 = vmatpush1.msra.mxu0 %v2917
        %3057 = vmatprep.subr.mxu0 0.0
        %3058 = vmatpush1.msra.mxu0 %v2918
        %3059 = vmatprep.subr.mxu0 0.0
        %3060 = vmatpush1.msra.mxu0 %v2919
        %3061 = vmatprep.subr.mxu0 0.0
        %3062 = vmatpush1.msra.mxu0 %v2920
        %3063 = vmatprep.subr.mxu0 0.0
        %3064 = vmatpush1.msra.mxu0 %v2921
        %3065 = vmatprep.subr.mxu0 0.0
        %3066 = vmatpush1.msra.mxu0 %v2922
        %3067 = vmatprep.mubr.f32.mxu0 %v2598
        %3068 = vmatmul.mubr.f32.gmra.mrb[0].mxu0 %v2562
        %v3069 = vpop.f32.mrb[0].mxu0
        %v3070 = vadd.f32 0.0, %v3069
        %v3071 = vpop.f32.mrb[0].mxu0
        %3072 = vmatprep.mubr.f32.mxu0 %v2600
        %3073 = vmatmul.mubr.f32.gmra.mrb[0].mxu0 %v2563
        %v3074 = vpop.f32.mrb[0].mxu0
        %v3075 = vpop.f32.mrb[0].mxu0
        %3076 = vmatprep.mubr.f32.mxu0 %v2602
        %3077 = vmatmul.mubr.f32.gmra.mrb[0].mxu0 %v2564
        %v3078 = vpop.f32.mrb[0].mxu0
        %v3079 = vadd.f32 0.0, %v3078
        %v3080 = vpop.f32.mrb[0].mxu0
        %3081 = vmatprep.mubr.f32.mxu0 %v2604
        %3082 = vmatmul.mubr.f32.gmra.mrb[0].mxu0 %v2565
        %v3083 = vpop.f32.mrb[0].mxu0
        %v3084 = vpop.f32.mrb[0].mxu0
        %3085 = vmatprep.mubr.f32.mxu0 %v2606
        %3086 = vmatmul.mubr.f32.gmra.mrb[0].mxu0 %v2566
        %v3087 = vpop.f32.mrb[0].mxu0
        %v3088 = vadd.f32 0.0, %v3087
        %v3089 = vpop.f32.mrb[0].mxu0
        %3090 = vmatprep.mubr.f32.mxu0 %v2608
        %3091 = vmatmul.mubr.f32.gmra.mrb[0].mxu0 %v2567
        %v3092 = vpop.f32.mrb[0].mxu0
        %v3093 = vpop.f32.mrb[0].mxu0
        %3094 = vmatprep.mubr.f32.mxu0 %v2610
        %3095 = vmatmul.mubr.f32.gmra.mrb[0].mxu0 %v2568
        %v3096 = vpop.f32.mrb[0].mxu0
        %v3097 = vadd.f32 0.0, %v3096
        %v3098 = vpop.f32.mrb[0].mxu0
        %3099 = vmatprep.mubr.f32.mxu0 %v2612
        %3100 = vmatmul.mubr.f32.gmra.mrb[0].mxu0 %v2569
        %v3101 = vpop.f32.mrb[0].mxu0
        %v3102 = vpop.f32.mrb[0].mxu0
        %3103 = vmatprep.mubr.f32.mxu0 %v2614
        %3104 = vmatmul.mubr.f32.gmra.mrb[0].mxu0 %v2570
        %v3105 = vpop.f32.mrb[0].mxu0
        %v3106 = vadd.f32 0.0, %v3105
        %v3107 = vpop.f32.mrb[0].mxu0
        %3108 = vmatprep.mubr.f32.mxu0 %v2616
        %3109 = vmatmul.mubr.f32.gmra.mrb[0].mxu0 %v2571
        %v3110 = vpop.f32.mrb[0].mxu0
        %v3111 = vpop.f32.mrb[0].mxu0
        %3112 = vmatprep.mubr.f32.mxu0 %v2618
        %3113 = vmatmul.mubr.f32.gmra.mrb[0].mxu0 %v2572
        %v3114 = vpop.f32.mrb[0].mxu0
        %v3115 = vadd.f32 0.0, %v3114
        %v3116 = vpop.f32.mrb[0].mxu0
        %3117 = vmatprep.mubr.f32.mxu0 %v2620
        %3118 = vmatmul.mubr.f32.gmra.mrb[0].mxu0 %v2573
        %v3119 = vpop.f32.mrb[0].mxu0
        %v3120 = vpop.f32.mrb[0].mxu0
        %3121 = vmatprep.mubr.f32.mxu0 %v2622
        %3122 = vmatmul.mubr.f32.gmra.mrb[0].mxu0 %v2574
        %v3123 = vpop.f32.mrb[0].mxu0
        %v3124 = vadd.f32 0.0, %v3123
        %v3125 = vpop.f32.mrb[0].mxu0
        %3126 = vmatprep.mubr.f32.mxu0 %v2624
        %3127 = vmatmul.mubr.f32.gmra.mrb[0].mxu0 %v2575
        %v3128 = vpop.f32.mrb[0].mxu0
        %v3129 = vpop.f32.mrb[0].mxu0
        %3130 = vmatprep.mubr.f32.mxu0 %v2626
        %3131 = vmatmul.mubr.f32.gmra.mrb[0].mxu0 %v2576
        %v3132 = vpop.f32.mrb[0].mxu0
        %v3133 = vadd.f32 0.0, %v3132
        %v3134 = vpop.f32.mrb[0].mxu0
        %3135 = vmatprep.mubr.f32.mxu0 %v2628
        %3136 = vmatmul.mubr.f32.gmra.mrb[0].mxu0 %v2577
        %v3137 = vpop.f32.mrb[0].mxu0
        %v3138 = vpop.f32.mrb[0].mxu0
        %3139 = vdwg.mxu0
        %3140 = vmatprep.subr.mxu0 0.0
        %3141 = vmatpush1.msra.mxu0 %v2923
        %3142 = vmatprep.subr.mxu0 0.0
        %3143 = vmatpush1.msra.mxu0 %v2924
        %3144 = vmatprep.subr.mxu0 0.0
        %3145 = vmatpush1.msra.mxu0 %v2925
        %3146 = vmatprep.subr.mxu0 0.0
        %3147 = vmatpush1.msra.mxu0 %v2926
        %3148 = vmatprep.subr.mxu0 0.0
        %3149 = vmatpush1.msra.mxu0 %v2927
        %3150 = vmatprep.subr.mxu0 0.0
        %3151 = vmatpush1.msra.mxu0 %v2928
        %3152 = vmatprep.subr.mxu0 0.0
        %3153 = vmatpush1.msra.mxu0 %v2929
        %3154 = vmatprep.subr.mxu0 0.0
        %3155 = vmatpush1.msra.mxu0 %v2930
        %3156 = vmatprep.subr.mxu0 0.0
        %3157 = vmatpush1.msra.mxu0 %v2931
        %3158 = vmatprep.subr.mxu0 0.0
        %3159 = vmatpush1.msra.mxu0 %v2932
        %3160 = vmatprep.subr.mxu0 0.0
        %3161 = vmatpush1.msra.mxu0 %v2933
        %3162 = vmatprep.subr.mxu0 0.0
        %3163 = vmatpush1.msra.mxu0 %v2934
        %3164 = vmatprep.subr.mxu0 0.0
        %3165 = vmatpush1.msra.mxu0 %v2935
        %3166 = vmatprep.subr.mxu0 0.0
        %3167 = vmatpush1.msra.mxu0 %v2936
        %3168 = vmatprep.subr.mxu0 0.0
        %3169 = vmatpush1.msra.mxu0 %v2937
        %3170 = vmatprep.subr.mxu0 0.0
        %3171 = vmatpush1.msra.mxu0 %v2938
        %3172 = vmatprep.subr.mxu0 0.0
        %3173 = vmatpush1.msra.mxu0 %v2939
        %3174 = vmatprep.subr.mxu0 0.0
        %3175 = vmatpush1.msra.mxu0 %v2940
        %3176 = vmatprep.subr.mxu0 0.0
        %3177 = vmatpush1.msra.mxu0 %v2941
        %3178 = vmatprep.subr.mxu0 0.0
        %3179 = vmatpush1.msra.mxu0 %v2942
        %3180 = vmatprep.subr.mxu0 0.0
        %3181 = vmatpush1.msra.mxu0 %v2943
        %3182 = vmatprep.subr.mxu0 0.0
        %3183 = vmatpush1.msra.mxu0 %v2944
        %3184 = vmatprep.subr.mxu0 0.0
        %3185 = vmatpush1.msra.mxu0 %v2945
        %3186 = vmatprep.subr.mxu0 0.0
        %3187 = vmatpush1.msra.mxu0 %v2946
        %3188 = vmatprep.subr.mxu0 0.0
        %3189 = vmatpush1.msra.mxu0 %v2947
        %3190 = vmatprep.subr.mxu0 0.0
        %3191 = vmatpush1.msra.mxu0 %v2948
        %3192 = vmatprep.subr.mxu0 0.0
        %3193 = vmatpush1.msra.mxu0 %v2949
        %3194 = vmatprep.subr.mxu0 0.0
        %3195 = vmatpush1.msra.mxu0 %v2950
        %3196 = vmatprep.subr.mxu0 0.0
        %3197 = vmatpush1.msra.mxu0 %v2951
        %3198 = vmatprep.subr.mxu0 0.0
        %3199 = vmatpush1.msra.mxu0 %v2952
        %3200 = vmatprep.subr.mxu0 0.0
        %3201 = vmatpush1.msra.mxu0 %v2953
        %3202 = vmatprep.subr.mxu0 0.0
        %3203 = vmatpush1.msra.mxu0 %v2954
        %3204 = vmatprep.mubr.f32.mxu0 %v2696
        %3205 = vmatmul.mubr.f32.gmra.mrb[0].mxu0 %v2647
        %v3206 = vpop.f32.mrb[0].mxu0
        %v3207 = vadd.f32 %v3070, %v3206
        %v3208 = vpop.f32.mrb[0].mxu0
        %3209 = vmatprep.mubr.f32.mxu0 %v2698
        %3210 = vmatmul.mubr.f32.gmra.mrb[0].mxu0 %v2649
        %v3211 = vpop.f32.mrb[0].mxu0
        %v3212 = vpop.f32.mrb[0].mxu0
        %3213 = vmatprep.mubr.f32.mxu0 %v2700
        %3214 = vmatmul.mubr.f32.gmra.mrb[0].mxu0 %v2651
        %v3215 = vpop.f32.mrb[0].mxu0
        %v3216 = vadd.f32 %v3079, %v3215
        %v3217 = vpop.f32.mrb[0].mxu0
        %3218 = vmatprep.mubr.f32.mxu0 %v2702
        %3219 = vmatmul.mubr.f32.gmra.mrb[0].mxu0 %v2653
        %v3220 = vpop.f32.mrb[0].mxu0
        %v3221 = vpop.f32.mrb[0].mxu0
        %3222 = vmatprep.mubr.f32.mxu0 %v2704
        %3223 = vmatmul.mubr.f32.gmra.mrb[0].mxu0 %v2655
        %v3224 = vpop.f32.mrb[0].mxu0
        %v3225 = vadd.f32 %v3088, %v3224
        %v3226 = vpop.f32.mrb[0].mxu0
        %3227 = vmatprep.mubr.f32.mxu0 %v2706
        %3228 = vmatmul.mubr.f32.gmra.mrb[0].mxu0 %v2657
        %v3229 = vpop.f32.mrb[0].mxu0
        %v3230 = vpop.f32.mrb[0].mxu0
        %3231 = vmatprep.mubr.f32.mxu0 %v2708
        %3232 = vmatmul.mubr.f32.gmra.mrb[0].mxu0 %v2659
        %v3233 = vpop.f32.mrb[0].mxu0
        %v3234 = vadd.f32 %v3097, %v3233
        %v3235 = vpop.f32.mrb[0].mxu0
        %3236 = vmatprep.mubr.f32.mxu0 %v2710
        %3237 = vmatmul.mubr.f32.gmra.mrb[0].mxu0 %v2661
        %v3238 = vpop.f32.mrb[0].mxu0
        %v3239 = vpop.f32.mrb[0].mxu0
        %3240 = vmatprep.mubr.f32.mxu0 %v2712
        %3241 = vmatmul.mubr.f32.gmra.mrb[0].mxu0 %v2663
        %v3242 = vpop.f32.mrb[0].mxu0
        %v3243 = vadd.f32 %v3106, %v3242
        %v3244 = vpop.f32.mrb[0].mxu0
        %3245 = vmatprep.mubr.f32.mxu0 %v2714
        %3246 = vmatmul.mubr.f32.gmra.mrb[0].mxu0 %v2665
        %v3247 = vpop.f32.mrb[0].mxu0
        %v3248 = vpop.f32.mrb[0].mxu0
        %3249 = vmatprep.mubr.f32.mxu0 %v2716
        %3250 = vmatmul.mubr.f32.gmra.mrb[0].mxu0 %v2667
        %v3251 = vpop.f32.mrb[0].mxu0
        %v3252 = vadd.f32 %v3115, %v3251
        %v3253 = vpop.f32.mrb[0].mxu0
        %3254 = vmatprep.mubr.f32.mxu0 %v2718
        %3255 = vmatmul.mubr.f32.gmra.mrb[0].mxu0 %v2669
        %v3256 = vpop.f32.mrb[0].mxu0
        %v3257 = vpop.f32.mrb[0].mxu0
        %3258 = vmatprep.mubr.f32.mxu0 %v2720
        %3259 = vmatmul.mubr.f32.gmra.mrb[0].mxu0 %v2671
        %v3260 = vpop.f32.mrb[0].mxu0
        %v3261 = vadd.f32 %v3124, %v3260
        %v3262 = vpop.f32.mrb[0].mxu0
        %3263 = vmatprep.mubr.f32.mxu0 %v2722
        %3264 = vmatmul.mubr.f32.gmra.mrb[0].mxu0 %v2673
        %v3265 = vpop.f32.mrb[0].mxu0
        %v3266 = vpop.f32.mrb[0].mxu0
        %3267 = vmatprep.mubr.f32.mxu0 %v2724
        %3268 = vmatmul.mubr.f32.gmra.mrb[0].mxu0 %v2675
        %v3269 = vpop.f32.mrb[0].mxu0
        %v3270 = vadd.f32 %v3133, %v3269
        %v3271 = vpop.f32.mrb[0].mxu0
        %3272 = vmatprep.mubr.f32.mxu0 %v2726
        %3273 = vmatmul.mubr.f32.gmra.mrb[0].mxu0 %v2677
        %v3274 = vpop.f32.mrb[0].mxu0
        %v3275 = vpop.f32.mrb[0].mxu0
        %3276 = vdwg.mxu0
        %3277 = vmatprep.subr.mxu0 0.0
        %3278 = vmatpush1.msra.mxu0 %v2955
        %3279 = vmatprep.subr.mxu0 0.0
        %3280 = vmatpush1.msra.mxu0 %v2956
        %3281 = vmatprep.subr.mxu0 0.0
        %3282 = vmatpush1.msra.mxu0 %v2957
        %3283 = vmatprep.subr.mxu0 0.0
        %3284 = vmatpush1.msra.mxu0 %v2958
        %3285 = vmatprep.subr.mxu0 0.0
        %3286 = vmatpush1.msra.mxu0 %v2959
        %3287 = vmatprep.subr.mxu0 0.0
        %3288 = vmatpush1.msra.mxu0 %v2960
        %3289 = vmatprep.subr.mxu0 0.0
        %3290 = vmatpush1.msra.mxu0 %v2961
        %3291 = vmatprep.subr.mxu0 0.0
        %3292 = vmatpush1.msra.mxu0 %v2962
        %3293 = vmatprep.subr.mxu0 0.0
        %3294 = vmatpush1.msra.mxu0 %v2963
        %3295 = vmatprep.subr.mxu0 0.0
        %3296 = vmatpush1.msra.mxu0 %v2964
        %3297 = vmatprep.subr.mxu0 0.0
        %3298 = vmatpush1.msra.mxu0 %v2965
        %3299 = vmatprep.subr.mxu0 0.0
        %3300 = vmatpush1.msra.mxu0 %v2966
        %3301 = vmatprep.subr.mxu0 0.0
        %3302 = vmatpush1.msra.mxu0 %v2967
        %3303 = vmatprep.subr.mxu0 0.0
        %3304 = vmatpush1.msra.mxu0 %v2968
        %3305 = vmatprep.subr.mxu0 0.0
        %3306 = vmatpush1.msra.mxu0 %v2969
        %3307 = vmatprep.subr.mxu0 0.0
        %3308 = vmatpush1.msra.mxu0 %v2970
        %3309 = vmatprep.subr.mxu0 0.0
        %3310 = vmatpush1.msra.mxu0 %v2971
        %3311 = vmatprep.subr.mxu0 0.0
        %3312 = vmatpush1.msra.mxu0 %v2972
        %3313 = vmatprep.subr.mxu0 0.0
        %3314 = vmatpush1.msra.mxu0 %v2973
        %3315 = vmatprep.subr.mxu0 0.0
        %3316 = vmatpush1.msra.mxu0 %v2974
        %3317 = vmatprep.subr.mxu0 0.0
        %3318 = vmatpush1.msra.mxu0 %v2975
        %3319 = vmatprep.subr.mxu0 0.0
        %3320 = vmatpush1.msra.mxu0 %v2976
        %3321 = vmatprep.subr.mxu0 0.0
        %3322 = vmatpush1.msra.mxu0 %v2977
        %3323 = vmatprep.subr.mxu0 0.0
        %3324 = vmatpush1.msra.mxu0 %v2978
        %3325 = vmatprep.subr.mxu0 0.0
        %3326 = vmatpush1.msra.mxu0 %v2979
        %3327 = vmatprep.subr.mxu0 0.0
        %3328 = vmatpush1.msra.mxu0 %v2980
        %3329 = vmatprep.subr.mxu0 0.0
        %3330 = vmatpush1.msra.mxu0 %v2981
        %3331 = vmatprep.subr.mxu0 0.0
        %3332 = vmatpush1.msra.mxu0 %v2982
        %3333 = vmatprep.subr.mxu0 0.0
        %3334 = vmatpush1.msra.mxu0 %v2983
        %3335 = vmatprep.subr.mxu0 0.0
        %3336 = vmatpush1.msra.mxu0 %v2984
        %3337 = vmatprep.subr.mxu0 0.0
        %3338 = vmatpush1.msra.mxu0 %v2985
        %3339 = vmatprep.subr.mxu0 0.0
        %3340 = vmatpush1.msra.mxu0 %v2986
        %3341 = vmatprep.mubr.f32.mxu0 %v2794
        %3342 = vmatmul.mubr.f32.gmra.mrb[0].mxu0 %v2745
        %v3343 = vpop.f32.mrb[0].mxu0
        %v3344 = vadd.f32 %v3207, %v3343
        %v3345 = vpop.f32.mrb[0].mxu0
        %3346 = vmatprep.mubr.f32.mxu0 %v2796
        %3347 = vmatmul.mubr.f32.gmra.mrb[0].mxu0 %v2747
        %v3348 = vpop.f32.mrb[0].mxu0
        %v3349 = vpop.f32.mrb[0].mxu0
        %3350 = vmatprep.mubr.f32.mxu0 %v2798
        %3351 = vmatmul.mubr.f32.gmra.mrb[0].mxu0 %v2749
        %v3352 = vpop.f32.mrb[0].mxu0
        %v3353 = vadd.f32 %v3216, %v3352
        %v3354 = vpop.f32.mrb[0].mxu0
        %3355 = vmatprep.mubr.f32.mxu0 %v2800
        %3356 = vmatmul.mubr.f32.gmra.mrb[0].mxu0 %v2751
        %v3357 = vpop.f32.mrb[0].mxu0
        %v3358 = vpop.f32.mrb[0].mxu0
        %3359 = vmatprep.mubr.f32.mxu0 %v2802
        %3360 = vmatmul.mubr.f32.gmra.mrb[0].mxu0 %v2753
        %v3361 = vpop.f32.mrb[0].mxu0
        %v3362 = vadd.f32 %v3225, %v3361
        %v3363 = vpop.f32.mrb[0].mxu0
        %3364 = vmatprep.mubr.f32.mxu0 %v2804
        %3365 = vmatmul.mubr.f32.gmra.mrb[0].mxu0 %v2755
        %v3366 = vpop.f32.mrb[0].mxu0
        %v3367 = vpop.f32.mrb[0].mxu0
        %3368 = vmatprep.mubr.f32.mxu0 %v2806
        %3369 = vmatmul.mubr.f32.gmra.mrb[0].mxu0 %v2757
        %v3370 = vpop.f32.mrb[0].mxu0
        %v3371 = vadd.f32 %v3234, %v3370
        %v3372 = vpop.f32.mrb[0].mxu0
        %3373 = vmatprep.mubr.f32.mxu0 %v2808
        %3374 = vmatmul.mubr.f32.gmra.mrb[0].mxu0 %v2759
        %v3375 = vpop.f32.mrb[0].mxu0
        %v3376 = vpop.f32.mrb[0].mxu0
        %3377 = vmatprep.mubr.f32.mxu0 %v2810
        %3378 = vmatmul.mubr.f32.gmra.mrb[0].mxu0 %v2761
        %v3379 = vpop.f32.mrb[0].mxu0
        %v3380 = vadd.f32 %v3243, %v3379
        %v3381 = vpop.f32.mrb[0].mxu0
        %3382 = vmatprep.mubr.f32.mxu0 %v2812
        %3383 = vmatmul.mubr.f32.gmra.mrb[0].mxu0 %v2763
        %v3384 = vpop.f32.mrb[0].mxu0
        %v3385 = vpop.f32.mrb[0].mxu0
        %3386 = vmatprep.mubr.f32.mxu0 %v2814
        %3387 = vmatmul.mubr.f32.gmra.mrb[0].mxu0 %v2765
        %v3388 = vpop.f32.mrb[0].mxu0
        %v3389 = vadd.f32 %v3252, %v3388
        %v3390 = vpop.f32.mrb[0].mxu0
        %3391 = vmatprep.mubr.f32.mxu0 %v2816
        %3392 = vmatmul.mubr.f32.gmra.mrb[0].mxu0 %v2767
        %v3393 = vpop.f32.mrb[0].mxu0
        %v3394 = vpop.f32.mrb[0].mxu0
        %3395 = vmatprep.mubr.f32.mxu0 %v2818
        %3396 = vmatmul.mubr.f32.gmra.mrb[0].mxu0 %v2769
        %v3397 = vpop.f32.mrb[0].mxu0
        %v3398 = vadd.f32 %v3261, %v3397
        %v3399 = vpop.f32.mrb[0].mxu0
        %3400 = vmatprep.mubr.f32.mxu0 %v2820
        %3401 = vmatmul.mubr.f32.gmra.mrb[0].mxu0 %v2771
        %v3402 = vpop.f32.mrb[0].mxu0
        %v3403 = vpop.f32.mrb[0].mxu0
        %3404 = vmatprep.mubr.f32.mxu0 %v2822
        %3405 = vmatmul.mubr.f32.gmra.mrb[0].mxu0 %v2773
        %v3406 = vpop.f32.mrb[0].mxu0
        %v3407 = vadd.f32 %v3270, %v3406
        %v3408 = vpop.f32.mrb[0].mxu0
        %3409 = vmatprep.mubr.f32.mxu0 %v2824
        %3410 = vmatmul.mubr.f32.gmra.mrb[0].mxu0 %v2775
        %v3411 = vpop.f32.mrb[0].mxu0
        %v3412 = vpop.f32.mrb[0].mxu0
        %3413 = vdwg.mxu0
        %3414 = vmatprep.subr.mxu0 0.0
        %3415 = vmatpush1.msra.mxu0 %v2987
        %3416 = vmatprep.subr.mxu0 0.0
        %3417 = vmatpush1.msra.mxu0 %v2988
        %3418 = vmatprep.subr.mxu0 0.0
        %3419 = vmatpush1.msra.mxu0 %v2989
        %3420 = vmatprep.subr.mxu0 0.0
        %3421 = vmatpush1.msra.mxu0 %v2990
        %3422 = vmatprep.subr.mxu0 0.0
        %3423 = vmatpush1.msra.mxu0 %v2991
        %3424 = vmatprep.subr.mxu0 0.0
        %3425 = vmatpush1.msra.mxu0 %v2992
        %3426 = vmatprep.subr.mxu0 0.0
        %3427 = vmatpush1.msra.mxu0 %v2993
        %3428 = vmatprep.subr.mxu0 0.0
        %3429 = vmatpush1.msra.mxu0 %v2994
        %3430 = vmatprep.subr.mxu0 0.0
        %3431 = vmatpush1.msra.mxu0 %v2995
        %3432 = vmatprep.subr.mxu0 0.0
        %3433 = vmatpush1.msra.mxu0 %v2996
        %3434 = vmatprep.subr.mxu0 0.0
        %3435 = vmatpush1.msra.mxu0 %v2997
        %3436 = vmatprep.subr.mxu0 0.0
        %3437 = vmatpush1.msra.mxu0 %v2998
        %3438 = vmatprep.subr.mxu0 0.0
        %3439 = vmatpush1.msra.mxu0 %v2999
        %3440 = vmatprep.subr.mxu0 0.0
        %3441 = vmatpush1.msra.mxu0 %v3000
        %3442 = vmatprep.subr.mxu0 0.0
        %3443 = vmatpush1.msra.mxu0 %v3001
        %3444 = vmatprep.subr.mxu0 0.0
        %3445 = vmatpush1.msra.mxu0 %v3002
        %3446 = vmatprep.subr.mxu0 0.0
        %3447 = vmatpush1.msra.mxu0 0.0
        %3448 = vmatprep.subr.mxu0 0.0
        %3449 = vmatpush1.msra.mxu0 0.0
        %3450 = vmatprep.subr.mxu0 0.0
        %3451 = vmatpush1.msra.mxu0 0.0
        %3452 = vmatprep.subr.mxu0 0.0
        %3453 = vmatpush1.msra.mxu0 0.0
        %3454 = vmatprep.subr.mxu0 0.0
        %3455 = vmatpush1.msra.mxu0 0.0
        %3456 = vmatprep.subr.mxu0 0.0
        %3457 = vmatpush1.msra.mxu0 0.0
        %3458 = vmatprep.subr.mxu0 0.0
        %3459 = vmatpush1.msra.mxu0 0.0
        %3460 = vmatprep.subr.mxu0 0.0
        %3461 = vmatpush1.msra.mxu0 0.0
        %3462 = vmatprep.subr.mxu0 0.0
        %3463 = vmatpush1.msra.mxu0 0.0
        %3464 = vmatprep.subr.mxu0 0.0
        %3465 = vmatpush1.msra.mxu0 0.0
        %3466 = vmatprep.subr.mxu0 0.0
        %3467 = vmatpush1.msra.mxu0 0.0
        %3468 = vmatprep.subr.mxu0 0.0
        %3469 = vmatpush1.msra.mxu0 0.0
        %3470 = vmatprep.subr.mxu0 0.0
        %3471 = vmatpush1.msra.mxu0 0.0
        %3472 = vmatprep.subr.mxu0 0.0
        %3473 = vmatpush1.msra.mxu0 0.0
        %3474 = vmatprep.subr.mxu0 0.0
        %3475 = vmatpush1.msra.mxu0 0.0
        %3476 = vmatprep.subr.mxu0 0.0
        %3477 = vmatpush1.msra.mxu0 0.0
        %3478 = vmatprep.mubr.f32.mxu0 0.0
        %3479 = vmatmul.mubr.f32.gmra.mrb[0].mxu0 %v2843
        %v3480 = vpop.f32.mrb[0].mxu0
        %v3481 = vadd.f32 %v3344, %v3480
        %v3482 = vpop.f32.mrb[0].mxu0
        %3483 = vmatprep.mubr.f32.mxu0 0.0
        %3484 = vmatmul.mubr.f32.gmra.mrb[0].mxu0 %v2845
        %v3485 = vpop.f32.mrb[0].mxu0
        %v3486 = vpop.f32.mrb[0].mxu0
        %3487 = vmatprep.mubr.f32.mxu0 0.0
        %3488 = vmatmul.mubr.f32.gmra.mrb[0].mxu0 %v2847
        %v3489 = vpop.f32.mrb[0].mxu0
        %v3490 = vadd.f32 %v3353, %v3489
        %v3491 = vpop.f32.mrb[0].mxu0
        %3492 = vmatprep.mubr.f32.mxu0 0.0
        %3493 = vmatmul.mubr.f32.gmra.mrb[0].mxu0 %v2849
        %v3494 = vpop.f32.mrb[0].mxu0
        %v3495 = vpop.f32.mrb[0].mxu0
        %3496 = vmatprep.mubr.f32.mxu0 0.0
        %3497 = vmatmul.mubr.f32.gmra.mrb[0].mxu0 %v2851
        %v3498 = vpop.f32.mrb[0].mxu0
        %v3499 = vadd.f32 %v3362, %v3498
        %v3500 = vpop.f32.mrb[0].mxu0
        %3501 = vmatprep.mubr.f32.mxu0 0.0
        %3502 = vmatmul.mubr.f32.gmra.mrb[0].mxu0 %v2853
        %v3503 = vpop.f32.mrb[0].mxu0
        %v3504 = vpop.f32.mrb[0].mxu0
        %3505 = vmatprep.mubr.f32.mxu0 0.0
        %3506 = vmatmul.mubr.f32.gmra.mrb[0].mxu0 %v2855
        %v3507 = vpop.f32.mrb[0].mxu0
        %v3508 = vadd.f32 %v3371, %v3507
        %v3509 = vpop.f32.mrb[0].mxu0
        %3510 = vmatprep.mubr.f32.mxu0 0.0
        %3511 = vmatmul.mubr.f32.gmra.mrb[0].mxu0 %v2857
        %v3512 = vpop.f32.mrb[0].mxu0
        %v3513 = vpop.f32.mrb[0].mxu0
        %3514 = vmatprep.mubr.f32.mxu0 0.0
        %3515 = vmatmul.mubr.f32.gmra.mrb[0].mxu0 %v2859
        %v3516 = vpop.f32.mrb[0].mxu0
        %v3517 = vadd.f32 %v3380, %v3516
        %v3518 = vpop.f32.mrb[0].mxu0
        %3519 = vmatprep.mubr.f32.mxu0 0.0
        %3520 = vmatmul.mubr.f32.gmra.mrb[0].mxu0 %v2861
        %v3521 = vpop.f32.mrb[0].mxu0
        %v3522 = vpop.f32.mrb[0].mxu0
        %3523 = vmatprep.mubr.f32.mxu0 0.0
        %3524 = vmatmul.mubr.f32.gmra.mrb[0].mxu0 %v2863
        %v3525 = vpop.f32.mrb[0].mxu0
        %v3526 = vadd.f32 %v3389, %v3525
        %v3527 = vpop.f32.mrb[0].mxu0
        %3528 = vmatprep.mubr.f32.mxu0 0.0
        %3529 = vmatmul.mubr.f32.gmra.mrb[0].mxu0 %v2865
        %v3530 = vpop.f32.mrb[0].mxu0
        %v3531 = vpop.f32.mrb[0].mxu0
        %3532 = vmatprep.mubr.f32.mxu0 0.0
        %3533 = vmatmul.mubr.f32.gmra.mrb[0].mxu0 %v2867
        %v3534 = vpop.f32.mrb[0].mxu0
        %v3535 = vadd.f32 %v3398, %v3534
        %v3536 = vpop.f32.mrb[0].mxu0
        %3537 = vmatprep.mubr.f32.mxu0 0.0
        %3538 = vmatmul.mubr.f32.gmra.mrb[0].mxu0 %v2869
        %v3539 = vpop.f32.mrb[0].mxu0
        %v3540 = vpop.f32.mrb[0].mxu0
        %3541 = vmatprep.mubr.f32.mxu0 0.0
        %3542 = vmatmul.mubr.f32.gmra.mrb[0].mxu0 %v2871
        %v3543 = vpop.f32.mrb[0].mxu0
        %v3544 = vadd.f32 %v3407, %v3543
        %v3545 = vpop.f32.mrb[0].mxu0
        %3546 = vmatprep.mubr.f32.mxu0 0.0
        %3547 = vmatmul.mubr.f32.gmra.mrb[0].mxu0 %v2873
        %v3548 = vpop.f32.mrb[0].mxu0
        %v3549 = vpop.f32.mrb[0].mxu0
        %3550 = vdwg.mxu0
        %v3551 = vadd.f32 %v2491, %v3481
        %v3552 = vadd.f32 %v2500, %v3490
        %v3553 = vadd.f32 %v2509, %v3499
        %v3554 = vadd.f32 %v2518, %v3508
        %v3555 = vadd.f32 %v2527, %v3517
        %v3556 = vadd.f32 %v2536, %v3526
        %v3557 = vadd.f32 %v2545, %v3535
        %v3558 = vadd.f32 %v2554, %v3544
        %s3559 = scalar_lea.vmem [#allocation2], 48
        %v3560 = vld [vmem:[%s3559] sm:$0xff]
        %v3561 = vld [vmem:[%s3559 + $0x8] sm:$0xff]
        %v3562 = vld [vmem:[%s3559 + $0x10] sm:$0xff]
        %v3563 = vld [vmem:[%s3559 + $0x18] sm:$0xff]
        %v3564 = vld [vmem:[%s3559 + $0x20] sm:$0xff]
        %v3565 = vld [vmem:[%s3559 + $0x28] sm:$0xff]
        %v3566 = vld [vmem:[%s3559 + $0x30] sm:$0xff]
        %v3567 = vld [vmem:[%s3559 + $0x38] sm:$0xff]
        %v3568 = vld [vmem:[%s3559 + $0x40] sm:$0xff]
        %v3569 = vld [vmem:[%s3559 + $0x48] sm:$0xff]
        %v3570 = vld [vmem:[%s3559 + $0x50] sm:$0xff]
        %v3571 = vld [vmem:[%s3559 + $0x58] sm:$0xff]
        %v3572 = vld [vmem:[%s3559 + $0x60] sm:$0xff]
        %v3573 = vld [vmem:[%s3559 + $0x68] sm:$0xff]
        %v3574 = vld [vmem:[%s3559 + $0x70] sm:$0xff]
        %v3575 = vld [vmem:[%s3559 + $0x78] sm:$0xff]
        %v3576 = vld [vmem:[%s3559 + $0x80] sm:$0xff]
        %v3594 = vrot.slane %v3560, 1
        %v3595 = vrot.slane %v3561, 1
        %v3596 = vsel %vm611, %v3594, %v3595
        %v3597 = vrot.slane %v3562, 1
        %v3598 = vsel %vm611, %v3595, %v3597
        %v3599 = vrot.slane %v3563, 1
        %v3600 = vsel %vm611, %v3597, %v3599
        %v3601 = vrot.slane %v3564, 1
        %v3602 = vsel %vm611, %v3599, %v3601
        %v3603 = vrot.slane %v3565, 1
        %v3604 = vsel %vm611, %v3601, %v3603
        %v3605 = vrot.slane %v3566, 1
        %v3606 = vsel %vm611, %v3603, %v3605
        %v3607 = vrot.slane %v3567, 1
        %v3608 = vsel %vm611, %v3605, %v3607
        %v3609 = vrot.slane %v3568, 1
        %v3610 = vsel %vm611, %v3607, %v3609
        %v3611 = vrot.slane %v3569, 1
        %v3612 = vsel %vm611, %v3609, %v3611
        %v3613 = vrot.slane %v3570, 1
        %v3614 = vsel %vm611, %v3611, %v3613
        %v3615 = vrot.slane %v3571, 1
        %v3616 = vsel %vm611, %v3613, %v3615
        %v3617 = vrot.slane %v3572, 1
        %v3618 = vsel %vm611, %v3615, %v3617
        %v3619 = vrot.slane %v3573, 1
        %v3620 = vsel %vm611, %v3617, %v3619
        %v3621 = vrot.slane %v3574, 1
        %v3622 = vsel %vm611, %v3619, %v3621
        %v3623 = vrot.slane %v3575, 1
        %v3624 = vsel %vm611, %v3621, %v3623
        %v3625 = vrot.slane %v3576, 1
        %v3626 = vsel %vm611, %v3623, %v3625
        %v3643 = vrot.slane %v3560, 2
        %v3644 = vrot.slane %v3561, 2
        %v3645 = vsel %vm661, %v3643, %v3644
        %v3646 = vrot.slane %v3562, 2
        %v3647 = vsel %vm661, %v3644, %v3646
        %v3648 = vrot.slane %v3563, 2
        %v3649 = vsel %vm661, %v3646, %v3648
        %v3650 = vrot.slane %v3564, 2
        %v3651 = vsel %vm661, %v3648, %v3650
        %v3652 = vrot.slane %v3565, 2
        %v3653 = vsel %vm661, %v3650, %v3652
        %v3654 = vrot.slane %v3566, 2
        %v3655 = vsel %vm661, %v3652, %v3654
        %v3656 = vrot.slane %v3567, 2
        %v3657 = vsel %vm661, %v3654, %v3656
        %v3658 = vrot.slane %v3568, 2
        %v3659 = vsel %vm661, %v3656, %v3658
        %v3660 = vrot.slane %v3569, 2
        %v3661 = vsel %vm661, %v3658, %v3660
        %v3662 = vrot.slane %v3570, 2
        %v3663 = vsel %vm661, %v3660, %v3662
        %v3664 = vrot.slane %v3571, 2
        %v3665 = vsel %vm661, %v3662, %v3664
        %v3666 = vrot.slane %v3572, 2
        %v3667 = vsel %vm661, %v3664, %v3666
        %v3668 = vrot.slane %v3573, 2
        %v3669 = vsel %vm661, %v3666, %v3668
        %v3670 = vrot.slane %v3574, 2
        %v3671 = vsel %vm661, %v3668, %v3670
        %v3672 = vrot.slane %v3575, 2
        %v3673 = vsel %vm661, %v3670, %v3672
        %v3674 = vrot.slane %v3576, 2
        %v3675 = vsel %vm661, %v3672, %v3674
        %v3692 = vrot.slane %v3560, 3
        %v3693 = vrot.slane %v3561, 3
        %v3694 = vsel %vm711, %v3692, %v3693
        %v3695 = vrot.slane %v3562, 3
        %v3696 = vsel %vm711, %v3693, %v3695
        %v3697 = vrot.slane %v3563, 3
        %v3698 = vsel %vm711, %v3695, %v3697
        %v3699 = vrot.slane %v3564, 3
        %v3700 = vsel %vm711, %v3697, %v3699
        %v3701 = vrot.slane %v3565, 3
        %v3702 = vsel %vm711, %v3699, %v3701
        %v3703 = vrot.slane %v3566, 3
        %v3704 = vsel %vm711, %v3701, %v3703
        %v3705 = vrot.slane %v3567, 3
        %v3706 = vsel %vm711, %v3703, %v3705
        %v3707 = vrot.slane %v3568, 3
        %v3708 = vsel %vm711, %v3705, %v3707
        %v3709 = vrot.slane %v3569, 3
        %v3710 = vsel %vm711, %v3707, %v3709
        %v3711 = vrot.slane %v3570, 3
        %v3712 = vsel %vm711, %v3709, %v3711
        %v3713 = vrot.slane %v3571, 3
        %v3714 = vsel %vm711, %v3711, %v3713
        %v3715 = vrot.slane %v3572, 3
        %v3716 = vsel %vm711, %v3713, %v3715
        %v3717 = vrot.slane %v3573, 3
        %v3718 = vsel %vm711, %v3715, %v3717
        %v3719 = vrot.slane %v3574, 3
        %v3720 = vsel %vm711, %v3717, %v3719
        %v3721 = vrot.slane %v3575, 3
        %v3722 = vsel %vm711, %v3719, %v3721
        %v3723 = vrot.slane %v3576, 3
        %v3724 = vsel %vm711, %v3721, %v3723
        %v3741 = vrot.slane %v3560, 4
        %v3742 = vrot.slane %v3561, 4
        %v3743 = vsel %vm761, %v3741, %v3742
        %v3744 = vrot.slane %v3562, 4
        %v3745 = vsel %vm761, %v3742, %v3744
        %v3746 = vrot.slane %v3563, 4
        %v3747 = vsel %vm761, %v3744, %v3746
        %v3748 = vrot.slane %v3564, 4
        %v3749 = vsel %vm761, %v3746, %v3748
        %v3750 = vrot.slane %v3565, 4
        %v3751 = vsel %vm761, %v3748, %v3750
        %v3752 = vrot.slane %v3566, 4
        %v3753 = vsel %vm761, %v3750, %v3752
        %v3754 = vrot.slane %v3567, 4
        %v3755 = vsel %vm761, %v3752, %v3754
        %v3756 = vrot.slane %v3568, 4
        %v3757 = vsel %vm761, %v3754, %v3756
        %v3758 = vrot.slane %v3569, 4
        %v3759 = vsel %vm761, %v3756, %v3758
        %v3760 = vrot.slane %v3570, 4
        %v3761 = vsel %vm761, %v3758, %v3760
        %v3762 = vrot.slane %v3571, 4
        %v3763 = vsel %vm761, %v3760, %v3762
        %v3764 = vrot.slane %v3572, 4
        %v3765 = vsel %vm761, %v3762, %v3764
        %v3766 = vrot.slane %v3573, 4
        %v3767 = vsel %vm761, %v3764, %v3766
        %v3768 = vrot.slane %v3574, 4
        %v3769 = vsel %vm761, %v3766, %v3768
        %v3770 = vrot.slane %v3575, 4
        %v3771 = vsel %vm761, %v3768, %v3770
        %v3772 = vrot.slane %v3576, 4
        %v3773 = vsel %vm761, %v3770, %v3772
        %v3790 = vrot.slane %v3560, 5
        %v3791 = vrot.slane %v3561, 5
        %v3792 = vsel %vm811, %v3790, %v3791
        %v3793 = vrot.slane %v3562, 5
        %v3794 = vsel %vm811, %v3791, %v3793
        %v3795 = vrot.slane %v3563, 5
        %v3796 = vsel %vm811, %v3793, %v3795
        %v3797 = vrot.slane %v3564, 5
        %v3798 = vsel %vm811, %v3795, %v3797
        %v3799 = vrot.slane %v3565, 5
        %v3800 = vsel %vm811, %v3797, %v3799
        %v3801 = vrot.slane %v3566, 5
        %v3802 = vsel %vm811, %v3799, %v3801
        %v3803 = vrot.slane %v3567, 5
        %v3804 = vsel %vm811, %v3801, %v3803
        %v3805 = vrot.slane %v3568, 5
        %v3806 = vsel %vm811, %v3803, %v3805
        %v3807 = vrot.slane %v3569, 5
        %v3808 = vsel %vm811, %v3805, %v3807
        %v3809 = vrot.slane %v3570, 5
        %v3810 = vsel %vm811, %v3807, %v3809
        %v3811 = vrot.slane %v3571, 5
        %v3812 = vsel %vm811, %v3809, %v3811
        %v3813 = vrot.slane %v3572, 5
        %v3814 = vsel %vm811, %v3811, %v3813
        %v3815 = vrot.slane %v3573, 5
        %v3816 = vsel %vm811, %v3813, %v3815
        %v3817 = vrot.slane %v3574, 5
        %v3818 = vsel %vm811, %v3815, %v3817
        %v3819 = vrot.slane %v3575, 5
        %v3820 = vsel %vm811, %v3817, %v3819
        %v3821 = vrot.slane %v3576, 5
        %v3822 = vsel %vm811, %v3819, %v3821
        %v3839 = vrot.slane %v3560, 6
        %v3840 = vrot.slane %v3561, 6
        %v3841 = vsel %vm861, %v3839, %v3840
        %v3842 = vrot.slane %v3562, 6
        %v3843 = vsel %vm861, %v3840, %v3842
        %v3844 = vrot.slane %v3563, 6
        %v3845 = vsel %vm861, %v3842, %v3844
        %v3846 = vrot.slane %v3564, 6
        %v3847 = vsel %vm861, %v3844, %v3846
        %v3848 = vrot.slane %v3565, 6
        %v3849 = vsel %vm861, %v3846, %v3848
        %v3850 = vrot.slane %v3566, 6
        %v3851 = vsel %vm861, %v3848, %v3850
        %v3852 = vrot.slane %v3567, 6
        %v3853 = vsel %vm861, %v3850, %v3852
        %v3854 = vrot.slane %v3568, 6
        %v3855 = vsel %vm861, %v3852, %v3854
        %v3856 = vrot.slane %v3569, 6
        %v3857 = vsel %vm861, %v3854, %v3856
        %v3858 = vrot.slane %v3570, 6
        %v3859 = vsel %vm861, %v3856, %v3858
        %v3860 = vrot.slane %v3571, 6
        %v3861 = vsel %vm861, %v3858, %v3860
        %v3862 = vrot.slane %v3572, 6
        %v3863 = vsel %vm861, %v3860, %v3862
        %v3864 = vrot.slane %v3573, 6
        %v3865 = vsel %vm861, %v3862, %v3864
        %v3866 = vrot.slane %v3574, 6
        %v3867 = vsel %vm861, %v3864, %v3866
        %v3868 = vrot.slane %v3575, 6
        %v3869 = vsel %vm861, %v3866, %v3868
        %v3870 = vrot.slane %v3576, 6
        %v3871 = vsel %vm861, %v3868, %v3870
        %s3888 = scalar_lea.vmem [#allocation6], 2688
        %v3889 = vld [vmem:[%s3888] sm:$0xff]
        %v3890 = vld [vmem:[%s3888 + $0x8] sm:$0xff]
        %v3891 = vld [vmem:[%s3888 + $0x10] sm:$0xff]
        %v3892 = vld [vmem:[%s3888 + $0x18] sm:$0xff]
        %v3893 = vld [vmem:[%s3888 + $0x20] sm:$0xff]
        %v3894 = vld [vmem:[%s3888 + $0x28] sm:$0xff]
        %v3895 = vld [vmem:[%s3888 + $0x30] sm:$0xff]
        %v3896 = vld [vmem:[%s3888 + $0x38] sm:$0xff]
        %v3897 = vld [vmem:[%s3888 + $0x40] sm:$0xff]
        %v3898 = vld [vmem:[%s3888 + $0x48] sm:$0xff]
        %v3899 = vld [vmem:[%s3888 + $0x50] sm:$0xff]
        %v3900 = vld [vmem:[%s3888 + $0x58] sm:$0xff]
        %v3901 = vld [vmem:[%s3888 + $0x60] sm:$0xff]
        %v3902 = vld [vmem:[%s3888 + $0x68] sm:$0xff]
        %v3903 = vld [vmem:[%s3888 + $0x70] sm:$0xff]
        %v3904 = vld [vmem:[%s3888 + $0x78] sm:$0xff]
        %v3905 = vld [vmem:[%s3888 + $0x80] sm:$0xff]
        %v3906 = vld [vmem:[%s3888 + $0x88] sm:$0xff]
        %v3907 = vld [vmem:[%s3888 + $0x90] sm:$0xff]
        %v3908 = vld [vmem:[%s3888 + $0x98] sm:$0xff]
        %v3909 = vld [vmem:[%s3888 + $0xa0] sm:$0xff]
        %v3910 = vld [vmem:[%s3888 + $0xa8] sm:$0xff]
        %v3911 = vld [vmem:[%s3888 + $0xb0] sm:$0xff]
        %v3912 = vld [vmem:[%s3888 + $0xb8] sm:$0xff]
        %v3913 = vld [vmem:[%s3888 + $0xc0] sm:$0xff]
        %v3914 = vld [vmem:[%s3888 + $0xc8] sm:$0xff]
        %v3915 = vld [vmem:[%s3888 + $0xd0] sm:$0xff]
        %v3916 = vld [vmem:[%s3888 + $0xd8] sm:$0xff]
        %v3917 = vld [vmem:[%s3888 + $0xe0] sm:$0xff]
        %v3918 = vld [vmem:[%s3888 + $0xe8] sm:$0xff]
        %v3919 = vld [vmem:[%s3888 + $0xf0] sm:$0xff]
        %v3920 = vld [vmem:[%s3888 + $0xf8] sm:$0xff]
        %v3921 = vld [vmem:[%s3888 + $0x100] sm:$0xff]
        %v3922 = vld [vmem:[%s3888 + $0x108] sm:$0xff]
        %v3923 = vld [vmem:[%s3888 + $0x110] sm:$0xff]
        %v3924 = vld [vmem:[%s3888 + $0x118] sm:$0xff]
        %v3925 = vld [vmem:[%s3888 + $0x120] sm:$0xff]
        %v3926 = vld [vmem:[%s3888 + $0x128] sm:$0xff]
        %v3927 = vld [vmem:[%s3888 + $0x130] sm:$0xff]
        %v3928 = vld [vmem:[%s3888 + $0x138] sm:$0xff]
        %v3929 = vld [vmem:[%s3888 + $0x140] sm:$0xff]
        %v3930 = vld [vmem:[%s3888 + $0x148] sm:$0xff]
        %v3931 = vld [vmem:[%s3888 + $0x150] sm:$0xff]
        %v3932 = vld [vmem:[%s3888 + $0x158] sm:$0xff]
        %v3933 = vld [vmem:[%s3888 + $0x160] sm:$0xff]
        %v3934 = vld [vmem:[%s3888 + $0x168] sm:$0xff]
        %v3935 = vld [vmem:[%s3888 + $0x170] sm:$0xff]
        %v3936 = vld [vmem:[%s3888 + $0x178] sm:$0xff]
        %v3937 = vld [vmem:[%s3888 + $0x180] sm:$0xff]
        %v3938 = vld [vmem:[%s3888 + $0x188] sm:$0xff]
        %v3939 = vld [vmem:[%s3888 + $0x190] sm:$0xff]
        %v3940 = vld [vmem:[%s3888 + $0x198] sm:$0xff]
        %v3941 = vld [vmem:[%s3888 + $0x1a0] sm:$0xff]
        %v3942 = vld [vmem:[%s3888 + $0x1a8] sm:$0xff]
        %v3943 = vld [vmem:[%s3888 + $0x1b0] sm:$0xff]
        %v3944 = vld [vmem:[%s3888 + $0x1b8] sm:$0xff]
        %v3945 = vld [vmem:[%s3888 + $0x1c0] sm:$0xff]
        %v3946 = vld [vmem:[%s3888 + $0x1c8] sm:$0xff]
        %v3947 = vld [vmem:[%s3888 + $0x1d0] sm:$0xff]
        %v3948 = vld [vmem:[%s3888 + $0x1d8] sm:$0xff]
        %v3949 = vld [vmem:[%s3888 + $0x1e0] sm:$0xff]
        %v3950 = vld [vmem:[%s3888 + $0x1e8] sm:$0xff]
        %v3951 = vld [vmem:[%s3888 + $0x1f0] sm:$0xff]
        %v3952 = vld [vmem:[%s3888 + $0x1f8] sm:$0xff]
        %v3953 = vld [vmem:[%s3888 + $0x200] sm:$0xff]
        %v3954 = vld [vmem:[%s3888 + $0x208] sm:$0xff]
        %v3955 = vld [vmem:[%s3888 + $0x210] sm:$0xff]
        %v3956 = vld [vmem:[%s3888 + $0x218] sm:$0xff]
        %v3957 = vld [vmem:[%s3888 + $0x220] sm:$0xff]
        %v3958 = vld [vmem:[%s3888 + $0x228] sm:$0xff]
        %v3959 = vld [vmem:[%s3888 + $0x230] sm:$0xff]
        %v3960 = vld [vmem:[%s3888 + $0x238] sm:$0xff]
        %v3961 = vld [vmem:[%s3888 + $0x240] sm:$0xff]
        %v3962 = vld [vmem:[%s3888 + $0x248] sm:$0xff]
        %v3963 = vld [vmem:[%s3888 + $0x250] sm:$0xff]
        %v3964 = vld [vmem:[%s3888 + $0x258] sm:$0xff]
        %v3965 = vld [vmem:[%s3888 + $0x260] sm:$0xff]
        %v3966 = vld [vmem:[%s3888 + $0x268] sm:$0xff]
        %v3967 = vld [vmem:[%s3888 + $0x270] sm:$0xff]
        %v3968 = vld [vmem:[%s3888 + $0x278] sm:$0xff]
        %v3969 = vld [vmem:[%s3888 + $0x280] sm:$0xff]
        %v3970 = vld [vmem:[%s3888 + $0x288] sm:$0xff]
        %v3971 = vld [vmem:[%s3888 + $0x290] sm:$0xff]
        %v3972 = vld [vmem:[%s3888 + $0x298] sm:$0xff]
        %v3973 = vld [vmem:[%s3888 + $0x2a0] sm:$0xff]
        %v3974 = vld [vmem:[%s3888 + $0x2a8] sm:$0xff]
        %v3975 = vld [vmem:[%s3888 + $0x2b0] sm:$0xff]
        %v3976 = vld [vmem:[%s3888 + $0x2b8] sm:$0xff]
        %v3977 = vld [vmem:[%s3888 + $0x2c0] sm:$0xff]
        %v3978 = vld [vmem:[%s3888 + $0x2c8] sm:$0xff]
        %v3979 = vld [vmem:[%s3888 + $0x2d0] sm:$0xff]
        %v3980 = vld [vmem:[%s3888 + $0x2d8] sm:$0xff]
        %v3981 = vld [vmem:[%s3888 + $0x2e0] sm:$0xff]
        %v3982 = vld [vmem:[%s3888 + $0x2e8] sm:$0xff]
        %v3983 = vld [vmem:[%s3888 + $0x2f0] sm:$0xff]
        %v3984 = vld [vmem:[%s3888 + $0x2f8] sm:$0xff]
        %v3985 = vld [vmem:[%s3888 + $0x300] sm:$0xff]
        %v3986 = vld [vmem:[%s3888 + $0x308] sm:$0xff]
        %v3987 = vld [vmem:[%s3888 + $0x310] sm:$0xff]
        %v3988 = vld [vmem:[%s3888 + $0x318] sm:$0xff]
        %v3989 = vld [vmem:[%s3888 + $0x320] sm:$0xff]
        %v3990 = vld [vmem:[%s3888 + $0x328] sm:$0xff]
        %v3991 = vld [vmem:[%s3888 + $0x330] sm:$0xff]
        %v3992 = vld [vmem:[%s3888 + $0x338] sm:$0xff]
        %v3993 = vld [vmem:[%s3888 + $0x340] sm:$0xff]
        %v3994 = vld [vmem:[%s3888 + $0x348] sm:$0xff]
        %v3995 = vld [vmem:[%s3888 + $0x350] sm:$0xff]
        %v3996 = vld [vmem:[%s3888 + $0x358] sm:$0xff]
        %v3997 = vld [vmem:[%s3888 + $0x360] sm:$0xff]
        %v3998 = vld [vmem:[%s3888 + $0x368] sm:$0xff]
        %v3999 = vld [vmem:[%s3888 + $0x370] sm:$0xff]
        %v4000 = vld [vmem:[%s3888 + $0x378] sm:$0xff]
        %4001 = vmatprep.subr.mxu0 0.0
        %4002 = vmatpush1.msra.mxu0 %v3889
        %4003 = vmatprep.subr.mxu0 0.0
        %4004 = vmatpush1.msra.mxu0 %v3890
        %4005 = vmatprep.subr.mxu0 0.0
        %4006 = vmatpush1.msra.mxu0 %v3891
        %4007 = vmatprep.subr.mxu0 0.0
        %4008 = vmatpush1.msra.mxu0 %v3892
        %4009 = vmatprep.subr.mxu0 0.0
        %4010 = vmatpush1.msra.mxu0 %v3893
        %4011 = vmatprep.subr.mxu0 0.0
        %4012 = vmatpush1.msra.mxu0 %v3894
        %4013 = vmatprep.subr.mxu0 0.0
        %4014 = vmatpush1.msra.mxu0 %v3895
        %4015 = vmatprep.subr.mxu0 0.0
        %4016 = vmatpush1.msra.mxu0 %v3896
        %4017 = vmatprep.subr.mxu0 0.0
        %4018 = vmatpush1.msra.mxu0 %v3897
        %4019 = vmatprep.subr.mxu0 0.0
        %4020 = vmatpush1.msra.mxu0 %v3898
        %4021 = vmatprep.subr.mxu0 0.0
        %4022 = vmatpush1.msra.mxu0 %v3899
        %4023 = vmatprep.subr.mxu0 0.0
        %4024 = vmatpush1.msra.mxu0 %v3900
        %4025 = vmatprep.subr.mxu0 0.0
        %4026 = vmatpush1.msra.mxu0 %v3901
        %4027 = vmatprep.subr.mxu0 0.0
        %4028 = vmatpush1.msra.mxu0 %v3902
        %4029 = vmatprep.subr.mxu0 0.0
        %4030 = vmatpush1.msra.mxu0 %v3903
        %4031 = vmatprep.subr.mxu0 0.0
        %4032 = vmatpush1.msra.mxu0 %v3904
        %4033 = vmatprep.subr.mxu0 0.0
        %4034 = vmatpush1.msra.mxu0 %v3905
        %4035 = vmatprep.subr.mxu0 0.0
        %4036 = vmatpush1.msra.mxu0 %v3906
        %4037 = vmatprep.subr.mxu0 0.0
        %4038 = vmatpush1.msra.mxu0 %v3907
        %4039 = vmatprep.subr.mxu0 0.0
        %4040 = vmatpush1.msra.mxu0 %v3908
        %4041 = vmatprep.subr.mxu0 0.0
        %4042 = vmatpush1.msra.mxu0 %v3909
        %4043 = vmatprep.subr.mxu0 0.0
        %4044 = vmatpush1.msra.mxu0 %v3910
        %4045 = vmatprep.subr.mxu0 0.0
        %4046 = vmatpush1.msra.mxu0 %v3911
        %4047 = vmatprep.subr.mxu0 0.0
        %4048 = vmatpush1.msra.mxu0 %v3912
        %4049 = vmatprep.subr.mxu0 0.0
        %4050 = vmatpush1.msra.mxu0 %v3913
        %4051 = vmatprep.subr.mxu0 0.0
        %4052 = vmatpush1.msra.mxu0 %v3914
        %4053 = vmatprep.subr.mxu0 0.0
        %4054 = vmatpush1.msra.mxu0 %v3915
        %4055 = vmatprep.subr.mxu0 0.0
        %4056 = vmatpush1.msra.mxu0 %v3916
        %4057 = vmatprep.subr.mxu0 0.0
        %4058 = vmatpush1.msra.mxu0 %v3917
        %4059 = vmatprep.subr.mxu0 0.0
        %4060 = vmatpush1.msra.mxu0 %v3918
        %4061 = vmatprep.subr.mxu0 0.0
        %4062 = vmatpush1.msra.mxu0 %v3919
        %4063 = vmatprep.subr.mxu0 0.0
        %4064 = vmatpush1.msra.mxu0 %v3920
        %4065 = vmatprep.mubr.f32.mxu0 %v3596
        %4066 = vmatmul.mubr.f32.gmra.mrb[0].mxu0 %v3560
        %v4067 = vpop.f32.mrb[0].mxu0
        %v4068 = vadd.f32 0.0, %v4067
        %v4069 = vpop.f32.mrb[0].mxu0
        %4070 = vmatprep.mubr.f32.mxu0 %v3598
        %4071 = vmatmul.mubr.f32.gmra.mrb[0].mxu0 %v3561
        %v4072 = vpop.f32.mrb[0].mxu0
        %v4073 = vpop.f32.mrb[0].mxu0
        %4074 = vmatprep.mubr.f32.mxu0 %v3600
        %4075 = vmatmul.mubr.f32.gmra.mrb[0].mxu0 %v3562
        %v4076 = vpop.f32.mrb[0].mxu0
        %v4077 = vadd.f32 0.0, %v4076
        %v4078 = vpop.f32.mrb[0].mxu0
        %4079 = vmatprep.mubr.f32.mxu0 %v3602
        %4080 = vmatmul.mubr.f32.gmra.mrb[0].mxu0 %v3563
        %v4081 = vpop.f32.mrb[0].mxu0
        %v4082 = vpop.f32.mrb[0].mxu0
        %4083 = vmatprep.mubr.f32.mxu0 %v3604
        %4084 = vmatmul.mubr.f32.gmra.mrb[0].mxu0 %v3564
        %v4085 = vpop.f32.mrb[0].mxu0
        %v4086 = vadd.f32 0.0, %v4085
        %v4087 = vpop.f32.mrb[0].mxu0
        %4088 = vmatprep.mubr.f32.mxu0 %v3606
        %4089 = vmatmul.mubr.f32.gmra.mrb[0].mxu0 %v3565
        %v4090 = vpop.f32.mrb[0].mxu0
        %v4091 = vpop.f32.mrb[0].mxu0
        %4092 = vmatprep.mubr.f32.mxu0 %v3608
        %4093 = vmatmul.mubr.f32.gmra.mrb[0].mxu0 %v3566
        %v4094 = vpop.f32.mrb[0].mxu0
        %v4095 = vadd.f32 0.0, %v4094
        %v4096 = vpop.f32.mrb[0].mxu0
        %4097 = vmatprep.mubr.f32.mxu0 %v3610
        %4098 = vmatmul.mubr.f32.gmra.mrb[0].mxu0 %v3567
        %v4099 = vpop.f32.mrb[0].mxu0
        %v4100 = vpop.f32.mrb[0].mxu0
        %4101 = vmatprep.mubr.f32.mxu0 %v3612
        %4102 = vmatmul.mubr.f32.gmra.mrb[0].mxu0 %v3568
        %v4103 = vpop.f32.mrb[0].mxu0
        %v4104 = vadd.f32 0.0, %v4103
        %v4105 = vpop.f32.mrb[0].mxu0
        %4106 = vmatprep.mubr.f32.mxu0 %v3614
        %4107 = vmatmul.mubr.f32.gmra.mrb[0].mxu0 %v3569
        %v4108 = vpop.f32.mrb[0].mxu0
        %v4109 = vpop.f32.mrb[0].mxu0
        %4110 = vmatprep.mubr.f32.mxu0 %v3616
        %4111 = vmatmul.mubr.f32.gmra.mrb[0].mxu0 %v3570
        %v4112 = vpop.f32.mrb[0].mxu0
        %v4113 = vadd.f32 0.0, %v4112
        %v4114 = vpop.f32.mrb[0].mxu0
        %4115 = vmatprep.mubr.f32.mxu0 %v3618
        %4116 = vmatmul.mubr.f32.gmra.mrb[0].mxu0 %v3571
        %v4117 = vpop.f32.mrb[0].mxu0
        %v4118 = vpop.f32.mrb[0].mxu0
        %4119 = vmatprep.mubr.f32.mxu0 %v3620
        %4120 = vmatmul.mubr.f32.gmra.mrb[0].mxu0 %v3572
        %v4121 = vpop.f32.mrb[0].mxu0
        %v4122 = vadd.f32 0.0, %v4121
        %v4123 = vpop.f32.mrb[0].mxu0
        %4124 = vmatprep.mubr.f32.mxu0 %v3622
        %4125 = vmatmul.mubr.f32.gmra.mrb[0].mxu0 %v3573
        %v4126 = vpop.f32.mrb[0].mxu0
        %v4127 = vpop.f32.mrb[0].mxu0
        %4128 = vmatprep.mubr.f32.mxu0 %v3624
        %4129 = vmatmul.mubr.f32.gmra.mrb[0].mxu0 %v3574
        %v4130 = vpop.f32.mrb[0].mxu0
        %v4131 = vadd.f32 0.0, %v4130
        %v4132 = vpop.f32.mrb[0].mxu0
        %4133 = vmatprep.mubr.f32.mxu0 %v3626
        %4134 = vmatmul.mubr.f32.gmra.mrb[0].mxu0 %v3575
        %v4135 = vpop.f32.mrb[0].mxu0
        %v4136 = vpop.f32.mrb[0].mxu0
        %4137 = vdwg.mxu0
        %4138 = vmatprep.subr.mxu0 0.0
        %4139 = vmatpush1.msra.mxu0 %v3921
        %4140 = vmatprep.subr.mxu0 0.0
        %4141 = vmatpush1.msra.mxu0 %v3922
        %4142 = vmatprep.subr.mxu0 0.0
        %4143 = vmatpush1.msra.mxu0 %v3923
        %4144 = vmatprep.subr.mxu0 0.0
        %4145 = vmatpush1.msra.mxu0 %v3924
        %4146 = vmatprep.subr.mxu0 0.0
        %4147 = vmatpush1.msra.mxu0 %v3925
        %4148 = vmatprep.subr.mxu0 0.0
        %4149 = vmatpush1.msra.mxu0 %v3926
        %4150 = vmatprep.subr.mxu0 0.0
        %4151 = vmatpush1.msra.mxu0 %v3927
        %4152 = vmatprep.subr.mxu0 0.0
        %4153 = vmatpush1.msra.mxu0 %v3928
        %4154 = vmatprep.subr.mxu0 0.0
        %4155 = vmatpush1.msra.mxu0 %v3929
        %4156 = vmatprep.subr.mxu0 0.0
        %4157 = vmatpush1.msra.mxu0 %v3930
        %4158 = vmatprep.subr.mxu0 0.0
        %4159 = vmatpush1.msra.mxu0 %v3931
        %4160 = vmatprep.subr.mxu0 0.0
        %4161 = vmatpush1.msra.mxu0 %v3932
        %4162 = vmatprep.subr.mxu0 0.0
        %4163 = vmatpush1.msra.mxu0 %v3933
        %4164 = vmatprep.subr.mxu0 0.0
        %4165 = vmatpush1.msra.mxu0 %v3934
        %4166 = vmatprep.subr.mxu0 0.0
        %4167 = vmatpush1.msra.mxu0 %v3935
        %4168 = vmatprep.subr.mxu0 0.0
        %4169 = vmatpush1.msra.mxu0 %v3936
        %4170 = vmatprep.subr.mxu0 0.0
        %4171 = vmatpush1.msra.mxu0 %v3937
        %4172 = vmatprep.subr.mxu0 0.0
        %4173 = vmatpush1.msra.mxu0 %v3938
        %4174 = vmatprep.subr.mxu0 0.0
        %4175 = vmatpush1.msra.mxu0 %v3939
        %4176 = vmatprep.subr.mxu0 0.0
        %4177 = vmatpush1.msra.mxu0 %v3940
        %4178 = vmatprep.subr.mxu0 0.0
        %4179 = vmatpush1.msra.mxu0 %v3941
        %4180 = vmatprep.subr.mxu0 0.0
        %4181 = vmatpush1.msra.mxu0 %v3942
        %4182 = vmatprep.subr.mxu0 0.0
        %4183 = vmatpush1.msra.mxu0 %v3943
        %4184 = vmatprep.subr.mxu0 0.0
        %4185 = vmatpush1.msra.mxu0 %v3944
        %4186 = vmatprep.subr.mxu0 0.0
        %4187 = vmatpush1.msra.mxu0 %v3945
        %4188 = vmatprep.subr.mxu0 0.0
        %4189 = vmatpush1.msra.mxu0 %v3946
        %4190 = vmatprep.subr.mxu0 0.0
        %4191 = vmatpush1.msra.mxu0 %v3947
        %4192 = vmatprep.subr.mxu0 0.0
        %4193 = vmatpush1.msra.mxu0 %v3948
        %4194 = vmatprep.subr.mxu0 0.0
        %4195 = vmatpush1.msra.mxu0 %v3949
        %4196 = vmatprep.subr.mxu0 0.0
        %4197 = vmatpush1.msra.mxu0 %v3950
        %4198 = vmatprep.subr.mxu0 0.0
        %4199 = vmatpush1.msra.mxu0 %v3951
        %4200 = vmatprep.subr.mxu0 0.0
        %4201 = vmatpush1.msra.mxu0 %v3952
        %4202 = vmatprep.mubr.f32.mxu0 %v3694
        %4203 = vmatmul.mubr.f32.gmra.mrb[0].mxu0 %v3645
        %v4204 = vpop.f32.mrb[0].mxu0
        %v4205 = vadd.f32 %v4068, %v4204
        %v4206 = vpop.f32.mrb[0].mxu0
        %4207 = vmatprep.mubr.f32.mxu0 %v3696
        %4208 = vmatmul.mubr.f32.gmra.mrb[0].mxu0 %v3647
        %v4209 = vpop.f32.mrb[0].mxu0
        %v4210 = vpop.f32.mrb[0].mxu0
        %4211 = vmatprep.mubr.f32.mxu0 %v3698
        %4212 = vmatmul.mubr.f32.gmra.mrb[0].mxu0 %v3649
        %v4213 = vpop.f32.mrb[0].mxu0
        %v4214 = vadd.f32 %v4077, %v4213
        %v4215 = vpop.f32.mrb[0].mxu0
        %4216 = vmatprep.mubr.f32.mxu0 %v3700
        %4217 = vmatmul.mubr.f32.gmra.mrb[0].mxu0 %v3651
        %v4218 = vpop.f32.mrb[0].mxu0
        %v4219 = vpop.f32.mrb[0].mxu0
        %4220 = vmatprep.mubr.f32.mxu0 %v3702
        %4221 = vmatmul.mubr.f32.gmra.mrb[0].mxu0 %v3653
        %v4222 = vpop.f32.mrb[0].mxu0
        %v4223 = vadd.f32 %v4086, %v4222
        %v4224 = vpop.f32.mrb[0].mxu0
        %4225 = vmatprep.mubr.f32.mxu0 %v3704
        %4226 = vmatmul.mubr.f32.gmra.mrb[0].mxu0 %v3655
        %v4227 = vpop.f32.mrb[0].mxu0
        %v4228 = vpop.f32.mrb[0].mxu0
        %4229 = vmatprep.mubr.f32.mxu0 %v3706
        %4230 = vmatmul.mubr.f32.gmra.mrb[0].mxu0 %v3657
        %v4231 = vpop.f32.mrb[0].mxu0
        %v4232 = vadd.f32 %v4095, %v4231
        %v4233 = vpop.f32.mrb[0].mxu0
        %4234 = vmatprep.mubr.f32.mxu0 %v3708
        %4235 = vmatmul.mubr.f32.gmra.mrb[0].mxu0 %v3659
        %v4236 = vpop.f32.mrb[0].mxu0
        %v4237 = vpop.f32.mrb[0].mxu0
        %4238 = vmatprep.mubr.f32.mxu0 %v3710
        %4239 = vmatmul.mubr.f32.gmra.mrb[0].mxu0 %v3661
        %v4240 = vpop.f32.mrb[0].mxu0
        %v4241 = vadd.f32 %v4104, %v4240
        %v4242 = vpop.f32.mrb[0].mxu0
        %4243 = vmatprep.mubr.f32.mxu0 %v3712
        %4244 = vmatmul.mubr.f32.gmra.mrb[0].mxu0 %v3663
        %v4245 = vpop.f32.mrb[0].mxu0
        %v4246 = vpop.f32.mrb[0].mxu0
        %4247 = vmatprep.mubr.f32.mxu0 %v3714
        %4248 = vmatmul.mubr.f32.gmra.mrb[0].mxu0 %v3665
        %v4249 = vpop.f32.mrb[0].mxu0
        %v4250 = vadd.f32 %v4113, %v4249
        %v4251 = vpop.f32.mrb[0].mxu0
        %4252 = vmatprep.mubr.f32.mxu0 %v3716
        %4253 = vmatmul.mubr.f32.gmra.mrb[0].mxu0 %v3667
        %v4254 = vpop.f32.mrb[0].mxu0
        %v4255 = vpop.f32.mrb[0].mxu0
        %4256 = vmatprep.mubr.f32.mxu0 %v3718
        %4257 = vmatmul.mubr.f32.gmra.mrb[0].mxu0 %v3669
        %v4258 = vpop.f32.mrb[0].mxu0
        %v4259 = vadd.f32 %v4122, %v4258
        %v4260 = vpop.f32.mrb[0].mxu0
        %4261 = vmatprep.mubr.f32.mxu0 %v3720
        %4262 = vmatmul.mubr.f32.gmra.mrb[0].mxu0 %v3671
        %v4263 = vpop.f32.mrb[0].mxu0
        %v4264 = vpop.f32.mrb[0].mxu0
        %4265 = vmatprep.mubr.f32.mxu0 %v3722
        %4266 = vmatmul.mubr.f32.gmra.mrb[0].mxu0 %v3673
        %v4267 = vpop.f32.mrb[0].mxu0
        %v4268 = vadd.f32 %v4131, %v4267
        %v4269 = vpop.f32.mrb[0].mxu0
        %4270 = vmatprep.mubr.f32.mxu0 %v3724
        %4271 = vmatmul.mubr.f32.gmra.mrb[0].mxu0 %v3675
        %v4272 = vpop.f32.mrb[0].mxu0
        %v4273 = vpop.f32.mrb[0].mxu0
        %4274 = vdwg.mxu0
        %4275 = vmatprep.subr.mxu0 0.0
        %4276 = vmatpush1.msra.mxu0 %v3953
        %4277 = vmatprep.subr.mxu0 0.0
        %4278 = vmatpush1.msra.mxu0 %v3954
        %4279 = vmatprep.subr.mxu0 0.0
        %4280 = vmatpush1.msra.mxu0 %v3955
        %4281 = vmatprep.subr.mxu0 0.0
        %4282 = vmatpush1.msra.mxu0 %v3956
        %4283 = vmatprep.subr.mxu0 0.0
        %4284 = vmatpush1.msra.mxu0 %v3957
        %4285 = vmatprep.subr.mxu0 0.0
        %4286 = vmatpush1.msra.mxu0 %v3958
        %4287 = vmatprep.subr.mxu0 0.0
        %4288 = vmatpush1.msra.mxu0 %v3959
        %4289 = vmatprep.subr.mxu0 0.0
        %4290 = vmatpush1.msra.mxu0 %v3960
        %4291 = vmatprep.subr.mxu0 0.0
        %4292 = vmatpush1.msra.mxu0 %v3961
        %4293 = vmatprep.subr.mxu0 0.0
        %4294 = vmatpush1.msra.mxu0 %v3962
        %4295 = vmatprep.subr.mxu0 0.0
        %4296 = vmatpush1.msra.mxu0 %v3963
        %4297 = vmatprep.subr.mxu0 0.0
        %4298 = vmatpush1.msra.mxu0 %v3964
        %4299 = vmatprep.subr.mxu0 0.0
        %4300 = vmatpush1.msra.mxu0 %v3965
        %4301 = vmatprep.subr.mxu0 0.0
        %4302 = vmatpush1.msra.mxu0 %v3966
        %4303 = vmatprep.subr.mxu0 0.0
        %4304 = vmatpush1.msra.mxu0 %v3967
        %4305 = vmatprep.subr.mxu0 0.0
        %4306 = vmatpush1.msra.mxu0 %v3968
        %4307 = vmatprep.subr.mxu0 0.0
        %4308 = vmatpush1.msra.mxu0 %v3969
        %4309 = vmatprep.subr.mxu0 0.0
        %4310 = vmatpush1.msra.mxu0 %v3970
        %4311 = vmatprep.subr.mxu0 0.0
        %4312 = vmatpush1.msra.mxu0 %v3971
        %4313 = vmatprep.subr.mxu0 0.0
        %4314 = vmatpush1.msra.mxu0 %v3972
        %4315 = vmatprep.subr.mxu0 0.0
        %4316 = vmatpush1.msra.mxu0 %v3973
        %4317 = vmatprep.subr.mxu0 0.0
        %4318 = vmatpush1.msra.mxu0 %v3974
        %4319 = vmatprep.subr.mxu0 0.0
        %4320 = vmatpush1.msra.mxu0 %v3975
        %4321 = vmatprep.subr.mxu0 0.0
        %4322 = vmatpush1.msra.mxu0 %v3976
        %4323 = vmatprep.subr.mxu0 0.0
        %4324 = vmatpush1.msra.mxu0 %v3977
        %4325 = vmatprep.subr.mxu0 0.0
        %4326 = vmatpush1.msra.mxu0 %v3978
        %4327 = vmatprep.subr.mxu0 0.0
        %4328 = vmatpush1.msra.mxu0 %v3979
        %4329 = vmatprep.subr.mxu0 0.0
        %4330 = vmatpush1.msra.mxu0 %v3980
        %4331 = vmatprep.subr.mxu0 0.0
        %4332 = vmatpush1.msra.mxu0 %v3981
        %4333 = vmatprep.subr.mxu0 0.0
        %4334 = vmatpush1.msra.mxu0 %v3982
        %4335 = vmatprep.subr.mxu0 0.0
        %4336 = vmatpush1.msra.mxu0 %v3983
        %4337 = vmatprep.subr.mxu0 0.0
        %4338 = vmatpush1.msra.mxu0 %v3984
        %4339 = vmatprep.mubr.f32.mxu0 %v3792
        %4340 = vmatmul.mubr.f32.gmra.mrb[0].mxu0 %v3743
        %v4341 = vpop.f32.mrb[0].mxu0
        %v4342 = vadd.f32 %v4205, %v4341
        %v4343 = vpop.f32.mrb[0].mxu0
        %4344 = vmatprep.mubr.f32.mxu0 %v3794
        %4345 = vmatmul.mubr.f32.gmra.mrb[0].mxu0 %v3745
        %v4346 = vpop.f32.mrb[0].mxu0
        %v4347 = vpop.f32.mrb[0].mxu0
        %4348 = vmatprep.mubr.f32.mxu0 %v3796
        %4349 = vmatmul.mubr.f32.gmra.mrb[0].mxu0 %v3747
        %v4350 = vpop.f32.mrb[0].mxu0
        %v4351 = vadd.f32 %v4214, %v4350
        %v4352 = vpop.f32.mrb[0].mxu0
        %4353 = vmatprep.mubr.f32.mxu0 %v3798
        %4354 = vmatmul.mubr.f32.gmra.mrb[0].mxu0 %v3749
        %v4355 = vpop.f32.mrb[0].mxu0
        %v4356 = vpop.f32.mrb[0].mxu0
        %4357 = vmatprep.mubr.f32.mxu0 %v3800
        %4358 = vmatmul.mubr.f32.gmra.mrb[0].mxu0 %v3751
        %v4359 = vpop.f32.mrb[0].mxu0
        %v4360 = vadd.f32 %v4223, %v4359
        %v4361 = vpop.f32.mrb[0].mxu0
        %4362 = vmatprep.mubr.f32.mxu0 %v3802
        %4363 = vmatmul.mubr.f32.gmra.mrb[0].mxu0 %v3753
        %v4364 = vpop.f32.mrb[0].mxu0
        %v4365 = vpop.f32.mrb[0].mxu0
        %4366 = vmatprep.mubr.f32.mxu0 %v3804
        %4367 = vmatmul.mubr.f32.gmra.mrb[0].mxu0 %v3755
        %v4368 = vpop.f32.mrb[0].mxu0
        %v4369 = vadd.f32 %v4232, %v4368
        %v4370 = vpop.f32.mrb[0].mxu0
        %4371 = vmatprep.mubr.f32.mxu0 %v3806
        %4372 = vmatmul.mubr.f32.gmra.mrb[0].mxu0 %v3757
        %v4373 = vpop.f32.mrb[0].mxu0
        %v4374 = vpop.f32.mrb[0].mxu0
        %4375 = vmatprep.mubr.f32.mxu0 %v3808
        %4376 = vmatmul.mubr.f32.gmra.mrb[0].mxu0 %v3759
        %v4377 = vpop.f32.mrb[0].mxu0
        %v4378 = vadd.f32 %v4241, %v4377
        %v4379 = vpop.f32.mrb[0].mxu0
        %4380 = vmatprep.mubr.f32.mxu0 %v3810
        %4381 = vmatmul.mubr.f32.gmra.mrb[0].mxu0 %v3761
        %v4382 = vpop.f32.mrb[0].mxu0
        %v4383 = vpop.f32.mrb[0].mxu0
        %4384 = vmatprep.mubr.f32.mxu0 %v3812
        %4385 = vmatmul.mubr.f32.gmra.mrb[0].mxu0 %v3763
        %v4386 = vpop.f32.mrb[0].mxu0
        %v4387 = vadd.f32 %v4250, %v4386
        %v4388 = vpop.f32.mrb[0].mxu0
        %4389 = vmatprep.mubr.f32.mxu0 %v3814
        %4390 = vmatmul.mubr.f32.gmra.mrb[0].mxu0 %v3765
        %v4391 = vpop.f32.mrb[0].mxu0
        %v4392 = vpop.f32.mrb[0].mxu0
        %4393 = vmatprep.mubr.f32.mxu0 %v3816
        %4394 = vmatmul.mubr.f32.gmra.mrb[0].mxu0 %v3767
        %v4395 = vpop.f32.mrb[0].mxu0
        %v4396 = vadd.f32 %v4259, %v4395
        %v4397 = vpop.f32.mrb[0].mxu0
        %4398 = vmatprep.mubr.f32.mxu0 %v3818
        %4399 = vmatmul.mubr.f32.gmra.mrb[0].mxu0 %v3769
        %v4400 = vpop.f32.mrb[0].mxu0
        %v4401 = vpop.f32.mrb[0].mxu0
        %4402 = vmatprep.mubr.f32.mxu0 %v3820
        %4403 = vmatmul.mubr.f32.gmra.mrb[0].mxu0 %v3771
        %v4404 = vpop.f32.mrb[0].mxu0
        %v4405 = vadd.f32 %v4268, %v4404
        %v4406 = vpop.f32.mrb[0].mxu0
        %4407 = vmatprep.mubr.f32.mxu0 %v3822
        %4408 = vmatmul.mubr.f32.gmra.mrb[0].mxu0 %v3773
        %v4409 = vpop.f32.mrb[0].mxu0
        %v4410 = vpop.f32.mrb[0].mxu0
        %4411 = vdwg.mxu0
        %4412 = vmatprep.subr.mxu0 0.0
        %4413 = vmatpush1.msra.mxu0 %v3985
        %4414 = vmatprep.subr.mxu0 0.0
        %4415 = vmatpush1.msra.mxu0 %v3986
        %4416 = vmatprep.subr.mxu0 0.0
        %4417 = vmatpush1.msra.mxu0 %v3987
        %4418 = vmatprep.subr.mxu0 0.0
        %4419 = vmatpush1.msra.mxu0 %v3988
        %4420 = vmatprep.subr.mxu0 0.0
        %4421 = vmatpush1.msra.mxu0 %v3989
        %4422 = vmatprep.subr.mxu0 0.0
        %4423 = vmatpush1.msra.mxu0 %v3990
        %4424 = vmatprep.subr.mxu0 0.0
        %4425 = vmatpush1.msra.mxu0 %v3991
        %4426 = vmatprep.subr.mxu0 0.0
        %4427 = vmatpush1.msra.mxu0 %v3992
        %4428 = vmatprep.subr.mxu0 0.0
        %4429 = vmatpush1.msra.mxu0 %v3993
        %4430 = vmatprep.subr.mxu0 0.0
        %4431 = vmatpush1.msra.mxu0 %v3994
        %4432 = vmatprep.subr.mxu0 0.0
        %4433 = vmatpush1.msra.mxu0 %v3995
        %4434 = vmatprep.subr.mxu0 0.0
        %4435 = vmatpush1.msra.mxu0 %v3996
        %4436 = vmatprep.subr.mxu0 0.0
        %4437 = vmatpush1.msra.mxu0 %v3997
        %4438 = vmatprep.subr.mxu0 0.0
        %4439 = vmatpush1.msra.mxu0 %v3998
        %4440 = vmatprep.subr.mxu0 0.0
        %4441 = vmatpush1.msra.mxu0 %v3999
        %4442 = vmatprep.subr.mxu0 0.0
        %4443 = vmatpush1.msra.mxu0 %v4000
        %4444 = vmatprep.subr.mxu0 0.0
        %4445 = vmatpush1.msra.mxu0 0.0
        %4446 = vmatprep.subr.mxu0 0.0
        %4447 = vmatpush1.msra.mxu0 0.0
        %4448 = vmatprep.subr.mxu0 0.0
        %4449 = vmatpush1.msra.mxu0 0.0
        %4450 = vmatprep.subr.mxu0 0.0
        %4451 = vmatpush1.msra.mxu0 0.0
        %4452 = vmatprep.subr.mxu0 0.0
        %4453 = vmatpush1.msra.mxu0 0.0
        %4454 = vmatprep.subr.mxu0 0.0
        %4455 = vmatpush1.msra.mxu0 0.0
        %4456 = vmatprep.subr.mxu0 0.0
        %4457 = vmatpush1.msra.mxu0 0.0
        %4458 = vmatprep.subr.mxu0 0.0
        %4459 = vmatpush1.msra.mxu0 0.0
        %4460 = vmatprep.subr.mxu0 0.0
        %4461 = vmatpush1.msra.mxu0 0.0
        %4462 = vmatprep.subr.mxu0 0.0
        %4463 = vmatpush1.msra.mxu0 0.0
        %4464 = vmatprep.subr.mxu0 0.0
        %4465 = vmatpush1.msra.mxu0 0.0
        %4466 = vmatprep.subr.mxu0 0.0
        %4467 = vmatpush1.msra.mxu0 0.0
        %4468 = vmatprep.subr.mxu0 0.0
        %4469 = vmatpush1.msra.mxu0 0.0
        %4470 = vmatprep.subr.mxu0 0.0
        %4471 = vmatpush1.msra.mxu0 0.0
        %4472 = vmatprep.subr.mxu0 0.0
        %4473 = vmatpush1.msra.mxu0 0.0
        %4474 = vmatprep.subr.mxu0 0.0
        %4475 = vmatpush1.msra.mxu0 0.0
        %4476 = vmatprep.mubr.f32.mxu0 0.0
        %4477 = vmatmul.mubr.f32.gmra.mrb[0].mxu0 %v3841
        %v4478 = vpop.f32.mrb[0].mxu0
        %v4479 = vadd.f32 %v4342, %v4478
        %v4480 = vpop.f32.mrb[0].mxu0
        %4481 = vmatprep.mubr.f32.mxu0 0.0
        %4482 = vmatmul.mubr.f32.gmra.mrb[0].mxu0 %v3843
        %v4483 = vpop.f32.mrb[0].mxu0
        %v4484 = vpop.f32.mrb[0].mxu0
        %4485 = vmatprep.mubr.f32.mxu0 0.0
        %4486 = vmatmul.mubr.f32.gmra.mrb[0].mxu0 %v3845
        %v4487 = vpop.f32.mrb[0].mxu0
        %v4488 = vadd.f32 %v4351, %v4487
        %v4489 = vpop.f32.mrb[0].mxu0
        %4490 = vmatprep.mubr.f32.mxu0 0.0
        %4491 = vmatmul.mubr.f32.gmra.mrb[0].mxu0 %v3847
        %v4492 = vpop.f32.mrb[0].mxu0
        %v4493 = vpop.f32.mrb[0].mxu0
        %4494 = vmatprep.mubr.f32.mxu0 0.0
        %4495 = vmatmul.mubr.f32.gmra.mrb[0].mxu0 %v3849
        %v4496 = vpop.f32.mrb[0].mxu0
        %v4497 = vadd.f32 %v4360, %v4496
        %v4498 = vpop.f32.mrb[0].mxu0
        %4499 = vmatprep.mubr.f32.mxu0 0.0
        %4500 = vmatmul.mubr.f32.gmra.mrb[0].mxu0 %v3851
        %v4501 = vpop.f32.mrb[0].mxu0
        %v4502 = vpop.f32.mrb[0].mxu0
        %4503 = vmatprep.mubr.f32.mxu0 0.0
        %4504 = vmatmul.mubr.f32.gmra.mrb[0].mxu0 %v3853
        %v4505 = vpop.f32.mrb[0].mxu0
        %v4506 = vadd.f32 %v4369, %v4505
        %v4507 = vpop.f32.mrb[0].mxu0
        %4508 = vmatprep.mubr.f32.mxu0 0.0
        %4509 = vmatmul.mubr.f32.gmra.mrb[0].mxu0 %v3855
        %v4510 = vpop.f32.mrb[0].mxu0
        %v4511 = vpop.f32.mrb[0].mxu0
        %4512 = vmatprep.mubr.f32.mxu0 0.0
        %4513 = vmatmul.mubr.f32.gmra.mrb[0].mxu0 %v3857
        %v4514 = vpop.f32.mrb[0].mxu0
        %v4515 = vadd.f32 %v4378, %v4514
        %v4516 = vpop.f32.mrb[0].mxu0
        %4517 = vmatprep.mubr.f32.mxu0 0.0
        %4518 = vmatmul.mubr.f32.gmra.mrb[0].mxu0 %v3859
        %v4519 = vpop.f32.mrb[0].mxu0
        %v4520 = vpop.f32.mrb[0].mxu0
        %4521 = vmatprep.mubr.f32.mxu0 0.0
        %4522 = vmatmul.mubr.f32.gmra.mrb[0].mxu0 %v3861
        %v4523 = vpop.f32.mrb[0].mxu0
        %v4524 = vadd.f32 %v4387, %v4523
        %v4525 = vpop.f32.mrb[0].mxu0
        %4526 = vmatprep.mubr.f32.mxu0 0.0
        %4527 = vmatmul.mubr.f32.gmra.mrb[0].mxu0 %v3863
        %v4528 = vpop.f32.mrb[0].mxu0
        %v4529 = vpop.f32.mrb[0].mxu0
        %4530 = vmatprep.mubr.f32.mxu0 0.0
        %4531 = vmatmul.mubr.f32.gmra.mrb[0].mxu0 %v3865
        %v4532 = vpop.f32.mrb[0].mxu0
        %v4533 = vadd.f32 %v4396, %v4532
        %v4534 = vpop.f32.mrb[0].mxu0
        %4535 = vmatprep.mubr.f32.mxu0 0.0
        %4536 = vmatmul.mubr.f32.gmra.mrb[0].mxu0 %v3867
        %v4537 = vpop.f32.mrb[0].mxu0
        %v4538 = vpop.f32.mrb[0].mxu0
        %4539 = vmatprep.mubr.f32.mxu0 0.0
        %4540 = vmatmul.mubr.f32.gmra.mrb[0].mxu0 %v3869
        %v4541 = vpop.f32.mrb[0].mxu0
        %v4542 = vadd.f32 %v4405, %v4541
        %v4543 = vpop.f32.mrb[0].mxu0
        %4544 = vmatprep.mubr.f32.mxu0 0.0
        %4545 = vmatmul.mubr.f32.gmra.mrb[0].mxu0 %v3871
        %v4546 = vpop.f32.mrb[0].mxu0
        %v4547 = vpop.f32.mrb[0].mxu0
        %4548 = vdwg.mxu0
        %v4549 = vadd.f32 %v3551, %v4479
        %v4550 = vadd.f32 %v3552, %v4488
        %v4551 = vadd.f32 %v3553, %v4497
        %v4552 = vadd.f32 %v3554, %v4506
        %v4553 = vadd.f32 %v3555, %v4515
        %v4554 = vadd.f32 %v3556, %v4524
        %v4555 = vadd.f32 %v3557, %v4533
        %v4556 = vadd.f32 %v3558, %v4542
        %s4557 = scalar_lea.vmem [#allocation2], 64
        %v4558 = vld [vmem:[%s4557] sm:$0xff]
        %v4559 = vld [vmem:[%s4557 + $0x8] sm:$0xff]
        %v4560 = vld [vmem:[%s4557 + $0x10] sm:$0xff]
        %v4561 = vld [vmem:[%s4557 + $0x18] sm:$0xff]
        %v4562 = vld [vmem:[%s4557 + $0x20] sm:$0xff]
        %v4563 = vld [vmem:[%s4557 + $0x28] sm:$0xff]
        %v4564 = vld [vmem:[%s4557 + $0x30] sm:$0xff]
        %v4565 = vld [vmem:[%s4557 + $0x38] sm:$0xff]
        %v4566 = vld [vmem:[%s4557 + $0x40] sm:$0xff]
        %v4567 = vld [vmem:[%s4557 + $0x48] sm:$0xff]
        %v4568 = vld [vmem:[%s4557 + $0x50] sm:$0xff]
        %v4569 = vld [vmem:[%s4557 + $0x58] sm:$0xff]
        %v4570 = vld [vmem:[%s4557 + $0x60] sm:$0xff]
        %v4571 = vld [vmem:[%s4557 + $0x68] sm:$0xff]
        %v4572 = vld [vmem:[%s4557 + $0x70] sm:$0xff]
        %v4573 = vld [vmem:[%s4557 + $0x78] sm:$0xff]
        %v4574 = vld [vmem:[%s4557 + $0x80] sm:$0xff]
        %v4592 = vrot.slane %v4558, 1
        %v4593 = vrot.slane %v4559, 1
        %v4594 = vsel %vm611, %v4592, %v4593
        %v4595 = vrot.slane %v4560, 1
        %v4596 = vsel %vm611, %v4593, %v4595
        %v4597 = vrot.slane %v4561, 1
        %v4598 = vsel %vm611, %v4595, %v4597
        %v4599 = vrot.slane %v4562, 1
        %v4600 = vsel %vm611, %v4597, %v4599
        %v4601 = vrot.slane %v4563, 1
        %v4602 = vsel %vm611, %v4599, %v4601
        %v4603 = vrot.slane %v4564, 1
        %v4604 = vsel %vm611, %v4601, %v4603
        %v4605 = vrot.slane %v4565, 1
        %v4606 = vsel %vm611, %v4603, %v4605
        %v4607 = vrot.slane %v4566, 1
        %v4608 = vsel %vm611, %v4605, %v4607
        %v4609 = vrot.slane %v4567, 1
        %v4610 = vsel %vm611, %v4607, %v4609
        %v4611 = vrot.slane %v4568, 1
        %v4612 = vsel %vm611, %v4609, %v4611
        %v4613 = vrot.slane %v4569, 1
        %v4614 = vsel %vm611, %v4611, %v4613
        %v4615 = vrot.slane %v4570, 1
        %v4616 = vsel %vm611, %v4613, %v4615
        %v4617 = vrot.slane %v4571, 1
        %v4618 = vsel %vm611, %v4615, %v4617
        %v4619 = vrot.slane %v4572, 1
        %v4620 = vsel %vm611, %v4617, %v4619
        %v4621 = vrot.slane %v4573, 1
        %v4622 = vsel %vm611, %v4619, %v4621
        %v4623 = vrot.slane %v4574, 1
        %v4624 = vsel %vm611, %v4621, %v4623
        %v4641 = vrot.slane %v4558, 2
        %v4642 = vrot.slane %v4559, 2
        %v4643 = vsel %vm661, %v4641, %v4642
        %v4644 = vrot.slane %v4560, 2
        %v4645 = vsel %vm661, %v4642, %v4644
        %v4646 = vrot.slane %v4561, 2
        %v4647 = vsel %vm661, %v4644, %v4646
        %v4648 = vrot.slane %v4562, 2
        %v4649 = vsel %vm661, %v4646, %v4648
        %v4650 = vrot.slane %v4563, 2
        %v4651 = vsel %vm661, %v4648, %v4650
        %v4652 = vrot.slane %v4564, 2
        %v4653 = vsel %vm661, %v4650, %v4652
        %v4654 = vrot.slane %v4565, 2
        %v4655 = vsel %vm661, %v4652, %v4654
        %v4656 = vrot.slane %v4566, 2
        %v4657 = vsel %vm661, %v4654, %v4656
        %v4658 = vrot.slane %v4567, 2
        %v4659 = vsel %vm661, %v4656, %v4658
        %v4660 = vrot.slane %v4568, 2
        %v4661 = vsel %vm661, %v4658, %v4660
        %v4662 = vrot.slane %v4569, 2
        %v4663 = vsel %vm661, %v4660, %v4662
        %v4664 = vrot.slane %v4570, 2
        %v4665 = vsel %vm661, %v4662, %v4664
        %v4666 = vrot.slane %v4571, 2
        %v4667 = vsel %vm661, %v4664, %v4666
        %v4668 = vrot.slane %v4572, 2
        %v4669 = vsel %vm661, %v4666, %v4668
        %v4670 = vrot.slane %v4573, 2
        %v4671 = vsel %vm661, %v4668, %v4670
        %v4672 = vrot.slane %v4574, 2
        %v4673 = vsel %vm661, %v4670, %v4672
        %v4690 = vrot.slane %v4558, 3
        %v4691 = vrot.slane %v4559, 3
        %v4692 = vsel %vm711, %v4690, %v4691
        %v4693 = vrot.slane %v4560, 3
        %v4694 = vsel %vm711, %v4691, %v4693
        %v4695 = vrot.slane %v4561, 3
        %v4696 = vsel %vm711, %v4693, %v4695
        %v4697 = vrot.slane %v4562, 3
        %v4698 = vsel %vm711, %v4695, %v4697
        %v4699 = vrot.slane %v4563, 3
        %v4700 = vsel %vm711, %v4697, %v4699
        %v4701 = vrot.slane %v4564, 3
        %v4702 = vsel %vm711, %v4699, %v4701
        %v4703 = vrot.slane %v4565, 3
        %v4704 = vsel %vm711, %v4701, %v4703
        %v4705 = vrot.slane %v4566, 3
        %v4706 = vsel %vm711, %v4703, %v4705
        %v4707 = vrot.slane %v4567, 3
        %v4708 = vsel %vm711, %v4705, %v4707
        %v4709 = vrot.slane %v4568, 3
        %v4710 = vsel %vm711, %v4707, %v4709
        %v4711 = vrot.slane %v4569, 3
        %v4712 = vsel %vm711, %v4709, %v4711
        %v4713 = vrot.slane %v4570, 3
        %v4714 = vsel %vm711, %v4711, %v4713
        %v4715 = vrot.slane %v4571, 3
        %v4716 = vsel %vm711, %v4713, %v4715
        %v4717 = vrot.slane %v4572, 3
        %v4718 = vsel %vm711, %v4715, %v4717
        %v4719 = vrot.slane %v4573, 3
        %v4720 = vsel %vm711, %v4717, %v4719
        %v4721 = vrot.slane %v4574, 3
        %v4722 = vsel %vm711, %v4719, %v4721
        %v4739 = vrot.slane %v4558, 4
        %v4740 = vrot.slane %v4559, 4
        %v4741 = vsel %vm761, %v4739, %v4740
        %v4742 = vrot.slane %v4560, 4
        %v4743 = vsel %vm761, %v4740, %v4742
        %v4744 = vrot.slane %v4561, 4
        %v4745 = vsel %vm761, %v4742, %v4744
        %v4746 = vrot.slane %v4562, 4
        %v4747 = vsel %vm761, %v4744, %v4746
        %v4748 = vrot.slane %v4563, 4
        %v4749 = vsel %vm761, %v4746, %v4748
        %v4750 = vrot.slane %v4564, 4
        %v4751 = vsel %vm761, %v4748, %v4750
        %v4752 = vrot.slane %v4565, 4
        %v4753 = vsel %vm761, %v4750, %v4752
        %v4754 = vrot.slane %v4566, 4
        %v4755 = vsel %vm761, %v4752, %v4754
        %v4756 = vrot.slane %v4567, 4
        %v4757 = vsel %vm761, %v4754, %v4756
        %v4758 = vrot.slane %v4568, 4
        %v4759 = vsel %vm761, %v4756, %v4758
        %v4760 = vrot.slane %v4569, 4
        %v4761 = vsel %vm761, %v4758, %v4760
        %v4762 = vrot.slane %v4570, 4
        %v4763 = vsel %vm761, %v4760, %v4762
        %v4764 = vrot.slane %v4571, 4
        %v4765 = vsel %vm761, %v4762, %v4764
        %v4766 = vrot.slane %v4572, 4
        %v4767 = vsel %vm761, %v4764, %v4766
        %v4768 = vrot.slane %v4573, 4
        %v4769 = vsel %vm761, %v4766, %v4768
        %v4770 = vrot.slane %v4574, 4
        %v4771 = vsel %vm761, %v4768, %v4770
        %v4788 = vrot.slane %v4558, 5
        %v4789 = vrot.slane %v4559, 5
        %v4790 = vsel %vm811, %v4788, %v4789
        %v4791 = vrot.slane %v4560, 5
        %v4792 = vsel %vm811, %v4789, %v4791
        %v4793 = vrot.slane %v4561, 5
        %v4794 = vsel %vm811, %v4791, %v4793
        %v4795 = vrot.slane %v4562, 5
        %v4796 = vsel %vm811, %v4793, %v4795
        %v4797 = vrot.slane %v4563, 5
        %v4798 = vsel %vm811, %v4795, %v4797
        %v4799 = vrot.slane %v4564, 5
        %v4800 = vsel %vm811, %v4797, %v4799
        %v4801 = vrot.slane %v4565, 5
        %v4802 = vsel %vm811, %v4799, %v4801
        %v4803 = vrot.slane %v4566, 5
        %v4804 = vsel %vm811, %v4801, %v4803
        %v4805 = vrot.slane %v4567, 5
        %v4806 = vsel %vm811, %v4803, %v4805
        %v4807 = vrot.slane %v4568, 5
        %v4808 = vsel %vm811, %v4805, %v4807
        %v4809 = vrot.slane %v4569, 5
        %v4810 = vsel %vm811, %v4807, %v4809
        %v4811 = vrot.slane %v4570, 5
        %v4812 = vsel %vm811, %v4809, %v4811
        %v4813 = vrot.slane %v4571, 5
        %v4814 = vsel %vm811, %v4811, %v4813
        %v4815 = vrot.slane %v4572, 5
        %v4816 = vsel %vm811, %v4813, %v4815
        %v4817 = vrot.slane %v4573, 5
        %v4818 = vsel %vm811, %v4815, %v4817
        %v4819 = vrot.slane %v4574, 5
        %v4820 = vsel %vm811, %v4817, %v4819
        %v4837 = vrot.slane %v4558, 6
        %v4838 = vrot.slane %v4559, 6
        %v4839 = vsel %vm861, %v4837, %v4838
        %v4840 = vrot.slane %v4560, 6
        %v4841 = vsel %vm861, %v4838, %v4840
        %v4842 = vrot.slane %v4561, 6
        %v4843 = vsel %vm861, %v4840, %v4842
        %v4844 = vrot.slane %v4562, 6
        %v4845 = vsel %vm861, %v4842, %v4844
        %v4846 = vrot.slane %v4563, 6
        %v4847 = vsel %vm861, %v4844, %v4846
        %v4848 = vrot.slane %v4564, 6
        %v4849 = vsel %vm861, %v4846, %v4848
        %v4850 = vrot.slane %v4565, 6
        %v4851 = vsel %vm861, %v4848, %v4850
        %v4852 = vrot.slane %v4566, 6
        %v4853 = vsel %vm861, %v4850, %v4852
        %v4854 = vrot.slane %v4567, 6
        %v4855 = vsel %vm861, %v4852, %v4854
        %v4856 = vrot.slane %v4568, 6
        %v4857 = vsel %vm861, %v4854, %v4856
        %v4858 = vrot.slane %v4569, 6
        %v4859 = vsel %vm861, %v4856, %v4858
        %v4860 = vrot.slane %v4570, 6
        %v4861 = vsel %vm861, %v4858, %v4860
        %v4862 = vrot.slane %v4571, 6
        %v4863 = vsel %vm861, %v4860, %v4862
        %v4864 = vrot.slane %v4572, 6
        %v4865 = vsel %vm861, %v4862, %v4864
        %v4866 = vrot.slane %v4573, 6
        %v4867 = vsel %vm861, %v4864, %v4866
        %v4868 = vrot.slane %v4574, 6
        %v4869 = vsel %vm861, %v4866, %v4868
        %s4886 = scalar_lea.vmem [#allocation6], 3584
        %v4887 = vld [vmem:[%s4886] sm:$0xff]
        %v4888 = vld [vmem:[%s4886 + $0x8] sm:$0xff]
        %v4889 = vld [vmem:[%s4886 + $0x10] sm:$0xff]
        %v4890 = vld [vmem:[%s4886 + $0x18] sm:$0xff]
        %v4891 = vld [vmem:[%s4886 + $0x20] sm:$0xff]
        %v4892 = vld [vmem:[%s4886 + $0x28] sm:$0xff]
        %v4893 = vld [vmem:[%s4886 + $0x30] sm:$0xff]
        %v4894 = vld [vmem:[%s4886 + $0x38] sm:$0xff]
        %v4895 = vld [vmem:[%s4886 + $0x40] sm:$0xff]
        %v4896 = vld [vmem:[%s4886 + $0x48] sm:$0xff]
        %v4897 = vld [vmem:[%s4886 + $0x50] sm:$0xff]
        %v4898 = vld [vmem:[%s4886 + $0x58] sm:$0xff]
        %v4899 = vld [vmem:[%s4886 + $0x60] sm:$0xff]
        %v4900 = vld [vmem:[%s4886 + $0x68] sm:$0xff]
        %v4901 = vld [vmem:[%s4886 + $0x70] sm:$0xff]
        %v4902 = vld [vmem:[%s4886 + $0x78] sm:$0xff]
        %v4903 = vld [vmem:[%s4886 + $0x80] sm:$0xff]
        %v4904 = vld [vmem:[%s4886 + $0x88] sm:$0xff]
        %v4905 = vld [vmem:[%s4886 + $0x90] sm:$0xff]
        %v4906 = vld [vmem:[%s4886 + $0x98] sm:$0xff]
        %v4907 = vld [vmem:[%s4886 + $0xa0] sm:$0xff]
        %v4908 = vld [vmem:[%s4886 + $0xa8] sm:$0xff]
        %v4909 = vld [vmem:[%s4886 + $0xb0] sm:$0xff]
        %v4910 = vld [vmem:[%s4886 + $0xb8] sm:$0xff]
        %v4911 = vld [vmem:[%s4886 + $0xc0] sm:$0xff]
        %v4912 = vld [vmem:[%s4886 + $0xc8] sm:$0xff]
        %v4913 = vld [vmem:[%s4886 + $0xd0] sm:$0xff]
        %v4914 = vld [vmem:[%s4886 + $0xd8] sm:$0xff]
        %v4915 = vld [vmem:[%s4886 + $0xe0] sm:$0xff]
        %v4916 = vld [vmem:[%s4886 + $0xe8] sm:$0xff]
        %v4917 = vld [vmem:[%s4886 + $0xf0] sm:$0xff]
        %v4918 = vld [vmem:[%s4886 + $0xf8] sm:$0xff]
        %v4919 = vld [vmem:[%s4886 + $0x100] sm:$0xff]
        %v4920 = vld [vmem:[%s4886 + $0x108] sm:$0xff]
        %v4921 = vld [vmem:[%s4886 + $0x110] sm:$0xff]
        %v4922 = vld [vmem:[%s4886 + $0x118] sm:$0xff]
        %v4923 = vld [vmem:[%s4886 + $0x120] sm:$0xff]
        %v4924 = vld [vmem:[%s4886 + $0x128] sm:$0xff]
        %v4925 = vld [vmem:[%s4886 + $0x130] sm:$0xff]
        %v4926 = vld [vmem:[%s4886 + $0x138] sm:$0xff]
        %v4927 = vld [vmem:[%s4886 + $0x140] sm:$0xff]
        %v4928 = vld [vmem:[%s4886 + $0x148] sm:$0xff]
        %v4929 = vld [vmem:[%s4886 + $0x150] sm:$0xff]
        %v4930 = vld [vmem:[%s4886 + $0x158] sm:$0xff]
        %v4931 = vld [vmem:[%s4886 + $0x160] sm:$0xff]
        %v4932 = vld [vmem:[%s4886 + $0x168] sm:$0xff]
        %v4933 = vld [vmem:[%s4886 + $0x170] sm:$0xff]
        %v4934 = vld [vmem:[%s4886 + $0x178] sm:$0xff]
        %v4935 = vld [vmem:[%s4886 + $0x180] sm:$0xff]
        %v4936 = vld [vmem:[%s4886 + $0x188] sm:$0xff]
        %v4937 = vld [vmem:[%s4886 + $0x190] sm:$0xff]
        %v4938 = vld [vmem:[%s4886 + $0x198] sm:$0xff]
        %v4939 = vld [vmem:[%s4886 + $0x1a0] sm:$0xff]
        %v4940 = vld [vmem:[%s4886 + $0x1a8] sm:$0xff]
        %v4941 = vld [vmem:[%s4886 + $0x1b0] sm:$0xff]
        %v4942 = vld [vmem:[%s4886 + $0x1b8] sm:$0xff]
        %v4943 = vld [vmem:[%s4886 + $0x1c0] sm:$0xff]
        %v4944 = vld [vmem:[%s4886 + $0x1c8] sm:$0xff]
        %v4945 = vld [vmem:[%s4886 + $0x1d0] sm:$0xff]
        %v4946 = vld [vmem:[%s4886 + $0x1d8] sm:$0xff]
        %v4947 = vld [vmem:[%s4886 + $0x1e0] sm:$0xff]
        %v4948 = vld [vmem:[%s4886 + $0x1e8] sm:$0xff]
        %v4949 = vld [vmem:[%s4886 + $0x1f0] sm:$0xff]
        %v4950 = vld [vmem:[%s4886 + $0x1f8] sm:$0xff]
        %v4951 = vld [vmem:[%s4886 + $0x200] sm:$0xff]
        %v4952 = vld [vmem:[%s4886 + $0x208] sm:$0xff]
        %v4953 = vld [vmem:[%s4886 + $0x210] sm:$0xff]
        %v4954 = vld [vmem:[%s4886 + $0x218] sm:$0xff]
        %v4955 = vld [vmem:[%s4886 + $0x220] sm:$0xff]
        %v4956 = vld [vmem:[%s4886 + $0x228] sm:$0xff]
        %v4957 = vld [vmem:[%s4886 + $0x230] sm:$0xff]
        %v4958 = vld [vmem:[%s4886 + $0x238] sm:$0xff]
        %v4959 = vld [vmem:[%s4886 + $0x240] sm:$0xff]
        %v4960 = vld [vmem:[%s4886 + $0x248] sm:$0xff]
        %v4961 = vld [vmem:[%s4886 + $0x250] sm:$0xff]
        %v4962 = vld [vmem:[%s4886 + $0x258] sm:$0xff]
        %v4963 = vld [vmem:[%s4886 + $0x260] sm:$0xff]
        %v4964 = vld [vmem:[%s4886 + $0x268] sm:$0xff]
        %v4965 = vld [vmem:[%s4886 + $0x270] sm:$0xff]
        %v4966 = vld [vmem:[%s4886 + $0x278] sm:$0xff]
        %v4967 = vld [vmem:[%s4886 + $0x280] sm:$0xff]
        %v4968 = vld [vmem:[%s4886 + $0x288] sm:$0xff]
        %v4969 = vld [vmem:[%s4886 + $0x290] sm:$0xff]
        %v4970 = vld [vmem:[%s4886 + $0x298] sm:$0xff]
        %v4971 = vld [vmem:[%s4886 + $0x2a0] sm:$0xff]
        %v4972 = vld [vmem:[%s4886 + $0x2a8] sm:$0xff]
        %v4973 = vld [vmem:[%s4886 + $0x2b0] sm:$0xff]
        %v4974 = vld [vmem:[%s4886 + $0x2b8] sm:$0xff]
        %v4975 = vld [vmem:[%s4886 + $0x2c0] sm:$0xff]
        %v4976 = vld [vmem:[%s4886 + $0x2c8] sm:$0xff]
        %v4977 = vld [vmem:[%s4886 + $0x2d0] sm:$0xff]
        %v4978 = vld [vmem:[%s4886 + $0x2d8] sm:$0xff]
        %v4979 = vld [vmem:[%s4886 + $0x2e0] sm:$0xff]
        %v4980 = vld [vmem:[%s4886 + $0x2e8] sm:$0xff]
        %v4981 = vld [vmem:[%s4886 + $0x2f0] sm:$0xff]
        %v4982 = vld [vmem:[%s4886 + $0x2f8] sm:$0xff]
        %v4983 = vld [vmem:[%s4886 + $0x300] sm:$0xff]
        %v4984 = vld [vmem:[%s4886 + $0x308] sm:$0xff]
        %v4985 = vld [vmem:[%s4886 + $0x310] sm:$0xff]
        %v4986 = vld [vmem:[%s4886 + $0x318] sm:$0xff]
        %v4987 = vld [vmem:[%s4886 + $0x320] sm:$0xff]
        %v4988 = vld [vmem:[%s4886 + $0x328] sm:$0xff]
        %v4989 = vld [vmem:[%s4886 + $0x330] sm:$0xff]
        %v4990 = vld [vmem:[%s4886 + $0x338] sm:$0xff]
        %v4991 = vld [vmem:[%s4886 + $0x340] sm:$0xff]
        %v4992 = vld [vmem:[%s4886 + $0x348] sm:$0xff]
        %v4993 = vld [vmem:[%s4886 + $0x350] sm:$0xff]
        %v4994 = vld [vmem:[%s4886 + $0x358] sm:$0xff]
        %v4995 = vld [vmem:[%s4886 + $0x360] sm:$0xff]
        %v4996 = vld [vmem:[%s4886 + $0x368] sm:$0xff]
        %v4997 = vld [vmem:[%s4886 + $0x370] sm:$0xff]
        %v4998 = vld [vmem:[%s4886 + $0x378] sm:$0xff]
        %4999 = vmatprep.subr.mxu0 0.0
        %5000 = vmatpush1.msra.mxu0 %v4887
        %5001 = vmatprep.subr.mxu0 0.0
        %5002 = vmatpush1.msra.mxu0 %v4888
        %5003 = vmatprep.subr.mxu0 0.0
        %5004 = vmatpush1.msra.mxu0 %v4889
        %5005 = vmatprep.subr.mxu0 0.0
        %5006 = vmatpush1.msra.mxu0 %v4890
        %5007 = vmatprep.subr.mxu0 0.0
        %5008 = vmatpush1.msra.mxu0 %v4891
        %5009 = vmatprep.subr.mxu0 0.0
        %5010 = vmatpush1.msra.mxu0 %v4892
        %5011 = vmatprep.subr.mxu0 0.0
        %5012 = vmatpush1.msra.mxu0 %v4893
        %5013 = vmatprep.subr.mxu0 0.0
        %5014 = vmatpush1.msra.mxu0 %v4894
        %5015 = vmatprep.subr.mxu0 0.0
        %5016 = vmatpush1.msra.mxu0 %v4895
        %5017 = vmatprep.subr.mxu0 0.0
        %5018 = vmatpush1.msra.mxu0 %v4896
        %5019 = vmatprep.subr.mxu0 0.0
        %5020 = vmatpush1.msra.mxu0 %v4897
        %5021 = vmatprep.subr.mxu0 0.0
        %5022 = vmatpush1.msra.mxu0 %v4898
        %5023 = vmatprep.subr.mxu0 0.0
        %5024 = vmatpush1.msra.mxu0 %v4899
        %5025 = vmatprep.subr.mxu0 0.0
        %5026 = vmatpush1.msra.mxu0 %v4900
        %5027 = vmatprep.subr.mxu0 0.0
        %5028 = vmatpush1.msra.mxu0 %v4901
        %5029 = vmatprep.subr.mxu0 0.0
        %5030 = vmatpush1.msra.mxu0 %v4902
        %5031 = vmatprep.subr.mxu0 0.0
        %5032 = vmatpush1.msra.mxu0 %v4903
        %5033 = vmatprep.subr.mxu0 0.0
        %5034 = vmatpush1.msra.mxu0 %v4904
        %5035 = vmatprep.subr.mxu0 0.0
        %5036 = vmatpush1.msra.mxu0 %v4905
        %5037 = vmatprep.subr.mxu0 0.0
        %5038 = vmatpush1.msra.mxu0 %v4906
        %5039 = vmatprep.subr.mxu0 0.0
        %5040 = vmatpush1.msra.mxu0 %v4907
        %5041 = vmatprep.subr.mxu0 0.0
        %5042 = vmatpush1.msra.mxu0 %v4908
        %5043 = vmatprep.subr.mxu0 0.0
        %5044 = vmatpush1.msra.mxu0 %v4909
        %5045 = vmatprep.subr.mxu0 0.0
        %5046 = vmatpush1.msra.mxu0 %v4910
        %5047 = vmatprep.subr.mxu0 0.0
        %5048 = vmatpush1.msra.mxu0 %v4911
        %5049 = vmatprep.subr.mxu0 0.0
        %5050 = vmatpush1.msra.mxu0 %v4912
        %5051 = vmatprep.subr.mxu0 0.0
        %5052 = vmatpush1.msra.mxu0 %v4913
        %5053 = vmatprep.subr.mxu0 0.0
        %5054 = vmatpush1.msra.mxu0 %v4914
        %5055 = vmatprep.subr.mxu0 0.0
        %5056 = vmatpush1.msra.mxu0 %v4915
        %5057 = vmatprep.subr.mxu0 0.0
        %5058 = vmatpush1.msra.mxu0 %v4916
        %5059 = vmatprep.subr.mxu0 0.0
        %5060 = vmatpush1.msra.mxu0 %v4917
        %5061 = vmatprep.subr.mxu0 0.0
        %5062 = vmatpush1.msra.mxu0 %v4918
        %5063 = vmatprep.mubr.f32.mxu0 %v4594
        %5064 = vmatmul.mubr.f32.gmra.mrb[0].mxu0 %v4558
        %v5065 = vpop.f32.mrb[0].mxu0
        %v5066 = vadd.f32 0.0, %v5065
        %v5067 = vpop.f32.mrb[0].mxu0
        %5068 = vmatprep.mubr.f32.mxu0 %v4596
        %5069 = vmatmul.mubr.f32.gmra.mrb[0].mxu0 %v4559
        %v5070 = vpop.f32.mrb[0].mxu0
        %v5071 = vpop.f32.mrb[0].mxu0
        %5072 = vmatprep.mubr.f32.mxu0 %v4598
        %5073 = vmatmul.mubr.f32.gmra.mrb[0].mxu0 %v4560
        %v5074 = vpop.f32.mrb[0].mxu0
        %v5075 = vadd.f32 0.0, %v5074
        %v5076 = vpop.f32.mrb[0].mxu0
        %5077 = vmatprep.mubr.f32.mxu0 %v4600
        %5078 = vmatmul.mubr.f32.gmra.mrb[0].mxu0 %v4561
        %v5079 = vpop.f32.mrb[0].mxu0
        %v5080 = vpop.f32.mrb[0].mxu0
        %5081 = vmatprep.mubr.f32.mxu0 %v4602
        %5082 = vmatmul.mubr.f32.gmra.mrb[0].mxu0 %v4562
        %v5083 = vpop.f32.mrb[0].mxu0
        %v5084 = vadd.f32 0.0, %v5083
        %v5085 = vpop.f32.mrb[0].mxu0
        %5086 = vmatprep.mubr.f32.mxu0 %v4604
        %5087 = vmatmul.mubr.f32.gmra.mrb[0].mxu0 %v4563
        %v5088 = vpop.f32.mrb[0].mxu0
        %v5089 = vpop.f32.mrb[0].mxu0
        %5090 = vmatprep.mubr.f32.mxu0 %v4606
        %5091 = vmatmul.mubr.f32.gmra.mrb[0].mxu0 %v4564
        %v5092 = vpop.f32.mrb[0].mxu0
        %v5093 = vadd.f32 0.0, %v5092
        %v5094 = vpop.f32.mrb[0].mxu0
        %5095 = vmatprep.mubr.f32.mxu0 %v4608
        %5096 = vmatmul.mubr.f32.gmra.mrb[0].mxu0 %v4565
        %v5097 = vpop.f32.mrb[0].mxu0
        %v5098 = vpop.f32.mrb[0].mxu0
        %5099 = vmatprep.mubr.f32.mxu0 %v4610
        %5100 = vmatmul.mubr.f32.gmra.mrb[0].mxu0 %v4566
        %v5101 = vpop.f32.mrb[0].mxu0
        %v5102 = vadd.f32 0.0, %v5101
        %v5103 = vpop.f32.mrb[0].mxu0
        %5104 = vmatprep.mubr.f32.mxu0 %v4612
        %5105 = vmatmul.mubr.f32.gmra.mrb[0].mxu0 %v4567
        %v5106 = vpop.f32.mrb[0].mxu0
        %v5107 = vpop.f32.mrb[0].mxu0
        %5108 = vmatprep.mubr.f32.mxu0 %v4614
        %5109 = vmatmul.mubr.f32.gmra.mrb[0].mxu0 %v4568
        %v5110 = vpop.f32.mrb[0].mxu0
        %v5111 = vadd.f32 0.0, %v5110
        %v5112 = vpop.f32.mrb[0].mxu0
        %5113 = vmatprep.mubr.f32.mxu0 %v4616
        %5114 = vmatmul.mubr.f32.gmra.mrb[0].mxu0 %v4569
        %v5115 = vpop.f32.mrb[0].mxu0
        %v5116 = vpop.f32.mrb[0].mxu0
        %5117 = vmatprep.mubr.f32.mxu0 %v4618
        %5118 = vmatmul.mubr.f32.gmra.mrb[0].mxu0 %v4570
        %v5119 = vpop.f32.mrb[0].mxu0
        %v5120 = vadd.f32 0.0, %v5119
        %v5121 = vpop.f32.mrb[0].mxu0
        %5122 = vmatprep.mubr.f32.mxu0 %v4620
        %5123 = vmatmul.mubr.f32.gmra.mrb[0].mxu0 %v4571
        %v5124 = vpop.f32.mrb[0].mxu0
        %v5125 = vpop.f32.mrb[0].mxu0
        %5126 = vmatprep.mubr.f32.mxu0 %v4622
        %5127 = vmatmul.mubr.f32.gmra.mrb[0].mxu0 %v4572
        %v5128 = vpop.f32.mrb[0].mxu0
        %v5129 = vadd.f32 0.0, %v5128
        %v5130 = vpop.f32.mrb[0].mxu0
        %5131 = vmatprep.mubr.f32.mxu0 %v4624
        %5132 = vmatmul.mubr.f32.gmra.mrb[0].mxu0 %v4573
        %v5133 = vpop.f32.mrb[0].mxu0
        %v5134 = vpop.f32.mrb[0].mxu0
        %5135 = vdwg.mxu0
        %5136 = vmatprep.subr.mxu0 0.0
        %5137 = vmatpush1.msra.mxu0 %v4919
        %5138 = vmatprep.subr.mxu0 0.0
        %5139 = vmatpush1.msra.mxu0 %v4920
        %5140 = vmatprep.subr.mxu0 0.0
        %5141 = vmatpush1.msra.mxu0 %v4921
        %5142 = vmatprep.subr.mxu0 0.0
        %5143 = vmatpush1.msra.mxu0 %v4922
        %5144 = vmatprep.subr.mxu0 0.0
        %5145 = vmatpush1.msra.mxu0 %v4923
        %5146 = vmatprep.subr.mxu0 0.0
        %5147 = vmatpush1.msra.mxu0 %v4924
        %5148 = vmatprep.subr.mxu0 0.0
        %5149 = vmatpush1.msra.mxu0 %v4925
        %5150 = vmatprep.subr.mxu0 0.0
        %5151 = vmatpush1.msra.mxu0 %v4926
        %5152 = vmatprep.subr.mxu0 0.0
        %5153 = vmatpush1.msra.mxu0 %v4927
        %5154 = vmatprep.subr.mxu0 0.0
        %5155 = vmatpush1.msra.mxu0 %v4928
        %5156 = vmatprep.subr.mxu0 0.0
        %5157 = vmatpush1.msra.mxu0 %v4929
        %5158 = vmatprep.subr.mxu0 0.0
        %5159 = vmatpush1.msra.mxu0 %v4930
        %5160 = vmatprep.subr.mxu0 0.0
        %5161 = vmatpush1.msra.mxu0 %v4931
        %5162 = vmatprep.subr.mxu0 0.0
        %5163 = vmatpush1.msra.mxu0 %v4932
        %5164 = vmatprep.subr.mxu0 0.0
        %5165 = vmatpush1.msra.mxu0 %v4933
        %5166 = vmatprep.subr.mxu0 0.0
        %5167 = vmatpush1.msra.mxu0 %v4934
        %5168 = vmatprep.subr.mxu0 0.0
        %5169 = vmatpush1.msra.mxu0 %v4935
        %5170 = vmatprep.subr.mxu0 0.0
        %5171 = vmatpush1.msra.mxu0 %v4936
        %5172 = vmatprep.subr.mxu0 0.0
        %5173 = vmatpush1.msra.mxu0 %v4937
        %5174 = vmatprep.subr.mxu0 0.0
        %5175 = vmatpush1.msra.mxu0 %v4938
        %5176 = vmatprep.subr.mxu0 0.0
        %5177 = vmatpush1.msra.mxu0 %v4939
        %5178 = vmatprep.subr.mxu0 0.0
        %5179 = vmatpush1.msra.mxu0 %v4940
        %5180 = vmatprep.subr.mxu0 0.0
        %5181 = vmatpush1.msra.mxu0 %v4941
        %5182 = vmatprep.subr.mxu0 0.0
        %5183 = vmatpush1.msra.mxu0 %v4942
        %5184 = vmatprep.subr.mxu0 0.0
        %5185 = vmatpush1.msra.mxu0 %v4943
        %5186 = vmatprep.subr.mxu0 0.0
        %5187 = vmatpush1.msra.mxu0 %v4944
        %5188 = vmatprep.subr.mxu0 0.0
        %5189 = vmatpush1.msra.mxu0 %v4945
        %5190 = vmatprep.subr.mxu0 0.0
        %5191 = vmatpush1.msra.mxu0 %v4946
        %5192 = vmatprep.subr.mxu0 0.0
        %5193 = vmatpush1.msra.mxu0 %v4947
        %5194 = vmatprep.subr.mxu0 0.0
        %5195 = vmatpush1.msra.mxu0 %v4948
        %5196 = vmatprep.subr.mxu0 0.0
        %5197 = vmatpush1.msra.mxu0 %v4949
        %5198 = vmatprep.subr.mxu0 0.0
        %5199 = vmatpush1.msra.mxu0 %v4950
        %5200 = vmatprep.mubr.f32.mxu0 %v4692
        %5201 = vmatmul.mubr.f32.gmra.mrb[0].mxu0 %v4643
        %v5202 = vpop.f32.mrb[0].mxu0
        %v5203 = vadd.f32 %v5066, %v5202
        %v5204 = vpop.f32.mrb[0].mxu0
        %5205 = vmatprep.mubr.f32.mxu0 %v4694
        %5206 = vmatmul.mubr.f32.gmra.mrb[0].mxu0 %v4645
        %v5207 = vpop.f32.mrb[0].mxu0
        %v5208 = vpop.f32.mrb[0].mxu0
        %5209 = vmatprep.mubr.f32.mxu0 %v4696
        %5210 = vmatmul.mubr.f32.gmra.mrb[0].mxu0 %v4647
        %v5211 = vpop.f32.mrb[0].mxu0
        %v5212 = vadd.f32 %v5075, %v5211
        %v5213 = vpop.f32.mrb[0].mxu0
        %5214 = vmatprep.mubr.f32.mxu0 %v4698
        %5215 = vmatmul.mubr.f32.gmra.mrb[0].mxu0 %v4649
        %v5216 = vpop.f32.mrb[0].mxu0
        %v5217 = vpop.f32.mrb[0].mxu0
        %5218 = vmatprep.mubr.f32.mxu0 %v4700
        %5219 = vmatmul.mubr.f32.gmra.mrb[0].mxu0 %v4651
        %v5220 = vpop.f32.mrb[0].mxu0
        %v5221 = vadd.f32 %v5084, %v5220
        %v5222 = vpop.f32.mrb[0].mxu0
        %5223 = vmatprep.mubr.f32.mxu0 %v4702
        %5224 = vmatmul.mubr.f32.gmra.mrb[0].mxu0 %v4653
        %v5225 = vpop.f32.mrb[0].mxu0
        %v5226 = vpop.f32.mrb[0].mxu0
        %5227 = vmatprep.mubr.f32.mxu0 %v4704
        %5228 = vmatmul.mubr.f32.gmra.mrb[0].mxu0 %v4655
        %v5229 = vpop.f32.mrb[0].mxu0
        %v5230 = vadd.f32 %v5093, %v5229
        %v5231 = vpop.f32.mrb[0].mxu0
        %5232 = vmatprep.mubr.f32.mxu0 %v4706
        %5233 = vmatmul.mubr.f32.gmra.mrb[0].mxu0 %v4657
        %v5234 = vpop.f32.mrb[0].mxu0
        %v5235 = vpop.f32.mrb[0].mxu0
        %5236 = vmatprep.mubr.f32.mxu0 %v4708
        %5237 = vmatmul.mubr.f32.gmra.mrb[0].mxu0 %v4659
        %v5238 = vpop.f32.mrb[0].mxu0
        %v5239 = vadd.f32 %v5102, %v5238
        %v5240 = vpop.f32.mrb[0].mxu0
        %5241 = vmatprep.mubr.f32.mxu0 %v4710
        %5242 = vmatmul.mubr.f32.gmra.mrb[0].mxu0 %v4661
        %v5243 = vpop.f32.mrb[0].mxu0
        %v5244 = vpop.f32.mrb[0].mxu0
        %5245 = vmatprep.mubr.f32.mxu0 %v4712
        %5246 = vmatmul.mubr.f32.gmra.mrb[0].mxu0 %v4663
        %v5247 = vpop.f32.mrb[0].mxu0
        %v5248 = vadd.f32 %v5111, %v5247
        %v5249 = vpop.f32.mrb[0].mxu0
        %5250 = vmatprep.mubr.f32.mxu0 %v4714
        %5251 = vmatmul.mubr.f32.gmra.mrb[0].mxu0 %v4665
        %v5252 = vpop.f32.mrb[0].mxu0
        %v5253 = vpop.f32.mrb[0].mxu0
        %5254 = vmatprep.mubr.f32.mxu0 %v4716
        %5255 = vmatmul.mubr.f32.gmra.mrb[0].mxu0 %v4667
        %v5256 = vpop.f32.mrb[0].mxu0
        %v5257 = vadd.f32 %v5120, %v5256
        %v5258 = vpop.f32.mrb[0].mxu0
        %5259 = vmatprep.mubr.f32.mxu0 %v4718
        %5260 = vmatmul.mubr.f32.gmra.mrb[0].mxu0 %v4669
        %v5261 = vpop.f32.mrb[0].mxu0
        %v5262 = vpop.f32.mrb[0].mxu0
        %5263 = vmatprep.mubr.f32.mxu0 %v4720
        %5264 = vmatmul.mubr.f32.gmra.mrb[0].mxu0 %v4671
        %v5265 = vpop.f32.mrb[0].mxu0
        %v5266 = vadd.f32 %v5129, %v5265
        %v5267 = vpop.f32.mrb[0].mxu0
        %5268 = vmatprep.mubr.f32.mxu0 %v4722
        %5269 = vmatmul.mubr.f32.gmra.mrb[0].mxu0 %v4673
        %v5270 = vpop.f32.mrb[0].mxu0
        %v5271 = vpop.f32.mrb[0].mxu0
        %5272 = vdwg.mxu0
        %5273 = vmatprep.subr.mxu0 0.0
        %5274 = vmatpush1.msra.mxu0 %v4951
        %5275 = vmatprep.subr.mxu0 0.0
        %5276 = vmatpush1.msra.mxu0 %v4952
        %5277 = vmatprep.subr.mxu0 0.0
        %5278 = vmatpush1.msra.mxu0 %v4953
        %5279 = vmatprep.subr.mxu0 0.0
        %5280 = vmatpush1.msra.mxu0 %v4954
        %5281 = vmatprep.subr.mxu0 0.0
        %5282 = vmatpush1.msra.mxu0 %v4955
        %5283 = vmatprep.subr.mxu0 0.0
        %5284 = vmatpush1.msra.mxu0 %v4956
        %5285 = vmatprep.subr.mxu0 0.0
        %5286 = vmatpush1.msra.mxu0 %v4957
        %5287 = vmatprep.subr.mxu0 0.0
        %5288 = vmatpush1.msra.mxu0 %v4958
        %5289 = vmatprep.subr.mxu0 0.0
        %5290 = vmatpush1.msra.mxu0 %v4959
        %5291 = vmatprep.subr.mxu0 0.0
        %5292 = vmatpush1.msra.mxu0 %v4960
        %5293 = vmatprep.subr.mxu0 0.0
        %5294 = vmatpush1.msra.mxu0 %v4961
        %5295 = vmatprep.subr.mxu0 0.0
        %5296 = vmatpush1.msra.mxu0 %v4962
        %5297 = vmatprep.subr.mxu0 0.0
        %5298 = vmatpush1.msra.mxu0 %v4963
        %5299 = vmatprep.subr.mxu0 0.0
        %5300 = vmatpush1.msra.mxu0 %v4964
        %5301 = vmatprep.subr.mxu0 0.0
        %5302 = vmatpush1.msra.mxu0 %v4965
        %5303 = vmatprep.subr.mxu0 0.0
        %5304 = vmatpush1.msra.mxu0 %v4966
        %5305 = vmatprep.subr.mxu0 0.0
        %5306 = vmatpush1.msra.mxu0 %v4967
        %5307 = vmatprep.subr.mxu0 0.0
        %5308 = vmatpush1.msra.mxu0 %v4968
        %5309 = vmatprep.subr.mxu0 0.0
        %5310 = vmatpush1.msra.mxu0 %v4969
        %5311 = vmatprep.subr.mxu0 0.0
        %5312 = vmatpush1.msra.mxu0 %v4970
        %5313 = vmatprep.subr.mxu0 0.0
        %5314 = vmatpush1.msra.mxu0 %v4971
        %5315 = vmatprep.subr.mxu0 0.0
        %5316 = vmatpush1.msra.mxu0 %v4972
        %5317 = vmatprep.subr.mxu0 0.0
        %5318 = vmatpush1.msra.mxu0 %v4973
        %5319 = vmatprep.subr.mxu0 0.0
        %5320 = vmatpush1.msra.mxu0 %v4974
        %5321 = vmatprep.subr.mxu0 0.0
        %5322 = vmatpush1.msra.mxu0 %v4975
        %5323 = vmatprep.subr.mxu0 0.0
        %5324 = vmatpush1.msra.mxu0 %v4976
        %5325 = vmatprep.subr.mxu0 0.0
        %5326 = vmatpush1.msra.mxu0 %v4977
        %5327 = vmatprep.subr.mxu0 0.0
        %5328 = vmatpush1.msra.mxu0 %v4978
        %5329 = vmatprep.subr.mxu0 0.0
        %5330 = vmatpush1.msra.mxu0 %v4979
        %5331 = vmatprep.subr.mxu0 0.0
        %5332 = vmatpush1.msra.mxu0 %v4980
        %5333 = vmatprep.subr.mxu0 0.0
        %5334 = vmatpush1.msra.mxu0 %v4981
        %5335 = vmatprep.subr.mxu0 0.0
        %5336 = vmatpush1.msra.mxu0 %v4982
        %5337 = vmatprep.mubr.f32.mxu0 %v4790
        %5338 = vmatmul.mubr.f32.gmra.mrb[0].mxu0 %v4741
        %v5339 = vpop.f32.mrb[0].mxu0
        %v5340 = vadd.f32 %v5203, %v5339
        %v5341 = vpop.f32.mrb[0].mxu0
        %5342 = vmatprep.mubr.f32.mxu0 %v4792
        %5343 = vmatmul.mubr.f32.gmra.mrb[0].mxu0 %v4743
        %v5344 = vpop.f32.mrb[0].mxu0
        %v5345 = vpop.f32.mrb[0].mxu0
        %5346 = vmatprep.mubr.f32.mxu0 %v4794
        %5347 = vmatmul.mubr.f32.gmra.mrb[0].mxu0 %v4745
        %v5348 = vpop.f32.mrb[0].mxu0
        %v5349 = vadd.f32 %v5212, %v5348
        %v5350 = vpop.f32.mrb[0].mxu0
        %5351 = vmatprep.mubr.f32.mxu0 %v4796
        %5352 = vmatmul.mubr.f32.gmra.mrb[0].mxu0 %v4747
        %v5353 = vpop.f32.mrb[0].mxu0
        %v5354 = vpop.f32.mrb[0].mxu0
        %5355 = vmatprep.mubr.f32.mxu0 %v4798
        %5356 = vmatmul.mubr.f32.gmra.mrb[0].mxu0 %v4749
        %v5357 = vpop.f32.mrb[0].mxu0
        %v5358 = vadd.f32 %v5221, %v5357
        %v5359 = vpop.f32.mrb[0].mxu0
        %5360 = vmatprep.mubr.f32.mxu0 %v4800
        %5361 = vmatmul.mubr.f32.gmra.mrb[0].mxu0 %v4751
        %v5362 = vpop.f32.mrb[0].mxu0
        %v5363 = vpop.f32.mrb[0].mxu0
        %5364 = vmatprep.mubr.f32.mxu0 %v4802
        %5365 = vmatmul.mubr.f32.gmra.mrb[0].mxu0 %v4753
        %v5366 = vpop.f32.mrb[0].mxu0
        %v5367 = vadd.f32 %v5230, %v5366
        %v5368 = vpop.f32.mrb[0].mxu0
        %5369 = vmatprep.mubr.f32.mxu0 %v4804
        %5370 = vmatmul.mubr.f32.gmra.mrb[0].mxu0 %v4755
        %v5371 = vpop.f32.mrb[0].mxu0
        %v5372 = vpop.f32.mrb[0].mxu0
        %5373 = vmatprep.mubr.f32.mxu0 %v4806
        %5374 = vmatmul.mubr.f32.gmra.mrb[0].mxu0 %v4757
        %v5375 = vpop.f32.mrb[0].mxu0
        %v5376 = vadd.f32 %v5239, %v5375
        %v5377 = vpop.f32.mrb[0].mxu0
        %5378 = vmatprep.mubr.f32.mxu0 %v4808
        %5379 = vmatmul.mubr.f32.gmra.mrb[0].mxu0 %v4759
        %v5380 = vpop.f32.mrb[0].mxu0
        %v5381 = vpop.f32.mrb[0].mxu0
        %5382 = vmatprep.mubr.f32.mxu0 %v4810
        %5383 = vmatmul.mubr.f32.gmra.mrb[0].mxu0 %v4761
        %v5384 = vpop.f32.mrb[0].mxu0
        %v5385 = vadd.f32 %v5248, %v5384
        %v5386 = vpop.f32.mrb[0].mxu0
        %5387 = vmatprep.mubr.f32.mxu0 %v4812
        %5388 = vmatmul.mubr.f32.gmra.mrb[0].mxu0 %v4763
        %v5389 = vpop.f32.mrb[0].mxu0
        %v5390 = vpop.f32.mrb[0].mxu0
        %5391 = vmatprep.mubr.f32.mxu0 %v4814
        %5392 = vmatmul.mubr.f32.gmra.mrb[0].mxu0 %v4765
        %v5393 = vpop.f32.mrb[0].mxu0
        %v5394 = vadd.f32 %v5257, %v5393
        %v5395 = vpop.f32.mrb[0].mxu0
        %5396 = vmatprep.mubr.f32.mxu0 %v4816
        %5397 = vmatmul.mubr.f32.gmra.mrb[0].mxu0 %v4767
        %v5398 = vpop.f32.mrb[0].mxu0
        %v5399 = vpop.f32.mrb[0].mxu0
        %5400 = vmatprep.mubr.f32.mxu0 %v4818
        %5401 = vmatmul.mubr.f32.gmra.mrb[0].mxu0 %v4769
        %v5402 = vpop.f32.mrb[0].mxu0
        %v5403 = vadd.f32 %v5266, %v5402
        %v5404 = vpop.f32.mrb[0].mxu0
        %5405 = vmatprep.mubr.f32.mxu0 %v4820
        %5406 = vmatmul.mubr.f32.gmra.mrb[0].mxu0 %v4771
        %v5407 = vpop.f32.mrb[0].mxu0
        %v5408 = vpop.f32.mrb[0].mxu0
        %5409 = vdwg.mxu0
        %5410 = vmatprep.subr.mxu0 0.0
        %5411 = vmatpush1.msra.mxu0 %v4983
        %5412 = vmatprep.subr.mxu0 0.0
        %5413 = vmatpush1.msra.mxu0 %v4984
        %5414 = vmatprep.subr.mxu0 0.0
        %5415 = vmatpush1.msra.mxu0 %v4985
        %5416 = vmatprep.subr.mxu0 0.0
        %5417 = vmatpush1.msra.mxu0 %v4986
        %5418 = vmatprep.subr.mxu0 0.0
        %5419 = vmatpush1.msra.mxu0 %v4987
        %5420 = vmatprep.subr.mxu0 0.0
        %5421 = vmatpush1.msra.mxu0 %v4988
        %5422 = vmatprep.subr.mxu0 0.0
        %5423 = vmatpush1.msra.mxu0 %v4989
        %5424 = vmatprep.subr.mxu0 0.0
        %5425 = vmatpush1.msra.mxu0 %v4990
        %5426 = vmatprep.subr.mxu0 0.0
        %5427 = vmatpush1.msra.mxu0 %v4991
        %5428 = vmatprep.subr.mxu0 0.0
        %5429 = vmatpush1.msra.mxu0 %v4992
        %5430 = vmatprep.subr.mxu0 0.0
        %5431 = vmatpush1.msra.mxu0 %v4993
        %5432 = vmatprep.subr.mxu0 0.0
        %5433 = vmatpush1.msra.mxu0 %v4994
        %5434 = vmatprep.subr.mxu0 0.0
        %5435 = vmatpush1.msra.mxu0 %v4995
        %5436 = vmatprep.subr.mxu0 0.0
        %5437 = vmatpush1.msra.mxu0 %v4996
        %5438 = vmatprep.subr.mxu0 0.0
        %5439 = vmatpush1.msra.mxu0 %v4997
        %5440 = vmatprep.subr.mxu0 0.0
        %5441 = vmatpush1.msra.mxu0 %v4998
        %5442 = vmatprep.subr.mxu0 0.0
        %5443 = vmatpush1.msra.mxu0 0.0
        %5444 = vmatprep.subr.mxu0 0.0
        %5445 = vmatpush1.msra.mxu0 0.0
        %5446 = vmatprep.subr.mxu0 0.0
        %5447 = vmatpush1.msra.mxu0 0.0
        %5448 = vmatprep.subr.mxu0 0.0
        %5449 = vmatpush1.msra.mxu0 0.0
        %5450 = vmatprep.subr.mxu0 0.0
        %5451 = vmatpush1.msra.mxu0 0.0
        %5452 = vmatprep.subr.mxu0 0.0
        %5453 = vmatpush1.msra.mxu0 0.0
        %5454 = vmatprep.subr.mxu0 0.0
        %5455 = vmatpush1.msra.mxu0 0.0
        %5456 = vmatprep.subr.mxu0 0.0
        %5457 = vmatpush1.msra.mxu0 0.0
        %5458 = vmatprep.subr.mxu0 0.0
        %5459 = vmatpush1.msra.mxu0 0.0
        %5460 = vmatprep.subr.mxu0 0.0
        %5461 = vmatpush1.msra.mxu0 0.0
        %5462 = vmatprep.subr.mxu0 0.0
        %5463 = vmatpush1.msra.mxu0 0.0
        %5464 = vmatprep.subr.mxu0 0.0
        %5465 = vmatpush1.msra.mxu0 0.0
        %5466 = vmatprep.subr.mxu0 0.0
        %5467 = vmatpush1.msra.mxu0 0.0
        %5468 = vmatprep.subr.mxu0 0.0
        %5469 = vmatpush1.msra.mxu0 0.0
        %5470 = vmatprep.subr.mxu0 0.0
        %5471 = vmatpush1.msra.mxu0 0.0
        %5472 = vmatprep.subr.mxu0 0.0
        %5473 = vmatpush1.msra.mxu0 0.0
        %5474 = vmatprep.mubr.f32.mxu0 0.0
        %5475 = vmatmul.mubr.f32.gmra.mrb[0].mxu0 %v4839
        %v5476 = vpop.f32.mrb[0].mxu0
        %v5477 = vadd.f32 %v5340, %v5476
        %v5478 = vpop.f32.mrb[0].mxu0
        %5479 = vmatprep.mubr.f32.mxu0 0.0
        %5480 = vmatmul.mubr.f32.gmra.mrb[0].mxu0 %v4841
        %v5481 = vpop.f32.mrb[0].mxu0
        %v5482 = vpop.f32.mrb[0].mxu0
        %5483 = vmatprep.mubr.f32.mxu0 0.0
        %5484 = vmatmul.mubr.f32.gmra.mrb[0].mxu0 %v4843
        %v5485 = vpop.f32.mrb[0].mxu0
        %v5486 = vadd.f32 %v5349, %v5485
        %v5487 = vpop.f32.mrb[0].mxu0
        %5488 = vmatprep.mubr.f32.mxu0 0.0
        %5489 = vmatmul.mubr.f32.gmra.mrb[0].mxu0 %v4845
        %v5490 = vpop.f32.mrb[0].mxu0
        %v5491 = vpop.f32.mrb[0].mxu0
        %5492 = vmatprep.mubr.f32.mxu0 0.0
        %5493 = vmatmul.mubr.f32.gmra.mrb[0].mxu0 %v4847
        %v5494 = vpop.f32.mrb[0].mxu0
        %v5495 = vadd.f32 %v5358, %v5494
        %v5496 = vpop.f32.mrb[0].mxu0
        %5497 = vmatprep.mubr.f32.mxu0 0.0
        %5498 = vmatmul.mubr.f32.gmra.mrb[0].mxu0 %v4849
        %v5499 = vpop.f32.mrb[0].mxu0
        %v5500 = vpop.f32.mrb[0].mxu0
        %5501 = vmatprep.mubr.f32.mxu0 0.0
        %5502 = vmatmul.mubr.f32.gmra.mrb[0].mxu0 %v4851
        %v5503 = vpop.f32.mrb[0].mxu0
        %v5504 = vadd.f32 %v5367, %v5503
        %v5505 = vpop.f32.mrb[0].mxu0
        %5506 = vmatprep.mubr.f32.mxu0 0.0
        %5507 = vmatmul.mubr.f32.gmra.mrb[0].mxu0 %v4853
        %v5508 = vpop.f32.mrb[0].mxu0
        %v5509 = vpop.f32.mrb[0].mxu0
        %5510 = vmatprep.mubr.f32.mxu0 0.0
        %5511 = vmatmul.mubr.f32.gmra.mrb[0].mxu0 %v4855
        %v5512 = vpop.f32.mrb[0].mxu0
        %v5513 = vadd.f32 %v5376, %v5512
        %v5514 = vpop.f32.mrb[0].mxu0
        %5515 = vmatprep.mubr.f32.mxu0 0.0
        %5516 = vmatmul.mubr.f32.gmra.mrb[0].mxu0 %v4857
        %v5517 = vpop.f32.mrb[0].mxu0
        %v5518 = vpop.f32.mrb[0].mxu0
        %5519 = vmatprep.mubr.f32.mxu0 0.0
        %5520 = vmatmul.mubr.f32.gmra.mrb[0].mxu0 %v4859
        %v5521 = vpop.f32.mrb[0].mxu0
        %v5522 = vadd.f32 %v5385, %v5521
        %v5523 = vpop.f32.mrb[0].mxu0
        %5524 = vmatprep.mubr.f32.mxu0 0.0
        %5525 = vmatmul.mubr.f32.gmra.mrb[0].mxu0 %v4861
        %v5526 = vpop.f32.mrb[0].mxu0
        %v5527 = vpop.f32.mrb[0].mxu0
        %5528 = vmatprep.mubr.f32.mxu0 0.0
        %5529 = vmatmul.mubr.f32.gmra.mrb[0].mxu0 %v4863
        %v5530 = vpop.f32.mrb[0].mxu0
        %v5531 = vadd.f32 %v5394, %v5530
        %v5532 = vpop.f32.mrb[0].mxu0
        %5533 = vmatprep.mubr.f32.mxu0 0.0
        %5534 = vmatmul.mubr.f32.gmra.mrb[0].mxu0 %v4865
        %v5535 = vpop.f32.mrb[0].mxu0
        %v5536 = vpop.f32.mrb[0].mxu0
        %5537 = vmatprep.mubr.f32.mxu0 0.0
        %5538 = vmatmul.mubr.f32.gmra.mrb[0].mxu0 %v4867
        %v5539 = vpop.f32.mrb[0].mxu0
        %v5540 = vadd.f32 %v5403, %v5539
        %v5541 = vpop.f32.mrb[0].mxu0
        %5542 = vmatprep.mubr.f32.mxu0 0.0
        %5543 = vmatmul.mubr.f32.gmra.mrb[0].mxu0 %v4869
        %v5544 = vpop.f32.mrb[0].mxu0
        %v5545 = vpop.f32.mrb[0].mxu0
        %5546 = vdwg.mxu0
        %v5547 = vadd.f32 %v4549, %v5477
        %v5548 = vadd.f32 %v4550, %v5486
        %v5549 = vadd.f32 %v4551, %v5495
        %v5550 = vadd.f32 %v4552, %v5504
        %v5551 = vadd.f32 %v4553, %v5513
        %v5552 = vadd.f32 %v4554, %v5522
        %v5553 = vadd.f32 %v4555, %v5531
        %v5554 = vadd.f32 %v4556, %v5540
        %s5555 = scalar_lea.vmem [#allocation2], 80
        %v5556 = vld [vmem:[%s5555] sm:$0xff]
        %v5557 = vld [vmem:[%s5555 + $0x8] sm:$0xff]
        %v5558 = vld [vmem:[%s5555 + $0x10] sm:$0xff]
        %v5559 = vld [vmem:[%s5555 + $0x18] sm:$0xff]
        %v5560 = vld [vmem:[%s5555 + $0x20] sm:$0xff]
        %v5561 = vld [vmem:[%s5555 + $0x28] sm:$0xff]
        %v5562 = vld [vmem:[%s5555 + $0x30] sm:$0xff]
        %v5563 = vld [vmem:[%s5555 + $0x38] sm:$0xff]
        %v5564 = vld [vmem:[%s5555 + $0x40] sm:$0xff]
        %v5565 = vld [vmem:[%s5555 + $0x48] sm:$0xff]
        %v5566 = vld [vmem:[%s5555 + $0x50] sm:$0xff]
        %v5567 = vld [vmem:[%s5555 + $0x58] sm:$0xff]
        %v5568 = vld [vmem:[%s5555 + $0x60] sm:$0xff]
        %v5569 = vld [vmem:[%s5555 + $0x68] sm:$0xff]
        %v5570 = vld [vmem:[%s5555 + $0x70] sm:$0xff]
        %v5571 = vld [vmem:[%s5555 + $0x78] sm:$0xff]
        %v5572 = vld [vmem:[%s5555 + $0x80] sm:$0xff]
        %v5590 = vrot.slane %v5556, 1
        %v5591 = vrot.slane %v5557, 1
        %v5592 = vsel %vm611, %v5590, %v5591
        %v5593 = vrot.slane %v5558, 1
        %v5594 = vsel %vm611, %v5591, %v5593
        %v5595 = vrot.slane %v5559, 1
        %v5596 = vsel %vm611, %v5593, %v5595
        %v5597 = vrot.slane %v5560, 1
        %v5598 = vsel %vm611, %v5595, %v5597
        %v5599 = vrot.slane %v5561, 1
        %v5600 = vsel %vm611, %v5597, %v5599
        %v5601 = vrot.slane %v5562, 1
        %v5602 = vsel %vm611, %v5599, %v5601
        %v5603 = vrot.slane %v5563, 1
        %v5604 = vsel %vm611, %v5601, %v5603
        %v5605 = vrot.slane %v5564, 1
        %v5606 = vsel %vm611, %v5603, %v5605
        %v5607 = vrot.slane %v5565, 1
        %v5608 = vsel %vm611, %v5605, %v5607
        %v5609 = vrot.slane %v5566, 1
        %v5610 = vsel %vm611, %v5607, %v5609
        %v5611 = vrot.slane %v5567, 1
        %v5612 = vsel %vm611, %v5609, %v5611
        %v5613 = vrot.slane %v5568, 1
        %v5614 = vsel %vm611, %v5611, %v5613
        %v5615 = vrot.slane %v5569, 1
        %v5616 = vsel %vm611, %v5613, %v5615
        %v5617 = vrot.slane %v5570, 1
        %v5618 = vsel %vm611, %v5615, %v5617
        %v5619 = vrot.slane %v5571, 1
        %v5620 = vsel %vm611, %v5617, %v5619
        %v5621 = vrot.slane %v5572, 1
        %v5622 = vsel %vm611, %v5619, %v5621
        %v5639 = vrot.slane %v5556, 2
        %v5640 = vrot.slane %v5557, 2
        %v5641 = vsel %vm661, %v5639, %v5640
        %v5642 = vrot.slane %v5558, 2
        %v5643 = vsel %vm661, %v5640, %v5642
        %v5644 = vrot.slane %v5559, 2
        %v5645 = vsel %vm661, %v5642, %v5644
        %v5646 = vrot.slane %v5560, 2
        %v5647 = vsel %vm661, %v5644, %v5646
        %v5648 = vrot.slane %v5561, 2
        %v5649 = vsel %vm661, %v5646, %v5648
        %v5650 = vrot.slane %v5562, 2
        %v5651 = vsel %vm661, %v5648, %v5650
        %v5652 = vrot.slane %v5563, 2
        %v5653 = vsel %vm661, %v5650, %v5652
        %v5654 = vrot.slane %v5564, 2
        %v5655 = vsel %vm661, %v5652, %v5654
        %v5656 = vrot.slane %v5565, 2
        %v5657 = vsel %vm661, %v5654, %v5656
        %v5658 = vrot.slane %v5566, 2
        %v5659 = vsel %vm661, %v5656, %v5658
        %v5660 = vrot.slane %v5567, 2
        %v5661 = vsel %vm661, %v5658, %v5660
        %v5662 = vrot.slane %v5568, 2
        %v5663 = vsel %vm661, %v5660, %v5662
        %v5664 = vrot.slane %v5569, 2
        %v5665 = vsel %vm661, %v5662, %v5664
        %v5666 = vrot.slane %v5570, 2
        %v5667 = vsel %vm661, %v5664, %v5666
        %v5668 = vrot.slane %v5571, 2
        %v5669 = vsel %vm661, %v5666, %v5668
        %v5670 = vrot.slane %v5572, 2
        %v5671 = vsel %vm661, %v5668, %v5670
        %v5688 = vrot.slane %v5556, 3
        %v5689 = vrot.slane %v5557, 3
        %v5690 = vsel %vm711, %v5688, %v5689
        %v5691 = vrot.slane %v5558, 3
        %v5692 = vsel %vm711, %v5689, %v5691
        %v5693 = vrot.slane %v5559, 3
        %v5694 = vsel %vm711, %v5691, %v5693
        %v5695 = vrot.slane %v5560, 3
        %v5696 = vsel %vm711, %v5693, %v5695
        %v5697 = vrot.slane %v5561, 3
        %v5698 = vsel %vm711, %v5695, %v5697
        %v5699 = vrot.slane %v5562, 3
        %v5700 = vsel %vm711, %v5697, %v5699
        %v5701 = vrot.slane %v5563, 3
        %v5702 = vsel %vm711, %v5699, %v5701
        %v5703 = vrot.slane %v5564, 3
        %v5704 = vsel %vm711, %v5701, %v5703
        %v5705 = vrot.slane %v5565, 3
        %v5706 = vsel %vm711, %v5703, %v5705
        %v5707 = vrot.slane %v5566, 3
        %v5708 = vsel %vm711, %v5705, %v5707
        %v5709 = vrot.slane %v5567, 3
        %v5710 = vsel %vm711, %v5707, %v5709
        %v5711 = vrot.slane %v5568, 3
        %v5712 = vsel %vm711, %v5709, %v5711
        %v5713 = vrot.slane %v5569, 3
        %v5714 = vsel %vm711, %v5711, %v5713
        %v5715 = vrot.slane %v5570, 3
        %v5716 = vsel %vm711, %v5713, %v5715
        %v5717 = vrot.slane %v5571, 3
        %v5718 = vsel %vm711, %v5715, %v5717
        %v5719 = vrot.slane %v5572, 3
        %v5720 = vsel %vm711, %v5717, %v5719
        %v5737 = vrot.slane %v5556, 4
        %v5738 = vrot.slane %v5557, 4
        %v5739 = vsel %vm761, %v5737, %v5738
        %v5740 = vrot.slane %v5558, 4
        %v5741 = vsel %vm761, %v5738, %v5740
        %v5742 = vrot.slane %v5559, 4
        %v5743 = vsel %vm761, %v5740, %v5742
        %v5744 = vrot.slane %v5560, 4
        %v5745 = vsel %vm761, %v5742, %v5744
        %v5746 = vrot.slane %v5561, 4
        %v5747 = vsel %vm761, %v5744, %v5746
        %v5748 = vrot.slane %v5562, 4
        %v5749 = vsel %vm761, %v5746, %v5748
        %v5750 = vrot.slane %v5563, 4
        %v5751 = vsel %vm761, %v5748, %v5750
        %v5752 = vrot.slane %v5564, 4
        %v5753 = vsel %vm761, %v5750, %v5752
        %v5754 = vrot.slane %v5565, 4
        %v5755 = vsel %vm761, %v5752, %v5754
        %v5756 = vrot.slane %v5566, 4
        %v5757 = vsel %vm761, %v5754, %v5756
        %v5758 = vrot.slane %v5567, 4
        %v5759 = vsel %vm761, %v5756, %v5758
        %v5760 = vrot.slane %v5568, 4
        %v5761 = vsel %vm761, %v5758, %v5760
        %v5762 = vrot.slane %v5569, 4
        %v5763 = vsel %vm761, %v5760, %v5762
        %v5764 = vrot.slane %v5570, 4
        %v5765 = vsel %vm761, %v5762, %v5764
        %v5766 = vrot.slane %v5571, 4
        %v5767 = vsel %vm761, %v5764, %v5766
        %v5768 = vrot.slane %v5572, 4
        %v5769 = vsel %vm761, %v5766, %v5768
        %v5786 = vrot.slane %v5556, 5
        %v5787 = vrot.slane %v5557, 5
        %v5788 = vsel %vm811, %v5786, %v5787
        %v5789 = vrot.slane %v5558, 5
        %v5790 = vsel %vm811, %v5787, %v5789
        %v5791 = vrot.slane %v5559, 5
        %v5792 = vsel %vm811, %v5789, %v5791
        %v5793 = vrot.slane %v5560, 5
        %v5794 = vsel %vm811, %v5791, %v5793
        %v5795 = vrot.slane %v5561, 5
        %v5796 = vsel %vm811, %v5793, %v5795
        %v5797 = vrot.slane %v5562, 5
        %v5798 = vsel %vm811, %v5795, %v5797
        %v5799 = vrot.slane %v5563, 5
        %v5800 = vsel %vm811, %v5797, %v5799
        %v5801 = vrot.slane %v5564, 5
        %v5802 = vsel %vm811, %v5799, %v5801
        %v5803 = vrot.slane %v5565, 5
        %v5804 = vsel %vm811, %v5801, %v5803
        %v5805 = vrot.slane %v5566, 5
        %v5806 = vsel %vm811, %v5803, %v5805
        %v5807 = vrot.slane %v5567, 5
        %v5808 = vsel %vm811, %v5805, %v5807
        %v5809 = vrot.slane %v5568, 5
        %v5810 = vsel %vm811, %v5807, %v5809
        %v5811 = vrot.slane %v5569, 5
        %v5812 = vsel %vm811, %v5809, %v5811
        %v5813 = vrot.slane %v5570, 5
        %v5814 = vsel %vm811, %v5811, %v5813
        %v5815 = vrot.slane %v5571, 5
        %v5816 = vsel %vm811, %v5813, %v5815
        %v5817 = vrot.slane %v5572, 5
        %v5818 = vsel %vm811, %v5815, %v5817
        %v5835 = vrot.slane %v5556, 6
        %v5836 = vrot.slane %v5557, 6
        %v5837 = vsel %vm861, %v5835, %v5836
        %v5838 = vrot.slane %v5558, 6
        %v5839 = vsel %vm861, %v5836, %v5838
        %v5840 = vrot.slane %v5559, 6
        %v5841 = vsel %vm861, %v5838, %v5840
        %v5842 = vrot.slane %v5560, 6
        %v5843 = vsel %vm861, %v5840, %v5842
        %v5844 = vrot.slane %v5561, 6
        %v5845 = vsel %vm861, %v5842, %v5844
        %v5846 = vrot.slane %v5562, 6
        %v5847 = vsel %vm861, %v5844, %v5846
        %v5848 = vrot.slane %v5563, 6
        %v5849 = vsel %vm861, %v5846, %v5848
        %v5850 = vrot.slane %v5564, 6
        %v5851 = vsel %vm861, %v5848, %v5850
        %v5852 = vrot.slane %v5565, 6
        %v5853 = vsel %vm861, %v5850, %v5852
        %v5854 = vrot.slane %v5566, 6
        %v5855 = vsel %vm861, %v5852, %v5854
        %v5856 = vrot.slane %v5567, 6
        %v5857 = vsel %vm861, %v5854, %v5856
        %v5858 = vrot.slane %v5568, 6
        %v5859 = vsel %vm861, %v5856, %v5858
        %v5860 = vrot.slane %v5569, 6
        %v5861 = vsel %vm861, %v5858, %v5860
        %v5862 = vrot.slane %v5570, 6
        %v5863 = vsel %vm861, %v5860, %v5862
        %v5864 = vrot.slane %v5571, 6
        %v5865 = vsel %vm861, %v5862, %v5864
        %v5866 = vrot.slane %v5572, 6
        %v5867 = vsel %vm861, %v5864, %v5866
        %s5884 = scalar_lea.vmem [#allocation6], 4480
        %v5885 = vld [vmem:[%s5884] sm:$0xff]
        %v5886 = vld [vmem:[%s5884 + $0x8] sm:$0xff]
        %v5887 = vld [vmem:[%s5884 + $0x10] sm:$0xff]
        %v5888 = vld [vmem:[%s5884 + $0x18] sm:$0xff]
        %v5889 = vld [vmem:[%s5884 + $0x20] sm:$0xff]
        %v5890 = vld [vmem:[%s5884 + $0x28] sm:$0xff]
        %v5891 = vld [vmem:[%s5884 + $0x30] sm:$0xff]
        %v5892 = vld [vmem:[%s5884 + $0x38] sm:$0xff]
        %v5893 = vld [vmem:[%s5884 + $0x40] sm:$0xff]
        %v5894 = vld [vmem:[%s5884 + $0x48] sm:$0xff]
        %v5895 = vld [vmem:[%s5884 + $0x50] sm:$0xff]
        %v5896 = vld [vmem:[%s5884 + $0x58] sm:$0xff]
        %v5897 = vld [vmem:[%s5884 + $0x60] sm:$0xff]
        %v5898 = vld [vmem:[%s5884 + $0x68] sm:$0xff]
        %v5899 = vld [vmem:[%s5884 + $0x70] sm:$0xff]
        %v5900 = vld [vmem:[%s5884 + $0x78] sm:$0xff]
        %v5901 = vld [vmem:[%s5884 + $0x80] sm:$0xff]
        %v5902 = vld [vmem:[%s5884 + $0x88] sm:$0xff]
        %v5903 = vld [vmem:[%s5884 + $0x90] sm:$0xff]
        %v5904 = vld [vmem:[%s5884 + $0x98] sm:$0xff]
        %v5905 = vld [vmem:[%s5884 + $0xa0] sm:$0xff]
        %v5906 = vld [vmem:[%s5884 + $0xa8] sm:$0xff]
        %v5907 = vld [vmem:[%s5884 + $0xb0] sm:$0xff]
        %v5908 = vld [vmem:[%s5884 + $0xb8] sm:$0xff]
        %v5909 = vld [vmem:[%s5884 + $0xc0] sm:$0xff]
        %v5910 = vld [vmem:[%s5884 + $0xc8] sm:$0xff]
        %v5911 = vld [vmem:[%s5884 + $0xd0] sm:$0xff]
        %v5912 = vld [vmem:[%s5884 + $0xd8] sm:$0xff]
        %v5913 = vld [vmem:[%s5884 + $0xe0] sm:$0xff]
        %v5914 = vld [vmem:[%s5884 + $0xe8] sm:$0xff]
        %v5915 = vld [vmem:[%s5884 + $0xf0] sm:$0xff]
        %v5916 = vld [vmem:[%s5884 + $0xf8] sm:$0xff]
        %v5917 = vld [vmem:[%s5884 + $0x100] sm:$0xff]
        %v5918 = vld [vmem:[%s5884 + $0x108] sm:$0xff]
        %v5919 = vld [vmem:[%s5884 + $0x110] sm:$0xff]
        %v5920 = vld [vmem:[%s5884 + $0x118] sm:$0xff]
        %v5921 = vld [vmem:[%s5884 + $0x120] sm:$0xff]
        %v5922 = vld [vmem:[%s5884 + $0x128] sm:$0xff]
        %v5923 = vld [vmem:[%s5884 + $0x130] sm:$0xff]
        %v5924 = vld [vmem:[%s5884 + $0x138] sm:$0xff]
        %v5925 = vld [vmem:[%s5884 + $0x140] sm:$0xff]
        %v5926 = vld [vmem:[%s5884 + $0x148] sm:$0xff]
        %v5927 = vld [vmem:[%s5884 + $0x150] sm:$0xff]
        %v5928 = vld [vmem:[%s5884 + $0x158] sm:$0xff]
        %v5929 = vld [vmem:[%s5884 + $0x160] sm:$0xff]
        %v5930 = vld [vmem:[%s5884 + $0x168] sm:$0xff]
        %v5931 = vld [vmem:[%s5884 + $0x170] sm:$0xff]
        %v5932 = vld [vmem:[%s5884 + $0x178] sm:$0xff]
        %v5933 = vld [vmem:[%s5884 + $0x180] sm:$0xff]
        %v5934 = vld [vmem:[%s5884 + $0x188] sm:$0xff]
        %v5935 = vld [vmem:[%s5884 + $0x190] sm:$0xff]
        %v5936 = vld [vmem:[%s5884 + $0x198] sm:$0xff]
        %v5937 = vld [vmem:[%s5884 + $0x1a0] sm:$0xff]
        %v5938 = vld [vmem:[%s5884 + $0x1a8] sm:$0xff]
        %v5939 = vld [vmem:[%s5884 + $0x1b0] sm:$0xff]
        %v5940 = vld [vmem:[%s5884 + $0x1b8] sm:$0xff]
        %v5941 = vld [vmem:[%s5884 + $0x1c0] sm:$0xff]
        %v5942 = vld [vmem:[%s5884 + $0x1c8] sm:$0xff]
        %v5943 = vld [vmem:[%s5884 + $0x1d0] sm:$0xff]
        %v5944 = vld [vmem:[%s5884 + $0x1d8] sm:$0xff]
        %v5945 = vld [vmem:[%s5884 + $0x1e0] sm:$0xff]
        %v5946 = vld [vmem:[%s5884 + $0x1e8] sm:$0xff]
        %v5947 = vld [vmem:[%s5884 + $0x1f0] sm:$0xff]
        %v5948 = vld [vmem:[%s5884 + $0x1f8] sm:$0xff]
        %v5949 = vld [vmem:[%s5884 + $0x200] sm:$0xff]
        %v5950 = vld [vmem:[%s5884 + $0x208] sm:$0xff]
        %v5951 = vld [vmem:[%s5884 + $0x210] sm:$0xff]
        %v5952 = vld [vmem:[%s5884 + $0x218] sm:$0xff]
        %v5953 = vld [vmem:[%s5884 + $0x220] sm:$0xff]
        %v5954 = vld [vmem:[%s5884 + $0x228] sm:$0xff]
        %v5955 = vld [vmem:[%s5884 + $0x230] sm:$0xff]
        %v5956 = vld [vmem:[%s5884 + $0x238] sm:$0xff]
        %v5957 = vld [vmem:[%s5884 + $0x240] sm:$0xff]
        %v5958 = vld [vmem:[%s5884 + $0x248] sm:$0xff]
        %v5959 = vld [vmem:[%s5884 + $0x250] sm:$0xff]
        %v5960 = vld [vmem:[%s5884 + $0x258] sm:$0xff]
        %v5961 = vld [vmem:[%s5884 + $0x260] sm:$0xff]
        %v5962 = vld [vmem:[%s5884 + $0x268] sm:$0xff]
        %v5963 = vld [vmem:[%s5884 + $0x270] sm:$0xff]
        %v5964 = vld [vmem:[%s5884 + $0x278] sm:$0xff]
        %v5965 = vld [vmem:[%s5884 + $0x280] sm:$0xff]
        %v5966 = vld [vmem:[%s5884 + $0x288] sm:$0xff]
        %v5967 = vld [vmem:[%s5884 + $0x290] sm:$0xff]
        %v5968 = vld [vmem:[%s5884 + $0x298] sm:$0xff]
        %v5969 = vld [vmem:[%s5884 + $0x2a0] sm:$0xff]
        %v5970 = vld [vmem:[%s5884 + $0x2a8] sm:$0xff]
        %v5971 = vld [vmem:[%s5884 + $0x2b0] sm:$0xff]
        %v5972 = vld [vmem:[%s5884 + $0x2b8] sm:$0xff]
        %v5973 = vld [vmem:[%s5884 + $0x2c0] sm:$0xff]
        %v5974 = vld [vmem:[%s5884 + $0x2c8] sm:$0xff]
        %v5975 = vld [vmem:[%s5884 + $0x2d0] sm:$0xff]
        %v5976 = vld [vmem:[%s5884 + $0x2d8] sm:$0xff]
        %v5977 = vld [vmem:[%s5884 + $0x2e0] sm:$0xff]
        %v5978 = vld [vmem:[%s5884 + $0x2e8] sm:$0xff]
        %v5979 = vld [vmem:[%s5884 + $0x2f0] sm:$0xff]
        %v5980 = vld [vmem:[%s5884 + $0x2f8] sm:$0xff]
        %v5981 = vld [vmem:[%s5884 + $0x300] sm:$0xff]
        %v5982 = vld [vmem:[%s5884 + $0x308] sm:$0xff]
        %v5983 = vld [vmem:[%s5884 + $0x310] sm:$0xff]
        %v5984 = vld [vmem:[%s5884 + $0x318] sm:$0xff]
        %v5985 = vld [vmem:[%s5884 + $0x320] sm:$0xff]
        %v5986 = vld [vmem:[%s5884 + $0x328] sm:$0xff]
        %v5987 = vld [vmem:[%s5884 + $0x330] sm:$0xff]
        %v5988 = vld [vmem:[%s5884 + $0x338] sm:$0xff]
        %v5989 = vld [vmem:[%s5884 + $0x340] sm:$0xff]
        %v5990 = vld [vmem:[%s5884 + $0x348] sm:$0xff]
        %v5991 = vld [vmem:[%s5884 + $0x350] sm:$0xff]
        %v5992 = vld [vmem:[%s5884 + $0x358] sm:$0xff]
        %v5993 = vld [vmem:[%s5884 + $0x360] sm:$0xff]
        %v5994 = vld [vmem:[%s5884 + $0x368] sm:$0xff]
        %v5995 = vld [vmem:[%s5884 + $0x370] sm:$0xff]
        %v5996 = vld [vmem:[%s5884 + $0x378] sm:$0xff]
        %5997 = vmatprep.subr.mxu0 0.0
        %5998 = vmatpush1.msra.mxu0 %v5885
        %5999 = vmatprep.subr.mxu0 0.0
        %6000 = vmatpush1.msra.mxu0 %v5886
        %6001 = vmatprep.subr.mxu0 0.0
        %6002 = vmatpush1.msra.mxu0 %v5887
        %6003 = vmatprep.subr.mxu0 0.0
        %6004 = vmatpush1.msra.mxu0 %v5888
        %6005 = vmatprep.subr.mxu0 0.0
        %6006 = vmatpush1.msra.mxu0 %v5889
        %6007 = vmatprep.subr.mxu0 0.0
        %6008 = vmatpush1.msra.mxu0 %v5890
        %6009 = vmatprep.subr.mxu0 0.0
        %6010 = vmatpush1.msra.mxu0 %v5891
        %6011 = vmatprep.subr.mxu0 0.0
        %6012 = vmatpush1.msra.mxu0 %v5892
        %6013 = vmatprep.subr.mxu0 0.0
        %6014 = vmatpush1.msra.mxu0 %v5893
        %6015 = vmatprep.subr.mxu0 0.0
        %6016 = vmatpush1.msra.mxu0 %v5894
        %6017 = vmatprep.subr.mxu0 0.0
        %6018 = vmatpush1.msra.mxu0 %v5895
        %6019 = vmatprep.subr.mxu0 0.0
        %6020 = vmatpush1.msra.mxu0 %v5896
        %6021 = vmatprep.subr.mxu0 0.0
        %6022 = vmatpush1.msra.mxu0 %v5897
        %6023 = vmatprep.subr.mxu0 0.0
        %6024 = vmatpush1.msra.mxu0 %v5898
        %6025 = vmatprep.subr.mxu0 0.0
        %6026 = vmatpush1.msra.mxu0 %v5899
        %6027 = vmatprep.subr.mxu0 0.0
        %6028 = vmatpush1.msra.mxu0 %v5900
        %6029 = vmatprep.subr.mxu0 0.0
        %6030 = vmatpush1.msra.mxu0 %v5901
        %6031 = vmatprep.subr.mxu0 0.0
        %6032 = vmatpush1.msra.mxu0 %v5902
        %6033 = vmatprep.subr.mxu0 0.0
        %6034 = vmatpush1.msra.mxu0 %v5903
        %6035 = vmatprep.subr.mxu0 0.0
        %6036 = vmatpush1.msra.mxu0 %v5904
        %6037 = vmatprep.subr.mxu0 0.0
        %6038 = vmatpush1.msra.mxu0 %v5905
        %6039 = vmatprep.subr.mxu0 0.0
        %6040 = vmatpush1.msra.mxu0 %v5906
        %6041 = vmatprep.subr.mxu0 0.0
        %6042 = vmatpush1.msra.mxu0 %v5907
        %6043 = vmatprep.subr.mxu0 0.0
        %6044 = vmatpush1.msra.mxu0 %v5908
        %6045 = vmatprep.subr.mxu0 0.0
        %6046 = vmatpush1.msra.mxu0 %v5909
        %6047 = vmatprep.subr.mxu0 0.0
        %6048 = vmatpush1.msra.mxu0 %v5910
        %6049 = vmatprep.subr.mxu0 0.0
        %6050 = vmatpush1.msra.mxu0 %v5911
        %6051 = vmatprep.subr.mxu0 0.0
        %6052 = vmatpush1.msra.mxu0 %v5912
        %6053 = vmatprep.subr.mxu0 0.0
        %6054 = vmatpush1.msra.mxu0 %v5913
        %6055 = vmatprep.subr.mxu0 0.0
        %6056 = vmatpush1.msra.mxu0 %v5914
        %6057 = vmatprep.subr.mxu0 0.0
        %6058 = vmatpush1.msra.mxu0 %v5915
        %6059 = vmatprep.subr.mxu0 0.0
        %6060 = vmatpush1.msra.mxu0 %v5916
        %6061 = vmatprep.mubr.f32.mxu0 %v5592
        %6062 = vmatmul.mubr.f32.gmra.mrb[0].mxu0 %v5556
        %v6063 = vpop.f32.mrb[0].mxu0
        %v6064 = vadd.f32 0.0, %v6063
        %v6065 = vpop.f32.mrb[0].mxu0
        %6066 = vmatprep.mubr.f32.mxu0 %v5594
        %6067 = vmatmul.mubr.f32.gmra.mrb[0].mxu0 %v5557
        %v6068 = vpop.f32.mrb[0].mxu0
        %v6069 = vpop.f32.mrb[0].mxu0
        %6070 = vmatprep.mubr.f32.mxu0 %v5596
        %6071 = vmatmul.mubr.f32.gmra.mrb[0].mxu0 %v5558
        %v6072 = vpop.f32.mrb[0].mxu0
        %v6073 = vadd.f32 0.0, %v6072
        %v6074 = vpop.f32.mrb[0].mxu0
        %6075 = vmatprep.mubr.f32.mxu0 %v5598
        %6076 = vmatmul.mubr.f32.gmra.mrb[0].mxu0 %v5559
        %v6077 = vpop.f32.mrb[0].mxu0
        %v6078 = vpop.f32.mrb[0].mxu0
        %6079 = vmatprep.mubr.f32.mxu0 %v5600
        %6080 = vmatmul.mubr.f32.gmra.mrb[0].mxu0 %v5560
        %v6081 = vpop.f32.mrb[0].mxu0
        %v6082 = vadd.f32 0.0, %v6081
        %v6083 = vpop.f32.mrb[0].mxu0
        %6084 = vmatprep.mubr.f32.mxu0 %v5602
        %6085 = vmatmul.mubr.f32.gmra.mrb[0].mxu0 %v5561
        %v6086 = vpop.f32.mrb[0].mxu0
        %v6087 = vpop.f32.mrb[0].mxu0
        %6088 = vmatprep.mubr.f32.mxu0 %v5604
        %6089 = vmatmul.mubr.f32.gmra.mrb[0].mxu0 %v5562
        %v6090 = vpop.f32.mrb[0].mxu0
        %v6091 = vadd.f32 0.0, %v6090
        %v6092 = vpop.f32.mrb[0].mxu0
        %6093 = vmatprep.mubr.f32.mxu0 %v5606
        %6094 = vmatmul.mubr.f32.gmra.mrb[0].mxu0 %v5563
        %v6095 = vpop.f32.mrb[0].mxu0
        %v6096 = vpop.f32.mrb[0].mxu0
        %6097 = vmatprep.mubr.f32.mxu0 %v5608
        %6098 = vmatmul.mubr.f32.gmra.mrb[0].mxu0 %v5564
        %v6099 = vpop.f32.mrb[0].mxu0
        %v6100 = vadd.f32 0.0, %v6099
        %v6101 = vpop.f32.mrb[0].mxu0
        %6102 = vmatprep.mubr.f32.mxu0 %v5610
        %6103 = vmatmul.mubr.f32.gmra.mrb[0].mxu0 %v5565
        %v6104 = vpop.f32.mrb[0].mxu0
        %v6105 = vpop.f32.mrb[0].mxu0
        %6106 = vmatprep.mubr.f32.mxu0 %v5612
        %6107 = vmatmul.mubr.f32.gmra.mrb[0].mxu0 %v5566
        %v6108 = vpop.f32.mrb[0].mxu0
        %v6109 = vadd.f32 0.0, %v6108
        %v6110 = vpop.f32.mrb[0].mxu0
        %6111 = vmatprep.mubr.f32.mxu0 %v5614
        %6112 = vmatmul.mubr.f32.gmra.mrb[0].mxu0 %v5567
        %v6113 = vpop.f32.mrb[0].mxu0
        %v6114 = vpop.f32.mrb[0].mxu0
        %6115 = vmatprep.mubr.f32.mxu0 %v5616
        %6116 = vmatmul.mubr.f32.gmra.mrb[0].mxu0 %v5568
        %v6117 = vpop.f32.mrb[0].mxu0
        %v6118 = vadd.f32 0.0, %v6117
        %v6119 = vpop.f32.mrb[0].mxu0
        %6120 = vmatprep.mubr.f32.mxu0 %v5618
        %6121 = vmatmul.mubr.f32.gmra.mrb[0].mxu0 %v5569
        %v6122 = vpop.f32.mrb[0].mxu0
        %v6123 = vpop.f32.mrb[0].mxu0
        %6124 = vmatprep.mubr.f32.mxu0 %v5620
        %6125 = vmatmul.mubr.f32.gmra.mrb[0].mxu0 %v5570
        %v6126 = vpop.f32.mrb[0].mxu0
        %v6127 = vadd.f32 0.0, %v6126
        %v6128 = vpop.f32.mrb[0].mxu0
        %6129 = vmatprep.mubr.f32.mxu0 %v5622
        %6130 = vmatmul.mubr.f32.gmra.mrb[0].mxu0 %v5571
        %v6131 = vpop.f32.mrb[0].mxu0
        %v6132 = vpop.f32.mrb[0].mxu0
        %6133 = vdwg.mxu0
        %6134 = vmatprep.subr.mxu0 0.0
        %6135 = vmatpush1.msra.mxu0 %v5917
        %6136 = vmatprep.subr.mxu0 0.0
        %6137 = vmatpush1.msra.mxu0 %v5918
        %6138 = vmatprep.subr.mxu0 0.0
        %6139 = vmatpush1.msra.mxu0 %v5919
        %6140 = vmatprep.subr.mxu0 0.0
        %6141 = vmatpush1.msra.mxu0 %v5920
        %6142 = vmatprep.subr.mxu0 0.0
        %6143 = vmatpush1.msra.mxu0 %v5921
        %6144 = vmatprep.subr.mxu0 0.0
        %6145 = vmatpush1.msra.mxu0 %v5922
        %6146 = vmatprep.subr.mxu0 0.0
        %6147 = vmatpush1.msra.mxu0 %v5923
        %6148 = vmatprep.subr.mxu0 0.0
        %6149 = vmatpush1.msra.mxu0 %v5924
        %6150 = vmatprep.subr.mxu0 0.0
        %6151 = vmatpush1.msra.mxu0 %v5925
        %6152 = vmatprep.subr.mxu0 0.0
        %6153 = vmatpush1.msra.mxu0 %v5926
        %6154 = vmatprep.subr.mxu0 0.0
        %6155 = vmatpush1.msra.mxu0 %v5927
        %6156 = vmatprep.subr.mxu0 0.0
        %6157 = vmatpush1.msra.mxu0 %v5928
        %6158 = vmatprep.subr.mxu0 0.0
        %6159 = vmatpush1.msra.mxu0 %v5929
        %6160 = vmatprep.subr.mxu0 0.0
        %6161 = vmatpush1.msra.mxu0 %v5930
        %6162 = vmatprep.subr.mxu0 0.0
        %6163 = vmatpush1.msra.mxu0 %v5931
        %6164 = vmatprep.subr.mxu0 0.0
        %6165 = vmatpush1.msra.mxu0 %v5932
        %6166 = vmatprep.subr.mxu0 0.0
        %6167 = vmatpush1.msra.mxu0 %v5933
        %6168 = vmatprep.subr.mxu0 0.0
        %6169 = vmatpush1.msra.mxu0 %v5934
        %6170 = vmatprep.subr.mxu0 0.0
        %6171 = vmatpush1.msra.mxu0 %v5935
        %6172 = vmatprep.subr.mxu0 0.0
        %6173 = vmatpush1.msra.mxu0 %v5936
        %6174 = vmatprep.subr.mxu0 0.0
        %6175 = vmatpush1.msra.mxu0 %v5937
        %6176 = vmatprep.subr.mxu0 0.0
        %6177 = vmatpush1.msra.mxu0 %v5938
        %6178 = vmatprep.subr.mxu0 0.0
        %6179 = vmatpush1.msra.mxu0 %v5939
        %6180 = vmatprep.subr.mxu0 0.0
        %6181 = vmatpush1.msra.mxu0 %v5940
        %6182 = vmatprep.subr.mxu0 0.0
        %6183 = vmatpush1.msra.mxu0 %v5941
        %6184 = vmatprep.subr.mxu0 0.0
        %6185 = vmatpush1.msra.mxu0 %v5942
        %6186 = vmatprep.subr.mxu0 0.0
        %6187 = vmatpush1.msra.mxu0 %v5943
        %6188 = vmatprep.subr.mxu0 0.0
        %6189 = vmatpush1.msra.mxu0 %v5944
        %6190 = vmatprep.subr.mxu0 0.0
        %6191 = vmatpush1.msra.mxu0 %v5945
        %6192 = vmatprep.subr.mxu0 0.0
        %6193 = vmatpush1.msra.mxu0 %v5946
        %6194 = vmatprep.subr.mxu0 0.0
        %6195 = vmatpush1.msra.mxu0 %v5947
        %6196 = vmatprep.subr.mxu0 0.0
        %6197 = vmatpush1.msra.mxu0 %v5948
        %6198 = vmatprep.mubr.f32.mxu0 %v5690
        %6199 = vmatmul.mubr.f32.gmra.mrb[0].mxu0 %v5641
        %v6200 = vpop.f32.mrb[0].mxu0
        %v6201 = vadd.f32 %v6064, %v6200
        %v6202 = vpop.f32.mrb[0].mxu0
        %6203 = vmatprep.mubr.f32.mxu0 %v5692
        %6204 = vmatmul.mubr.f32.gmra.mrb[0].mxu0 %v5643
        %v6205 = vpop.f32.mrb[0].mxu0
        %v6206 = vpop.f32.mrb[0].mxu0
        %6207 = vmatprep.mubr.f32.mxu0 %v5694
        %6208 = vmatmul.mubr.f32.gmra.mrb[0].mxu0 %v5645
        %v6209 = vpop.f32.mrb[0].mxu0
        %v6210 = vadd.f32 %v6073, %v6209
        %v6211 = vpop.f32.mrb[0].mxu0
        %6212 = vmatprep.mubr.f32.mxu0 %v5696
        %6213 = vmatmul.mubr.f32.gmra.mrb[0].mxu0 %v5647
        %v6214 = vpop.f32.mrb[0].mxu0
        %v6215 = vpop.f32.mrb[0].mxu0
        %6216 = vmatprep.mubr.f32.mxu0 %v5698
        %6217 = vmatmul.mubr.f32.gmra.mrb[0].mxu0 %v5649
        %v6218 = vpop.f32.mrb[0].mxu0
        %v6219 = vadd.f32 %v6082, %v6218
        %v6220 = vpop.f32.mrb[0].mxu0
        %6221 = vmatprep.mubr.f32.mxu0 %v5700
        %6222 = vmatmul.mubr.f32.gmra.mrb[0].mxu0 %v5651
        %v6223 = vpop.f32.mrb[0].mxu0
        %v6224 = vpop.f32.mrb[0].mxu0
        %6225 = vmatprep.mubr.f32.mxu0 %v5702
        %6226 = vmatmul.mubr.f32.gmra.mrb[0].mxu0 %v5653
        %v6227 = vpop.f32.mrb[0].mxu0
        %v6228 = vadd.f32 %v6091, %v6227
        %v6229 = vpop.f32.mrb[0].mxu0
        %6230 = vmatprep.mubr.f32.mxu0 %v5704
        %6231 = vmatmul.mubr.f32.gmra.mrb[0].mxu0 %v5655
        %v6232 = vpop.f32.mrb[0].mxu0
        %v6233 = vpop.f32.mrb[0].mxu0
        %6234 = vmatprep.mubr.f32.mxu0 %v5706
        %6235 = vmatmul.mubr.f32.gmra.mrb[0].mxu0 %v5657
        %v6236 = vpop.f32.mrb[0].mxu0
        %v6237 = vadd.f32 %v6100, %v6236
        %v6238 = vpop.f32.mrb[0].mxu0
        %6239 = vmatprep.mubr.f32.mxu0 %v5708
        %6240 = vmatmul.mubr.f32.gmra.mrb[0].mxu0 %v5659
        %v6241 = vpop.f32.mrb[0].mxu0
        %v6242 = vpop.f32.mrb[0].mxu0
        %6243 = vmatprep.mubr.f32.mxu0 %v5710
        %6244 = vmatmul.mubr.f32.gmra.mrb[0].mxu0 %v5661
        %v6245 = vpop.f32.mrb[0].mxu0
        %v6246 = vadd.f32 %v6109, %v6245
        %v6247 = vpop.f32.mrb[0].mxu0
        %6248 = vmatprep.mubr.f32.mxu0 %v5712
        %6249 = vmatmul.mubr.f32.gmra.mrb[0].mxu0 %v5663
        %v6250 = vpop.f32.mrb[0].mxu0
        %v6251 = vpop.f32.mrb[0].mxu0
        %6252 = vmatprep.mubr.f32.mxu0 %v5714
        %6253 = vmatmul.mubr.f32.gmra.mrb[0].mxu0 %v5665
        %v6254 = vpop.f32.mrb[0].mxu0
        %v6255 = vadd.f32 %v6118, %v6254
        %v6256 = vpop.f32.mrb[0].mxu0
        %6257 = vmatprep.mubr.f32.mxu0 %v5716
        %6258 = vmatmul.mubr.f32.gmra.mrb[0].mxu0 %v5667
        %v6259 = vpop.f32.mrb[0].mxu0
        %v6260 = vpop.f32.mrb[0].mxu0
        %6261 = vmatprep.mubr.f32.mxu0 %v5718
        %6262 = vmatmul.mubr.f32.gmra.mrb[0].mxu0 %v5669
        %v6263 = vpop.f32.mrb[0].mxu0
        %v6264 = vadd.f32 %v6127, %v6263
        %v6265 = vpop.f32.mrb[0].mxu0
        %6266 = vmatprep.mubr.f32.mxu0 %v5720
        %6267 = vmatmul.mubr.f32.gmra.mrb[0].mxu0 %v5671
        %v6268 = vpop.f32.mrb[0].mxu0
        %v6269 = vpop.f32.mrb[0].mxu0
        %6270 = vdwg.mxu0
        %6271 = vmatprep.subr.mxu0 0.0
        %6272 = vmatpush1.msra.mxu0 %v5949
        %6273 = vmatprep.subr.mxu0 0.0
        %6274 = vmatpush1.msra.mxu0 %v5950
        %6275 = vmatprep.subr.mxu0 0.0
        %6276 = vmatpush1.msra.mxu0 %v5951
        %6277 = vmatprep.subr.mxu0 0.0
        %6278 = vmatpush1.msra.mxu0 %v5952
        %6279 = vmatprep.subr.mxu0 0.0
        %6280 = vmatpush1.msra.mxu0 %v5953
        %6281 = vmatprep.subr.mxu0 0.0
        %6282 = vmatpush1.msra.mxu0 %v5954
        %6283 = vmatprep.subr.mxu0 0.0
        %6284 = vmatpush1.msra.mxu0 %v5955
        %6285 = vmatprep.subr.mxu0 0.0
        %6286 = vmatpush1.msra.mxu0 %v5956
        %6287 = vmatprep.subr.mxu0 0.0
        %6288 = vmatpush1.msra.mxu0 %v5957
        %6289 = vmatprep.subr.mxu0 0.0
        %6290 = vmatpush1.msra.mxu0 %v5958
        %6291 = vmatprep.subr.mxu0 0.0
        %6292 = vmatpush1.msra.mxu0 %v5959
        %6293 = vmatprep.subr.mxu0 0.0
        %6294 = vmatpush1.msra.mxu0 %v5960
        %6295 = vmatprep.subr.mxu0 0.0
        %6296 = vmatpush1.msra.mxu0 %v5961
        %6297 = vmatprep.subr.mxu0 0.0
        %6298 = vmatpush1.msra.mxu0 %v5962
        %6299 = vmatprep.subr.mxu0 0.0
        %6300 = vmatpush1.msra.mxu0 %v5963
        %6301 = vmatprep.subr.mxu0 0.0
        %6302 = vmatpush1.msra.mxu0 %v5964
        %6303 = vmatprep.subr.mxu0 0.0
        %6304 = vmatpush1.msra.mxu0 %v5965
        %6305 = vmatprep.subr.mxu0 0.0
        %6306 = vmatpush1.msra.mxu0 %v5966
        %6307 = vmatprep.subr.mxu0 0.0
        %6308 = vmatpush1.msra.mxu0 %v5967
        %6309 = vmatprep.subr.mxu0 0.0
        %6310 = vmatpush1.msra.mxu0 %v5968
        %6311 = vmatprep.subr.mxu0 0.0
        %6312 = vmatpush1.msra.mxu0 %v5969
        %6313 = vmatprep.subr.mxu0 0.0
        %6314 = vmatpush1.msra.mxu0 %v5970
        %6315 = vmatprep.subr.mxu0 0.0
        %6316 = vmatpush1.msra.mxu0 %v5971
        %6317 = vmatprep.subr.mxu0 0.0
        %6318 = vmatpush1.msra.mxu0 %v5972
        %6319 = vmatprep.subr.mxu0 0.0
        %6320 = vmatpush1.msra.mxu0 %v5973
        %6321 = vmatprep.subr.mxu0 0.0
        %6322 = vmatpush1.msra.mxu0 %v5974
        %6323 = vmatprep.subr.mxu0 0.0
        %6324 = vmatpush1.msra.mxu0 %v5975
        %6325 = vmatprep.subr.mxu0 0.0
        %6326 = vmatpush1.msra.mxu0 %v5976
        %6327 = vmatprep.subr.mxu0 0.0
        %6328 = vmatpush1.msra.mxu0 %v5977
        %6329 = vmatprep.subr.mxu0 0.0
        %6330 = vmatpush1.msra.mxu0 %v5978
        %6331 = vmatprep.subr.mxu0 0.0
        %6332 = vmatpush1.msra.mxu0 %v5979
        %6333 = vmatprep.subr.mxu0 0.0
        %6334 = vmatpush1.msra.mxu0 %v5980
        %6335 = vmatprep.mubr.f32.mxu0 %v5788
        %6336 = vmatmul.mubr.f32.gmra.mrb[0].mxu0 %v5739
        %v6337 = vpop.f32.mrb[0].mxu0
        %v6338 = vadd.f32 %v6201, %v6337
        %v6339 = vpop.f32.mrb[0].mxu0
        %6340 = vmatprep.mubr.f32.mxu0 %v5790
        %6341 = vmatmul.mubr.f32.gmra.mrb[0].mxu0 %v5741
        %v6342 = vpop.f32.mrb[0].mxu0
        %v6343 = vpop.f32.mrb[0].mxu0
        %6344 = vmatprep.mubr.f32.mxu0 %v5792
        %6345 = vmatmul.mubr.f32.gmra.mrb[0].mxu0 %v5743
        %v6346 = vpop.f32.mrb[0].mxu0
        %v6347 = vadd.f32 %v6210, %v6346
        %v6348 = vpop.f32.mrb[0].mxu0
        %6349 = vmatprep.mubr.f32.mxu0 %v5794
        %6350 = vmatmul.mubr.f32.gmra.mrb[0].mxu0 %v5745
        %v6351 = vpop.f32.mrb[0].mxu0
        %v6352 = vpop.f32.mrb[0].mxu0
        %6353 = vmatprep.mubr.f32.mxu0 %v5796
        %6354 = vmatmul.mubr.f32.gmra.mrb[0].mxu0 %v5747
        %v6355 = vpop.f32.mrb[0].mxu0
        %v6356 = vadd.f32 %v6219, %v6355
        %v6357 = vpop.f32.mrb[0].mxu0
        %6358 = vmatprep.mubr.f32.mxu0 %v5798
        %6359 = vmatmul.mubr.f32.gmra.mrb[0].mxu0 %v5749
        %v6360 = vpop.f32.mrb[0].mxu0
        %v6361 = vpop.f32.mrb[0].mxu0
        %6362 = vmatprep.mubr.f32.mxu0 %v5800
        %6363 = vmatmul.mubr.f32.gmra.mrb[0].mxu0 %v5751
        %v6364 = vpop.f32.mrb[0].mxu0
        %v6365 = vadd.f32 %v6228, %v6364
        %v6366 = vpop.f32.mrb[0].mxu0
        %6367 = vmatprep.mubr.f32.mxu0 %v5802
        %6368 = vmatmul.mubr.f32.gmra.mrb[0].mxu0 %v5753
        %v6369 = vpop.f32.mrb[0].mxu0
        %v6370 = vpop.f32.mrb[0].mxu0
        %6371 = vmatprep.mubr.f32.mxu0 %v5804
        %6372 = vmatmul.mubr.f32.gmra.mrb[0].mxu0 %v5755
        %v6373 = vpop.f32.mrb[0].mxu0
        %v6374 = vadd.f32 %v6237, %v6373
        %v6375 = vpop.f32.mrb[0].mxu0
        %6376 = vmatprep.mubr.f32.mxu0 %v5806
        %6377 = vmatmul.mubr.f32.gmra.mrb[0].mxu0 %v5757
        %v6378 = vpop.f32.mrb[0].mxu0
        %v6379 = vpop.f32.mrb[0].mxu0
        %6380 = vmatprep.mubr.f32.mxu0 %v5808
        %6381 = vmatmul.mubr.f32.gmra.mrb[0].mxu0 %v5759
        %v6382 = vpop.f32.mrb[0].mxu0
        %v6383 = vadd.f32 %v6246, %v6382
        %v6384 = vpop.f32.mrb[0].mxu0
        %6385 = vmatprep.mubr.f32.mxu0 %v5810
        %6386 = vmatmul.mubr.f32.gmra.mrb[0].mxu0 %v5761
        %v6387 = vpop.f32.mrb[0].mxu0
        %v6388 = vpop.f32.mrb[0].mxu0
        %6389 = vmatprep.mubr.f32.mxu0 %v5812
        %6390 = vmatmul.mubr.f32.gmra.mrb[0].mxu0 %v5763
        %v6391 = vpop.f32.mrb[0].mxu0
        %v6392 = vadd.f32 %v6255, %v6391
        %v6393 = vpop.f32.mrb[0].mxu0
        %6394 = vmatprep.mubr.f32.mxu0 %v5814
        %6395 = vmatmul.mubr.f32.gmra.mrb[0].mxu0 %v5765
        %v6396 = vpop.f32.mrb[0].mxu0
        %v6397 = vpop.f32.mrb[0].mxu0
        %6398 = vmatprep.mubr.f32.mxu0 %v5816
        %6399 = vmatmul.mubr.f32.gmra.mrb[0].mxu0 %v5767
        %v6400 = vpop.f32.mrb[0].mxu0
        %v6401 = vadd.f32 %v6264, %v6400
        %v6402 = vpop.f32.mrb[0].mxu0
        %6403 = vmatprep.mubr.f32.mxu0 %v5818
        %6404 = vmatmul.mubr.f32.gmra.mrb[0].mxu0 %v5769
        %v6405 = vpop.f32.mrb[0].mxu0
        %v6406 = vpop.f32.mrb[0].mxu0
        %6407 = vdwg.mxu0
        %6408 = vmatprep.subr.mxu0 0.0
        %6409 = vmatpush1.msra.mxu0 %v5981
        %6410 = vmatprep.subr.mxu0 0.0
        %6411 = vmatpush1.msra.mxu0 %v5982
        %6412 = vmatprep.subr.mxu0 0.0
        %6413 = vmatpush1.msra.mxu0 %v5983
        %6414 = vmatprep.subr.mxu0 0.0
        %6415 = vmatpush1.msra.mxu0 %v5984
        %6416 = vmatprep.subr.mxu0 0.0
        %6417 = vmatpush1.msra.mxu0 %v5985
        %6418 = vmatprep.subr.mxu0 0.0
        %6419 = vmatpush1.msra.mxu0 %v5986
        %6420 = vmatprep.subr.mxu0 0.0
        %6421 = vmatpush1.msra.mxu0 %v5987
        %6422 = vmatprep.subr.mxu0 0.0
        %6423 = vmatpush1.msra.mxu0 %v5988
        %6424 = vmatprep.subr.mxu0 0.0
        %6425 = vmatpush1.msra.mxu0 %v5989
        %6426 = vmatprep.subr.mxu0 0.0
        %6427 = vmatpush1.msra.mxu0 %v5990
        %6428 = vmatprep.subr.mxu0 0.0
        %6429 = vmatpush1.msra.mxu0 %v5991
        %6430 = vmatprep.subr.mxu0 0.0
        %6431 = vmatpush1.msra.mxu0 %v5992
        %6432 = vmatprep.subr.mxu0 0.0
        %6433 = vmatpush1.msra.mxu0 %v5993
        %6434 = vmatprep.subr.mxu0 0.0
        %6435 = vmatpush1.msra.mxu0 %v5994
        %6436 = vmatprep.subr.mxu0 0.0
        %6437 = vmatpush1.msra.mxu0 %v5995
        %6438 = vmatprep.subr.mxu0 0.0
        %6439 = vmatpush1.msra.mxu0 %v5996
        %6440 = vmatprep.subr.mxu0 0.0
        %6441 = vmatpush1.msra.mxu0 0.0
        %6442 = vmatprep.subr.mxu0 0.0
        %6443 = vmatpush1.msra.mxu0 0.0
        %6444 = vmatprep.subr.mxu0 0.0
        %6445 = vmatpush1.msra.mxu0 0.0
        %6446 = vmatprep.subr.mxu0 0.0
        %6447 = vmatpush1.msra.mxu0 0.0
        %6448 = vmatprep.subr.mxu0 0.0
        %6449 = vmatpush1.msra.mxu0 0.0
        %6450 = vmatprep.subr.mxu0 0.0
        %6451 = vmatpush1.msra.mxu0 0.0
        %6452 = vmatprep.subr.mxu0 0.0
        %6453 = vmatpush1.msra.mxu0 0.0
        %6454 = vmatprep.subr.mxu0 0.0
        %6455 = vmatpush1.msra.mxu0 0.0
        %6456 = vmatprep.subr.mxu0 0.0
        %6457 = vmatpush1.msra.mxu0 0.0
        %6458 = vmatprep.subr.mxu0 0.0
        %6459 = vmatpush1.msra.mxu0 0.0
        %6460 = vmatprep.subr.mxu0 0.0
        %6461 = vmatpush1.msra.mxu0 0.0
        %6462 = vmatprep.subr.mxu0 0.0
        %6463 = vmatpush1.msra.mxu0 0.0
        %6464 = vmatprep.subr.mxu0 0.0
        %6465 = vmatpush1.msra.mxu0 0.0
        %6466 = vmatprep.subr.mxu0 0.0
        %6467 = vmatpush1.msra.mxu0 0.0
        %6468 = vmatprep.subr.mxu0 0.0
        %6469 = vmatpush1.msra.mxu0 0.0
        %6470 = vmatprep.subr.mxu0 0.0
        %6471 = vmatpush1.msra.mxu0 0.0
        %6472 = vmatprep.mubr.f32.mxu0 0.0
        %6473 = vmatmul.mubr.f32.gmra.mrb[0].mxu0 %v5837
        %v6474 = vpop.f32.mrb[0].mxu0
        %v6475 = vadd.f32 %v6338, %v6474
        %v6476 = vpop.f32.mrb[0].mxu0
        %6477 = vmatprep.mubr.f32.mxu0 0.0
        %6478 = vmatmul.mubr.f32.gmra.mrb[0].mxu0 %v5839
        %v6479 = vpop.f32.mrb[0].mxu0
        %v6480 = vpop.f32.mrb[0].mxu0
        %6481 = vmatprep.mubr.f32.mxu0 0.0
        %6482 = vmatmul.mubr.f32.gmra.mrb[0].mxu0 %v5841
        %v6483 = vpop.f32.mrb[0].mxu0
        %v6484 = vadd.f32 %v6347, %v6483
        %v6485 = vpop.f32.mrb[0].mxu0
        %6486 = vmatprep.mubr.f32.mxu0 0.0
        %6487 = vmatmul.mubr.f32.gmra.mrb[0].mxu0 %v5843
        %v6488 = vpop.f32.mrb[0].mxu0
        %v6489 = vpop.f32.mrb[0].mxu0
        %6490 = vmatprep.mubr.f32.mxu0 0.0
        %6491 = vmatmul.mubr.f32.gmra.mrb[0].mxu0 %v5845
        %v6492 = vpop.f32.mrb[0].mxu0
        %v6493 = vadd.f32 %v6356, %v6492
        %v6494 = vpop.f32.mrb[0].mxu0
        %6495 = vmatprep.mubr.f32.mxu0 0.0
        %6496 = vmatmul.mubr.f32.gmra.mrb[0].mxu0 %v5847
        %v6497 = vpop.f32.mrb[0].mxu0
        %v6498 = vpop.f32.mrb[0].mxu0
        %6499 = vmatprep.mubr.f32.mxu0 0.0
        %6500 = vmatmul.mubr.f32.gmra.mrb[0].mxu0 %v5849
        %v6501 = vpop.f32.mrb[0].mxu0
        %v6502 = vadd.f32 %v6365, %v6501
        %v6503 = vpop.f32.mrb[0].mxu0
        %6504 = vmatprep.mubr.f32.mxu0 0.0
        %6505 = vmatmul.mubr.f32.gmra.mrb[0].mxu0 %v5851
        %v6506 = vpop.f32.mrb[0].mxu0
        %v6507 = vpop.f32.mrb[0].mxu0
        %6508 = vmatprep.mubr.f32.mxu0 0.0
        %6509 = vmatmul.mubr.f32.gmra.mrb[0].mxu0 %v5853
        %v6510 = vpop.f32.mrb[0].mxu0
        %v6511 = vadd.f32 %v6374, %v6510
        %v6512 = vpop.f32.mrb[0].mxu0
        %6513 = vmatprep.mubr.f32.mxu0 0.0
        %6514 = vmatmul.mubr.f32.gmra.mrb[0].mxu0 %v5855
        %v6515 = vpop.f32.mrb[0].mxu0
        %v6516 = vpop.f32.mrb[0].mxu0
        %6517 = vmatprep.mubr.f32.mxu0 0.0
        %6518 = vmatmul.mubr.f32.gmra.mrb[0].mxu0 %v5857
        %v6519 = vpop.f32.mrb[0].mxu0
        %v6520 = vadd.f32 %v6383, %v6519
        %v6521 = vpop.f32.mrb[0].mxu0
        %6522 = vmatprep.mubr.f32.mxu0 0.0
        %6523 = vmatmul.mubr.f32.gmra.mrb[0].mxu0 %v5859
        %v6524 = vpop.f32.mrb[0].mxu0
        %v6525 = vpop.f32.mrb[0].mxu0
        %6526 = vmatprep.mubr.f32.mxu0 0.0
        %6527 = vmatmul.mubr.f32.gmra.mrb[0].mxu0 %v5861
        %v6528 = vpop.f32.mrb[0].mxu0
        %v6529 = vadd.f32 %v6392, %v6528
        %v6530 = vpop.f32.mrb[0].mxu0
        %6531 = vmatprep.mubr.f32.mxu0 0.0
        %6532 = vmatmul.mubr.f32.gmra.mrb[0].mxu0 %v5863
        %v6533 = vpop.f32.mrb[0].mxu0
        %v6534 = vpop.f32.mrb[0].mxu0
        %6535 = vmatprep.mubr.f32.mxu0 0.0
        %6536 = vmatmul.mubr.f32.gmra.mrb[0].mxu0 %v5865
        %v6537 = vpop.f32.mrb[0].mxu0
        %v6538 = vadd.f32 %v6401, %v6537
        %v6539 = vpop.f32.mrb[0].mxu0
        %6540 = vmatprep.mubr.f32.mxu0 0.0
        %6541 = vmatmul.mubr.f32.gmra.mrb[0].mxu0 %v5867
        %v6542 = vpop.f32.mrb[0].mxu0
        %v6543 = vpop.f32.mrb[0].mxu0
        %6544 = vdwg.mxu0
        %v6545 = vadd.f32 %v5547, %v6475
        %v6546 = vadd.f32 %v5548, %v6484
        %v6547 = vadd.f32 %v5549, %v6493
        %v6548 = vadd.f32 %v5550, %v6502
        %v6549 = vadd.f32 %v5551, %v6511
        %v6550 = vadd.f32 %v5552, %v6520
        %v6551 = vadd.f32 %v5553, %v6529
        %v6552 = vadd.f32 %v5554, %v6538
        %s6553 = scalar_lea.vmem [#allocation2], 96
        %v6554 = vld [vmem:[%s6553] sm:$0xff]
        %v6555 = vld [vmem:[%s6553 + $0x8] sm:$0xff]
        %v6556 = vld [vmem:[%s6553 + $0x10] sm:$0xff]
        %v6557 = vld [vmem:[%s6553 + $0x18] sm:$0xff]
        %v6558 = vld [vmem:[%s6553 + $0x20] sm:$0xff]
        %v6559 = vld [vmem:[%s6553 + $0x28] sm:$0xff]
        %v6560 = vld [vmem:[%s6553 + $0x30] sm:$0xff]
        %v6561 = vld [vmem:[%s6553 + $0x38] sm:$0xff]
        %v6562 = vld [vmem:[%s6553 + $0x40] sm:$0xff]
        %v6563 = vld [vmem:[%s6553 + $0x48] sm:$0xff]
        %v6564 = vld [vmem:[%s6553 + $0x50] sm:$0xff]
        %v6565 = vld [vmem:[%s6553 + $0x58] sm:$0xff]
        %v6566 = vld [vmem:[%s6553 + $0x60] sm:$0xff]
        %v6567 = vld [vmem:[%s6553 + $0x68] sm:$0xff]
        %v6568 = vld [vmem:[%s6553 + $0x70] sm:$0xff]
        %v6569 = vld [vmem:[%s6553 + $0x78] sm:$0xff]
        %v6570 = vld [vmem:[%s6553 + $0x80] sm:$0xff]
        %v6588 = vrot.slane %v6554, 1
        %v6589 = vrot.slane %v6555, 1
        %v6590 = vsel %vm611, %v6588, %v6589
        %v6591 = vrot.slane %v6556, 1
        %v6592 = vsel %vm611, %v6589, %v6591
        %v6593 = vrot.slane %v6557, 1
        %v6594 = vsel %vm611, %v6591, %v6593
        %v6595 = vrot.slane %v6558, 1
        %v6596 = vsel %vm611, %v6593, %v6595
        %v6597 = vrot.slane %v6559, 1
        %v6598 = vsel %vm611, %v6595, %v6597
        %v6599 = vrot.slane %v6560, 1
        %v6600 = vsel %vm611, %v6597, %v6599
        %v6601 = vrot.slane %v6561, 1
        %v6602 = vsel %vm611, %v6599, %v6601
        %v6603 = vrot.slane %v6562, 1
        %v6604 = vsel %vm611, %v6601, %v6603
        %v6605 = vrot.slane %v6563, 1
        %v6606 = vsel %vm611, %v6603, %v6605
        %v6607 = vrot.slane %v6564, 1
        %v6608 = vsel %vm611, %v6605, %v6607
        %v6609 = vrot.slane %v6565, 1
        %v6610 = vsel %vm611, %v6607, %v6609
        %v6611 = vrot.slane %v6566, 1
        %v6612 = vsel %vm611, %v6609, %v6611
        %v6613 = vrot.slane %v6567, 1
        %v6614 = vsel %vm611, %v6611, %v6613
        %v6615 = vrot.slane %v6568, 1
        %v6616 = vsel %vm611, %v6613, %v6615
        %v6617 = vrot.slane %v6569, 1
        %v6618 = vsel %vm611, %v6615, %v6617
        %v6619 = vrot.slane %v6570, 1
        %v6620 = vsel %vm611, %v6617, %v6619
        %v6637 = vrot.slane %v6554, 2
        %v6638 = vrot.slane %v6555, 2
        %v6639 = vsel %vm661, %v6637, %v6638
        %v6640 = vrot.slane %v6556, 2
        %v6641 = vsel %vm661, %v6638, %v6640
        %v6642 = vrot.slane %v6557, 2
        %v6643 = vsel %vm661, %v6640, %v6642
        %v6644 = vrot.slane %v6558, 2
        %v6645 = vsel %vm661, %v6642, %v6644
        %v6646 = vrot.slane %v6559, 2
        %v6647 = vsel %vm661, %v6644, %v6646
        %v6648 = vrot.slane %v6560, 2
        %v6649 = vsel %vm661, %v6646, %v6648
        %v6650 = vrot.slane %v6561, 2
        %v6651 = vsel %vm661, %v6648, %v6650
        %v6652 = vrot.slane %v6562, 2
        %v6653 = vsel %vm661, %v6650, %v6652
        %v6654 = vrot.slane %v6563, 2
        %v6655 = vsel %vm661, %v6652, %v6654
        %v6656 = vrot.slane %v6564, 2
        %v6657 = vsel %vm661, %v6654, %v6656
        %v6658 = vrot.slane %v6565, 2
        %v6659 = vsel %vm661, %v6656, %v6658
        %v6660 = vrot.slane %v6566, 2
        %v6661 = vsel %vm661, %v6658, %v6660
        %v6662 = vrot.slane %v6567, 2
        %v6663 = vsel %vm661, %v6660, %v6662
        %v6664 = vrot.slane %v6568, 2
        %v6665 = vsel %vm661, %v6662, %v6664
        %v6666 = vrot.slane %v6569, 2
        %v6667 = vsel %vm661, %v6664, %v6666
        %v6668 = vrot.slane %v6570, 2
        %v6669 = vsel %vm661, %v6666, %v6668
        %v6686 = vrot.slane %v6554, 3
        %v6687 = vrot.slane %v6555, 3
        %v6688 = vsel %vm711, %v6686, %v6687
        %v6689 = vrot.slane %v6556, 3
        %v6690 = vsel %vm711, %v6687, %v6689
        %v6691 = vrot.slane %v6557, 3
        %v6692 = vsel %vm711, %v6689, %v6691
        %v6693 = vrot.slane %v6558, 3
        %v6694 = vsel %vm711, %v6691, %v6693
        %v6695 = vrot.slane %v6559, 3
        %v6696 = vsel %vm711, %v6693, %v6695
        %v6697 = vrot.slane %v6560, 3
        %v6698 = vsel %vm711, %v6695, %v6697
        %v6699 = vrot.slane %v6561, 3
        %v6700 = vsel %vm711, %v6697, %v6699
        %v6701 = vrot.slane %v6562, 3
        %v6702 = vsel %vm711, %v6699, %v6701
        %v6703 = vrot.slane %v6563, 3
        %v6704 = vsel %vm711, %v6701, %v6703
        %v6705 = vrot.slane %v6564, 3
        %v6706 = vsel %vm711, %v6703, %v6705
        %v6707 = vrot.slane %v6565, 3
        %v6708 = vsel %vm711, %v6705, %v6707
        %v6709 = vrot.slane %v6566, 3
        %v6710 = vsel %vm711, %v6707, %v6709
        %v6711 = vrot.slane %v6567, 3
        %v6712 = vsel %vm711, %v6709, %v6711
        %v6713 = vrot.slane %v6568, 3
        %v6714 = vsel %vm711, %v6711, %v6713
        %v6715 = vrot.slane %v6569, 3
        %v6716 = vsel %vm711, %v6713, %v6715
        %v6717 = vrot.slane %v6570, 3
        %v6718 = vsel %vm711, %v6715, %v6717
        %v6735 = vrot.slane %v6554, 4
        %v6736 = vrot.slane %v6555, 4
        %v6737 = vsel %vm761, %v6735, %v6736
        %v6738 = vrot.slane %v6556, 4
        %v6739 = vsel %vm761, %v6736, %v6738
        %v6740 = vrot.slane %v6557, 4
        %v6741 = vsel %vm761, %v6738, %v6740
        %v6742 = vrot.slane %v6558, 4
        %v6743 = vsel %vm761, %v6740, %v6742
        %v6744 = vrot.slane %v6559, 4
        %v6745 = vsel %vm761, %v6742, %v6744
        %v6746 = vrot.slane %v6560, 4
        %v6747 = vsel %vm761, %v6744, %v6746
        %v6748 = vrot.slane %v6561, 4
        %v6749 = vsel %vm761, %v6746, %v6748
        %v6750 = vrot.slane %v6562, 4
        %v6751 = vsel %vm761, %v6748, %v6750
        %v6752 = vrot.slane %v6563, 4
        %v6753 = vsel %vm761, %v6750, %v6752
        %v6754 = vrot.slane %v6564, 4
        %v6755 = vsel %vm761, %v6752, %v6754
        %v6756 = vrot.slane %v6565, 4
        %v6757 = vsel %vm761, %v6754, %v6756
        %v6758 = vrot.slane %v6566, 4
        %v6759 = vsel %vm761, %v6756, %v6758
        %v6760 = vrot.slane %v6567, 4
        %v6761 = vsel %vm761, %v6758, %v6760
        %v6762 = vrot.slane %v6568, 4
        %v6763 = vsel %vm761, %v6760, %v6762
        %v6764 = vrot.slane %v6569, 4
        %v6765 = vsel %vm761, %v6762, %v6764
        %v6766 = vrot.slane %v6570, 4
        %v6767 = vsel %vm761, %v6764, %v6766
        %v6784 = vrot.slane %v6554, 5
        %v6785 = vrot.slane %v6555, 5
        %v6786 = vsel %vm811, %v6784, %v6785
        %v6787 = vrot.slane %v6556, 5
        %v6788 = vsel %vm811, %v6785, %v6787
        %v6789 = vrot.slane %v6557, 5
        %v6790 = vsel %vm811, %v6787, %v6789
        %v6791 = vrot.slane %v6558, 5
        %v6792 = vsel %vm811, %v6789, %v6791
        %v6793 = vrot.slane %v6559, 5
        %v6794 = vsel %vm811, %v6791, %v6793
        %v6795 = vrot.slane %v6560, 5
        %v6796 = vsel %vm811, %v6793, %v6795
        %v6797 = vrot.slane %v6561, 5
        %v6798 = vsel %vm811, %v6795, %v6797
        %v6799 = vrot.slane %v6562, 5
        %v6800 = vsel %vm811, %v6797, %v6799
        %v6801 = vrot.slane %v6563, 5
        %v6802 = vsel %vm811, %v6799, %v6801
        %v6803 = vrot.slane %v6564, 5
        %v6804 = vsel %vm811, %v6801, %v6803
        %v6805 = vrot.slane %v6565, 5
        %v6806 = vsel %vm811, %v6803, %v6805
        %v6807 = vrot.slane %v6566, 5
        %v6808 = vsel %vm811, %v6805, %v6807
        %v6809 = vrot.slane %v6567, 5
        %v6810 = vsel %vm811, %v6807, %v6809
        %v6811 = vrot.slane %v6568, 5
        %v6812 = vsel %vm811, %v6809, %v6811
        %v6813 = vrot.slane %v6569, 5
        %v6814 = vsel %vm811, %v6811, %v6813
        %v6815 = vrot.slane %v6570, 5
        %v6816 = vsel %vm811, %v6813, %v6815
        %v6833 = vrot.slane %v6554, 6
        %v6834 = vrot.slane %v6555, 6
        %v6835 = vsel %vm861, %v6833, %v6834
        %v6836 = vrot.slane %v6556, 6
        %v6837 = vsel %vm861, %v6834, %v6836
        %v6838 = vrot.slane %v6557, 6
        %v6839 = vsel %vm861, %v6836, %v6838
        %v6840 = vrot.slane %v6558, 6
        %v6841 = vsel %vm861, %v6838, %v6840
        %v6842 = vrot.slane %v6559, 6
        %v6843 = vsel %vm861, %v6840, %v6842
        %v6844 = vrot.slane %v6560, 6
        %v6845 = vsel %vm861, %v6842, %v6844
        %v6846 = vrot.slane %v6561, 6
        %v6847 = vsel %vm861, %v6844, %v6846
        %v6848 = vrot.slane %v6562, 6
        %v6849 = vsel %vm861, %v6846, %v6848
        %v6850 = vrot.slane %v6563, 6
        %v6851 = vsel %vm861, %v6848, %v6850
        %v6852 = vrot.slane %v6564, 6
        %v6853 = vsel %vm861, %v6850, %v6852
        %v6854 = vrot.slane %v6565, 6
        %v6855 = vsel %vm861, %v6852, %v6854
        %v6856 = vrot.slane %v6566, 6
        %v6857 = vsel %vm861, %v6854, %v6856
        %v6858 = vrot.slane %v6567, 6
        %v6859 = vsel %vm861, %v6856, %v6858
        %v6860 = vrot.slane %v6568, 6
        %v6861 = vsel %vm861, %v6858, %v6860
        %v6862 = vrot.slane %v6569, 6
        %v6863 = vsel %vm861, %v6860, %v6862
        %v6864 = vrot.slane %v6570, 6
        %v6865 = vsel %vm861, %v6862, %v6864
        %s6882 = scalar_lea.vmem [#allocation6], 5376
        %v6883 = vld [vmem:[%s6882] sm:$0xff]
        %v6884 = vld [vmem:[%s6882 + $0x8] sm:$0xff]
        %v6885 = vld [vmem:[%s6882 + $0x10] sm:$0xff]
        %v6886 = vld [vmem:[%s6882 + $0x18] sm:$0xff]
        %v6887 = vld [vmem:[%s6882 + $0x20] sm:$0xff]
        %v6888 = vld [vmem:[%s6882 + $0x28] sm:$0xff]
        %v6889 = vld [vmem:[%s6882 + $0x30] sm:$0xff]
        %v6890 = vld [vmem:[%s6882 + $0x38] sm:$0xff]
        %v6891 = vld [vmem:[%s6882 + $0x40] sm:$0xff]
        %v6892 = vld [vmem:[%s6882 + $0x48] sm:$0xff]
        %v6893 = vld [vmem:[%s6882 + $0x50] sm:$0xff]
        %v6894 = vld [vmem:[%s6882 + $0x58] sm:$0xff]
        %v6895 = vld [vmem:[%s6882 + $0x60] sm:$0xff]
        %v6896 = vld [vmem:[%s6882 + $0x68] sm:$0xff]
        %v6897 = vld [vmem:[%s6882 + $0x70] sm:$0xff]
        %v6898 = vld [vmem:[%s6882 + $0x78] sm:$0xff]
        %v6899 = vld [vmem:[%s6882 + $0x80] sm:$0xff]
        %v6900 = vld [vmem:[%s6882 + $0x88] sm:$0xff]
        %v6901 = vld [vmem:[%s6882 + $0x90] sm:$0xff]
        %v6902 = vld [vmem:[%s6882 + $0x98] sm:$0xff]
        %v6903 = vld [vmem:[%s6882 + $0xa0] sm:$0xff]
        %v6904 = vld [vmem:[%s6882 + $0xa8] sm:$0xff]
        %v6905 = vld [vmem:[%s6882 + $0xb0] sm:$0xff]
        %v6906 = vld [vmem:[%s6882 + $0xb8] sm:$0xff]
        %v6907 = vld [vmem:[%s6882 + $0xc0] sm:$0xff]
        %v6908 = vld [vmem:[%s6882 + $0xc8] sm:$0xff]
        %v6909 = vld [vmem:[%s6882 + $0xd0] sm:$0xff]
        %v6910 = vld [vmem:[%s6882 + $0xd8] sm:$0xff]
        %v6911 = vld [vmem:[%s6882 + $0xe0] sm:$0xff]
        %v6912 = vld [vmem:[%s6882 + $0xe8] sm:$0xff]
        %v6913 = vld [vmem:[%s6882 + $0xf0] sm:$0xff]
        %v6914 = vld [vmem:[%s6882 + $0xf8] sm:$0xff]
        %v6915 = vld [vmem:[%s6882 + $0x100] sm:$0xff]
        %v6916 = vld [vmem:[%s6882 + $0x108] sm:$0xff]
        %v6917 = vld [vmem:[%s6882 + $0x110] sm:$0xff]
        %v6918 = vld [vmem:[%s6882 + $0x118] sm:$0xff]
        %v6919 = vld [vmem:[%s6882 + $0x120] sm:$0xff]
        %v6920 = vld [vmem:[%s6882 + $0x128] sm:$0xff]
        %v6921 = vld [vmem:[%s6882 + $0x130] sm:$0xff]
        %v6922 = vld [vmem:[%s6882 + $0x138] sm:$0xff]
        %v6923 = vld [vmem:[%s6882 + $0x140] sm:$0xff]
        %v6924 = vld [vmem:[%s6882 + $0x148] sm:$0xff]
        %v6925 = vld [vmem:[%s6882 + $0x150] sm:$0xff]
        %v6926 = vld [vmem:[%s6882 + $0x158] sm:$0xff]
        %v6927 = vld [vmem:[%s6882 + $0x160] sm:$0xff]
        %v6928 = vld [vmem:[%s6882 + $0x168] sm:$0xff]
        %v6929 = vld [vmem:[%s6882 + $0x170] sm:$0xff]
        %v6930 = vld [vmem:[%s6882 + $0x178] sm:$0xff]
        %v6931 = vld [vmem:[%s6882 + $0x180] sm:$0xff]
        %v6932 = vld [vmem:[%s6882 + $0x188] sm:$0xff]
        %v6933 = vld [vmem:[%s6882 + $0x190] sm:$0xff]
        %v6934 = vld [vmem:[%s6882 + $0x198] sm:$0xff]
        %v6935 = vld [vmem:[%s6882 + $0x1a0] sm:$0xff]
        %v6936 = vld [vmem:[%s6882 + $0x1a8] sm:$0xff]
        %v6937 = vld [vmem:[%s6882 + $0x1b0] sm:$0xff]
        %v6938 = vld [vmem:[%s6882 + $0x1b8] sm:$0xff]
        %v6939 = vld [vmem:[%s6882 + $0x1c0] sm:$0xff]
        %v6940 = vld [vmem:[%s6882 + $0x1c8] sm:$0xff]
        %v6941 = vld [vmem:[%s6882 + $0x1d0] sm:$0xff]
        %v6942 = vld [vmem:[%s6882 + $0x1d8] sm:$0xff]
        %v6943 = vld [vmem:[%s6882 + $0x1e0] sm:$0xff]
        %v6944 = vld [vmem:[%s6882 + $0x1e8] sm:$0xff]
        %v6945 = vld [vmem:[%s6882 + $0x1f0] sm:$0xff]
        %v6946 = vld [vmem:[%s6882 + $0x1f8] sm:$0xff]
        %v6947 = vld [vmem:[%s6882 + $0x200] sm:$0xff]
        %v6948 = vld [vmem:[%s6882 + $0x208] sm:$0xff]
        %v6949 = vld [vmem:[%s6882 + $0x210] sm:$0xff]
        %v6950 = vld [vmem:[%s6882 + $0x218] sm:$0xff]
        %v6951 = vld [vmem:[%s6882 + $0x220] sm:$0xff]
        %v6952 = vld [vmem:[%s6882 + $0x228] sm:$0xff]
        %v6953 = vld [vmem:[%s6882 + $0x230] sm:$0xff]
        %v6954 = vld [vmem:[%s6882 + $0x238] sm:$0xff]
        %v6955 = vld [vmem:[%s6882 + $0x240] sm:$0xff]
        %v6956 = vld [vmem:[%s6882 + $0x248] sm:$0xff]
        %v6957 = vld [vmem:[%s6882 + $0x250] sm:$0xff]
        %v6958 = vld [vmem:[%s6882 + $0x258] sm:$0xff]
        %v6959 = vld [vmem:[%s6882 + $0x260] sm:$0xff]
        %v6960 = vld [vmem:[%s6882 + $0x268] sm:$0xff]
        %v6961 = vld [vmem:[%s6882 + $0x270] sm:$0xff]
        %v6962 = vld [vmem:[%s6882 + $0x278] sm:$0xff]
        %v6963 = vld [vmem:[%s6882 + $0x280] sm:$0xff]
        %v6964 = vld [vmem:[%s6882 + $0x288] sm:$0xff]
        %v6965 = vld [vmem:[%s6882 + $0x290] sm:$0xff]
        %v6966 = vld [vmem:[%s6882 + $0x298] sm:$0xff]
        %v6967 = vld [vmem:[%s6882 + $0x2a0] sm:$0xff]
        %v6968 = vld [vmem:[%s6882 + $0x2a8] sm:$0xff]
        %v6969 = vld [vmem:[%s6882 + $0x2b0] sm:$0xff]
        %v6970 = vld [vmem:[%s6882 + $0x2b8] sm:$0xff]
        %v6971 = vld [vmem:[%s6882 + $0x2c0] sm:$0xff]
        %v6972 = vld [vmem:[%s6882 + $0x2c8] sm:$0xff]
        %v6973 = vld [vmem:[%s6882 + $0x2d0] sm:$0xff]
        %v6974 = vld [vmem:[%s6882 + $0x2d8] sm:$0xff]
        %v6975 = vld [vmem:[%s6882 + $0x2e0] sm:$0xff]
        %v6976 = vld [vmem:[%s6882 + $0x2e8] sm:$0xff]
        %v6977 = vld [vmem:[%s6882 + $0x2f0] sm:$0xff]
        %v6978 = vld [vmem:[%s6882 + $0x2f8] sm:$0xff]
        %v6979 = vld [vmem:[%s6882 + $0x300] sm:$0xff]
        %v6980 = vld [vmem:[%s6882 + $0x308] sm:$0xff]
        %v6981 = vld [vmem:[%s6882 + $0x310] sm:$0xff]
        %v6982 = vld [vmem:[%s6882 + $0x318] sm:$0xff]
        %v6983 = vld [vmem:[%s6882 + $0x320] sm:$0xff]
        %v6984 = vld [vmem:[%s6882 + $0x328] sm:$0xff]
        %v6985 = vld [vmem:[%s6882 + $0x330] sm:$0xff]
        %v6986 = vld [vmem:[%s6882 + $0x338] sm:$0xff]
        %v6987 = vld [vmem:[%s6882 + $0x340] sm:$0xff]
        %v6988 = vld [vmem:[%s6882 + $0x348] sm:$0xff]
        %v6989 = vld [vmem:[%s6882 + $0x350] sm:$0xff]
        %v6990 = vld [vmem:[%s6882 + $0x358] sm:$0xff]
        %v6991 = vld [vmem:[%s6882 + $0x360] sm:$0xff]
        %v6992 = vld [vmem:[%s6882 + $0x368] sm:$0xff]
        %v6993 = vld [vmem:[%s6882 + $0x370] sm:$0xff]
        %v6994 = vld [vmem:[%s6882 + $0x378] sm:$0xff]
        %6995 = vmatprep.subr.mxu0 0.0
        %6996 = vmatpush1.msra.mxu0 %v6883
        %6997 = vmatprep.subr.mxu0 0.0
        %6998 = vmatpush1.msra.mxu0 %v6884
        %6999 = vmatprep.subr.mxu0 0.0
        %7000 = vmatpush1.msra.mxu0 %v6885
        %7001 = vmatprep.subr.mxu0 0.0
        %7002 = vmatpush1.msra.mxu0 %v6886
        %7003 = vmatprep.subr.mxu0 0.0
        %7004 = vmatpush1.msra.mxu0 %v6887
        %7005 = vmatprep.subr.mxu0 0.0
        %7006 = vmatpush1.msra.mxu0 %v6888
        %7007 = vmatprep.subr.mxu0 0.0
        %7008 = vmatpush1.msra.mxu0 %v6889
        %7009 = vmatprep.subr.mxu0 0.0
        %7010 = vmatpush1.msra.mxu0 %v6890
        %7011 = vmatprep.subr.mxu0 0.0
        %7012 = vmatpush1.msra.mxu0 %v6891
        %7013 = vmatprep.subr.mxu0 0.0
        %7014 = vmatpush1.msra.mxu0 %v6892
        %7015 = vmatprep.subr.mxu0 0.0
        %7016 = vmatpush1.msra.mxu0 %v6893
        %7017 = vmatprep.subr.mxu0 0.0
        %7018 = vmatpush1.msra.mxu0 %v6894
        %7019 = vmatprep.subr.mxu0 0.0
        %7020 = vmatpush1.msra.mxu0 %v6895
        %7021 = vmatprep.subr.mxu0 0.0
        %7022 = vmatpush1.msra.mxu0 %v6896
        %7023 = vmatprep.subr.mxu0 0.0
        %7024 = vmatpush1.msra.mxu0 %v6897
        %7025 = vmatprep.subr.mxu0 0.0
        %7026 = vmatpush1.msra.mxu0 %v6898
        %7027 = vmatprep.subr.mxu0 0.0
        %7028 = vmatpush1.msra.mxu0 %v6899
        %7029 = vmatprep.subr.mxu0 0.0
        %7030 = vmatpush1.msra.mxu0 %v6900
        %7031 = vmatprep.subr.mxu0 0.0
        %7032 = vmatpush1.msra.mxu0 %v6901
        %7033 = vmatprep.subr.mxu0 0.0
        %7034 = vmatpush1.msra.mxu0 %v6902
        %7035 = vmatprep.subr.mxu0 0.0
        %7036 = vmatpush1.msra.mxu0 %v6903
        %7037 = vmatprep.subr.mxu0 0.0
        %7038 = vmatpush1.msra.mxu0 %v6904
        %7039 = vmatprep.subr.mxu0 0.0
        %7040 = vmatpush1.msra.mxu0 %v6905
        %7041 = vmatprep.subr.mxu0 0.0
        %7042 = vmatpush1.msra.mxu0 %v6906
        %7043 = vmatprep.subr.mxu0 0.0
        %7044 = vmatpush1.msra.mxu0 %v6907
        %7045 = vmatprep.subr.mxu0 0.0
        %7046 = vmatpush1.msra.mxu0 %v6908
        %7047 = vmatprep.subr.mxu0 0.0
        %7048 = vmatpush1.msra.mxu0 %v6909
        %7049 = vmatprep.subr.mxu0 0.0
        %7050 = vmatpush1.msra.mxu0 %v6910
        %7051 = vmatprep.subr.mxu0 0.0
        %7052 = vmatpush1.msra.mxu0 %v6911
        %7053 = vmatprep.subr.mxu0 0.0
        %7054 = vmatpush1.msra.mxu0 %v6912
        %7055 = vmatprep.subr.mxu0 0.0
        %7056 = vmatpush1.msra.mxu0 %v6913
        %7057 = vmatprep.subr.mxu0 0.0
        %7058 = vmatpush1.msra.mxu0 %v6914
        %7059 = vmatprep.mubr.f32.mxu0 %v6590
        %7060 = vmatmul.mubr.f32.gmra.mrb[0].mxu0 %v6554
        %v7061 = vpop.f32.mrb[0].mxu0
        %v7062 = vadd.f32 0.0, %v7061
        %v7063 = vpop.f32.mrb[0].mxu0
        %7064 = vmatprep.mubr.f32.mxu0 %v6592
        %7065 = vmatmul.mubr.f32.gmra.mrb[0].mxu0 %v6555
        %v7066 = vpop.f32.mrb[0].mxu0
        %v7067 = vpop.f32.mrb[0].mxu0
        %7068 = vmatprep.mubr.f32.mxu0 %v6594
        %7069 = vmatmul.mubr.f32.gmra.mrb[0].mxu0 %v6556
        %v7070 = vpop.f32.mrb[0].mxu0
        %v7071 = vadd.f32 0.0, %v7070
        %v7072 = vpop.f32.mrb[0].mxu0
        %7073 = vmatprep.mubr.f32.mxu0 %v6596
        %7074 = vmatmul.mubr.f32.gmra.mrb[0].mxu0 %v6557
        %v7075 = vpop.f32.mrb[0].mxu0
        %v7076 = vpop.f32.mrb[0].mxu0
        %7077 = vmatprep.mubr.f32.mxu0 %v6598
        %7078 = vmatmul.mubr.f32.gmra.mrb[0].mxu0 %v6558
        %v7079 = vpop.f32.mrb[0].mxu0
        %v7080 = vadd.f32 0.0, %v7079
        %v7081 = vpop.f32.mrb[0].mxu0
        %7082 = vmatprep.mubr.f32.mxu0 %v6600
        %7083 = vmatmul.mubr.f32.gmra.mrb[0].mxu0 %v6559
        %v7084 = vpop.f32.mrb[0].mxu0
        %v7085 = vpop.f32.mrb[0].mxu0
        %7086 = vmatprep.mubr.f32.mxu0 %v6602
        %7087 = vmatmul.mubr.f32.gmra.mrb[0].mxu0 %v6560
        %v7088 = vpop.f32.mrb[0].mxu0
        %v7089 = vadd.f32 0.0, %v7088
        %v7090 = vpop.f32.mrb[0].mxu0
        %7091 = vmatprep.mubr.f32.mxu0 %v6604
        %7092 = vmatmul.mubr.f32.gmra.mrb[0].mxu0 %v6561
        %v7093 = vpop.f32.mrb[0].mxu0
        %v7094 = vpop.f32.mrb[0].mxu0
        %7095 = vmatprep.mubr.f32.mxu0 %v6606
        %7096 = vmatmul.mubr.f32.gmra.mrb[0].mxu0 %v6562
        %v7097 = vpop.f32.mrb[0].mxu0
        %v7098 = vadd.f32 0.0, %v7097
        %v7099 = vpop.f32.mrb[0].mxu0
        %7100 = vmatprep.mubr.f32.mxu0 %v6608
        %7101 = vmatmul.mubr.f32.gmra.mrb[0].mxu0 %v6563
        %v7102 = vpop.f32.mrb[0].mxu0
        %v7103 = vpop.f32.mrb[0].mxu0
        %7104 = vmatprep.mubr.f32.mxu0 %v6610
        %7105 = vmatmul.mubr.f32.gmra.mrb[0].mxu0 %v6564
        %v7106 = vpop.f32.mrb[0].mxu0
        %v7107 = vadd.f32 0.0, %v7106
        %v7108 = vpop.f32.mrb[0].mxu0
        %7109 = vmatprep.mubr.f32.mxu0 %v6612
        %7110 = vmatmul.mubr.f32.gmra.mrb[0].mxu0 %v6565
        %v7111 = vpop.f32.mrb[0].mxu0
        %v7112 = vpop.f32.mrb[0].mxu0
        %7113 = vmatprep.mubr.f32.mxu0 %v6614
        %7114 = vmatmul.mubr.f32.gmra.mrb[0].mxu0 %v6566
        %v7115 = vpop.f32.mrb[0].mxu0
        %v7116 = vadd.f32 0.0, %v7115
        %v7117 = vpop.f32.mrb[0].mxu0
        %7118 = vmatprep.mubr.f32.mxu0 %v6616
        %7119 = vmatmul.mubr.f32.gmra.mrb[0].mxu0 %v6567
        %v7120 = vpop.f32.mrb[0].mxu0
        %v7121 = vpop.f32.mrb[0].mxu0
        %7122 = vmatprep.mubr.f32.mxu0 %v6618
        %7123 = vmatmul.mubr.f32.gmra.mrb[0].mxu0 %v6568
        %v7124 = vpop.f32.mrb[0].mxu0
        %v7125 = vadd.f32 0.0, %v7124
        %v7126 = vpop.f32.mrb[0].mxu0
        %7127 = vmatprep.mubr.f32.mxu0 %v6620
        %7128 = vmatmul.mubr.f32.gmra.mrb[0].mxu0 %v6569
        %v7129 = vpop.f32.mrb[0].mxu0
        %v7130 = vpop.f32.mrb[0].mxu0
        %7131 = vdwg.mxu0
        %7132 = vmatprep.subr.mxu0 0.0
        %7133 = vmatpush1.msra.mxu0 %v6915
        %7134 = vmatprep.subr.mxu0 0.0
        %7135 = vmatpush1.msra.mxu0 %v6916
        %7136 = vmatprep.subr.mxu0 0.0
        %7137 = vmatpush1.msra.mxu0 %v6917
        %7138 = vmatprep.subr.mxu0 0.0
        %7139 = vmatpush1.msra.mxu0 %v6918
        %7140 = vmatprep.subr.mxu0 0.0
        %7141 = vmatpush1.msra.mxu0 %v6919
        %7142 = vmatprep.subr.mxu0 0.0
        %7143 = vmatpush1.msra.mxu0 %v6920
        %7144 = vmatprep.subr.mxu0 0.0
        %7145 = vmatpush1.msra.mxu0 %v6921
        %7146 = vmatprep.subr.mxu0 0.0
        %7147 = vmatpush1.msra.mxu0 %v6922
        %7148 = vmatprep.subr.mxu0 0.0
        %7149 = vmatpush1.msra.mxu0 %v6923
        %7150 = vmatprep.subr.mxu0 0.0
        %7151 = vmatpush1.msra.mxu0 %v6924
        %7152 = vmatprep.subr.mxu0 0.0
        %7153 = vmatpush1.msra.mxu0 %v6925
        %7154 = vmatprep.subr.mxu0 0.0
        %7155 = vmatpush1.msra.mxu0 %v6926
        %7156 = vmatprep.subr.mxu0 0.0
        %7157 = vmatpush1.msra.mxu0 %v6927
        %7158 = vmatprep.subr.mxu0 0.0
        %7159 = vmatpush1.msra.mxu0 %v6928
        %7160 = vmatprep.subr.mxu0 0.0
        %7161 = vmatpush1.msra.mxu0 %v6929
        %7162 = vmatprep.subr.mxu0 0.0
        %7163 = vmatpush1.msra.mxu0 %v6930
        %7164 = vmatprep.subr.mxu0 0.0
        %7165 = vmatpush1.msra.mxu0 %v6931
        %7166 = vmatprep.subr.mxu0 0.0
        %7167 = vmatpush1.msra.mxu0 %v6932
        %7168 = vmatprep.subr.mxu0 0.0
        %7169 = vmatpush1.msra.mxu0 %v6933
        %7170 = vmatprep.subr.mxu0 0.0
        %7171 = vmatpush1.msra.mxu0 %v6934
        %7172 = vmatprep.subr.mxu0 0.0
        %7173 = vmatpush1.msra.mxu0 %v6935
        %7174 = vmatprep.subr.mxu0 0.0
        %7175 = vmatpush1.msra.mxu0 %v6936
        %7176 = vmatprep.subr.mxu0 0.0
        %7177 = vmatpush1.msra.mxu0 %v6937
        %7178 = vmatprep.subr.mxu0 0.0
        %7179 = vmatpush1.msra.mxu0 %v6938
        %7180 = vmatprep.subr.mxu0 0.0
        %7181 = vmatpush1.msra.mxu0 %v6939
        %7182 = vmatprep.subr.mxu0 0.0
        %7183 = vmatpush1.msra.mxu0 %v6940
        %7184 = vmatprep.subr.mxu0 0.0
        %7185 = vmatpush1.msra.mxu0 %v6941
        %7186 = vmatprep.subr.mxu0 0.0
        %7187 = vmatpush1.msra.mxu0 %v6942
        %7188 = vmatprep.subr.mxu0 0.0
        %7189 = vmatpush1.msra.mxu0 %v6943
        %7190 = vmatprep.subr.mxu0 0.0
        %7191 = vmatpush1.msra.mxu0 %v6944
        %7192 = vmatprep.subr.mxu0 0.0
        %7193 = vmatpush1.msra.mxu0 %v6945
        %7194 = vmatprep.subr.mxu0 0.0
        %7195 = vmatpush1.msra.mxu0 %v6946
        %7196 = vmatprep.mubr.f32.mxu0 %v6688
        %7197 = vmatmul.mubr.f32.gmra.mrb[0].mxu0 %v6639
        %v7198 = vpop.f32.mrb[0].mxu0
        %v7199 = vadd.f32 %v7062, %v7198
        %v7200 = vpop.f32.mrb[0].mxu0
        %7201 = vmatprep.mubr.f32.mxu0 %v6690
        %7202 = vmatmul.mubr.f32.gmra.mrb[0].mxu0 %v6641
        %v7203 = vpop.f32.mrb[0].mxu0
        %v7204 = vpop.f32.mrb[0].mxu0
        %7205 = vmatprep.mubr.f32.mxu0 %v6692
        %7206 = vmatmul.mubr.f32.gmra.mrb[0].mxu0 %v6643
        %v7207 = vpop.f32.mrb[0].mxu0
        %v7208 = vadd.f32 %v7071, %v7207
        %v7209 = vpop.f32.mrb[0].mxu0
        %7210 = vmatprep.mubr.f32.mxu0 %v6694
        %7211 = vmatmul.mubr.f32.gmra.mrb[0].mxu0 %v6645
        %v7212 = vpop.f32.mrb[0].mxu0
        %v7213 = vpop.f32.mrb[0].mxu0
        %7214 = vmatprep.mubr.f32.mxu0 %v6696
        %7215 = vmatmul.mubr.f32.gmra.mrb[0].mxu0 %v6647
        %v7216 = vpop.f32.mrb[0].mxu0
        %v7217 = vadd.f32 %v7080, %v7216
        %v7218 = vpop.f32.mrb[0].mxu0
        %7219 = vmatprep.mubr.f32.mxu0 %v6698
        %7220 = vmatmul.mubr.f32.gmra.mrb[0].mxu0 %v6649
        %v7221 = vpop.f32.mrb[0].mxu0
        %v7222 = vpop.f32.mrb[0].mxu0
        %7223 = vmatprep.mubr.f32.mxu0 %v6700
        %7224 = vmatmul.mubr.f32.gmra.mrb[0].mxu0 %v6651
        %v7225 = vpop.f32.mrb[0].mxu0
        %v7226 = vadd.f32 %v7089, %v7225
        %v7227 = vpop.f32.mrb[0].mxu0
        %7228 = vmatprep.mubr.f32.mxu0 %v6702
        %7229 = vmatmul.mubr.f32.gmra.mrb[0].mxu0 %v6653
        %v7230 = vpop.f32.mrb[0].mxu0
        %v7231 = vpop.f32.mrb[0].mxu0
        %7232 = vmatprep.mubr.f32.mxu0 %v6704
        %7233 = vmatmul.mubr.f32.gmra.mrb[0].mxu0 %v6655
        %v7234 = vpop.f32.mrb[0].mxu0
        %v7235 = vadd.f32 %v7098, %v7234
        %v7236 = vpop.f32.mrb[0].mxu0
        %7237 = vmatprep.mubr.f32.mxu0 %v6706
        %7238 = vmatmul.mubr.f32.gmra.mrb[0].mxu0 %v6657
        %v7239 = vpop.f32.mrb[0].mxu0
        %v7240 = vpop.f32.mrb[0].mxu0
        %7241 = vmatprep.mubr.f32.mxu0 %v6708
        %7242 = vmatmul.mubr.f32.gmra.mrb[0].mxu0 %v6659
        %v7243 = vpop.f32.mrb[0].mxu0
        %v7244 = vadd.f32 %v7107, %v7243
        %v7245 = vpop.f32.mrb[0].mxu0
        %7246 = vmatprep.mubr.f32.mxu0 %v6710
        %7247 = vmatmul.mubr.f32.gmra.mrb[0].mxu0 %v6661
        %v7248 = vpop.f32.mrb[0].mxu0
        %v7249 = vpop.f32.mrb[0].mxu0
        %7250 = vmatprep.mubr.f32.mxu0 %v6712
        %7251 = vmatmul.mubr.f32.gmra.mrb[0].mxu0 %v6663
        %v7252 = vpop.f32.mrb[0].mxu0
        %v7253 = vadd.f32 %v7116, %v7252
        %v7254 = vpop.f32.mrb[0].mxu0
        %7255 = vmatprep.mubr.f32.mxu0 %v6714
        %7256 = vmatmul.mubr.f32.gmra.mrb[0].mxu0 %v6665
        %v7257 = vpop.f32.mrb[0].mxu0
        %v7258 = vpop.f32.mrb[0].mxu0
        %7259 = vmatprep.mubr.f32.mxu0 %v6716
        %7260 = vmatmul.mubr.f32.gmra.mrb[0].mxu0 %v6667
        %v7261 = vpop.f32.mrb[0].mxu0
        %v7262 = vadd.f32 %v7125, %v7261
        %v7263 = vpop.f32.mrb[0].mxu0
        %7264 = vmatprep.mubr.f32.mxu0 %v6718
        %7265 = vmatmul.mubr.f32.gmra.mrb[0].mxu0 %v6669
        %v7266 = vpop.f32.mrb[0].mxu0
        %v7267 = vpop.f32.mrb[0].mxu0
        %7268 = vdwg.mxu0
        %7269 = vmatprep.subr.mxu0 0.0
        %7270 = vmatpush1.msra.mxu0 %v6947
        %7271 = vmatprep.subr.mxu0 0.0
        %7272 = vmatpush1.msra.mxu0 %v6948
        %7273 = vmatprep.subr.mxu0 0.0
        %7274 = vmatpush1.msra.mxu0 %v6949
        %7275 = vmatprep.subr.mxu0 0.0
        %7276 = vmatpush1.msra.mxu0 %v6950
        %7277 = vmatprep.subr.mxu0 0.0
        %7278 = vmatpush1.msra.mxu0 %v6951
        %7279 = vmatprep.subr.mxu0 0.0
        %7280 = vmatpush1.msra.mxu0 %v6952
        %7281 = vmatprep.subr.mxu0 0.0
        %7282 = vmatpush1.msra.mxu0 %v6953
        %7283 = vmatprep.subr.mxu0 0.0
        %7284 = vmatpush1.msra.mxu0 %v6954
        %7285 = vmatprep.subr.mxu0 0.0
        %7286 = vmatpush1.msra.mxu0 %v6955
        %7287 = vmatprep.subr.mxu0 0.0
        %7288 = vmatpush1.msra.mxu0 %v6956
        %7289 = vmatprep.subr.mxu0 0.0
        %7290 = vmatpush1.msra.mxu0 %v6957
        %7291 = vmatprep.subr.mxu0 0.0
        %7292 = vmatpush1.msra.mxu0 %v6958
        %7293 = vmatprep.subr.mxu0 0.0
        %7294 = vmatpush1.msra.mxu0 %v6959
        %7295 = vmatprep.subr.mxu0 0.0
        %7296 = vmatpush1.msra.mxu0 %v6960
        %7297 = vmatprep.subr.mxu0 0.0
        %7298 = vmatpush1.msra.mxu0 %v6961
        %7299 = vmatprep.subr.mxu0 0.0
        %7300 = vmatpush1.msra.mxu0 %v6962
        %7301 = vmatprep.subr.mxu0 0.0
        %7302 = vmatpush1.msra.mxu0 %v6963
        %7303 = vmatprep.subr.mxu0 0.0
        %7304 = vmatpush1.msra.mxu0 %v6964
        %7305 = vmatprep.subr.mxu0 0.0
        %7306 = vmatpush1.msra.mxu0 %v6965
        %7307 = vmatprep.subr.mxu0 0.0
        %7308 = vmatpush1.msra.mxu0 %v6966
        %7309 = vmatprep.subr.mxu0 0.0
        %7310 = vmatpush1.msra.mxu0 %v6967
        %7311 = vmatprep.subr.mxu0 0.0
        %7312 = vmatpush1.msra.mxu0 %v6968
        %7313 = vmatprep.subr.mxu0 0.0
        %7314 = vmatpush1.msra.mxu0 %v6969
        %7315 = vmatprep.subr.mxu0 0.0
        %7316 = vmatpush1.msra.mxu0 %v6970
        %7317 = vmatprep.subr.mxu0 0.0
        %7318 = vmatpush1.msra.mxu0 %v6971
        %7319 = vmatprep.subr.mxu0 0.0
        %7320 = vmatpush1.msra.mxu0 %v6972
        %7321 = vmatprep.subr.mxu0 0.0
        %7322 = vmatpush1.msra.mxu0 %v6973
        %7323 = vmatprep.subr.mxu0 0.0
        %7324 = vmatpush1.msra.mxu0 %v6974
        %7325 = vmatprep.subr.mxu0 0.0
        %7326 = vmatpush1.msra.mxu0 %v6975
        %7327 = vmatprep.subr.mxu0 0.0
        %7328 = vmatpush1.msra.mxu0 %v6976
        %7329 = vmatprep.subr.mxu0 0.0
        %7330 = vmatpush1.msra.mxu0 %v6977
        %7331 = vmatprep.subr.mxu0 0.0
        %7332 = vmatpush1.msra.mxu0 %v6978
        %7333 = vmatprep.mubr.f32.mxu0 %v6786
        %7334 = vmatmul.mubr.f32.gmra.mrb[0].mxu0 %v6737
        %v7335 = vpop.f32.mrb[0].mxu0
        %v7336 = vadd.f32 %v7199, %v7335
        %v7337 = vpop.f32.mrb[0].mxu0
        %7338 = vmatprep.mubr.f32.mxu0 %v6788
        %7339 = vmatmul.mubr.f32.gmra.mrb[0].mxu0 %v6739
        %v7340 = vpop.f32.mrb[0].mxu0
        %v7341 = vpop.f32.mrb[0].mxu0
        %7342 = vmatprep.mubr.f32.mxu0 %v6790
        %7343 = vmatmul.mubr.f32.gmra.mrb[0].mxu0 %v6741
        %v7344 = vpop.f32.mrb[0].mxu0
        %v7345 = vadd.f32 %v7208, %v7344
        %v7346 = vpop.f32.mrb[0].mxu0
        %7347 = vmatprep.mubr.f32.mxu0 %v6792
        %7348 = vmatmul.mubr.f32.gmra.mrb[0].mxu0 %v6743
        %v7349 = vpop.f32.mrb[0].mxu0
        %v7350 = vpop.f32.mrb[0].mxu0
        %7351 = vmatprep.mubr.f32.mxu0 %v6794
        %7352 = vmatmul.mubr.f32.gmra.mrb[0].mxu0 %v6745
        %v7353 = vpop.f32.mrb[0].mxu0
        %v7354 = vadd.f32 %v7217, %v7353
        %v7355 = vpop.f32.mrb[0].mxu0
        %7356 = vmatprep.mubr.f32.mxu0 %v6796
        %7357 = vmatmul.mubr.f32.gmra.mrb[0].mxu0 %v6747
        %v7358 = vpop.f32.mrb[0].mxu0
        %v7359 = vpop.f32.mrb[0].mxu0
        %7360 = vmatprep.mubr.f32.mxu0 %v6798
        %7361 = vmatmul.mubr.f32.gmra.mrb[0].mxu0 %v6749
        %v7362 = vpop.f32.mrb[0].mxu0
        %v7363 = vadd.f32 %v7226, %v7362
        %v7364 = vpop.f32.mrb[0].mxu0
        %7365 = vmatprep.mubr.f32.mxu0 %v6800
        %7366 = vmatmul.mubr.f32.gmra.mrb[0].mxu0 %v6751
        %v7367 = vpop.f32.mrb[0].mxu0
        %v7368 = vpop.f32.mrb[0].mxu0
        %7369 = vmatprep.mubr.f32.mxu0 %v6802
        %7370 = vmatmul.mubr.f32.gmra.mrb[0].mxu0 %v6753
        %v7371 = vpop.f32.mrb[0].mxu0
        %v7372 = vadd.f32 %v7235, %v7371
        %v7373 = vpop.f32.mrb[0].mxu0
        %7374 = vmatprep.mubr.f32.mxu0 %v6804
        %7375 = vmatmul.mubr.f32.gmra.mrb[0].mxu0 %v6755
        %v7376 = vpop.f32.mrb[0].mxu0
        %v7377 = vpop.f32.mrb[0].mxu0
        %7378 = vmatprep.mubr.f32.mxu0 %v6806
        %7379 = vmatmul.mubr.f32.gmra.mrb[0].mxu0 %v6757
        %v7380 = vpop.f32.mrb[0].mxu0
        %v7381 = vadd.f32 %v7244, %v7380
        %v7382 = vpop.f32.mrb[0].mxu0
        %7383 = vmatprep.mubr.f32.mxu0 %v6808
        %7384 = vmatmul.mubr.f32.gmra.mrb[0].mxu0 %v6759
        %v7385 = vpop.f32.mrb[0].mxu0
        %v7386 = vpop.f32.mrb[0].mxu0
        %7387 = vmatprep.mubr.f32.mxu0 %v6810
        %7388 = vmatmul.mubr.f32.gmra.mrb[0].mxu0 %v6761
        %v7389 = vpop.f32.mrb[0].mxu0
        %v7390 = vadd.f32 %v7253, %v7389
        %v7391 = vpop.f32.mrb[0].mxu0
        %7392 = vmatprep.mubr.f32.mxu0 %v6812
        %7393 = vmatmul.mubr.f32.gmra.mrb[0].mxu0 %v6763
        %v7394 = vpop.f32.mrb[0].mxu0
        %v7395 = vpop.f32.mrb[0].mxu0
        %7396 = vmatprep.mubr.f32.mxu0 %v6814
        %7397 = vmatmul.mubr.f32.gmra.mrb[0].mxu0 %v6765
        %v7398 = vpop.f32.mrb[0].mxu0
        %v7399 = vadd.f32 %v7262, %v7398
        %v7400 = vpop.f32.mrb[0].mxu0
        %7401 = vmatprep.mubr.f32.mxu0 %v6816
        %7402 = vmatmul.mubr.f32.gmra.mrb[0].mxu0 %v6767
        %v7403 = vpop.f32.mrb[0].mxu0
        %v7404 = vpop.f32.mrb[0].mxu0
        %7405 = vdwg.mxu0
        %7406 = vmatprep.subr.mxu0 0.0
        %7407 = vmatpush1.msra.mxu0 %v6979
        %7408 = vmatprep.subr.mxu0 0.0
        %7409 = vmatpush1.msra.mxu0 %v6980
        %7410 = vmatprep.subr.mxu0 0.0
        %7411 = vmatpush1.msra.mxu0 %v6981
        %7412 = vmatprep.subr.mxu0 0.0
        %7413 = vmatpush1.msra.mxu0 %v6982
        %7414 = vmatprep.subr.mxu0 0.0
        %7415 = vmatpush1.msra.mxu0 %v6983
        %7416 = vmatprep.subr.mxu0 0.0
        %7417 = vmatpush1.msra.mxu0 %v6984
        %7418 = vmatprep.subr.mxu0 0.0
        %7419 = vmatpush1.msra.mxu0 %v6985
        %7420 = vmatprep.subr.mxu0 0.0
        %7421 = vmatpush1.msra.mxu0 %v6986
        %7422 = vmatprep.subr.mxu0 0.0
        %7423 = vmatpush1.msra.mxu0 %v6987
        %7424 = vmatprep.subr.mxu0 0.0
        %7425 = vmatpush1.msra.mxu0 %v6988
        %7426 = vmatprep.subr.mxu0 0.0
        %7427 = vmatpush1.msra.mxu0 %v6989
        %7428 = vmatprep.subr.mxu0 0.0
        %7429 = vmatpush1.msra.mxu0 %v6990
        %7430 = vmatprep.subr.mxu0 0.0
        %7431 = vmatpush1.msra.mxu0 %v6991
        %7432 = vmatprep.subr.mxu0 0.0
        %7433 = vmatpush1.msra.mxu0 %v6992
        %7434 = vmatprep.subr.mxu0 0.0
        %7435 = vmatpush1.msra.mxu0 %v6993
        %7436 = vmatprep.subr.mxu0 0.0
        %7437 = vmatpush1.msra.mxu0 %v6994
        %7438 = vmatprep.subr.mxu0 0.0
        %7439 = vmatpush1.msra.mxu0 0.0
        %7440 = vmatprep.subr.mxu0 0.0
        %7441 = vmatpush1.msra.mxu0 0.0
        %7442 = vmatprep.subr.mxu0 0.0
        %7443 = vmatpush1.msra.mxu0 0.0
        %7444 = vmatprep.subr.mxu0 0.0
        %7445 = vmatpush1.msra.mxu0 0.0
        %7446 = vmatprep.subr.mxu0 0.0
        %7447 = vmatpush1.msra.mxu0 0.0
        %7448 = vmatprep.subr.mxu0 0.0
        %7449 = vmatpush1.msra.mxu0 0.0
        %7450 = vmatprep.subr.mxu0 0.0
        %7451 = vmatpush1.msra.mxu0 0.0
        %7452 = vmatprep.subr.mxu0 0.0
        %7453 = vmatpush1.msra.mxu0 0.0
        %7454 = vmatprep.subr.mxu0 0.0
        %7455 = vmatpush1.msra.mxu0 0.0
        %7456 = vmatprep.subr.mxu0 0.0
        %7457 = vmatpush1.msra.mxu0 0.0
        %7458 = vmatprep.subr.mxu0 0.0
        %7459 = vmatpush1.msra.mxu0 0.0
        %7460 = vmatprep.subr.mxu0 0.0
        %7461 = vmatpush1.msra.mxu0 0.0
        %7462 = vmatprep.subr.mxu0 0.0
        %7463 = vmatpush1.msra.mxu0 0.0
        %7464 = vmatprep.subr.mxu0 0.0
        %7465 = vmatpush1.msra.mxu0 0.0
        %7466 = vmatprep.subr.mxu0 0.0
        %7467 = vmatpush1.msra.mxu0 0.0
        %7468 = vmatprep.subr.mxu0 0.0
        %7469 = vmatpush1.msra.mxu0 0.0
        %7470 = vmatprep.mubr.f32.mxu0 0.0
        %7471 = vmatmul.mubr.f32.gmra.mrb[0].mxu0 %v6835
        %v7472 = vpop.f32.mrb[0].mxu0
        %v7473 = vadd.f32 %v7336, %v7472
        %v7474 = vpop.f32.mrb[0].mxu0
        %7475 = vmatprep.mubr.f32.mxu0 0.0
        %7476 = vmatmul.mubr.f32.gmra.mrb[0].mxu0 %v6837
        %v7477 = vpop.f32.mrb[0].mxu0
        %v7478 = vpop.f32.mrb[0].mxu0
        %7479 = vmatprep.mubr.f32.mxu0 0.0
        %7480 = vmatmul.mubr.f32.gmra.mrb[0].mxu0 %v6839
        %v7481 = vpop.f32.mrb[0].mxu0
        %v7482 = vadd.f32 %v7345, %v7481
        %v7483 = vpop.f32.mrb[0].mxu0
        %7484 = vmatprep.mubr.f32.mxu0 0.0
        %7485 = vmatmul.mubr.f32.gmra.mrb[0].mxu0 %v6841
        %v7486 = vpop.f32.mrb[0].mxu0
        %v7487 = vpop.f32.mrb[0].mxu0
        %7488 = vmatprep.mubr.f32.mxu0 0.0
        %7489 = vmatmul.mubr.f32.gmra.mrb[0].mxu0 %v6843
        %v7490 = vpop.f32.mrb[0].mxu0
        %v7491 = vadd.f32 %v7354, %v7490
        %v7492 = vpop.f32.mrb[0].mxu0
        %7493 = vmatprep.mubr.f32.mxu0 0.0
        %7494 = vmatmul.mubr.f32.gmra.mrb[0].mxu0 %v6845
        %v7495 = vpop.f32.mrb[0].mxu0
        %v7496 = vpop.f32.mrb[0].mxu0
        %7497 = vmatprep.mubr.f32.mxu0 0.0
        %7498 = vmatmul.mubr.f32.gmra.mrb[0].mxu0 %v6847
        %v7499 = vpop.f32.mrb[0].mxu0
        %v7500 = vadd.f32 %v7363, %v7499
        %v7501 = vpop.f32.mrb[0].mxu0
        %7502 = vmatprep.mubr.f32.mxu0 0.0
        %7503 = vmatmul.mubr.f32.gmra.mrb[0].mxu0 %v6849
        %v7504 = vpop.f32.mrb[0].mxu0
        %v7505 = vpop.f32.mrb[0].mxu0
        %7506 = vmatprep.mubr.f32.mxu0 0.0
        %7507 = vmatmul.mubr.f32.gmra.mrb[0].mxu0 %v6851
        %v7508 = vpop.f32.mrb[0].mxu0
        %v7509 = vadd.f32 %v7372, %v7508
        %v7510 = vpop.f32.mrb[0].mxu0
        %7511 = vmatprep.mubr.f32.mxu0 0.0
        %7512 = vmatmul.mubr.f32.gmra.mrb[0].mxu0 %v6853
        %v7513 = vpop.f32.mrb[0].mxu0
        %v7514 = vpop.f32.mrb[0].mxu0
        %7515 = vmatprep.mubr.f32.mxu0 0.0
        %7516 = vmatmul.mubr.f32.gmra.mrb[0].mxu0 %v6855
        %v7517 = vpop.f32.mrb[0].mxu0
        %v7518 = vadd.f32 %v7381, %v7517
        %v7519 = vpop.f32.mrb[0].mxu0
        %7520 = vmatprep.mubr.f32.mxu0 0.0
        %7521 = vmatmul.mubr.f32.gmra.mrb[0].mxu0 %v6857
        %v7522 = vpop.f32.mrb[0].mxu0
        %v7523 = vpop.f32.mrb[0].mxu0
        %7524 = vmatprep.mubr.f32.mxu0 0.0
        %7525 = vmatmul.mubr.f32.gmra.mrb[0].mxu0 %v6859
        %v7526 = vpop.f32.mrb[0].mxu0
        %v7527 = vadd.f32 %v7390, %v7526
        %v7528 = vpop.f32.mrb[0].mxu0
        %7529 = vmatprep.mubr.f32.mxu0 0.0
        %7530 = vmatmul.mubr.f32.gmra.mrb[0].mxu0 %v6861
        %v7531 = vpop.f32.mrb[0].mxu0
        %v7532 = vpop.f32.mrb[0].mxu0
        %7533 = vmatprep.mubr.f32.mxu0 0.0
        %7534 = vmatmul.mubr.f32.gmra.mrb[0].mxu0 %v6863
        %v7535 = vpop.f32.mrb[0].mxu0
        %v7536 = vadd.f32 %v7399, %v7535
        %v7537 = vpop.f32.mrb[0].mxu0
        %7538 = vmatprep.mubr.f32.mxu0 0.0
        %7539 = vmatmul.mubr.f32.gmra.mrb[0].mxu0 %v6865
        %v7540 = vpop.f32.mrb[0].mxu0
        %v7541 = vpop.f32.mrb[0].mxu0
        %7542 = vdwg.mxu0
        %v7543 = vadd.f32 %v6545, %v7473
        %v7544 = vadd.f32 %v6546, %v7482
        %v7545 = vadd.f32 %v6547, %v7491
        %v7546 = vadd.f32 %v6548, %v7500
        %v7547 = vadd.f32 %v6549, %v7509
        %v7548 = vadd.f32 %v6550, %v7518
        %v7549 = vadd.f32 %v6551, %v7527
        %v7550 = vadd.f32 %v6552, %v7536
        %v7551 = vld [vmem:[#allocation8] sm:$0x1]
        %v7553 = vlaneseq
        %v7554 = vshrl.u32 %v7553, 7
        %v7555 = vsub.s32 0, %v7554
        %v7556 = vrot.slane %v7551, %v7555
        %v7558 = vadd.f32 %v7543, %v7556
        %v7559 = vadd.f32 %v7544, %v7556
        %v7560 = vadd.f32 %v7545, %v7556
        %v7561 = vadd.f32 %v7546, %v7556
        %v7562 = vadd.f32 %v7547, %v7556
        %v7563 = vadd.f32 %v7548, %v7556
        %v7564 = vadd.f32 %v7549, %v7556
        %v7565 = vadd.f32 %v7550, %v7556
        %7566 = vadd.xlane.f32.xlu0 %v7558
        %v7567 = vpop.xlane.xlu0 %7566
        %7568 = vadd.xlane.f32.xlu0 %v7559
        %v7569 = vpop.xlane.xlu0 %7568
        %7570 = vadd.xlane.f32.xlu0 %v7560
        %v7571 = vpop.xlane.xlu0 %7570
        %7572 = vadd.xlane.f32.xlu0 %v7561
        %v7573 = vpop.xlane.xlu0 %7572
        %7574 = vadd.xlane.f32.xlu0 %v7562
        %v7575 = vpop.xlane.xlu0 %7574
        %7576 = vadd.xlane.f32.xlu0 %v7563
        %v7577 = vpop.xlane.xlu0 %7576
        %7578 = vadd.xlane.f32.xlu0 %v7564
        %v7579 = vpop.xlane.xlu0 %7578
        %7580 = vadd.xlane.f32.xlu0 %v7565
        %v7581 = vpop.xlane.xlu0 %7580
        %v7582 = vrcp.pop 128.0
        %v7583 = vmul.f32 %v7567, %v7582
        %v7584 = vmul.f32 %v7569, %v7582
        %v7585 = vmul.f32 %v7571, %v7582
        %v7586 = vmul.f32 %v7573, %v7582
        %v7587 = vmul.f32 %v7575, %v7582
        %v7588 = vmul.f32 %v7577, %v7582
        %v7589 = vmul.f32 %v7579, %v7582
        %v7590 = vmul.f32 %v7581, %v7582
        %v7591 = vmul.f32 %v7558, %v7558
        %v7592 = vmul.f32 %v7559, %v7559
        %v7593 = vmul.f32 %v7560, %v7560
        %v7594 = vmul.f32 %v7561, %v7561
        %v7595 = vmul.f32 %v7562, %v7562
        %v7596 = vmul.f32 %v7563, %v7563
        %v7597 = vmul.f32 %v7564, %v7564
        %v7598 = vmul.f32 %v7565, %v7565
        %7599 = vadd.xlane.f32.xlu0 %v7591
        %v7600 = vpop.xlane.xlu0 %7599
        %7601 = vadd.xlane.f32.xlu0 %v7592
        %v7602 = vpop.xlane.xlu0 %7601
        %7603 = vadd.xlane.f32.xlu0 %v7593
        %v7604 = vpop.xlane.xlu0 %7603
        %7605 = vadd.xlane.f32.xlu0 %v7594
        %v7606 = vpop.xlane.xlu0 %7605
        %7607 = vadd.xlane.f32.xlu0 %v7595
        %v7608 = vpop.xlane.xlu0 %7607
        %7609 = vadd.xlane.f32.xlu0 %v7596
        %v7610 = vpop.xlane.xlu0 %7609
        %7611 = vadd.xlane.f32.xlu0 %v7597
        %v7612 = vpop.xlane.xlu0 %7611
        %7613 = vadd.xlane.f32.xlu0 %v7598
        %v7614 = vpop.xlane.xlu0 %7613
        %v7615 = vmul.f32 %v7600, %v7582
        %v7616 = vmul.f32 %v7602, %v7582
        %v7617 = vmul.f32 %v7604, %v7582
        %v7618 = vmul.f32 %v7606, %v7582
        %v7619 = vmul.f32 %v7608, %v7582
        %v7620 = vmul.f32 %v7610, %v7582
        %v7621 = vmul.f32 %v7612, %v7582
        %v7622 = vmul.f32 %v7614, %v7582
        %v7623 = vmul.f32 %v7583, %v7583
        %v7624 = vmul.f32 %v7584, %v7584
        %v7625 = vmul.f32 %v7585, %v7585
        %v7626 = vmul.f32 %v7586, %v7586
        %v7627 = vmul.f32 %v7587, %v7587
        %v7628 = vmul.f32 %v7588, %v7588
        %v7629 = vmul.f32 %v7589, %v7589
        %v7630 = vmul.f32 %v7590, %v7590
        %v7631 = vsub.f32 %v7615, %v7623
        %v7632 = vsub.f32 %v7616, %v7624
        %v7633 = vsub.f32 %v7617, %v7625
        %v7634 = vsub.f32 %v7618, %v7626
        %v7635 = vsub.f32 %v7619, %v7627
        %v7636 = vsub.f32 %v7620, %v7628
        %v7637 = vsub.f32 %v7621, %v7629
        %v7638 = vsub.f32 %v7622, %v7630
        %v7639 = vmax.f32 %v7631, 0.0
        %v7640 = vmax.f32 %v7632, 0.0
        %v7641 = vmax.f32 %v7633, 0.0
        %v7642 = vmax.f32 %v7634, 0.0
        %v7643 = vmax.f32 %v7635, 0.0
        %v7644 = vmax.f32 %v7636, 0.0
        %v7645 = vmax.f32 %v7637, 0.0
        %v7646 = vmax.f32 %v7638, 0.0
        %v7647 = vsub.f32 %v7558, %v7583
        %v7648 = vsub.f32 %v7559, %v7584
        %v7649 = vsub.f32 %v7560, %v7585
        %v7650 = vsub.f32 %v7561, %v7586
        %v7651 = vsub.f32 %v7562, %v7587
        %v7652 = vsub.f32 %v7563, %v7588
        %v7653 = vsub.f32 %v7564, %v7589
        %v7654 = vsub.f32 %v7565, %v7590
        %v7655 = vadd.f32 %v7639, 1e-05
        %v7656 = vadd.f32 %v7640, 1e-05
        %v7657 = vadd.f32 %v7641, 1e-05
        %v7658 = vadd.f32 %v7642, 1e-05
        %v7659 = vadd.f32 %v7643, 1e-05
        %v7660 = vadd.f32 %v7644, 1e-05
        %v7661 = vadd.f32 %v7645, 1e-05
        %v7662 = vadd.f32 %v7646, 1e-05
        %v7663 = vrsqrt.pop %v7655
        %v7664 = vrsqrt.pop %v7656
        %v7665 = vrsqrt.pop %v7657
        %v7666 = vrsqrt.pop %v7658
        %v7667 = vrsqrt.pop %v7659
        %v7668 = vrsqrt.pop %v7660
        %v7669 = vrsqrt.pop %v7661
        %v7670 = vrsqrt.pop %v7662
        %v7671 = vmul.f32 %v7647, %v7663
        %v7672 = vmul.f32 %v7648, %v7664
        %v7673 = vmul.f32 %v7649, %v7665
        %v7674 = vmul.f32 %v7650, %v7666
        %v7675 = vmul.f32 %v7651, %v7667
        %v7676 = vmul.f32 %v7652, %v7668
        %v7677 = vmul.f32 %v7653, %v7669
        %v7678 = vmul.f32 %v7654, %v7670
        %v7679 = vld [vmem:[#allocation9] sm:$0x1]
        %v7681 = vlaneseq
        %v7682 = vshrl.u32 %v7681, 7
        %v7683 = vsub.s32 0, %v7682
        %v7684 = vrot.slane %v7679, %v7683
        %v7686 = vmul.f32 %v7671, %v7684
        %v7687 = vmul.f32 %v7672, %v7684
        %v7688 = vmul.f32 %v7673, %v7684
        %v7689 = vmul.f32 %v7674, %v7684
        %v7690 = vmul.f32 %v7675, %v7684
        %v7691 = vmul.f32 %v7676, %v7684
        %v7692 = vmul.f32 %v7677, %v7684
        %v7693 = vmul.f32 %v7678, %v7684
        %v7694 = vld [vmem:[#allocation11] sm:$0x1]
        %v7696 = vlaneseq
        %v7697 = vshrl.u32 %v7696, 7
        %v7698 = vsub.s32 0, %v7697
        %v7699 = vrot.slane %v7694, %v7698
        %v7701 = vadd.f32 %v7686, %v7699
        %v7702 = vadd.f32 %v7687, %v7699
        %v7703 = vadd.f32 %v7688, %v7699
        %v7704 = vadd.f32 %v7689, %v7699
        %v7705 = vadd.f32 %v7690, %v7699
        %v7706 = vadd.f32 %v7691, %v7699
        %v7707 = vadd.f32 %v7692, %v7699
        %v7708 = vadd.f32 %v7693, %v7699
        %v7709 = vld [vmem:[#allocation12] sm:$0xff]
        %v7710 = vld [vmem:[#allocation12 + $0x8] sm:$0xff]
        %v7711 = vld [vmem:[#allocation12 + $0x10] sm:$0xff]
        %v7712 = vld [vmem:[#allocation12 + $0x18] sm:$0xff]
        %v7713 = vld [vmem:[#allocation12 + $0x20] sm:$0xff]
        %v7714 = vld [vmem:[#allocation12 + $0x28] sm:$0xff]
        %v7715 = vld [vmem:[#allocation12 + $0x30] sm:$0xff]
        %v7716 = vld [vmem:[#allocation12 + $0x38] sm:$0xff]
        %v7717 = vld [vmem:[#allocation12 + $0x40] sm:$0xff]
        %v7718 = vld [vmem:[#allocation12 + $0x48] sm:$0xff]
        %v7719 = vld [vmem:[#allocation12 + $0x50] sm:$0xff]
        %v7720 = vld [vmem:[#allocation12 + $0x58] sm:$0xff]
        %v7721 = vld [vmem:[#allocation12 + $0x60] sm:$0xff]
        %v7722 = vld [vmem:[#allocation12 + $0x68] sm:$0xff]
        %v7723 = vld [vmem:[#allocation12 + $0x70] sm:$0xff]
        %v7724 = vld [vmem:[#allocation12 + $0x78] sm:$0xff]
        %v7725 = vld [vmem:[#allocation12 + $0x80] sm:$0xff]
        %v7726 = vld [vmem:[#allocation12 + $0x88] sm:$0xff]
        %v7727 = vld [vmem:[#allocation12 + $0x90] sm:$0xff]
        %v7728 = vld [vmem:[#allocation12 + $0x98] sm:$0xff]
        %v7729 = vld [vmem:[#allocation12 + $0xa0] sm:$0xff]
        %v7730 = vld [vmem:[#allocation12 + $0xa8] sm:$0xff]
        %v7731 = vld [vmem:[#allocation12 + $0xb0] sm:$0xff]
        %v7732 = vld [vmem:[#allocation12 + $0xb8] sm:$0xff]
        %v7733 = vld [vmem:[#allocation12 + $0xc0] sm:$0xff]
        %v7734 = vld [vmem:[#allocation12 + $0xc8] sm:$0xff]
        %v7735 = vld [vmem:[#allocation12 + $0xd0] sm:$0xff]
        %v7736 = vld [vmem:[#allocation12 + $0xd8] sm:$0xff]
        %v7737 = vld [vmem:[#allocation12 + $0xe0] sm:$0xff]
        %v7738 = vld [vmem:[#allocation12 + $0xe8] sm:$0xff]
        %v7739 = vld [vmem:[#allocation12 + $0xf0] sm:$0xff]
        %v7740 = vld [vmem:[#allocation12 + $0xf8] sm:$0xff]
        %v7741 = vld [vmem:[#allocation12 + $0x100] sm:$0xff]
        %v7742 = vld [vmem:[#allocation12 + $0x108] sm:$0xff]
        %v7743 = vld [vmem:[#allocation12 + $0x110] sm:$0xff]
        %v7744 = vld [vmem:[#allocation12 + $0x118] sm:$0xff]
        %v7745 = vld [vmem:[#allocation12 + $0x120] sm:$0xff]
        %v7746 = vld [vmem:[#allocation12 + $0x128] sm:$0xff]
        %v7747 = vld [vmem:[#allocation12 + $0x130] sm:$0xff]
        %v7748 = vld [vmem:[#allocation12 + $0x138] sm:$0xff]
        %v7749 = vld [vmem:[#allocation12 + $0x140] sm:$0xff]
        %v7750 = vld [vmem:[#allocation12 + $0x148] sm:$0xff]
        %v7751 = vld [vmem:[#allocation12 + $0x150] sm:$0xff]
        %v7752 = vld [vmem:[#allocation12 + $0x158] sm:$0xff]
        %v7753 = vld [vmem:[#allocation12 + $0x160] sm:$0xff]
        %v7754 = vld [vmem:[#allocation12 + $0x168] sm:$0xff]
        %v7755 = vld [vmem:[#allocation12 + $0x170] sm:$0xff]
        %v7756 = vld [vmem:[#allocation12 + $0x178] sm:$0xff]
        %v7757 = vld [vmem:[#allocation12 + $0x180] sm:$0xff]
        %v7758 = vld [vmem:[#allocation12 + $0x188] sm:$0xff]
        %v7759 = vld [vmem:[#allocation12 + $0x190] sm:$0xff]
        %v7760 = vld [vmem:[#allocation12 + $0x198] sm:$0xff]
        %v7761 = vld [vmem:[#allocation12 + $0x1a0] sm:$0xff]
        %v7762 = vld [vmem:[#allocation12 + $0x1a8] sm:$0xff]
        %v7763 = vld [vmem:[#allocation12 + $0x1b0] sm:$0xff]
        %v7764 = vld [vmem:[#allocation12 + $0x1b8] sm:$0xff]
        %v7765 = vld [vmem:[#allocation12 + $0x1c0] sm:$0xff]
        %v7766 = vld [vmem:[#allocation12 + $0x1c8] sm:$0xff]
        %v7767 = vld [vmem:[#allocation12 + $0x1d0] sm:$0xff]
        %v7768 = vld [vmem:[#allocation12 + $0x1d8] sm:$0xff]
        %v7769 = vld [vmem:[#allocation12 + $0x1e0] sm:$0xff]
        %v7770 = vld [vmem:[#allocation12 + $0x1e8] sm:$0xff]
        %v7771 = vld [vmem:[#allocation12 + $0x1f0] sm:$0xff]
        %v7772 = vld [vmem:[#allocation12 + $0x1f8] sm:$0xff]
        %v7773 = vld [vmem:[#allocation14] sm:$0xf]
        %v7775 = vlaneseq
        %v7776 = vshrl.u32 %v7775, 7
        %v7777 = vsub.s32 0, %v7776
        %v7778 = vrot.slane %v7773, %v7777
        %v7779 = vlaneseq
        %v7780 = vshrl.u32 %v7779, 7
        %v7781 = vsub.s32 1, %v7780
        %v7782 = vrot.slane %v7773, %v7781
        %v7783 = vlaneseq
        %v7784 = vshrl.u32 %v7783, 7
        %v7785 = vsub.s32 2, %v7784
        %v7786 = vrot.slane %v7773, %v7785
        %v7787 = vlaneseq
        %v7788 = vshrl.u32 %v7787, 7
        %v7789 = vsub.s32 3, %v7788
        %v7790 = vrot.slane %v7773, %v7789
        %7795 = vmatprep.subr.mxu0 %v7710
        %7796 = vmatpush1.msra.mxu0 %v7709
        %7797 = vmatprep.subr.mxu0 %v7714
        %7798 = vmatpush1.msra.mxu0 %v7713
        %7799 = vmatprep.subr.mxu0 %v7718
        %7800 = vmatpush1.msra.mxu0 %v7717
        %7801 = vmatprep.subr.mxu0 %v7722
        %7802 = vmatpush1.msra.mxu0 %v7721
        %7803 = vmatprep.subr.mxu0 %v7726
        %7804 = vmatpush1.msra.mxu0 %v7725
        %7805 = vmatprep.subr.mxu0 %v7730
        %7806 = vmatpush1.msra.mxu0 %v7729
        %7807 = vmatprep.subr.mxu0 %v7734
        %7808 = vmatpush1.msra.mxu0 %v7733
        %7809 = vmatprep.subr.mxu0 %v7738
        %7810 = vmatpush1.msra.mxu0 %v7737
        %7811 = vmatprep.subr.mxu0 %v7742
        %7812 = vmatpush1.msra.mxu0 %v7741
        %7813 = vmatprep.subr.mxu0 %v7746
        %7814 = vmatpush1.msra.mxu0 %v7745
        %7815 = vmatprep.subr.mxu0 %v7750
        %7816 = vmatpush1.msra.mxu0 %v7749
        %7817 = vmatprep.subr.mxu0 %v7754
        %7818 = vmatpush1.msra.mxu0 %v7753
        %7819 = vmatprep.subr.mxu0 %v7758
        %7820 = vmatpush1.msra.mxu0 %v7757
        %7821 = vmatprep.subr.mxu0 %v7762
        %7822 = vmatpush1.msra.mxu0 %v7761
        %7823 = vmatprep.subr.mxu0 %v7766
        %7824 = vmatpush1.msra.mxu0 %v7765
        %7825 = vmatprep.subr.mxu0 %v7770
        %7826 = vmatpush1.msra.mxu0 %v7769
        %7827 = vmatprep.subr.mxu0 0.0
        %7828 = vmatpush1.msra.mxu0 0.0
        %7829 = vmatprep.subr.mxu0 0.0
        %7830 = vmatpush1.msra.mxu0 0.0
        %7831 = vmatprep.subr.mxu0 0.0
        %7832 = vmatpush1.msra.mxu0 0.0
        %7833 = vmatprep.subr.mxu0 0.0
        %7834 = vmatpush1.msra.mxu0 0.0
        %7835 = vmatprep.subr.mxu0 0.0
        %7836 = vmatpush1.msra.mxu0 0.0
        %7837 = vmatprep.subr.mxu0 0.0
        %7838 = vmatpush1.msra.mxu0 0.0
        %7839 = vmatprep.subr.mxu0 0.0
        %7840 = vmatpush1.msra.mxu0 0.0
        %7841 = vmatprep.subr.mxu0 0.0
        %7842 = vmatpush1.msra.mxu0 0.0
        %7843 = vmatprep.subr.mxu0 0.0
        %7844 = vmatpush1.msra.mxu0 0.0
        %7845 = vmatprep.subr.mxu0 0.0
        %7846 = vmatpush1.msra.mxu0 0.0
        %7847 = vmatprep.subr.mxu0 0.0
        %7848 = vmatpush1.msra.mxu0 0.0
        %7849 = vmatprep.subr.mxu0 0.0
        %7850 = vmatpush1.msra.mxu0 0.0
        %7851 = vmatprep.subr.mxu0 0.0
        %7852 = vmatpush1.msra.mxu0 0.0
        %7853 = vmatprep.subr.mxu0 0.0
        %7854 = vmatpush1.msra.mxu0 0.0
        %7855 = vmatprep.subr.mxu0 0.0
        %7856 = vmatpush1.msra.mxu0 0.0
        %7857 = vmatprep.subr.mxu0 0.0
        %7858 = vmatpush1.msra.mxu0 0.0
        %7859 = vmatprep.mubr.f32.mxu0 0.0
        %7860 = vmatmul.mubr.f32.gmra.mrb[0].mxu0 %v7701
        %v7861 = vpop.f32.mrb[0].mxu0
        %v7862 = vadd.f32 %v7778, %v7861
        %v7863 = vpop.f32.mrb[0].mxu0
        %v7864 = vadd.f32 %v7782, %v7863
        %7865 = vmatprep.mubr.f32.mxu0 0.0
        %7866 = vmatmul.mubr.f32.gmra.mrb[0].mxu0 %v7702
        %v7867 = vpop.f32.mrb[0].mxu0
        %v7868 = vadd.f32 %v7778, %v7867
        %v7869 = vpop.f32.mrb[0].mxu0
        %v7870 = vadd.f32 %v7782, %v7869
        %7871 = vmatprep.mubr.f32.mxu0 0.0
        %7872 = vmatmul.mubr.f32.gmra.mrb[0].mxu0 %v7703
        %v7873 = vpop.f32.mrb[0].mxu0
        %v7874 = vadd.f32 %v7778, %v7873
        %v7875 = vpop.f32.mrb[0].mxu0
        %v7876 = vadd.f32 %v7782, %v7875
        %7877 = vmatprep.mubr.f32.mxu0 0.0
        %7878 = vmatmul.mubr.f32.gmra.mrb[0].mxu0 %v7704
        %v7879 = vpop.f32.mrb[0].mxu0
        %v7880 = vadd.f32 %v7778, %v7879
        %v7881 = vpop.f32.mrb[0].mxu0
        %v7882 = vadd.f32 %v7782, %v7881
        %7883 = vmatprep.mubr.f32.mxu0 0.0
        %7884 = vmatmul.mubr.f32.gmra.mrb[0].mxu0 %v7705
        %v7885 = vpop.f32.mrb[0].mxu0
        %v7886 = vadd.f32 %v7778, %v7885
        %v7887 = vpop.f32.mrb[0].mxu0
        %v7888 = vadd.f32 %v7782, %v7887
        %7889 = vmatprep.mubr.f32.mxu0 0.0
        %7890 = vmatmul.mubr.f32.gmra.mrb[0].mxu0 %v7706
        %v7891 = vpop.f32.mrb[0].mxu0
        %v7892 = vadd.f32 %v7778, %v7891
        %v7893 = vpop.f32.mrb[0].mxu0
        %v7894 = vadd.f32 %v7782, %v7893
        %7895 = vmatprep.mubr.f32.mxu0 0.0
        %7896 = vmatmul.mubr.f32.gmra.mrb[0].mxu0 %v7707
        %v7897 = vpop.f32.mrb[0].mxu0
        %v7898 = vadd.f32 %v7778, %v7897
        %v7899 = vpop.f32.mrb[0].mxu0
        %v7900 = vadd.f32 %v7782, %v7899
        %7901 = vmatprep.mubr.f32.mxu0 0.0
        %7902 = vmatmul.mubr.f32.gmra.mrb[0].mxu0 %v7708
        %v7903 = vpop.f32.mrb[0].mxu0
        %v7904 = vadd.f32 %v7778, %v7903
        %v7905 = vpop.f32.mrb[0].mxu0
        %v7906 = vadd.f32 %v7782, %v7905
        %7907 = vdwg.mxu0
        %7908 = vmatprep.subr.mxu0 %v7712
        %7909 = vmatpush1.msra.mxu0 %v7711
        %7910 = vmatprep.subr.mxu0 %v7716
        %7911 = vmatpush1.msra.mxu0 %v7715
        %7912 = vmatprep.subr.mxu0 %v7720
        %7913 = vmatpush1.msra.mxu0 %v7719
        %7914 = vmatprep.subr.mxu0 %v7724
        %7915 = vmatpush1.msra.mxu0 %v7723
        %7916 = vmatprep.subr.mxu0 %v7728
        %7917 = vmatpush1.msra.mxu0 %v7727
        %7918 = vmatprep.subr.mxu0 %v7732
        %7919 = vmatpush1.msra.mxu0 %v7731
        %7920 = vmatprep.subr.mxu0 %v7736
        %7921 = vmatpush1.msra.mxu0 %v7735
        %7922 = vmatprep.subr.mxu0 %v7740
        %7923 = vmatpush1.msra.mxu0 %v7739
        %7924 = vmatprep.subr.mxu0 %v7744
        %7925 = vmatpush1.msra.mxu0 %v7743
        %7926 = vmatprep.subr.mxu0 %v7748
        %7927 = vmatpush1.msra.mxu0 %v7747
        %7928 = vmatprep.subr.mxu0 %v7752
        %7929 = vmatpush1.msra.mxu0 %v7751
        %7930 = vmatprep.subr.mxu0 %v7756
        %7931 = vmatpush1.msra.mxu0 %v7755
        %7932 = vmatprep.subr.mxu0 %v7760
        %7933 = vmatpush1.msra.mxu0 %v7759
        %7934 = vmatprep.subr.mxu0 %v7764
        %7935 = vmatpush1.msra.mxu0 %v7763
        %7936 = vmatprep.subr.mxu0 %v7768
        %7937 = vmatpush1.msra.mxu0 %v7767
        %7938 = vmatprep.subr.mxu0 %v7772
        %7939 = vmatpush1.msra.mxu0 %v7771
        %7940 = vmatprep.subr.mxu0 0.0
        %7941 = vmatpush1.msra.mxu0 0.0
        %7942 = vmatprep.subr.mxu0 0.0
        %7943 = vmatpush1.msra.mxu0 0.0
        %7944 = vmatprep.subr.mxu0 0.0
        %7945 = vmatpush1.msra.mxu0 0.0
        %7946 = vmatprep.subr.mxu0 0.0
        %7947 = vmatpush1.msra.mxu0 0.0
        %7948 = vmatprep.subr.mxu0 0.0
        %7949 = vmatpush1.msra.mxu0 0.0
        %7950 = vmatprep.subr.mxu0 0.0
        %7951 = vmatpush1.msra.mxu0 0.0
        %7952 = vmatprep.subr.mxu0 0.0
        %7953 = vmatpush1.msra.mxu0 0.0
        %7954 = vmatprep.subr.mxu0 0.0
        %7955 = vmatpush1.msra.mxu0 0.0
        %7956 = vmatprep.subr.mxu0 0.0
        %7957 = vmatpush1.msra.mxu0 0.0
        %7958 = vmatprep.subr.mxu0 0.0
        %7959 = vmatpush1.msra.mxu0 0.0
        %7960 = vmatprep.subr.mxu0 0.0
        %7961 = vmatpush1.msra.mxu0 0.0
        %7962 = vmatprep.subr.mxu0 0.0
        %7963 = vmatpush1.msra.mxu0 0.0
        %7964 = vmatprep.subr.mxu0 0.0
        %7965 = vmatpush1.msra.mxu0 0.0
        %7966 = vmatprep.subr.mxu0 0.0
        %7967 = vmatpush1.msra.mxu0 0.0
        %7968 = vmatprep.subr.mxu0 0.0
        %7969 = vmatpush1.msra.mxu0 0.0
        %7970 = vmatprep.subr.mxu0 0.0
        %7971 = vmatpush1.msra.mxu0 0.0
        %7972 = vmatprep.mubr.f32.mxu0 0.0
        %7973 = vmatmul.mubr.f32.gmra.mrb[0].mxu0 %v7701
        %v7974 = vpop.f32.mrb[0].mxu0
        %v7975 = vadd.f32 %v7786, %v7974
        %v7976 = vpop.f32.mrb[0].mxu0
        %v7977 = vadd.f32 %v7790, %v7976
        %7978 = vmatprep.mubr.f32.mxu0 0.0
        %7979 = vmatmul.mubr.f32.gmra.mrb[0].mxu0 %v7702
        %v7980 = vpop.f32.mrb[0].mxu0
        %v7981 = vadd.f32 %v7786, %v7980
        %v7982 = vpop.f32.mrb[0].mxu0
        %v7983 = vadd.f32 %v7790, %v7982
        %7984 = vmatprep.mubr.f32.mxu0 0.0
        %7985 = vmatmul.mubr.f32.gmra.mrb[0].mxu0 %v7703
        %v7986 = vpop.f32.mrb[0].mxu0
        %v7987 = vadd.f32 %v7786, %v7986
        %v7988 = vpop.f32.mrb[0].mxu0
        %v7989 = vadd.f32 %v7790, %v7988
        %7990 = vmatprep.mubr.f32.mxu0 0.0
        %7991 = vmatmul.mubr.f32.gmra.mrb[0].mxu0 %v7704
        %v7992 = vpop.f32.mrb[0].mxu0
        %v7993 = vadd.f32 %v7786, %v7992
        %v7994 = vpop.f32.mrb[0].mxu0
        %v7995 = vadd.f32 %v7790, %v7994
        %7996 = vmatprep.mubr.f32.mxu0 0.0
        %7997 = vmatmul.mubr.f32.gmra.mrb[0].mxu0 %v7705
        %v7998 = vpop.f32.mrb[0].mxu0
        %v7999 = vadd.f32 %v7786, %v7998
        %v8000 = vpop.f32.mrb[0].mxu0
        %v8001 = vadd.f32 %v7790, %v8000
        %8002 = vmatprep.mubr.f32.mxu0 0.0
        %8003 = vmatmul.mubr.f32.gmra.mrb[0].mxu0 %v7706
        %v8004 = vpop.f32.mrb[0].mxu0
        %v8005 = vadd.f32 %v7786, %v8004
        %v8006 = vpop.f32.mrb[0].mxu0
        %v8007 = vadd.f32 %v7790, %v8006
        %8008 = vmatprep.mubr.f32.mxu0 0.0
        %8009 = vmatmul.mubr.f32.gmra.mrb[0].mxu0 %v7707
        %v8010 = vpop.f32.mrb[0].mxu0
        %v8011 = vadd.f32 %v7786, %v8010
        %v8012 = vpop.f32.mrb[0].mxu0
        %v8013 = vadd.f32 %v7790, %v8012
        %8014 = vmatprep.mubr.f32.mxu0 0.0
        %8015 = vmatmul.mubr.f32.gmra.mrb[0].mxu0 %v7708
        %v8016 = vpop.f32.mrb[0].mxu0
        %v8017 = vadd.f32 %v7786, %v8016
        %v8018 = vpop.f32.mrb[0].mxu0
        %v8019 = vadd.f32 %v7790, %v8018
        %8020 = vdwg.mxu0
        %v8021 = vmul.f32 %v7862, 0.5
        %v8022 = vmul.f32 %v7864, 0.5
        %v8023 = vmul.f32 %v7975, 0.5
        %v8024 = vmul.f32 %v7977, 0.5
        %v8025 = vmul.f32 %v7868, 0.5
        %v8026 = vmul.f32 %v7870, 0.5
        %v8027 = vmul.f32 %v7981, 0.5
        %v8028 = vmul.f32 %v7983, 0.5
        %v8029 = vmul.f32 %v7874, 0.5
        %v8030 = vmul.f32 %v7876, 0.5
        %v8031 = vmul.f32 %v7987, 0.5
        %v8032 = vmul.f32 %v7989, 0.5
        %v8033 = vmul.f32 %v7880, 0.5
        %v8034 = vmul.f32 %v7882, 0.5
        %v8035 = vmul.f32 %v7993, 0.5
        %v8036 = vmul.f32 %v7995, 0.5
        %v8037 = vmul.f32 %v7886, 0.5
        %v8038 = vmul.f32 %v7888, 0.5
        %v8039 = vmul.f32 %v7999, 0.5
        %v8040 = vmul.f32 %v8001, 0.5
        %v8041 = vmul.f32 %v7892, 0.5
        %v8042 = vmul.f32 %v7894, 0.5
        %v8043 = vmul.f32 %v8005, 0.5
        %v8044 = vmul.f32 %v8007, 0.5
        %v8045 = vmul.f32 %v7898, 0.5
        %v8046 = vmul.f32 %v7900, 0.5
        %v8047 = vmul.f32 %v8011, 0.5
        %v8048 = vmul.f32 %v8013, 0.5
        %v8049 = vmul.f32 %v7904, 0.5
        %v8050 = vmul.f32 %v7906, 0.5
        %v8051 = vmul.f32 %v8017, 0.5
        %v8052 = vmul.f32 %v8019, 0.5
        %v8053 = vmul.f32 %v7862, 0.70710677
        %v8054 = vmul.f32 %v7864, 0.70710677
        %v8055 = vmul.f32 %v7975, 0.70710677
        %v8056 = vmul.f32 %v7977, 0.70710677
        %v8057 = vmul.f32 %v7868, 0.70710677
        %v8058 = vmul.f32 %v7870, 0.70710677
        %v8059 = vmul.f32 %v7981, 0.70710677
        %v8060 = vmul.f32 %v7983, 0.70710677
        %v8061 = vmul.f32 %v7874, 0.70710677
        %v8062 = vmul.f32 %v7876, 0.70710677
        %v8063 = vmul.f32 %v7987, 0.70710677
        %v8064 = vmul.f32 %v7989, 0.70710677
        %v8065 = vmul.f32 %v7880, 0.70710677
        %v8066 = vmul.f32 %v7882, 0.70710677
        %v8067 = vmul.f32 %v7993, 0.70710677
        %v8068 = vmul.f32 %v7995, 0.70710677
        %v8069 = vmul.f32 %v7886, 0.70710677
        %v8070 = vmul.f32 %v7888, 0.70710677
        %v8071 = vmul.f32 %v7999, 0.70710677
        %v8072 = vmul.f32 %v8001, 0.70710677
        %v8073 = vmul.f32 %v7892, 0.70710677
        %v8074 = vmul.f32 %v7894, 0.70710677
        %v8075 = vmul.f32 %v8005, 0.70710677
        %v8076 = vmul.f32 %v8007, 0.70710677
        %v8077 = vmul.f32 %v7898, 0.70710677
        %v8078 = vmul.f32 %v7900, 0.70710677
        %v8079 = vmul.f32 %v8011, 0.70710677
        %v8080 = vmul.f32 %v8013, 0.70710677
        %v8081 = vmul.f32 %v7904, 0.70710677
        %v8082 = vmul.f32 %v7906, 0.70710677
        %v8083 = vmul.f32 %v8017, 0.70710677
        %v8084 = vmul.f32 %v8019, 0.70710677
        %v8085 = verf.f32.pop %v8053
        %v8086 = verf.f32.pop %v8054
        %v8087 = verf.f32.pop %v8055
        %v8088 = verf.f32.pop %v8056
        %v8089 = verf.f32.pop %v8057
        %v8090 = verf.f32.pop %v8058
        %v8091 = verf.f32.pop %v8059
        %v8092 = verf.f32.pop %v8060
        %v8093 = verf.f32.pop %v8061
        %v8094 = verf.f32.pop %v8062
        %v8095 = verf.f32.pop %v8063
        %v8096 = verf.f32.pop %v8064
        %v8097 = verf.f32.pop %v8065
        %v8098 = verf.f32.pop %v8066
        %v8099 = verf.f32.pop %v8067
        %v8100 = verf.f32.pop %v8068
        %v8101 = verf.f32.pop %v8069
        %v8102 = verf.f32.pop %v8070
        %v8103 = verf.f32.pop %v8071
        %v8104 = verf.f32.pop %v8072
        %v8105 = verf.f32.pop %v8073
        %v8106 = verf.f32.pop %v8074
        %v8107 = verf.f32.pop %v8075
        %v8108 = verf.f32.pop %v8076
        %v8109 = verf.f32.pop %v8077
        %v8110 = verf.f32.pop %v8078
        %v8111 = verf.f32.pop %v8079
        %v8112 = verf.f32.pop %v8080
        %v8113 = verf.f32.pop %v8081
        %v8114 = verf.f32.pop %v8082
        %v8115 = verf.f32.pop %v8083
        %v8116 = verf.f32.pop %v8084
        %v8117 = vadd.f32 %v8085, 1.0
        %v8118 = vadd.f32 %v8086, 1.0
        %v8119 = vadd.f32 %v8087, 1.0
        %v8120 = vadd.f32 %v8088, 1.0
        %v8121 = vadd.f32 %v8089, 1.0
        %v8122 = vadd.f32 %v8090, 1.0
        %v8123 = vadd.f32 %v8091, 1.0
        %v8124 = vadd.f32 %v8092, 1.0
        %v8125 = vadd.f32 %v8093, 1.0
        %v8126 = vadd.f32 %v8094, 1.0
        %v8127 = vadd.f32 %v8095, 1.0
        %v8128 = vadd.f32 %v8096, 1.0
        %v8129 = vadd.f32 %v8097, 1.0
        %v8130 = vadd.f32 %v8098, 1.0
        %v8131 = vadd.f32 %v8099, 1.0
        %v8132 = vadd.f32 %v8100, 1.0
        %v8133 = vadd.f32 %v8101, 1.0
        %v8134 = vadd.f32 %v8102, 1.0
        %v8135 = vadd.f32 %v8103, 1.0
        %v8136 = vadd.f32 %v8104, 1.0
        %v8137 = vadd.f32 %v8105, 1.0
        %v8138 = vadd.f32 %v8106, 1.0
        %v8139 = vadd.f32 %v8107, 1.0
        %v8140 = vadd.f32 %v8108, 1.0
        %v8141 = vadd.f32 %v8109, 1.0
        %v8142 = vadd.f32 %v8110, 1.0
        %v8143 = vadd.f32 %v8111, 1.0
        %v8144 = vadd.f32 %v8112, 1.0
        %v8145 = vadd.f32 %v8113, 1.0
        %v8146 = vadd.f32 %v8114, 1.0
        %v8147 = vadd.f32 %v8115, 1.0
        %v8148 = vadd.f32 %v8116, 1.0
        %v8149 = vmul.f32 %v8021, %v8117
        %v8150 = vmul.f32 %v8022, %v8118
        %v8151 = vmul.f32 %v8023, %v8119
        %v8152 = vmul.f32 %v8024, %v8120
        %v8153 = vmul.f32 %v8025, %v8121
        %v8154 = vmul.f32 %v8026, %v8122
        %v8155 = vmul.f32 %v8027, %v8123
        %v8156 = vmul.f32 %v8028, %v8124
        %v8157 = vmul.f32 %v8029, %v8125
        %v8158 = vmul.f32 %v8030, %v8126
        %v8159 = vmul.f32 %v8031, %v8127
        %v8160 = vmul.f32 %v8032, %v8128
        %v8161 = vmul.f32 %v8033, %v8129
        %v8162 = vmul.f32 %v8034, %v8130
        %v8163 = vmul.f32 %v8035, %v8131
        %v8164 = vmul.f32 %v8036, %v8132
        %v8165 = vmul.f32 %v8037, %v8133
        %v8166 = vmul.f32 %v8038, %v8134
        %v8167 = vmul.f32 %v8039, %v8135
        %v8168 = vmul.f32 %v8040, %v8136
        %v8169 = vmul.f32 %v8041, %v8137
        %v8170 = vmul.f32 %v8042, %v8138
        %v8171 = vmul.f32 %v8043, %v8139
        %v8172 = vmul.f32 %v8044, %v8140
        %v8173 = vmul.f32 %v8045, %v8141
        %v8174 = vmul.f32 %v8046, %v8142
        %v8175 = vmul.f32 %v8047, %v8143
        %v8176 = vmul.f32 %v8048, %v8144
        %v8177 = vmul.f32 %v8049, %v8145
        %v8178 = vmul.f32 %v8050, %v8146
        %v8179 = vmul.f32 %v8051, %v8147
        %v8180 = vmul.f32 %v8052, %v8148
        %v8181 = vld [vmem:[#allocation15] sm:$0xff]
        %v8182 = vld [vmem:[#allocation15 + $0x8] sm:$0xff]
        %v8183 = vld [vmem:[#allocation15 + $0x10] sm:$0xff]
        %v8184 = vld [vmem:[#allocation15 + $0x18] sm:$0xff]
        %v8185 = vld [vmem:[#allocation15 + $0x20] sm:$0xff]
        %v8186 = vld [vmem:[#allocation15 + $0x28] sm:$0xff]
        %v8187 = vld [vmem:[#allocation15 + $0x30] sm:$0xff]
        %v8188 = vld [vmem:[#allocation15 + $0x38] sm:$0xff]
        %v8189 = vld [vmem:[#allocation15 + $0x40] sm:$0xff]
        %v8190 = vld [vmem:[#allocation15 + $0x48] sm:$0xff]
        %v8191 = vld [vmem:[#allocation15 + $0x50] sm:$0xff]
        %v8192 = vld [vmem:[#allocation15 + $0x58] sm:$0xff]
        %v8193 = vld [vmem:[#allocation15 + $0x60] sm:$0xff]
        %v8194 = vld [vmem:[#allocation15 + $0x68] sm:$0xff]
        %v8195 = vld [vmem:[#allocation15 + $0x70] sm:$0xff]
        %v8196 = vld [vmem:[#allocation15 + $0x78] sm:$0xff]
        %v8197 = vld [vmem:[#allocation15 + $0x80] sm:$0xff]
        %v8198 = vld [vmem:[#allocation15 + $0x88] sm:$0xff]
        %v8199 = vld [vmem:[#allocation15 + $0x90] sm:$0xff]
        %v8200 = vld [vmem:[#allocation15 + $0x98] sm:$0xff]
        %v8201 = vld [vmem:[#allocation15 + $0xa0] sm:$0xff]
        %v8202 = vld [vmem:[#allocation15 + $0xa8] sm:$0xff]
        %v8203 = vld [vmem:[#allocation15 + $0xb0] sm:$0xff]
        %v8204 = vld [vmem:[#allocation15 + $0xb8] sm:$0xff]
        %v8205 = vld [vmem:[#allocation15 + $0xc0] sm:$0xff]
        %v8206 = vld [vmem:[#allocation15 + $0xc8] sm:$0xff]
        %v8207 = vld [vmem:[#allocation15 + $0xd0] sm:$0xff]
        %v8208 = vld [vmem:[#allocation15 + $0xd8] sm:$0xff]
        %v8209 = vld [vmem:[#allocation15 + $0xe0] sm:$0xff]
        %v8210 = vld [vmem:[#allocation15 + $0xe8] sm:$0xff]
        %v8211 = vld [vmem:[#allocation15 + $0xf0] sm:$0xff]
        %v8212 = vld [vmem:[#allocation15 + $0xf8] sm:$0xff]
        %v8213 = vld [vmem:[#allocation15 + $0x100] sm:$0xff]
        %v8214 = vld [vmem:[#allocation15 + $0x108] sm:$0xff]
        %v8215 = vld [vmem:[#allocation15 + $0x110] sm:$0xff]
        %v8216 = vld [vmem:[#allocation15 + $0x118] sm:$0xff]
        %v8217 = vld [vmem:[#allocation15 + $0x120] sm:$0xff]
        %v8218 = vld [vmem:[#allocation15 + $0x128] sm:$0xff]
        %v8219 = vld [vmem:[#allocation15 + $0x130] sm:$0xff]
        %v8220 = vld [vmem:[#allocation15 + $0x138] sm:$0xff]
        %v8221 = vld [vmem:[#allocation15 + $0x140] sm:$0xff]
        %v8222 = vld [vmem:[#allocation15 + $0x148] sm:$0xff]
        %v8223 = vld [vmem:[#allocation15 + $0x150] sm:$0xff]
        %v8224 = vld [vmem:[#allocation15 + $0x158] sm:$0xff]
        %v8225 = vld [vmem:[#allocation15 + $0x160] sm:$0xff]
        %v8226 = vld [vmem:[#allocation15 + $0x168] sm:$0xff]
        %v8227 = vld [vmem:[#allocation15 + $0x170] sm:$0xff]
        %v8228 = vld [vmem:[#allocation15 + $0x178] sm:$0xff]
        %v8229 = vld [vmem:[#allocation15 + $0x180] sm:$0xff]
        %v8230 = vld [vmem:[#allocation15 + $0x188] sm:$0xff]
        %v8231 = vld [vmem:[#allocation15 + $0x190] sm:$0xff]
        %v8232 = vld [vmem:[#allocation15 + $0x198] sm:$0xff]
        %v8233 = vld [vmem:[#allocation15 + $0x1a0] sm:$0xff]
        %v8234 = vld [vmem:[#allocation15 + $0x1a8] sm:$0xff]
        %v8235 = vld [vmem:[#allocation15 + $0x1b0] sm:$0xff]
        %v8236 = vld [vmem:[#allocation15 + $0x1b8] sm:$0xff]
        %v8237 = vld [vmem:[#allocation15 + $0x1c0] sm:$0xff]
        %v8238 = vld [vmem:[#allocation15 + $0x1c8] sm:$0xff]
        %v8239 = vld [vmem:[#allocation15 + $0x1d0] sm:$0xff]
        %v8240 = vld [vmem:[#allocation15 + $0x1d8] sm:$0xff]
        %v8241 = vld [vmem:[#allocation15 + $0x1e0] sm:$0xff]
        %v8242 = vld [vmem:[#allocation15 + $0x1e8] sm:$0xff]
        %v8243 = vld [vmem:[#allocation15 + $0x1f0] sm:$0xff]
        %v8244 = vld [vmem:[#allocation15 + $0x1f8] sm:$0xff]
        %v8245 = vld [vmem:[#allocation17] sm:$0x1]
        %v8247 = vlaneseq
        %v8248 = vshrl.u32 %v8247, 7
        %v8249 = vsub.s32 0, %v8248
        %v8250 = vrot.slane %v8245, %v8249
        %8252 = vmatprep.subr.mxu0 0.0
        %8253 = vmatpush1.msra.mxu0 %v8181
        %8254 = vmatprep.subr.mxu0 0.0
        %8255 = vmatpush1.msra.mxu0 %v8182
        %8256 = vmatprep.subr.mxu0 0.0
        %8257 = vmatpush1.msra.mxu0 %v8183
        %8258 = vmatprep.subr.mxu0 0.0
        %8259 = vmatpush1.msra.mxu0 %v8184
        %8260 = vmatprep.subr.mxu0 0.0
        %8261 = vmatpush1.msra.mxu0 %v8185
        %8262 = vmatprep.subr.mxu0 0.0
        %8263 = vmatpush1.msra.mxu0 %v8186
        %8264 = vmatprep.subr.mxu0 0.0
        %8265 = vmatpush1.msra.mxu0 %v8187
        %8266 = vmatprep.subr.mxu0 0.0
        %8267 = vmatpush1.msra.mxu0 %v8188
        %8268 = vmatprep.subr.mxu0 0.0
        %8269 = vmatpush1.msra.mxu0 %v8189
        %8270 = vmatprep.subr.mxu0 0.0
        %8271 = vmatpush1.msra.mxu0 %v8190
        %8272 = vmatprep.subr.mxu0 0.0
        %8273 = vmatpush1.msra.mxu0 %v8191
        %8274 = vmatprep.subr.mxu0 0.0
        %8275 = vmatpush1.msra.mxu0 %v8192
        %8276 = vmatprep.subr.mxu0 0.0
        %8277 = vmatpush1.msra.mxu0 %v8193
        %8278 = vmatprep.subr.mxu0 0.0
        %8279 = vmatpush1.msra.mxu0 %v8194
        %8280 = vmatprep.subr.mxu0 0.0
        %8281 = vmatpush1.msra.mxu0 %v8195
        %8282 = vmatprep.subr.mxu0 0.0
        %8283 = vmatpush1.msra.mxu0 %v8196
        %8284 = vmatprep.subr.mxu0 0.0
        %8285 = vmatpush1.msra.mxu0 %v8197
        %8286 = vmatprep.subr.mxu0 0.0
        %8287 = vmatpush1.msra.mxu0 %v8198
        %8288 = vmatprep.subr.mxu0 0.0
        %8289 = vmatpush1.msra.mxu0 %v8199
        %8290 = vmatprep.subr.mxu0 0.0
        %8291 = vmatpush1.msra.mxu0 %v8200
        %8292 = vmatprep.subr.mxu0 0.0
        %8293 = vmatpush1.msra.mxu0 %v8201
        %8294 = vmatprep.subr.mxu0 0.0
        %8295 = vmatpush1.msra.mxu0 %v8202
        %8296 = vmatprep.subr.mxu0 0.0
        %8297 = vmatpush1.msra.mxu0 %v8203
        %8298 = vmatprep.subr.mxu0 0.0
        %8299 = vmatpush1.msra.mxu0 %v8204
        %8300 = vmatprep.subr.mxu0 0.0
        %8301 = vmatpush1.msra.mxu0 %v8205
        %8302 = vmatprep.subr.mxu0 0.0
        %8303 = vmatpush1.msra.mxu0 %v8206
        %8304 = vmatprep.subr.mxu0 0.0
        %8305 = vmatpush1.msra.mxu0 %v8207
        %8306 = vmatprep.subr.mxu0 0.0
        %8307 = vmatpush1.msra.mxu0 %v8208
        %8308 = vmatprep.subr.mxu0 0.0
        %8309 = vmatpush1.msra.mxu0 %v8209
        %8310 = vmatprep.subr.mxu0 0.0
        %8311 = vmatpush1.msra.mxu0 %v8210
        %8312 = vmatprep.subr.mxu0 0.0
        %8313 = vmatpush1.msra.mxu0 %v8211
        %8314 = vmatprep.subr.mxu0 0.0
        %8315 = vmatpush1.msra.mxu0 %v8212
        %8316 = vmatprep.mubr.f32.mxu0 %v8150
        %8317 = vmatmul.mubr.f32.gmra.mrb[0].mxu0 %v8149
        %v8318 = vpop.f32.mrb[0].mxu0
        %v8319 = vadd.f32 %v8250, %v8318
        %v8320 = vpop.f32.mrb[0].mxu0
        %8321 = vmatprep.mubr.f32.mxu0 %v8154
        %8322 = vmatmul.mubr.f32.gmra.mrb[0].mxu0 %v8153
        %v8323 = vpop.f32.mrb[0].mxu0
        %v8324 = vadd.f32 %v8250, %v8323
        %v8325 = vpop.f32.mrb[0].mxu0
        %8326 = vmatprep.mubr.f32.mxu0 %v8158
        %8327 = vmatmul.mubr.f32.gmra.mrb[0].mxu0 %v8157
        %v8328 = vpop.f32.mrb[0].mxu0
        %v8329 = vadd.f32 %v8250, %v8328
        %v8330 = vpop.f32.mrb[0].mxu0
        %8331 = vmatprep.mubr.f32.mxu0 %v8162
        %8332 = vmatmul.mubr.f32.gmra.mrb[0].mxu0 %v8161
        %v8333 = vpop.f32.mrb[0].mxu0
        %v8334 = vadd.f32 %v8250, %v8333
        %v8335 = vpop.f32.mrb[0].mxu0
        %8336 = vmatprep.mubr.f32.mxu0 %v8166
        %8337 = vmatmul.mubr.f32.gmra.mrb[0].mxu0 %v8165
        %v8338 = vpop.f32.mrb[0].mxu0
        %v8339 = vadd.f32 %v8250, %v8338
        %v8340 = vpop.f32.mrb[0].mxu0
        %8341 = vmatprep.mubr.f32.mxu0 %v8170
        %8342 = vmatmul.mubr.f32.gmra.mrb[0].mxu0 %v8169
        %v8343 = vpop.f32.mrb[0].mxu0
        %v8344 = vadd.f32 %v8250, %v8343
        %v8345 = vpop.f32.mrb[0].mxu0
        %8346 = vmatprep.mubr.f32.mxu0 %v8174
        %8347 = vmatmul.mubr.f32.gmra.mrb[0].mxu0 %v8173
        %v8348 = vpop.f32.mrb[0].mxu0
        %v8349 = vadd.f32 %v8250, %v8348
        %v8350 = vpop.f32.mrb[0].mxu0
        %8351 = vmatprep.mubr.f32.mxu0 %v8178
        %8352 = vmatmul.mubr.f32.gmra.mrb[0].mxu0 %v8177
        %v8353 = vpop.f32.mrb[0].mxu0
        %v8354 = vadd.f32 %v8250, %v8353
        %v8355 = vpop.f32.mrb[0].mxu0
        %8356 = vdwg.mxu0
        %8357 = vmatprep.subr.mxu0 0.0
        %8358 = vmatpush1.msra.mxu0 %v8213
        %8359 = vmatprep.subr.mxu0 0.0
        %8360 = vmatpush1.msra.mxu0 %v8214
        %8361 = vmatprep.subr.mxu0 0.0
        %8362 = vmatpush1.msra.mxu0 %v8215
        %8363 = vmatprep.subr.mxu0 0.0
        %8364 = vmatpush1.msra.mxu0 %v8216
        %8365 = vmatprep.subr.mxu0 0.0
        %8366 = vmatpush1.msra.mxu0 %v8217
        %8367 = vmatprep.subr.mxu0 0.0
        %8368 = vmatpush1.msra.mxu0 %v8218
        %8369 = vmatprep.subr.mxu0 0.0
        %8370 = vmatpush1.msra.mxu0 %v8219
        %8371 = vmatprep.subr.mxu0 0.0
        %8372 = vmatpush1.msra.mxu0 %v8220
        %8373 = vmatprep.subr.mxu0 0.0
        %8374 = vmatpush1.msra.mxu0 %v8221
        %8375 = vmatprep.subr.mxu0 0.0
        %8376 = vmatpush1.msra.mxu0 %v8222
        %8377 = vmatprep.subr.mxu0 0.0
        %8378 = vmatpush1.msra.mxu0 %v8223
        %8379 = vmatprep.subr.mxu0 0.0
        %8380 = vmatpush1.msra.mxu0 %v8224
        %8381 = vmatprep.subr.mxu0 0.0
        %8382 = vmatpush1.msra.mxu0 %v8225
        %8383 = vmatprep.subr.mxu0 0.0
        %8384 = vmatpush1.msra.mxu0 %v8226
        %8385 = vmatprep.subr.mxu0 0.0
        %8386 = vmatpush1.msra.mxu0 %v8227
        %8387 = vmatprep.subr.mxu0 0.0
        %8388 = vmatpush1.msra.mxu0 %v8228
        %8389 = vmatprep.subr.mxu0 0.0
        %8390 = vmatpush1.msra.mxu0 %v8229
        %8391 = vmatprep.subr.mxu0 0.0
        %8392 = vmatpush1.msra.mxu0 %v8230
        %8393 = vmatprep.subr.mxu0 0.0
        %8394 = vmatpush1.msra.mxu0 %v8231
        %8395 = vmatprep.subr.mxu0 0.0
        %8396 = vmatpush1.msra.mxu0 %v8232
        %8397 = vmatprep.subr.mxu0 0.0
        %8398 = vmatpush1.msra.mxu0 %v8233
        %8399 = vmatprep.subr.mxu0 0.0
        %8400 = vmatpush1.msra.mxu0 %v8234
        %8401 = vmatprep.subr.mxu0 0.0
        %8402 = vmatpush1.msra.mxu0 %v8235
        %8403 = vmatprep.subr.mxu0 0.0
        %8404 = vmatpush1.msra.mxu0 %v8236
        %8405 = vmatprep.subr.mxu0 0.0
        %8406 = vmatpush1.msra.mxu0 %v8237
        %8407 = vmatprep.subr.mxu0 0.0
        %8408 = vmatpush1.msra.mxu0 %v8238
        %8409 = vmatprep.subr.mxu0 0.0
        %8410 = vmatpush1.msra.mxu0 %v8239
        %8411 = vmatprep.subr.mxu0 0.0
        %8412 = vmatpush1.msra.mxu0 %v8240
        %8413 = vmatprep.subr.mxu0 0.0
        %8414 = vmatpush1.msra.mxu0 %v8241
        %8415 = vmatprep.subr.mxu0 0.0
        %8416 = vmatpush1.msra.mxu0 %v8242
        %8417 = vmatprep.subr.mxu0 0.0
        %8418 = vmatpush1.msra.mxu0 %v8243
        %8419 = vmatprep.subr.mxu0 0.0
        %8420 = vmatpush1.msra.mxu0 %v8244
        %8421 = vmatprep.mubr.f32.mxu0 %v8152
        %8422 = vmatmul.mubr.f32.gmra.mrb[0].mxu0 %v8151
        %v8423 = vpop.f32.mrb[0].mxu0
        %v8424 = vadd.f32 %v8319, %v8423
        %v8425 = vpop.f32.mrb[0].mxu0
        %8426 = vmatprep.mubr.f32.mxu0 %v8156
        %8427 = vmatmul.mubr.f32.gmra.mrb[0].mxu0 %v8155
        %v8428 = vpop.f32.mrb[0].mxu0
        %v8429 = vadd.f32 %v8324, %v8428
        %v8430 = vpop.f32.mrb[0].mxu0
        %8431 = vmatprep.mubr.f32.mxu0 %v8160
        %8432 = vmatmul.mubr.f32.gmra.mrb[0].mxu0 %v8159
        %v8433 = vpop.f32.mrb[0].mxu0
        %v8434 = vadd.f32 %v8329, %v8433
        %v8435 = vpop.f32.mrb[0].mxu0
        %8436 = vmatprep.mubr.f32.mxu0 %v8164
        %8437 = vmatmul.mubr.f32.gmra.mrb[0].mxu0 %v8163
        %v8438 = vpop.f32.mrb[0].mxu0
        %v8439 = vadd.f32 %v8334, %v8438
        %v8440 = vpop.f32.mrb[0].mxu0
        %8441 = vmatprep.mubr.f32.mxu0 %v8168
        %8442 = vmatmul.mubr.f32.gmra.mrb[0].mxu0 %v8167
        %v8443 = vpop.f32.mrb[0].mxu0
        %v8444 = vadd.f32 %v8339, %v8443
        %v8445 = vpop.f32.mrb[0].mxu0
        %8446 = vmatprep.mubr.f32.mxu0 %v8172
        %8447 = vmatmul.mubr.f32.gmra.mrb[0].mxu0 %v8171
        %v8448 = vpop.f32.mrb[0].mxu0
        %v8449 = vadd.f32 %v8344, %v8448
        %v8450 = vpop.f32.mrb[0].mxu0
        %8451 = vmatprep.mubr.f32.mxu0 %v8176
        %8452 = vmatmul.mubr.f32.gmra.mrb[0].mxu0 %v8175
        %v8453 = vpop.f32.mrb[0].mxu0
        %v8454 = vadd.f32 %v8349, %v8453
        %v8455 = vpop.f32.mrb[0].mxu0
        %8456 = vmatprep.mubr.f32.mxu0 %v8180
        %8457 = vmatmul.mubr.f32.gmra.mrb[0].mxu0 %v8179
        %v8458 = vpop.f32.mrb[0].mxu0
        %v8459 = vadd.f32 %v8354, %v8458
        %v8460 = vpop.f32.mrb[0].mxu0
        %8461 = vdwg.mxu0
        %v8462 = vld [vmem:[#allocation18] sm:$0x1]
        %v8464 = vlaneseq
        %v8465 = vshrl.u32 %v8464, 7
        %v8466 = vsub.s32 0, %v8465
        %v8467 = vrot.slane %v8462, %v8466
        %v8469 = vmul.f32 %v8424, %v8467
        %v8470 = vmul.f32 %v8429, %v8467
        %v8471 = vmul.f32 %v8434, %v8467
        %v8472 = vmul.f32 %v8439, %v8467
        %v8473 = vmul.f32 %v8444, %v8467
        %v8474 = vmul.f32 %v8449, %v8467
        %v8475 = vmul.f32 %v8454, %v8467
        %v8476 = vmul.f32 %v8459, %v8467
        %v8477 = vld [vmem:[%s443] sm:$0xff]
        %v8478 = vld [vmem:[%s443 + $0x8] sm:$0xff]
        %v8479 = vld [vmem:[%s443 + $0x10] sm:$0xff]
        %v8480 = vld [vmem:[%s443 + $0x18] sm:$0xff]
        %v8481 = vld [vmem:[%s443 + $0x20] sm:$0xff]
        %v8482 = vld [vmem:[%s443 + $0x28] sm:$0xff]
        %v8483 = vld [vmem:[%s443 + $0x30] sm:$0xff]
        %v8484 = vld [vmem:[%s443 + $0x38] sm:$0xff]
        %v8485 = vadd.f32 %v8477, %v8469
        %v8486 = vadd.f32 %v8478, %v8470
        %v8487 = vadd.f32 %v8479, %v8471
        %v8488 = vadd.f32 %v8480, %v8472
        %v8489 = vadd.f32 %v8481, %v8473
        %v8490 = vadd.f32 %v8482, %v8474
        %v8491 = vadd.f32 %v8483, %v8475
        %v8492 = vadd.f32 %v8484, %v8476
        %8493 = vst [vmem:[%s515] sm:$0xff] %v8485
        %8494 = vst [vmem:[%s515 + $0x8] sm:$0xff] %v8486
        %8495 = vst [vmem:[%s515 + $0x10] sm:$0xff] %v8487
        %8496 = vst [vmem:[%s515 + $0x18] sm:$0xff] %v8488
        %8497 = vst [vmem:[%s515 + $0x20] sm:$0xff] %v8489
        %8498 = vst [vmem:[%s515 + $0x28] sm:$0xff] %v8490
        %8499 = vst [vmem:[%s515 + $0x30] sm:$0xff] %v8491
        %8500 = vst [vmem:[%s515 + $0x38] sm:$0xff] %v8492
        %s8501 = sand.u32 %s272, 1
        %s8502 = scalar_lea.sflag [#allocation5], %s8501
        %s8503 = sand.u32 %s272, 1
        %s8504 = smul.addr %s8503, 64
        %s8505 = scalar_lea.vmem [#allocation20], %s8504
        // Predicated region
        $region102: #{tpu_custom_call.1} parent=59 // pred_check
          %p8506 = pneg %p282
        $region103: #{tpu_custom_call.1} parent=59 // pred_check_branch
          %8508 = sbr.rel (%p8506) target = $region105
        $region104: #{tpu_custom_call.1} parent=59 // pred_region
          %s8509 = smul.u32 8, %s38
          %s8511 = ssub.s32 1024, 1024
          %8512 = vsyncadd %s8502, %s8511
          %s8513 = smul.addr %s37, 8
          %s8514 = sadd.s32 %s8509, %s8513
          %s8515 = smul.addr %s8514, 128
          %s8516 = scalar_lea.hbm %s11, %s8515
          %s8517 = sshll.u32 %s8505, 4
          %s8518 = int_to_ptr.vmem [resolvable:$true] %s8517
          %8523 = dma.vmem_to_hbm [thread:$0]  %s8518, 1024, %s8516, %s8502, 128, 128, 8
        $region105: #{tpu_custom_call.1} parent=59 // pred_fallthru
          _
      $region60: #{tpu_custom_call.1} parent=5 // pred_fallthru
        _
      %p8524 = scmp.le.s32.totalorder 2, %s28
      // Predicated region
      $region106: #{tpu_custom_call.1} parent=5 // pred_check
        %p8525 = pneg %p8524
      $region107: #{tpu_custom_call.1} parent=5 // pred_check_branch
        %8527 = sbr.rel (%p8525) target = $region109
      $region108: #{tpu_custom_call.1} parent=5 // pred_region
        %s8528 = ssub.s32 %s28, 2
        // Predicated region
        $region110: #{tpu_custom_call.1} parent=108 // pred_check
          %p8529 = pneg %p288
        $region111: #{tpu_custom_call.1} parent=108 // pred_check_branch
          %8531 = sbr.rel (%p8529) target = $region113
        $region112: #{tpu_custom_call.1} parent=108 // pred_region
          %s8532 = sand.u32 %s273, 1
          %s8533 = scalar_lea.sflag [#allocation5], %s8532
          %s8534 = sand.u32 %s273, 1
          %s8535 = smul.addr %s8534, 64
          %s8536 = scalar_lea.vmem [#allocation20], %s8535
          %8537 = dma.done %s8533, 1024
        $region113: #{tpu_custom_call.1} parent=108 // pred_fallthru
          _
      $region109: #{tpu_custom_call.1} parent=5 // pred_fallthru
        _
    $region6: #{tpu_custom_call.1} parent=1 // loop_footer
      %s32 = sadd.s32 1, %s28
    $region7: #{tpu_custom_call.1} parent=1 // loop_footer_branch
      %27 = sbr.rel target = $region3
    $region8: #{tpu_custom_call.1} parent=1 // loop_exit
      _
    %8538 = vsyncpa [#allocation4], 1
    %s8539 = scalar_lea.sflag [#allocation4], 1
    %8540 = vsyncpa %s8539, 1
    %8541 = vsyncpa [#allocation7], 1
    %8542 = vsyncpa [#allocation10], 1
    %8543 = vsyncpa [#allocation13], 1
    %8544 = vsyncpa [#allocation16], 1
    %8545 = vsyncpa [#allocation19], 1
    %8546 = vsyncpa [#allocation5], 1
    %s8547 = scalar_lea.sflag [#allocation5], 1
    %8548 = vsyncpa %s8547, 1

</llo_original>
